<compile_context>
chip_gen: v7x
topology: tpu7x:2x2x1
jax: 0.10.0
libtpu: 0.0.40
codegen_flags: <defaults>
</compile_context>

<pallas_src>
import functools
import math

import jax
import jax.numpy as jnp
from jax.experimental import pallas as pl
from jax.experimental.pallas import tpu as pltpu

IN_CHANNELS = 4          # forced by combine_streams1 (Conv2d(8, 4)) and the mask logic
INPUT_SIZE = 128         # hard-wired in the PyTorch module (PatchSTN(128, 4), 128x128 mask)
_MM_TILE_BYTES = 2 * 1024 * 1024     # target VMEM bytes per activation tile
_VMEM_LIMIT = 48 * 1024 * 1024       # safe on v5e/v6e (128 MiB) and v7x (64 MiB/TC)


def _round_up(x, m):
    return (x + m - 1) // m * m


# ---------------------------------------------------------------------------
# Pallas kernels
# ---------------------------------------------------------------------------
def _matmul_bias_act_kernel(x_ref, w_ref, b_ref, o_ref, *, act):
    y = jnp.dot(x_ref[...], w_ref[...], preferred_element_type=jnp.float32)
    y = y + b_ref[...]
    if act == "relu":
        y = jnp.maximum(y, 0.0)
    elif act == "hardtanh":
        y = jnp.clip(y, -1.0, 1.0)
    elif act == "tanh":
        y = jnp.tanh(y)
    o_ref[...] = y.astype(o_ref.dtype)


def _maxpool_kernel(w_ref, o_ref):
    # w_ref block: (k*k, tm, C) -> max over the window-tap axis
    o_ref[...] = jnp.max(w_ref[...], axis=0)


def _finalize_kernel(m_ref, img_ref, wb_ref, inp_ref, out_ref):
    z = m_ref[0] * wb_ref[...]                    # (H, W, 1)
    gate = 1.0 / (1.0 + jnp.exp(-z))              # sigmoid
    oimg = jnp.tanh(img_ref[0])                   # (H, W, 3)
    out_ref[0] = oimg * gate + inp_ref[0] * (1.0 - gate)


# ---------------------------------------------------------------------------
# pallas_call wrappers
# ---------------------------------------------------------------------------
def matmul_bias_act(x, w, b, act):
    """(M, K) @ (K, Cout) + b with fused activation, tiled over M only.

    The whole (K, Cout) weight stays VMEM-resident (constant index_map); M is
    padded to a sublane multiple so arbitrary conv geometries tile cleanly."""
    M, K = x.shape
    Cout = w.shape[1]
    tm = max(8, min(_round_up(M, 8),
                    max(8, (_MM_TILE_BYTES // (K * 4)) // 8 * 8)))
    Mp = _round_up(M, tm)
    if Mp != M:
        x = jnp.pad(x, ((0, Mp - M), (0, 0)))
    out = pl.pallas_call(
        functools.partial(_matmul_bias_act_kernel, act=act),
        out_shape=jax.ShapeDtypeStruct((Mp, Cout), jnp.float32),
        grid_spec=pltpu.PrefetchScalarGridSpec(
            num_scalar_prefetch=0,
            grid=(Mp // tm,),
            in_specs=[
                pl.BlockSpec((tm, K), lambda i: (i, 0)),
                pl.BlockSpec((K, Cout), lambda i: (0, 0)),   # weight resident
                pl.BlockSpec((1, Cout), lambda i: (0, 0)),
            ],
            out_specs=pl.BlockSpec((tm, Cout), lambda i: (i, 0)),
        ),
        compiler_params=pltpu.CompilerParams(
            dimension_semantics=("parallel",),
            vmem_limit_bytes=_VMEM_LIMIT,
        ),
    )(x, w, b.reshape(1, Cout))
    return out[:M] if Mp != M else out


def maxpool2d(x, k, stride):
    """MaxPool2d(k, stride), NHWC."""
    N, H, W, C = x.shape
    OH = (H - k) // stride + 1
    OW = (W - k) // stride + 1
    views = [x[:, dy:dy + (OH - 1) * stride + 1:stride,
               dx:dx + (OW - 1) * stride + 1:stride, :]
             for dy in range(k) for dx in range(k)]
    wins = jnp.stack(views, axis=0).reshape(k * k, N * OH * OW, C)
    M = N * OH * OW
    tm = max(8, min(_round_up(M, 8),
                    max(8, (_MM_TILE_BYTES // (k * k * C * 4)) // 8 * 8)))
    Mp = _round_up(M, tm)
    if Mp != M:
        wins = jnp.pad(wins, ((0, 0), (0, Mp - M), (0, 0)))
    out = pl.pallas_call(
        _maxpool_kernel,
        out_shape=jax.ShapeDtypeStruct((Mp, C), jnp.float32),
        grid_spec=pltpu.PrefetchScalarGridSpec(
            num_scalar_prefetch=0,
            grid=(Mp // tm,),
            in_specs=[pl.BlockSpec((k * k, tm, C), lambda i: (0, i, 0))],
            out_specs=pl.BlockSpec((tm, C), lambda i: (i, 0)),
        ),
        compiler_params=pltpu.CompilerParams(
            dimension_semantics=("parallel",),
            vmem_limit_bytes=_VMEM_LIMIT,
        ),
    )(wins)
    if Mp != M:
        out = out[:M]
    return out.reshape(N, OH, OW, C)


# ---------------------------------------------------------------------------
# Conv building blocks (im2col is JAX slicing glue; the matmul is the kernel)
# ---------------------------------------------------------------------------
def _im2col(x, kh, kw):
    N, H, W, C = x.shape
    OH, OW = H - kh + 1, W - kw + 1
    views = [x[:, dy:dy + OH, dx:dx + OW, :] for dy in range(kh) for dx in range(kw)]
    cols = jnp.stack(views, axis=3)                       # (N, OH, OW, kh*kw, C)
    return cols.reshape(N * OH * OW, kh * kw * C), OH, OW


def conv2d_act(x, w_mat, b, kh, kw, act, padding=0):
    """Conv2d(stride=1) + bias + fused activation. w_mat is (kh*kw*Cin, Cout)
    in (ky, kx, cin) patch order (converted from the PyTorch layout)."""
    N = x.shape[0]
    if padding:
        x = jnp.pad(x, ((0, 0), (padding, padding), (padding, padding), (0, 0)))
    if kh == 1 and kw == 1:
        _, H, W, C = x.shape
        cols, OH, OW = x.reshape(N * H * W, C), H, W
    else:
        cols, OH, OW = _im2col(x, kh, kw)
    y = matmul_bias_act(cols, w_mat, b, act)
    return y.reshape(N, OH, OW, w_mat.shape[1])


# ---------------------------------------------------------------------------
# STN glue: affine_grid + grid_sample (align_corners=False, zeros padding)
# ---------------------------------------------------------------------------
def _affine_grid(theta, H, W):
    xs = (2.0 * (jnp.arange(W, dtype=jnp.float32) + 0.5)) / W - 1.0
    ys = (2.0 * (jnp.arange(H, dtype=jnp.float32) + 0.5)) / H - 1.0
    X, Y = jnp.meshgrid(xs, ys)                                  # (H, W)
    base = jnp.stack([X, Y, jnp.ones_like(X)], axis=-1)          # (H, W, 3)
    return jnp.einsum("hwk,nck->nhwc", base, theta)              # (N, H, W, 2)


# TODO(synk): data-dependent bilinear gather kept in plain JAX (no clean Pallas path).
def _grid_sample(img, grid):
    N, H, W, C = img.shape
    ix = ((grid[..., 0] + 1.0) * W - 1.0) * 0.5
    iy = ((grid[..., 1] + 1.0) * H - 1.0) * 0.5
    x0 = jnp.floor(ix)
    y0 = jnp.floor(iy)
    wx1 = ix - x0
    wy1 = iy - y0
    flat = img.reshape(N, H * W, C)

    def corner(xc, yc, wgt):
        valid = (xc >= 0) & (xc <= W - 1) & (yc >= 0) & (yc <= H - 1)
        xi = jnp.clip(xc, 0, W - 1).astype(jnp.int32)
        yi = jnp.clip(yc, 0, H - 1).astype(jnp.int32)
        idx = (yi * W + xi).reshape(N, H * W)
        vals = jax.vmap(lambda im2d, ind: im2d[ind])(flat, idx)  # (N, H*W, C)
        w = (wgt * valid.astype(img.dtype)).reshape(N, H * W, 1)
        return vals * w

    out = (corner(x0, y0, (1.0 - wy1) * (1.0 - wx1))
           + corner(x0 + 1.0, y0, (1.0 - wy1) * wx1)
           + corner(x0, y0 + 1.0, wy1 * (1.0 - wx1))
           + corner(x0 + 1.0, y0 + 1.0, wy1 * wx1))
    return out.reshape(N, H, W, C)


# ---------------------------------------------------------------------------
# PatchSTN / MultiPatchSTNLayer / auxiliary blocks
# ---------------------------------------------------------------------------
@jax.jit
def patch_stn_apply(p, x):
    """PatchSTN.forward on an NHWC patch.  ReLU is fused into the conv epilogue
    (Conv -> Pool -> ReLU == Conv+ReLU -> Pool since relu/max commute)."""
    h = conv2d_act(x, p["w1"], p["b1"], 7, 7, "relu")
    h = maxpool2d(h, 2, 2)
    h = conv2d_act(h, p["w2"], p["b2"], 5, 5, "relu")
    h = maxpool2d(h, 2, 2)
    h = conv2d_act(h, p["w3"], p["b3"], 3, 3, "relu")
    h = maxpool2d(h, 2, 2)
    N = h.shape[0]
    flat = jnp.transpose(h, (0, 3, 1, 2)).reshape(N, -1)     # NCHW flatten order
    t = matmul_bias_act(flat, p["fw1"], p["fb1"], "relu")
    theta = matmul_bias_act(t, p["fw2"], p["fb2"], "none").reshape(N, 2, 3)
    grid = _affine_grid(theta, x.shape[1], x.shape[2])
    return _grid_sample(x, grid)


def multipatch_layer(patch_params, x):
    """MultiPatchSTNLayer.forward (NHWC)."""
    num_patches = len(patch_params)
    n_rc = int(num_patches ** 0.5)
    input_size = x.shape[1]
    sps = int(math.ceil(input_size / n_rc))
    zd = abs(input_size - sps * n_rc)
    if zd > 0:
        x = jnp.pad(x, ((0, 0), (0, zd), (0, zd), (0, 0)))
    rows, row_out = [], []
    for pnum in range(num_patches):
        pr, pc = divmod(pnum, n_rc)
        rl = min(sps, input_size - sps * pr)
        cl = min(sps, input_size - sps * pc)
        patch = x[:, pr * sps:pr * sps + rl, pc * sps:pc * sps + cl, :]
        row_out.append(patch_stn_apply(patch_params[pnum], patch))
        if pc == n_rc - 1:
            rows.append(jnp.concatenate(row_out, axis=2))
            row_out = []
    recon = jnp.concatenate(rows, axis=1)
    if recon.shape[1] != input_size:
        recon = recon[:, :input_size, :input_size, :]
    return recon


@functools.partial(jax.jit, static_argnames=("act",))
def dwconv_pool_block(p, x, act):
    """Conv2d(C,C,7,1,3,groups=C) + act + Conv2d(C,C,1,1) + act + MaxPool2d(3,2)."""
    h = conv2d_act(x, p["dw_w"], p["dw_b"], 7, 7, act, padding=3)
    h = conv2d_act(h, p["pw_w"], p["pw_b"], 1, 1, act)
    return maxpool2d(h, 3, 2)


@functools.partial(jax.jit, static_argnames=("act",))
def deconv_block(p, x, act):
    """ConvTranspose2d(C,C,4,stride=2,padding=0) + act, lowered to
    zero-dilation + pad(3) + im2col + one fused MXU matmul."""
    N, H, W, C = x.shape
    s, k = 2, 4
    pad = k - 1
    up = jnp.zeros((N, (H - 1) * s + 1, (W - 1) * s + 1, C), x.dtype)
    up = up.at[:, ::s, ::s, :].set(x)
    up = jnp.pad(up, ((0, 0), (pad, pad), (pad, pad), (0, 0)))
    cols, OH, OW = _im2col(up, k, k)
    y = matmul_bias_act(cols, p["w"], p["b"], act)
    return y.reshape(N, OH, OW, C)


@jax.jit
def combine_block(p, x):
    """combine_streams1: Conv2d(8, 4, 1, 1) + Hardtanh."""
    return conv2d_act(x, p["w"], p["b"], 1, 1, "hardtanh")


@jax.jit
def finalize_transform(out4, mask_w, inp):
    """finallize_transform: sigmoid(W * mask-channel) gated blend of tanh(image)."""
    N, H, W, _ = out4.shape
    mask_ch = out4[:, :, :, 0:1]
    img_ch = out4[:, :, :, 1:4]
    wb = mask_w.reshape(H, W, 1)
    return pl.pallas_call(
        _finalize_kernel,
        out_shape=jax.ShapeDtypeStruct((N, H, W, 3), jnp.float32),
        grid_spec=pltpu.PrefetchScalarGridSpec(
            num_scalar_prefetch=0,
            grid=(N,),
            in_specs=[
                pl.BlockSpec((1, H, W, 1), lambda n: (n, 0, 0, 0)),
                pl.BlockSpec((1, H, W, 3), lambda n: (n, 0, 0, 0)),
                pl.BlockSpec((H, W, 1), lambda n: (0, 0, 0)),
                pl.BlockSpec((1, H, W, 3), lambda n: (n, 0, 0, 0)),
            ],
            out_specs=pl.BlockSpec((1, H, W, 3), lambda n: (n, 0, 0, 0)),
        ),
        compiler_params=pltpu.CompilerParams(
            dimension_semantics=("parallel",),
            vmem_limit_bytes=_VMEM_LIMIT,
        ),
    )(mask_ch, img_ch, wb, inp)


# ---------------------------------------------------------------------------
# MultiPatchSTN forward
# ---------------------------------------------------------------------------
def multipatch_stn_forward(params, tensor_4d, my_input):
    """MultiPatchSTN.forward (return_mask=False): returns
    (input_with_new_content, out) in NCHW, like the PyTorch module."""
    x = jnp.transpose(tensor_4d, (0, 2, 3, 1))       # NCHW -> NHWC
    inp = jnp.transpose(my_input, (0, 2, 3, 1))

    out_stn1 = multipatch_layer(params["stn9_b1"], x)
    sb1 = multipatch_layer(params["stn9_b2"], x)
    sb1 = dwconv_pool_block(params["dw1"], sb1, act="hardtanh")
    sb1 = deconv_block(params["deconv1"], sb1, act="hardtanh")
    out_b1 = combine_block(params["comb1"],
                           jnp.concatenate([out_stn1, sb1], axis=-1))
    out_res1 = patch_stn_apply(params["stn_all1"], out_b1)

    out_stn2 = multipatch_layer(params["stn4_b21"], out_res1)
    sb2 = multipatch_layer(params["stn4_b22"], out_res1)
    sb2 = dwconv_pool_block(params["dw2"], sb2, act="tanh")
    sb2 = deconv_block(params["deconv2"], sb2, act="tanh")
    # NOTE: the PyTorch forward reuses combine_streams1 here (combine_streams2 is unused).
    out_b2 = combine_block(params["comb1"],
                           jnp.concatenate([out_stn2, sb2], axis=-1))
    out = patch_stn_apply(params["stn_all2"], out_b2)

    blended = finalize_transform(out, params["mask_w"], inp)
    return (jnp.transpose(blended, (0, 3, 1, 2)),
            jnp.transpose(out, (0, 3, 1, 2)))


# ---------------------------------------------------------------------------
# Parameter construction (weights pre-converted to matmul layout once, not per call)
# ---------------------------------------------------------------------------
def _conv_w_to_mat(w):
    """PyTorch Conv2d weight (Cout, Cin, kh, kw) -> (kh*kw*Cin, Cout) im2col layout."""
    co, ci, kh, kw = w.shape
    return jnp.transpose(w, (2, 3, 1, 0)).reshape(kh * kw * ci, co)


def _conv_out(n, k, pad=0, stride=1):
    return (n + 2 * pad - (k - 1) - 1) // stride + 1


def _loc_out_size(n):
    n = _conv_out(_conv_out(n, 7), 2, stride=2)
    n = _conv_out(_conv_out(n, 5), 2, stride=2)
    n = _conv_out(_conv_out(n, 3), 2, stride=2)
    return n


def _normal(key, shape, scale=0.05):
    return scale * jax.random.normal(key, shape, jnp.float32)


def init_patch_stn(key, c_in, spatial):
    s = _loc_out_size(spatial)
    k = jax.random.split(key, 8)
    return {
        "w1": _conv_w_to_mat(_normal(k[0], (c_in + 4, c_in, 7, 7))),
        "b1": _normal(k[1], (c_in + 4,)),
        "w2": _conv_w_to_mat(_normal(k[2], (c_in + 8, c_in + 4, 5, 5))),
        "b2": _normal(k[3], (c_in + 8,)),
        "w3": _conv_w_to_mat(_normal(k[4], (c_in + 16, c_in + 8, 3, 3))),
        "b3": _normal(k[5], (c_in + 16,)),
        "fw1": _normal(k[6], ((c_in + 16) * s * s, 32), 0.02),
        "fb1": _normal(k[7], (32,)),
        # fc_loc[2]: zero weight + identity-affine bias (as in the PyTorch ctor)
        "fw2": jnp.zeros((32, 6), jnp.float32),
        "fb2": jnp.array([1, 0, 0, 0, 1, 0], jnp.float32),
    }


def init_dw_block(key, c):
    k = jax.random.split(key, 4)
    wd = _normal(k[0], (c, 1, 7, 7))                       # depthwise, torch layout
    taps = jnp.transpose(wd[:, 0], (1, 2, 0)).reshape(49, c)           # (tap, ch)
    dw_mat = (taps[:, :, None] * jnp.eye(c, dtype=jnp.float32)[None]).reshape(49 * c, c)
    return {
        "dw_w": dw_mat,
        "dw_b": _normal(k[1], (c,)),
        "pw_w": _conv_w_to_mat(_normal(k[2], (c, c, 1, 1))),
        "pw_b": _normal(k[3], (c,)),
    }


def init_deconv(key, c):
    k = jax.random.split(key, 2)
    w = _normal(k[0], (c, c, 4, 4))      # ConvTranspose2d layout (Cin, Cout, kh, kw)
    w_mat = jnp.transpose(w[:, :, ::-1, ::-1], (2, 3, 0, 1)).reshape(16 * c, c)
    return {"w": w_mat, "b": _normal(k[1], (c,))}


def init_conv1x1(key, c_in, c_out):
    k = jax.random.split(key, 2)
    return {"w": _conv_w_to_mat(_normal(k[0], (c_out, c_in, 1, 1))),
            "b": _normal(k[1], (c_out,))}


def init_multipatch_stn(key, c_in=IN_CHANNELS, input_size=INPUT_SIZE):
    keys = iter(jax.random.split(key, 64))
    sps9 = int(math.ceil(input_size / 3))
    sps4 = int(math.ceil(input_size / 2))
    return {
        "stn9_b1": [init_patch_stn(next(keys), c_in, sps9) for _ in range(9)],
        "stn9_b2": [init_patch_stn(next(keys), c_in, sps9) for _ in range(9)],
        "dw1": init_dw_block(next(keys), c_in),
        "deconv1": init_deconv(next(keys), c_in),
        "comb1": init_conv1x1(next(keys), 2 * c_in, c_in),
        "stn_all1": init_patch_stn(next(keys), c_in, input_size),
        "stn4_b21": [init_patch_stn(next(keys), c_in, sps4) for _ in range(4)],
        "stn4_b22": [init_patch_stn(next(keys), c_in, sps4) for _ in range(4)],
        "dw2": init_dw_block(next(keys), c_in),
        "deconv2": init_deconv(next(keys), c_in),
        # combine_streams2 / apply_mask_mul exist in the PyTorch module but are
        # never used by forward(), so they are not instantiated here.
        "stn_all2": init_patch_stn(next(keys), c_in, input_size),
        "mask_w": jnp.ones((input_size, input_size), jnp.float32),
    }


if __name__ == "__main__":
    key = jax.random.PRNGKey(0)
    kx, ki, kp = jax.random.split(key, 3)
    batch = 2
    tensor_4d = jax.random.normal(kx, (batch, IN_CHANNELS, INPUT_SIZE, INPUT_SIZE),
                                  jnp.float32)
    my_input = jax.random.normal(ki, (batch, 3, INPUT_SIZE, INPUT_SIZE), jnp.float32)
    params = init_multipatch_stn(kp)

    blended, out = multipatch_stn_forward(params, tensor_4d, my_input)
    blended, out = jax.block_until_ready((blended, out))

    assert blended.shape == (batch, 3, INPUT_SIZE, INPUT_SIZE), blended.shape
    assert out.shape == (batch, IN_CHANNELS, INPUT_SIZE, INPUT_SIZE), out.shape
    assert bool(jnp.all(jnp.isfinite(blended)))
    assert bool(jnp.all(jnp.isfinite(out)))
    print("KERNEL_OK")
</pallas_src>

<mosaic_0001>
module attributes {stable_mosaic.version = 11 : i64} {
  func.func @_matmul_bias_act_kernel(%arg0: i32, %arg1: memref<2672x196xf32, #tpu.memory_space<vmem>>, %arg2: memref<196x8xf32, #tpu.memory_space<vmem>>, %arg3: memref<1x8xf32, #tpu.memory_space<vmem>>, %arg4: memref<2672x8xf32, #tpu.memory_space<vmem>>) attributes {dimension_semantics = [#tpu.dimension_semantics<parallel>], iteration_bounds = array<i64: 2>, scalar_prefetch = 0 : i64, scratch_operands = 0 : i64, tpu.core_type = #tpu.core_type<tc>, window_params = [{transform_indices = @transform_0, window_bounds = array<i64: 2672, 196>}, {pipeline_mode = #tpu.pipeline_mode<synchronous>, transform_indices = @transform_1, window_bounds = array<i64: 196, 8>}, {pipeline_mode = #tpu.pipeline_mode<synchronous>, transform_indices = @transform_2, window_bounds = array<i64: 1, 8>}, {transform_indices = @transform_3, window_bounds = array<i64: 2672, 8>}]} {
    %c0 = arith.constant 0 : index
    %c0_0 = arith.constant 0 : index
    %0 = vector.load %arg1[%c0, %c0_0] : memref<2672x196xf32, #tpu.memory_space<vmem>>, vector<2672x196xf32>
    %c0_1 = arith.constant 0 : index
    %c0_2 = arith.constant 0 : index
    %1 = vector.load %arg2[%c0_1, %c0_2] : memref<196x8xf32, #tpu.memory_space<vmem>>, vector<196x8xf32>
    %cst = arith.constant dense<0.000000e+00> : vector<2672x8xf32>
    %2 = tpu.matmul %0, %1, %cst {dimension_numbers = #tpu.dot_dimension_numbers<[1], [0], [0], [1], [0, 0, 1, 1], [], []>} : vector<2672x196xf32>, vector<196x8xf32>, vector<2672x8xf32> -> vector<2672x8xf32>
    %c0_3 = arith.constant 0 : index
    %c0_4 = arith.constant 0 : index
    %3 = vector.load %arg3[%c0_3, %c0_4] : memref<1x8xf32, #tpu.memory_space<vmem>>, vector<1x8xf32>
    %4 = vector.broadcast %3 : vector<1x8xf32> to vector<2672x8xf32>
    %5 = arith.addf %2, %4 : vector<2672x8xf32>
    %cst_5 = arith.constant 0.000000e+00 : f32
    %6 = vector.broadcast %cst_5 : f32 to vector<2672x8xf32>
    %7 = arith.maximumf %5, %6 : vector<2672x8xf32>
    %c0_6 = arith.constant 0 : index
    %c0_7 = arith.constant 0 : index
    %8 = vector.load %arg4[%c0_6, %c0_7] : memref<2672x8xf32, #tpu.memory_space<vmem>>, vector<2672x8xf32>
    tpu.vector_store %arg4[%c0_6, %c0_7], %7 {strides = array<i32>} : memref<2672x8xf32, #tpu.memory_space<vmem>>, vector<2672x8xf32>,
    return
  }
  func.func @transform_0(%arg0: i32) -> (i32, i32) {
    %c0_i32 = arith.constant 0 : i32
    %c0_i32_0 = arith.constant 0 : i32
    return %arg0, %c0_i32 : i32, i32
  }
  func.func @transform_1(%arg0: i32) -> (i32, i32) {
    %c0_i32 = arith.constant 0 : i32
    %c0_i32_0 = arith.constant 0 : i32
    %c0_i32_1 = arith.constant 0 : i32
    return %c0_i32, %c0_i32_0 : i32, i32
  }
  func.func @transform_2(%arg0: i32) -> (i32, i32) {
    %c0_i32 = arith.constant 0 : i32
    %c0_i32_0 = arith.constant 0 : i32
    %c0_i32_1 = arith.constant 0 : i32
    return %c0_i32, %c0_i32_0 : i32, i32
  }
  func.func @transform_3(%arg0: i32) -> (i32, i32) {
    %c0_i32 = arith.constant 0 : i32
    %c0_i32_0 = arith.constant 0 : i32
    return %arg0, %c0_i32 : i32, i32
  }
}

module attributes {stable_mosaic.version = 11 : i64} {
  func.func @_maxpool_kernel(%arg0: i32, %arg1: memref<4x648x8xf32, #tpu.memory_space<vmem>>, %arg2: memref<648x8xf32, #tpu.memory_space<vmem>>) attributes {dimension_semantics = [#tpu.dimension_semantics<parallel>], iteration_bounds = array<i64: 1>, scalar_prefetch = 0 : i64, scratch_operands = 0 : i64, tpu.core_type = #tpu.core_type<tc>, window_params = [{transform_indices = @transform_0, window_bounds = array<i64: 4, 648, 8>}, {transform_indices = @transform_1, window_bounds = array<i64: 648, 8>}]} {
    %c0 = arith.constant 0 : index
    %c0_0 = arith.constant 0 : index
    %c0_1 = arith.constant 0 : index
    %0 = vector.load %arg1[%c0, %c0_0, %c0_1] : memref<4x648x8xf32, #tpu.memory_space<vmem>>, vector<4x648x8xf32>
    %cst = arith.constant dense<0xFF800000> : vector<648x8xf32>
    %1 = vector.multi_reduction <maximumf>, %0, %cst [0] : vector<4x648x8xf32> to vector<648x8xf32>
    %c0_2 = arith.constant 0 : index
    %c0_3 = arith.constant 0 : index
    %2 = vector.load %arg2[%c0_2, %c0_3] : memref<648x8xf32, #tpu.memory_space<vmem>>, vector<648x8xf32>
    tpu.vector_store %arg2[%c0_2, %c0_3], %1 {strides = array<i32>} : memref<648x8xf32, #tpu.memory_space<vmem>>, vector<648x8xf32>,
    return
  }
  func.func @transform_0(%arg0: i32) -> (i32, i32, i32) {
    %c0_i32 = arith.constant 0 : i32
    %c0_i32_0 = arith.constant 0 : i32
    %c0_i32_1 = arith.constant 0 : i32
    return %c0_i32, %arg0, %c0_i32_0 : i32, i32, i32
  }
  func.func @transform_1(%arg0: i32) -> (i32, i32) {
    %c0_i32 = arith.constant 0 : i32
    %c0_i32_0 = arith.constant 0 : i32
    return %arg0, %c0_i32 : i32, i32
  }
}

module attributes {stable_mosaic.version = 11 : i64} {
  func.func @_matmul_bias_act_kernel(%arg0: i32, %arg1: memref<392x200xf32, #tpu.memory_space<vmem>>, %arg2: memref<200x12xf32, #tpu.memory_space<vmem>>, %arg3: memref<1x12xf32, #tpu.memory_space<vmem>>, %arg4: memref<392x12xf32, #tpu.memory_space<vmem>>) attributes {dimension_semantics = [#tpu.dimension_semantics<parallel>], iteration_bounds = array<i64: 1>, scalar_prefetch = 0 : i64, scratch_operands = 0 : i64, tpu.core_type = #tpu.core_type<tc>, window_params = [{transform_indices = @transform_0, window_bounds = array<i64: 392, 200>}, {pipeline_mode = #tpu.pipeline_mode<synchronous>, transform_indices = @transform_1, window_bounds = array<i64: 200, 12>}, {pipeline_mode = #tpu.pipeline_mode<synchronous>, transform_indices = @transform_2, window_bounds = array<i64: 1, 12>}, {transform_indices = @transform_3, window_bounds = array<i64: 392, 12>}]} {
    %c0 = arith.constant 0 : index
    %c0_0 = arith.constant 0 : index
    %0 = vector.load %arg1[%c0, %c0_0] : memref<392x200xf32, #tpu.memory_space<vmem>>, vector<392x200xf32>
    %c0_1 = arith.constant 0 : index
    %c0_2 = arith.constant 0 : index
    %1 = vector.load %arg2[%c0_1, %c0_2] : memref<200x12xf32, #tpu.memory_space<vmem>>, vector<200x12xf32>
    %cst = arith.constant dense<0.000000e+00> : vector<392x12xf32>
    %2 = tpu.matmul %0, %1, %cst {dimension_numbers = #tpu.dot_dimension_numbers<[1], [0], [0], [1], [0, 0, 1, 1], [], []>} : vector<392x200xf32>, vector<200x12xf32>, vector<392x12xf32> -> vector<392x12xf32>
    %c0_3 = arith.constant 0 : index
    %c0_4 = arith.constant 0 : index
    %3 = vector.load %arg3[%c0_3, %c0_4] : memref<1x12xf32, #tpu.memory_space<vmem>>, vector<1x12xf32>
    %4 = vector.broadcast %3 : vector<1x12xf32> to vector<392x12xf32>
    %5 = arith.addf %2, %4 : vector<392x12xf32>
    %cst_5 = arith.constant 0.000000e+00 : f32
    %6 = vector.broadcast %cst_5 : f32 to vector<392x12xf32>
    %7 = arith.maximumf %5, %6 : vector<392x12xf32>
    %c0_6 = arith.constant 0 : index
    %c0_7 = arith.constant 0 : index
    %8 = vector.load %arg4[%c0_6, %c0_7] : memref<392x12xf32, #tpu.memory_space<vmem>>, vector<392x12xf32>
    tpu.vector_store %arg4[%c0_6, %c0_7], %7 {strides = array<i32>} : memref<392x12xf32, #tpu.memory_space<vmem>>, vector<392x12xf32>,
    return
  }
  func.func @transform_0(%arg0: i32) -> (i32, i32) {
    %c0_i32 = arith.constant 0 : i32
    %c0_i32_0 = arith.constant 0 : i32
    return %arg0, %c0_i32 : i32, i32
  }
  func.func @transform_1(%arg0: i32) -> (i32, i32) {
    %c0_i32 = arith.constant 0 : i32
    %c0_i32_0 = arith.constant 0 : i32
    %c0_i32_1 = arith.constant 0 : i32
    return %c0_i32, %c0_i32_0 : i32, i32
  }
  func.func @transform_2(%arg0: i32) -> (i32, i32) {
    %c0_i32 = arith.constant 0 : i32
    %c0_i32_0 = arith.constant 0 : i32
    %c0_i32_1 = arith.constant 0 : i32
    return %c0_i32, %c0_i32_0 : i32, i32
  }
  func.func @transform_3(%arg0: i32) -> (i32, i32) {
    %c0_i32 = arith.constant 0 : i32
    %c0_i32_0 = arith.constant 0 : i32
    return %arg0, %c0_i32 : i32, i32
  }
}

module attributes {stable_mosaic.version = 11 : i64} {
  func.func @_maxpool_kernel(%arg0: i32, %arg1: memref<4x104x12xf32, #tpu.memory_space<vmem>>, %arg2: memref<104x12xf32, #tpu.memory_space<vmem>>) attributes {dimension_semantics = [#tpu.dimension_semantics<parallel>], iteration_bounds = array<i64: 1>, scalar_prefetch = 0 : i64, scratch_operands = 0 : i64, tpu.core_type = #tpu.core_type<tc>, window_params = [{transform_indices = @transform_0, window_bounds = array<i64: 4, 104, 12>}, {transform_indices = @transform_1, window_bounds = array<i64: 104, 12>}]} {
    %c0 = arith.constant 0 : index
    %c0_0 = arith.constant 0 : index
    %c0_1 = arith.constant 0 : index
    %0 = vector.load %arg1[%c0, %c0_0, %c0_1] : memref<4x104x12xf32, #tpu.memory_space<vmem>>, vector<4x104x12xf32>
    %cst = arith.constant dense<0xFF800000> : vector<104x12xf32>
    %1 = vector.multi_reduction <maximumf>, %0, %cst [0] : vector<4x104x12xf32> to vector<104x12xf32>
    %c0_2 = arith.constant 0 : index
    %c0_3 = arith.constant 0 : index
    %2 = vector.load %arg2[%c0_2, %c0_3] : memref<104x12xf32, #tpu.memory_space<vmem>>, vector<104x12xf32>
    tpu.vector_store %arg2[%c0_2, %c0_3], %1 {strides = array<i32>} : memref<104x12xf32, #tpu.memory_space<vmem>>, vector<104x12xf32>,
    return
  }
  func.func @transform_0(%arg0: i32) -> (i32, i32, i32) {
    %c0_i32 = arith.constant 0 : i32
    %c0_i32_0 = arith.constant 0 : i32
    %c0_i32_1 = arith.constant 0 : i32
    return %c0_i32, %arg0, %c0_i32_0 : i32, i32, i32
  }
  func.func @transform_1(%arg0: i32) -> (i32, i32) {
    %c0_i32 = arith.constant 0 : i32
    %c0_i32_0 = arith.constant 0 : i32
    return %arg0, %c0_i32 : i32, i32
  }
}

module attributes {stable_mosaic.version = 11 : i64} {
  func.func @_matmul_bias_act_kernel(%arg0: i32, %arg1: memref<56x108xf32, #tpu.memory_space<vmem>>, %arg2: memref<108x20xf32, #tpu.memory_space<vmem>>, %arg3: memref<1x20xf32, #tpu.memory_space<vmem>>, %arg4: memref<56x20xf32, #tpu.memory_space<vmem>>) attributes {dimension_semantics = [#tpu.dimension_semantics<parallel>], iteration_bounds = array<i64: 1>, scalar_prefetch = 0 : i64, scratch_operands = 0 : i64, tpu.core_type = #tpu.core_type<tc>, window_params = [{transform_indices = @transform_0, window_bounds = array<i64: 56, 108>}, {pipeline_mode = #tpu.pipeline_mode<synchronous>, transform_indices = @transform_1, window_bounds = array<i64: 108, 20>}, {pipeline_mode = #tpu.pipeline_mode<synchronous>, transform_indices = @transform_2, window_bounds = array<i64: 1, 20>}, {transform_indices = @transform_3, window_bounds = array<i64: 56, 20>}]} {
    %c0 = arith.constant 0 : index
    %c0_0 = arith.constant 0 : index
    %0 = vector.load %arg1[%c0, %c0_0] : memref<56x108xf32, #tpu.memory_space<vmem>>, vector<56x108xf32>
    %c0_1 = arith.constant 0 : index
    %c0_2 = arith.constant 0 : index
    %1 = vector.load %arg2[%c0_1, %c0_2] : memref<108x20xf32, #tpu.memory_space<vmem>>, vector<108x20xf32>
    %cst = arith.constant dense<0.000000e+00> : vector<56x20xf32>
    %2 = tpu.matmul %0, %1, %cst {dimension_numbers = #tpu.dot_dimension_numbers<[1], [0], [0], [1], [0, 0, 1, 1], [], []>} : vector<56x108xf32>, vector<108x20xf32>, vector<56x20xf32> -> vector<56x20xf32>
    %c0_3 = arith.constant 0 : index
    %c0_4 = arith.constant 0 : index
    %3 = vector.load %arg3[%c0_3, %c0_4] : memref<1x20xf32, #tpu.memory_space<vmem>>, vector<1x20xf32>
    %4 = vector.broadcast %3 : vector<1x20xf32> to vector<56x20xf32>
    %5 = arith.addf %2, %4 : vector<56x20xf32>
    %cst_5 = arith.constant 0.000000e+00 : f32
    %6 = vector.broadcast %cst_5 : f32 to vector<56x20xf32>
    %7 = arith.maximumf %5, %6 : vector<56x20xf32>
    %c0_6 = arith.constant 0 : index
    %c0_7 = arith.constant 0 : index
    %8 = vector.load %arg4[%c0_6, %c0_7] : memref<56x20xf32, #tpu.memory_space<vmem>>, vector<56x20xf32>
    tpu.vector_store %arg4[%c0_6, %c0_7], %7 {strides = array<i32>} : memref<56x20xf32, #tpu.memory_space<vmem>>, vector<56x20xf32>,
    return
  }
  func.func @transform_0(%arg0: i32) -> (i32, i32) {
    %c0_i32 = arith.constant 0 : i32
    %c0_i32_0 = arith.constant 0 : i32
    return %arg0, %c0_i32 : i32, i32
  }
  func.func @transform_1(%arg0: i32) -> (i32, i32) {
    %c0_i32 = arith.constant 0 : i32
    %c0_i32_0 = arith.constant 0 : i32
    %c0_i32_1 = arith.constant 0 : i32
    return %c0_i32, %c0_i32_0 : i32, i32
  }
  func.func @transform_2(%arg0: i32) -> (i32, i32) {
    %c0_i32 = arith.constant 0 : i32
    %c0_i32_0 = arith.constant 0 : i32
    %c0_i32_1 = arith.constant 0 : i32
    return %c0_i32, %c0_i32_0 : i32, i32
  }
  func.func @transform_3(%arg0: i32) -> (i32, i32) {
    %c0_i32 = arith.constant 0 : i32
    %c0_i32_0 = arith.constant 0 : i32
    return %arg0, %c0_i32 : i32, i32
  }
}

module attributes {stable_mosaic.version = 11 : i64} {
  func.func @_maxpool_kernel(%arg0: i32, %arg1: memref<4x8x20xf32, #tpu.memory_space<vmem>>, %arg2: memref<8x20xf32, #tpu.memory_space<vmem>>) attributes {dimension_semantics = [#tpu.dimension_semantics<parallel>], iteration_bounds = array<i64: 1>, scalar_prefetch = 0 : i64, scratch_operands = 0 : i64, tpu.core_type = #tpu.core_type<tc>, window_params = [{transform_indices = @transform_0, window_bounds = array<i64: 4, 8, 20>}, {transform_indices = @transform_1, window_bounds = array<i64: 8, 20>}]} {
    %c0 = arith.constant 0 : index
    %c0_0 = arith.constant 0 : index
    %c0_1 = arith.constant 0 : index
    %0 = vector.load %arg1[%c0, %c0_0, %c0_1] : memref<4x8x20xf32, #tpu.memory_space<vmem>>, vector<4x8x20xf32>
    %cst = arith.constant dense<0xFF800000> : vector<8x20xf32>
    %1 = vector.multi_reduction <maximumf>, %0, %cst [0] : vector<4x8x20xf32> to vector<8x20xf32>
    %c0_2 = arith.constant 0 : index
    %c0_3 = arith.constant 0 : index
    %2 = vector.load %arg2[%c0_2, %c0_3] : memref<8x20xf32, #tpu.memory_space<vmem>>, vector<8x20xf32>
    tpu.vector_store %arg2[%c0_2, %c0_3], %1 {strides = array<i32>} : memref<8x20xf32, #tpu.memory_space<vmem>>, vector<8x20xf32>,
    return
  }
  func.func @transform_0(%arg0: i32) -> (i32, i32, i32) {
    %c0_i32 = arith.constant 0 : i32
    %c0_i32_0 = arith.constant 0 : i32
    %c0_i32_1 = arith.constant 0 : i32
    return %c0_i32, %arg0, %c0_i32_0 : i32, i32, i32
  }
  func.func @transform_1(%arg0: i32) -> (i32, i32) {
    %c0_i32 = arith.constant 0 : i32
    %c0_i32_0 = arith.constant 0 : i32
    return %arg0, %c0_i32 : i32, i32
  }
}

module attributes {stable_mosaic.version = 11 : i64} {
  func.func @_matmul_bias_act_kernel(%arg0: i32, %arg1: memref<8x80xf32, #tpu.memory_space<vmem>>, %arg2: memref<80x32xf32, #tpu.memory_space<vmem>>, %arg3: memref<1x32xf32, #tpu.memory_space<vmem>>, %arg4: memref<8x32xf32, #tpu.memory_space<vmem>>) attributes {dimension_semantics = [#tpu.dimension_semantics<parallel>], iteration_bounds = array<i64: 1>, scalar_prefetch = 0 : i64, scratch_operands = 0 : i64, tpu.core_type = #tpu.core_type<tc>, window_params = [{transform_indices = @transform_0, window_bounds = array<i64: 8, 80>}, {pipeline_mode = #tpu.pipeline_mode<synchronous>, transform_indices = @transform_1, window_bounds = array<i64: 80, 32>}, {pipeline_mode = #tpu.pipeline_mode<synchronous>, transform_indices = @transform_2, window_bounds = array<i64: 1, 32>}, {transform_indices = @transform_3, window_bounds = array<i64: 8, 32>}]} {
    %c0 = arith.constant 0 : index
    %c0_0 = arith.constant 0 : index
    %0 = vector.load %arg1[%c0, %c0_0] : memref<8x80xf32, #tpu.memory_space<vmem>>, vector<8x80xf32>
    %c0_1 = arith.constant 0 : index
    %c0_2 = arith.constant 0 : index
    %1 = vector.load %arg2[%c0_1, %c0_2] : memref<80x32xf32, #tpu.memory_space<vmem>>, vector<80x32xf32>
    %cst = arith.constant dense<0.000000e+00> : vector<8x32xf32>
    %2 = tpu.matmul %0, %1, %cst {dimension_numbers = #tpu.dot_dimension_numbers<[1], [0], [0], [1], [0, 0, 1, 1], [], []>} : vector<8x80xf32>, vector<80x32xf32>, vector<8x32xf32> -> vector<8x32xf32>
    %c0_3 = arith.constant 0 : index
    %c0_4 = arith.constant 0 : index
    %3 = vector.load %arg3[%c0_3, %c0_4] : memref<1x32xf32, #tpu.memory_space<vmem>>, vector<1x32xf32>
    %4 = vector.broadcast %3 : vector<1x32xf32> to vector<8x32xf32>
    %5 = arith.addf %2, %4 : vector<8x32xf32>
    %cst_5 = arith.constant 0.000000e+00 : f32
    %6 = vector.broadcast %cst_5 : f32 to vector<8x32xf32>
    %7 = arith.maximumf %5, %6 : vector<8x32xf32>
    %c0_6 = arith.constant 0 : index
    %c0_7 = arith.constant 0 : index
    %8 = vector.load %arg4[%c0_6, %c0_7] : memref<8x32xf32, #tpu.memory_space<vmem>>, vector<8x32xf32>
    tpu.vector_store %arg4[%c0_6, %c0_7], %7 {strides = array<i32>} : memref<8x32xf32, #tpu.memory_space<vmem>>, vector<8x32xf32>,
    return
  }
  func.func @transform_0(%arg0: i32) -> (i32, i32) {
    %c0_i32 = arith.constant 0 : i32
    %c0_i32_0 = arith.constant 0 : i32
    return %arg0, %c0_i32 : i32, i32
  }
  func.func @transform_1(%arg0: i32) -> (i32, i32) {
    %c0_i32 = arith.constant 0 : i32
    %c0_i32_0 = arith.constant 0 : i32
    %c0_i32_1 = arith.constant 0 : i32
    return %c0_i32, %c0_i32_0 : i32, i32
  }
  func.func @transform_2(%arg0: i32) -> (i32, i32) {
    %c0_i32 = arith.constant 0 : i32
    %c0_i32_0 = arith.constant 0 : i32
    %c0_i32_1 = arith.constant 0 : i32
    return %c0_i32, %c0_i32_0 : i32, i32
  }
  func.func @transform_3(%arg0: i32) -> (i32, i32) {
    %c0_i32 = arith.constant 0 : i32
    %c0_i32_0 = arith.constant 0 : i32
    return %arg0, %c0_i32 : i32, i32
  }
}

module attributes {stable_mosaic.version = 11 : i64} {
  func.func @_matmul_bias_act_kernel(%arg0: i32, %arg1: memref<8x32xf32, #tpu.memory_space<vmem>>, %arg2: memref<32x6xf32, #tpu.memory_space<vmem>>, %arg3: memref<1x6xf32, #tpu.memory_space<vmem>>, %arg4: memref<8x6xf32, #tpu.memory_space<vmem>>) attributes {dimension_semantics = [#tpu.dimension_semantics<parallel>], iteration_bounds = array<i64: 1>, scalar_prefetch = 0 : i64, scratch_operands = 0 : i64, tpu.core_type = #tpu.core_type<tc>, window_params = [{transform_indices = @transform_0, window_bounds = array<i64: 8, 32>}, {pipeline_mode = #tpu.pipeline_mode<synchronous>, transform_indices = @transform_1, window_bounds = array<i64: 32, 6>}, {pipeline_mode = #tpu.pipeline_mode<synchronous>, transform_indices = @transform_2, window_bounds = array<i64: 1, 6>}, {transform_indices = @transform_3, window_bounds = array<i64: 8, 6>}]} {
    %c0 = arith.constant 0 : index
    %c0_0 = arith.constant 0 : index
    %0 = vector.load %arg1[%c0, %c0_0] : memref<8x32xf32, #tpu.memory_space<vmem>>, vector<8x32xf32>
    %c0_1 = arith.constant 0 : index
    %c0_2 = arith.constant 0 : index
    %1 = vector.load %arg2[%c0_1, %c0_2] : memref<32x6xf32, #tpu.memory_space<vmem>>, vector<32x6xf32>
    %cst = arith.constant dense<0.000000e+00> : vector<8x6xf32>
    %2 = tpu.matmul %0, %1, %cst {dimension_numbers = #tpu.dot_dimension_numbers<[1], [0], [0], [1], [0, 0, 1, 1], [], []>} : vector<8x32xf32>, vector<32x6xf32>, vector<8x6xf32> -> vector<8x6xf32>
    %c0_3 = arith.constant 0 : index
    %c0_4 = arith.constant 0 : index
    %3 = vector.load %arg3[%c0_3, %c0_4] : memref<1x6xf32, #tpu.memory_space<vmem>>, vector<1x6xf32>
    %4 = vector.broadcast %3 : vector<1x6xf32> to vector<8x6xf32>
    %5 = arith.addf %2, %4 : vector<8x6xf32>
    %c0_5 = arith.constant 0 : index
    %c0_6 = arith.constant 0 : index
    %6 = vector.load %arg4[%c0_5, %c0_6] : memref<8x6xf32, #tpu.memory_space<vmem>>, vector<8x6xf32>
    tpu.vector_store %arg4[%c0_5, %c0_6], %5 {strides = array<i32>} : memref<8x6xf32, #tpu.memory_space<vmem>>, vector<8x6xf32>,
    return
  }
  func.func @transform_0(%arg0: i32) -> (i32, i32) {
    %c0_i32 = arith.constant 0 : i32
    %c0_i32_0 = arith.constant 0 : i32
    return %arg0, %c0_i32 : i32, i32
  }
  func.func @transform_1(%arg0: i32) -> (i32, i32) {
    %c0_i32 = arith.constant 0 : i32
    %c0_i32_0 = arith.constant 0 : i32
    %c0_i32_1 = arith.constant 0 : i32
    return %c0_i32, %c0_i32_0 : i32, i32
  }
  func.func @transform_2(%arg0: i32) -> (i32, i32) {
    %c0_i32 = arith.constant 0 : i32
    %c0_i32_0 = arith.constant 0 : i32
    %c0_i32_1 = arith.constant 0 : i32
    return %c0_i32, %c0_i32_0 : i32, i32
  }
  func.func @transform_3(%arg0: i32) -> (i32, i32) {
    %c0_i32 = arith.constant 0 : i32
    %c0_i32_0 = arith.constant 0 : i32
    return %arg0, %c0_i32 : i32, i32
  }
}

</mosaic_0001>

<llo_original>
// kernel: patch_stn_apply.8
$region0: #{patch_stn_apply.8}
  #allocation0 [shape = 'u32[]', space=smem, size = 0x4, offset = 0x4, fixed_abs, tag = 'smem constant byte address 0x4 - core index']
  #allocation1 [shape = 'u32[144,128]{1,0:T(1,128)}', space=vmem, size = 0x12000, scoped, tag = 'internal scratch']
  %s0 = inlined_call_operand.vmem [shape: f32[5344,196], index: 0, kind: input, shape index: {}]
  %s1 = inlined_call_operand.vmem [shape: f32[196,8], index: 1, kind: input, shape index: {}]
  %s2 = inlined_call_operand.vmem [shape: f32[1,8], index: 2, kind: input, shape index: {}]
  %s3 = inlined_call_operand.vmem [shape: f32[5344,8], index: 3, kind: output, shape index: {}]
  %s4 = sld [smem:[#allocation0]]
  $region45: #{patch_stn_apply.8} parent=0
    _
  %s6 = ssub.s32 1, %s4
  %s7 = scalar_select 0, %s6, %s4
  loop: start=0, step=1, limit=4
  $region2: #{patch_stn_apply.8} parent=0 // loop_pre_header
    _
  $region3: #{patch_stn_apply.8} parent=0 // loop_header
    %s9 = sphi 0, %s13
    %p10 = scmp.ge.s32.totalorder %s9, 4
    %s19 = sphi 0, %s21
    %s22 = sphi 0, %s19
    %s23 = sphi 0, %s22
    %s39 = sphi 0, %s23
    %s43 = sphi 0, %s43
    %s45 = sphi 0, %s43
    %s46 = sphi 0, %s45
    %s60 = sphi 0, %s46
    %s64 = sphi 0, %s64
    %s66 = sphi 0, %s64
    %s67 = sphi 0, %s66
    %s81 = sphi 0, %s67
    %s87 = sphi 0, %s89
    %s90 = sphi 0, %s87
    %s91 = sphi 0, %s90
    %s107 = sphi 0, %s91
  $region4: #{patch_stn_apply.8} parent=0 // loop_header_branch
    %12 = sbr.rel (%p10) target = $region8
  $region5: #{patch_stn_apply.8} parent=0 // loop_body
    %s14 = ssub.s32 %s9, 1
    %s15 = ssub.s32 %s9, 2
    %s16 = sadd.s32 %s9, 1
    %s17 = ssub.s32 %s9, %s16
    %p18 = scmp.eq.s32.totalorder %s17, 0
    %s20 = sadd.s32 %s19, 1
    %s21 = scalar_select %p18, %s19, %s20
    %p24 = pneg %p18
    %p25 = scmp.eq.s32.totalorder %s9, 1
    %p26 = por %p24, %p25
    %p27 = scmp.ne.s32.totalorder %s19, %s22
    %p28 = scmp.eq.s32.totalorder %s9, 0
    %p29 = por %p27, %p28
    %p30 = scmp.ne.s32.totalorder %s19, %s22
    %p31 = scmp.eq.s32.totalorder %s14, 1
    %p32 = por %p30, %p31
    %p33 = scmp.ne.s32.totalorder %s22, %s23
    %p34 = scmp.eq.s32.totalorder %s14, 0
    %p35 = por %p33, %p34
    %p36 = scmp.ne.s32.totalorder %s22, %s23
    %p37 = scmp.eq.s32.totalorder %s15, 1
    %p38 = por %p36, %p37
    %p40 = scmp.ne.s32.totalorder %s23, %s39
    %p41 = scmp.eq.s32.totalorder %s15, 0
    %p42 = por %p40, %p41
    %s44 = sadd.s32 %s43, 1
    %p47 = scmp.eq.s32.totalorder %s9, 1
    %p48 = scmp.ne.s32.totalorder %s43, %s45
    %p49 = scmp.eq.s32.totalorder %s9, 0
    %p50 = por %p48, %p49
    %p51 = scmp.ne.s32.totalorder %s43, %s45
    %p52 = scmp.eq.s32.totalorder %s14, 1
    %p53 = por %p51, %p52
    %p54 = scmp.ne.s32.totalorder %s45, %s46
    %p55 = scmp.eq.s32.totalorder %s14, 0
    %p56 = por %p54, %p55
    %p57 = scmp.ne.s32.totalorder %s45, %s46
    %p58 = scmp.eq.s32.totalorder %s15, 1
    %p59 = por %p57, %p58
    %p61 = scmp.ne.s32.totalorder %s46, %s60
    %p62 = scmp.eq.s32.totalorder %s15, 0
    %p63 = por %p61, %p62
    %s65 = sadd.s32 %s64, 1
    %p68 = scmp.eq.s32.totalorder %s9, 1
    %p69 = scmp.ne.s32.totalorder %s64, %s66
    %p70 = scmp.eq.s32.totalorder %s9, 0
    %p71 = por %p69, %p70
    %p72 = scmp.ne.s32.totalorder %s64, %s66
    %p73 = scmp.eq.s32.totalorder %s14, 1
    %p74 = por %p72, %p73
    %p75 = scmp.ne.s32.totalorder %s66, %s67
    %p76 = scmp.eq.s32.totalorder %s14, 0
    %p77 = por %p75, %p76
    %p78 = scmp.ne.s32.totalorder %s66, %s67
    %p79 = scmp.eq.s32.totalorder %s15, 1
    %p80 = por %p78, %p79
    %p82 = scmp.ne.s32.totalorder %s67, %s81
    %p83 = scmp.eq.s32.totalorder %s15, 0
    %p84 = por %p82, %p83
    %s85 = ssub.s32 %s9, %s16
    %p86 = scmp.eq.s32.totalorder %s85, 0
    %s88 = sadd.s32 %s87, 1
    %s89 = scalar_select %p86, %s87, %s88
    %p92 = pneg %p86
    %p93 = scmp.eq.s32.totalorder %s9, 1
    %p94 = por %p92, %p93
    %p95 = scmp.ne.s32.totalorder %s87, %s90
    %p96 = scmp.eq.s32.totalorder %s9, 0
    %p97 = por %p95, %p96
    %p98 = scmp.ne.s32.totalorder %s87, %s90
    %p99 = scmp.eq.s32.totalorder %s14, 1
    %p100 = por %p98, %p99
    %p101 = scmp.ne.s32.totalorder %s90, %s91
    %p102 = scmp.eq.s32.totalorder %s14, 0
    %p103 = por %p101, %p102
    %p104 = scmp.ne.s32.totalorder %s90, %s91
    %p105 = scmp.eq.s32.totalorder %s15, 1
    %p106 = por %p104, %p105
    %p108 = scmp.ne.s32.totalorder %s91, %s107
    %p109 = scmp.eq.s32.totalorder %s15, 0
    %p110 = por %p108, %p109
    %p111 = scmp.le.s32.totalorder 1, %s9
    %p112 = scmp.lt.s32.totalorder %s9, 3
    %p113 = pnand %p111, %p112
    %p114 = pneg %p113
    // Predicated region
    $region9: #{patch_stn_apply.8} parent=5 // pred_check
      _
    $region10: #{patch_stn_apply.8} parent=5 // pred_check_branch
      %116 = sbr.rel (%p113) target = $region12
    $region11: #{patch_stn_apply.8} parent=5 // pred_region
      %s117 = ssub.s32 %s9, 1
      // Predicated region
      $region13: #{patch_stn_apply.8} parent=11 // pred_check
        %p118 = pneg %p56
      $region14: #{patch_stn_apply.8} parent=11 // pred_check_branch
        %120 = sbr.rel (%p118) target = $region16
      $region15: #{patch_stn_apply.8} parent=11 // pred_region
        _
      $region16: #{patch_stn_apply.8} parent=11 // pred_fallthru
        _
      // Predicated region
      $region17: #{patch_stn_apply.8} parent=11 // pred_check
        %p121 = pneg %p77
      $region18: #{patch_stn_apply.8} parent=11 // pred_check_branch
        %123 = sbr.rel (%p121) target = $region20
      $region19: #{patch_stn_apply.8} parent=11 // pred_region
        _
      $region20: #{patch_stn_apply.8} parent=11 // pred_fallthru
        _
    $region12: #{patch_stn_apply.8} parent=5 // pred_fallthru
      _
    %p124 = scmp.lt.s32.totalorder %s9, 2
    // Predicated region
    $region21: #{patch_stn_apply.8} parent=5 // pred_check
      %p125 = pneg %p124
    $region22: #{patch_stn_apply.8} parent=5 // pred_check_branch
      %127 = sbr.rel (%p125) target = $region24
    $region23: #{patch_stn_apply.8} parent=5 // pred_region
      // Predicated region
      $region25: #{patch_stn_apply.8} parent=23 // pred_check
        %p128 = pneg %p29
      $region26: #{patch_stn_apply.8} parent=23 // pred_check_branch
        %130 = sbr.rel (%p128) target = $region28
      $region27: #{patch_stn_apply.8} parent=23 // pred_region
        %s131 = smul.u32 334, %s9
        %p132 = scmp.lt.s32.totalorder %s131, 667
        %s133 = scalar_select %p132, %s131, 667
        %s134 = smul.addr %s133, 2
        %s135 = smul.addr %s134, 8
        %s136 = scalar_lea.vmem %s0, %s135
        %s137 = smul.u32 334, %s9
      $region28: #{patch_stn_apply.8} parent=23 // pred_fallthru
        _
    $region24: #{patch_stn_apply.8} parent=5 // pred_fallthru
      _
    %p138 = scmp.le.s32.totalorder 1, %s9
    %p139 = scmp.lt.s32.totalorder %s9, 3
    %p140 = pnand %p138, %p139
    %p141 = pneg %p140
    // Predicated region
    $region29: #{patch_stn_apply.8} parent=5 // pred_check
      _
    $region30: #{patch_stn_apply.8} parent=5 // pred_check_branch
      %143 = sbr.rel (%p140) target = $region32
    $region31: #{patch_stn_apply.8} parent=5 // pred_region
      %s144 = ssub.s32 %s9, 1
      %s145 = smul.u32 334, %s14
      %p146 = scmp.lt.s32.totalorder %s145, 667
      %s147 = scalar_select %p146, %s145, 667
      %s148 = smul.addr %s147, 2
      %s149 = smul.addr %s148, 8
      %s150 = scalar_lea.vmem %s0, %s149
      %p151 = pneg %p35
      %p152 = pneg %p32
      %p153 = pneg %p56
      %p154 = pneg %p53
      %p155 = pneg %p77
      %p156 = pneg %p74
      %p157 = pneg %p103
      %p158 = pneg %p100
      %s159 = smul.u32 334, %s14
      %p160 = scmp.lt.s32.totalorder %s159, 667
      %s161 = scalar_select %p160, %s159, 667
      %s162 = smul.addr %s161, 8
      %s163 = scalar_lea.vmem %s3, %s162
      %s164 = smul.u32 334, %s14
      %p165 = scmp.lt.s32.totalorder %s164, 667
      %s166 = scalar_select %p165, %s164, 667
      %s167 = smul.addr %s166, 2
      %s168 = smul.addr %s167, 8
      %s169 = scalar_lea.vmem %s0, %s168
      %s170 = smul.u32 334, %s14
      %s171 = smul.u32 334, %s14
      %p172 = scmp.lt.s32.totalorder %s171, 667
      %s173 = scalar_select %p172, %s171, 667
      %s174 = smul.addr %s173, 8
      %s175 = scalar_lea.vmem %s3, %s174
      %s176 = smul.u32 334, %s14
      %v177 = vld [vmem:[%s169] sm:$0xff]
      %v178 = vld [vmem:[%s169 + $0x8] sm:$0xff]
      %v179 = vld [vmem:[%s169 + $0x10] sm:$0xff]
      %v180 = vld [vmem:[%s169 + $0x18] sm:$0xff]
      %v181 = vld [vmem:[%s169 + $0x20] sm:$0xff]
      %v182 = vld [vmem:[%s169 + $0x28] sm:$0xff]
      %v183 = vld [vmem:[%s169 + $0x30] sm:$0xff]
      %v184 = vld [vmem:[%s169 + $0x38] sm:$0xff]
      %v185 = vld [vmem:[%s169 + $0x40] sm:$0xff]
      %v186 = vld [vmem:[%s169 + $0x48] sm:$0xff]
      %v187 = vld [vmem:[%s169 + $0x50] sm:$0xff]
      %v188 = vld [vmem:[%s169 + $0x58] sm:$0xff]
      %v189 = vld [vmem:[%s169 + $0x60] sm:$0xff]
      %v190 = vld [vmem:[%s169 + $0x68] sm:$0xff]
      %v191 = vld [vmem:[%s169 + $0x70] sm:$0xff]
      %v192 = vld [vmem:[%s169 + $0x78] sm:$0xff]
      %v193 = vld [vmem:[%s169 + $0x80] sm:$0xff]
      %v194 = vld [vmem:[%s169 + $0x88] sm:$0xff]
      %v195 = vld [vmem:[%s169 + $0x90] sm:$0xff]
      %v196 = vld [vmem:[%s169 + $0x98] sm:$0xff]
      %v197 = vld [vmem:[%s169 + $0xa0] sm:$0xff]
      %v198 = vld [vmem:[%s169 + $0xa8] sm:$0xff]
      %v199 = vld [vmem:[%s169 + $0xb0] sm:$0xff]
      %v200 = vld [vmem:[%s169 + $0xb8] sm:$0xff]
      %v201 = vld [vmem:[%s169 + $0xc0] sm:$0xff]
      %v202 = vld [vmem:[%s169 + $0xc8] sm:$0xff]
      %v203 = vld [vmem:[%s169 + $0xd0] sm:$0xff]
      %v204 = vld [vmem:[%s169 + $0xd8] sm:$0xff]
      %v205 = vld [vmem:[%s169 + $0xe0] sm:$0xff]
      %v206 = vld [vmem:[%s169 + $0xe8] sm:$0xff]
      %v207 = vld [vmem:[%s169 + $0xf0] sm:$0xff]
      %v208 = vld [vmem:[%s169 + $0xf8] sm:$0xff]
      %v209 = vld [vmem:[%s169 + $0x100] sm:$0xff]
      %v210 = vld [vmem:[%s169 + $0x108] sm:$0xff]
      %v211 = vld [vmem:[%s169 + $0x110] sm:$0xff]
      %v212 = vld [vmem:[%s169 + $0x118] sm:$0xff]
      %v213 = vld [vmem:[%s169 + $0x120] sm:$0xff]
      %v214 = vld [vmem:[%s169 + $0x128] sm:$0xff]
      %v215 = vld [vmem:[%s169 + $0x130] sm:$0xff]
      %v216 = vld [vmem:[%s169 + $0x138] sm:$0xff]
      %v217 = vld [vmem:[%s169 + $0x140] sm:$0xff]
      %v218 = vld [vmem:[%s169 + $0x148] sm:$0xff]
      %v219 = vld [vmem:[%s169 + $0x150] sm:$0xff]
      %v220 = vld [vmem:[%s169 + $0x158] sm:$0xff]
      %v221 = vld [vmem:[%s169 + $0x160] sm:$0xff]
      %v222 = vld [vmem:[%s169 + $0x168] sm:$0xff]
      %v223 = vld [vmem:[%s169 + $0x170] sm:$0xff]
      %v224 = vld [vmem:[%s169 + $0x178] sm:$0xff]
      %v225 = vld [vmem:[%s169 + $0x180] sm:$0xff]
      %v226 = vld [vmem:[%s169 + $0x188] sm:$0xff]
      %v227 = vld [vmem:[%s169 + $0x190] sm:$0xff]
      %v228 = vld [vmem:[%s169 + $0x198] sm:$0xff]
      %v229 = vld [vmem:[%s169 + $0x1a0] sm:$0xff]
      %v230 = vld [vmem:[%s169 + $0x1a8] sm:$0xff]
      %v231 = vld [vmem:[%s169 + $0x1b0] sm:$0xff]
      %v232 = vld [vmem:[%s169 + $0x1b8] sm:$0xff]
      %v233 = vld [vmem:[%s169 + $0x1c0] sm:$0xff]
      %v234 = vld [vmem:[%s169 + $0x1c8] sm:$0xff]
      %v235 = vld [vmem:[%s169 + $0x1d0] sm:$0xff]
      %v236 = vld [vmem:[%s169 + $0x1d8] sm:$0xff]
      %v237 = vld [vmem:[%s169 + $0x1e0] sm:$0xff]
      %v238 = vld [vmem:[%s169 + $0x1e8] sm:$0xff]
      %v239 = vld [vmem:[%s169 + $0x1f0] sm:$0xff]
      %v240 = vld [vmem:[%s169 + $0x1f8] sm:$0xff]
      %v241 = vld [vmem:[%s169 + $0x200] sm:$0xff]
      %v242 = vld [vmem:[%s169 + $0x208] sm:$0xff]
      %v243 = vld [vmem:[%s169 + $0x210] sm:$0xff]
      %v244 = vld [vmem:[%s169 + $0x218] sm:$0xff]
      %v245 = vld [vmem:[%s169 + $0x220] sm:$0xff]
      %v246 = vld [vmem:[%s169 + $0x228] sm:$0xff]
      %v247 = vld [vmem:[%s169 + $0x230] sm:$0xff]
      %v248 = vld [vmem:[%s169 + $0x238] sm:$0xff]
      %v249 = vld [vmem:[%s169 + $0x240] sm:$0xff]
      %v250 = vld [vmem:[%s169 + $0x248] sm:$0xff]
      %v251 = vld [vmem:[%s169 + $0x250] sm:$0xff]
      %v252 = vld [vmem:[%s169 + $0x258] sm:$0xff]
      %v253 = vld [vmem:[%s169 + $0x260] sm:$0xff]
      %v254 = vld [vmem:[%s169 + $0x268] sm:$0xff]
      %v255 = vld [vmem:[%s169 + $0x270] sm:$0xff]
      %v256 = vld [vmem:[%s169 + $0x278] sm:$0xff]
      %v257 = vld [vmem:[%s169 + $0x280] sm:$0xff]
      %v258 = vld [vmem:[%s169 + $0x288] sm:$0xff]
      %v259 = vld [vmem:[%s169 + $0x290] sm:$0xff]
      %v260 = vld [vmem:[%s169 + $0x298] sm:$0xff]
      %v261 = vld [vmem:[%s169 + $0x2a0] sm:$0xff]
      %v262 = vld [vmem:[%s169 + $0x2a8] sm:$0xff]
      %v263 = vld [vmem:[%s169 + $0x2b0] sm:$0xff]
      %v264 = vld [vmem:[%s169 + $0x2b8] sm:$0xff]
      %v265 = vld [vmem:[%s169 + $0x2c0] sm:$0xff]
      %v266 = vld [vmem:[%s169 + $0x2c8] sm:$0xff]
      %v267 = vld [vmem:[%s169 + $0x2d0] sm:$0xff]
      %v268 = vld [vmem:[%s169 + $0x2d8] sm:$0xff]
      %v269 = vld [vmem:[%s169 + $0x2e0] sm:$0xff]
      %v270 = vld [vmem:[%s169 + $0x2e8] sm:$0xff]
      %v271 = vld [vmem:[%s169 + $0x2f0] sm:$0xff]
      %v272 = vld [vmem:[%s169 + $0x2f8] sm:$0xff]
      %v273 = vld [vmem:[%s169 + $0x300] sm:$0xff]
      %v274 = vld [vmem:[%s169 + $0x308] sm:$0xff]
      %v275 = vld [vmem:[%s169 + $0x310] sm:$0xff]
      %v276 = vld [vmem:[%s169 + $0x318] sm:$0xff]
      %v277 = vld [vmem:[%s169 + $0x320] sm:$0xff]
      %v278 = vld [vmem:[%s169 + $0x328] sm:$0xff]
      %v279 = vld [vmem:[%s169 + $0x330] sm:$0xff]
      %v280 = vld [vmem:[%s169 + $0x338] sm:$0xff]
      %v281 = vld [vmem:[%s169 + $0x340] sm:$0xff]
      %v282 = vld [vmem:[%s169 + $0x348] sm:$0xff]
      %v283 = vld [vmem:[%s169 + $0x350] sm:$0xff]
      %v284 = vld [vmem:[%s169 + $0x358] sm:$0xff]
      %v285 = vld [vmem:[%s169 + $0x360] sm:$0xff]
      %v286 = vld [vmem:[%s169 + $0x368] sm:$0xff]
      %v287 = vld [vmem:[%s169 + $0x370] sm:$0xff]
      %v288 = vld [vmem:[%s169 + $0x378] sm:$0xff]
      %v289 = vld [vmem:[%s169 + $0x380] sm:$0xff]
      %v290 = vld [vmem:[%s169 + $0x388] sm:$0xff]
      %v291 = vld [vmem:[%s169 + $0x390] sm:$0xff]
      %v292 = vld [vmem:[%s169 + $0x398] sm:$0xff]
      %v293 = vld [vmem:[%s169 + $0x3a0] sm:$0xff]
      %v294 = vld [vmem:[%s169 + $0x3a8] sm:$0xff]
      %v295 = vld [vmem:[%s169 + $0x3b0] sm:$0xff]
      %v296 = vld [vmem:[%s169 + $0x3b8] sm:$0xff]
      %v297 = vld [vmem:[%s169 + $0x3c0] sm:$0xff]
      %v298 = vld [vmem:[%s169 + $0x3c8] sm:$0xff]
      %v299 = vld [vmem:[%s169 + $0x3d0] sm:$0xff]
      %v300 = vld [vmem:[%s169 + $0x3d8] sm:$0xff]
      %v301 = vld [vmem:[%s169 + $0x3e0] sm:$0xff]
      %v302 = vld [vmem:[%s169 + $0x3e8] sm:$0xff]
      %v303 = vld [vmem:[%s169 + $0x3f0] sm:$0xff]
      %v304 = vld [vmem:[%s169 + $0x3f8] sm:$0xff]
      %v305 = vld [vmem:[%s169 + $0x400] sm:$0xff]
      %v306 = vld [vmem:[%s169 + $0x408] sm:$0xff]
      %v307 = vld [vmem:[%s169 + $0x410] sm:$0xff]
      %v308 = vld [vmem:[%s169 + $0x418] sm:$0xff]
      %v309 = vld [vmem:[%s169 + $0x420] sm:$0xff]
      %v310 = vld [vmem:[%s169 + $0x428] sm:$0xff]
      %v311 = vld [vmem:[%s169 + $0x430] sm:$0xff]
      %v312 = vld [vmem:[%s169 + $0x438] sm:$0xff]
      %v313 = vld [vmem:[%s169 + $0x440] sm:$0xff]
      %v314 = vld [vmem:[%s169 + $0x448] sm:$0xff]
      %v315 = vld [vmem:[%s169 + $0x450] sm:$0xff]
      %v316 = vld [vmem:[%s169 + $0x458] sm:$0xff]
      %v317 = vld [vmem:[%s169 + $0x460] sm:$0xff]
      %v318 = vld [vmem:[%s169 + $0x468] sm:$0xff]
      %v319 = vld [vmem:[%s169 + $0x470] sm:$0xff]
      %v320 = vld [vmem:[%s169 + $0x478] sm:$0xff]
      %v321 = vld [vmem:[%s169 + $0x480] sm:$0xff]
      %v322 = vld [vmem:[%s169 + $0x488] sm:$0xff]
      %v323 = vld [vmem:[%s169 + $0x490] sm:$0xff]
      %v324 = vld [vmem:[%s169 + $0x498] sm:$0xff]
      %v325 = vld [vmem:[%s169 + $0x4a0] sm:$0xff]
      %v326 = vld [vmem:[%s169 + $0x4a8] sm:$0xff]
      %v327 = vld [vmem:[%s169 + $0x4b0] sm:$0xff]
      %v328 = vld [vmem:[%s169 + $0x4b8] sm:$0xff]
      %v329 = vld [vmem:[%s169 + $0x4c0] sm:$0xff]
      %v330 = vld [vmem:[%s169 + $0x4c8] sm:$0xff]
      %v331 = vld [vmem:[%s169 + $0x4d0] sm:$0xff]
      %v332 = vld [vmem:[%s169 + $0x4d8] sm:$0xff]
      %v333 = vld [vmem:[%s169 + $0x4e0] sm:$0xff]
      %v334 = vld [vmem:[%s169 + $0x4e8] sm:$0xff]
      %v335 = vld [vmem:[%s169 + $0x4f0] sm:$0xff]
      %v336 = vld [vmem:[%s169 + $0x4f8] sm:$0xff]
      %v337 = vld [vmem:[%s169 + $0x500] sm:$0xff]
      %v338 = vld [vmem:[%s169 + $0x508] sm:$0xff]
      %v339 = vld [vmem:[%s169 + $0x510] sm:$0xff]
      %v340 = vld [vmem:[%s169 + $0x518] sm:$0xff]
      %v341 = vld [vmem:[%s169 + $0x520] sm:$0xff]
      %v342 = vld [vmem:[%s169 + $0x528] sm:$0xff]
      %v343 = vld [vmem:[%s169 + $0x530] sm:$0xff]
      %v344 = vld [vmem:[%s169 + $0x538] sm:$0xff]
      %v345 = vld [vmem:[%s169 + $0x540] sm:$0xff]
      %v346 = vld [vmem:[%s169 + $0x548] sm:$0xff]
      %v347 = vld [vmem:[%s169 + $0x550] sm:$0xff]
      %v348 = vld [vmem:[%s169 + $0x558] sm:$0xff]
      %v349 = vld [vmem:[%s169 + $0x560] sm:$0xff]
      %v350 = vld [vmem:[%s169 + $0x568] sm:$0xff]
      %v351 = vld [vmem:[%s169 + $0x570] sm:$0xff]
      %v352 = vld [vmem:[%s169 + $0x578] sm:$0xff]
      %v353 = vld [vmem:[%s169 + $0x580] sm:$0xff]
      %v354 = vld [vmem:[%s169 + $0x588] sm:$0xff]
      %v355 = vld [vmem:[%s169 + $0x590] sm:$0xff]
      %v356 = vld [vmem:[%s169 + $0x598] sm:$0xff]
      %v357 = vld [vmem:[%s169 + $0x5a0] sm:$0xff]
      %v358 = vld [vmem:[%s169 + $0x5a8] sm:$0xff]
      %v359 = vld [vmem:[%s169 + $0x5b0] sm:$0xff]
      %v360 = vld [vmem:[%s169 + $0x5b8] sm:$0xff]
      %v361 = vld [vmem:[%s169 + $0x5c0] sm:$0xff]
      %v362 = vld [vmem:[%s169 + $0x5c8] sm:$0xff]
      %v363 = vld [vmem:[%s169 + $0x5d0] sm:$0xff]
      %v364 = vld [vmem:[%s169 + $0x5d8] sm:$0xff]
      %v365 = vld [vmem:[%s169 + $0x5e0] sm:$0xff]
      %v366 = vld [vmem:[%s169 + $0x5e8] sm:$0xff]
      %v367 = vld [vmem:[%s169 + $0x5f0] sm:$0xff]
      %v368 = vld [vmem:[%s169 + $0x5f8] sm:$0xff]
      %v369 = vld [vmem:[%s169 + $0x600] sm:$0xff]
      %v370 = vld [vmem:[%s169 + $0x608] sm:$0xff]
      %v371 = vld [vmem:[%s169 + $0x610] sm:$0xff]
      %v372 = vld [vmem:[%s169 + $0x618] sm:$0xff]
      %v373 = vld [vmem:[%s169 + $0x620] sm:$0xff]
      %v374 = vld [vmem:[%s169 + $0x628] sm:$0xff]
      %v375 = vld [vmem:[%s169 + $0x630] sm:$0xff]
      %v376 = vld [vmem:[%s169 + $0x638] sm:$0xff]
      %v377 = vld [vmem:[%s169 + $0x640] sm:$0xff]
      %v378 = vld [vmem:[%s169 + $0x648] sm:$0xff]
      %v379 = vld [vmem:[%s169 + $0x650] sm:$0xff]
      %v380 = vld [vmem:[%s169 + $0x658] sm:$0xff]
      %v381 = vld [vmem:[%s169 + $0x660] sm:$0xff]
      %v382 = vld [vmem:[%s169 + $0x668] sm:$0xff]
      %v383 = vld [vmem:[%s169 + $0x670] sm:$0xff]
      %v384 = vld [vmem:[%s169 + $0x678] sm:$0xff]
      %v385 = vld [vmem:[%s169 + $0x680] sm:$0xff]
      %v386 = vld [vmem:[%s169 + $0x688] sm:$0xff]
      %v387 = vld [vmem:[%s169 + $0x690] sm:$0xff]
      %v388 = vld [vmem:[%s169 + $0x698] sm:$0xff]
      %v389 = vld [vmem:[%s169 + $0x6a0] sm:$0xff]
      %v390 = vld [vmem:[%s169 + $0x6a8] sm:$0xff]
      %v391 = vld [vmem:[%s169 + $0x6b0] sm:$0xff]
      %v392 = vld [vmem:[%s169 + $0x6b8] sm:$0xff]
      %v393 = vld [vmem:[%s169 + $0x6c0] sm:$0xff]
      %v394 = vld [vmem:[%s169 + $0x6c8] sm:$0xff]
      %v395 = vld [vmem:[%s169 + $0x6d0] sm:$0xff]
      %v396 = vld [vmem:[%s169 + $0x6d8] sm:$0xff]
      %v397 = vld [vmem:[%s169 + $0x6e0] sm:$0xff]
      %v398 = vld [vmem:[%s169 + $0x6e8] sm:$0xff]
      %v399 = vld [vmem:[%s169 + $0x6f0] sm:$0xff]
      %v400 = vld [vmem:[%s169 + $0x6f8] sm:$0xff]
      %v401 = vld [vmem:[%s169 + $0x700] sm:$0xff]
      %v402 = vld [vmem:[%s169 + $0x708] sm:$0xff]
      %v403 = vld [vmem:[%s169 + $0x710] sm:$0xff]
      %v404 = vld [vmem:[%s169 + $0x718] sm:$0xff]
      %v405 = vld [vmem:[%s169 + $0x720] sm:$0xff]
      %v406 = vld [vmem:[%s169 + $0x728] sm:$0xff]
      %v407 = vld [vmem:[%s169 + $0x730] sm:$0xff]
      %v408 = vld [vmem:[%s169 + $0x738] sm:$0xff]
      %v409 = vld [vmem:[%s169 + $0x740] sm:$0xff]
      %v410 = vld [vmem:[%s169 + $0x748] sm:$0xff]
      %v411 = vld [vmem:[%s169 + $0x750] sm:$0xff]
      %v412 = vld [vmem:[%s169 + $0x758] sm:$0xff]
      %v413 = vld [vmem:[%s169 + $0x760] sm:$0xff]
      %v414 = vld [vmem:[%s169 + $0x768] sm:$0xff]
      %v415 = vld [vmem:[%s169 + $0x770] sm:$0xff]
      %v416 = vld [vmem:[%s169 + $0x778] sm:$0xff]
      %v417 = vld [vmem:[%s169 + $0x780] sm:$0xff]
      %v418 = vld [vmem:[%s169 + $0x788] sm:$0xff]
      %v419 = vld [vmem:[%s169 + $0x790] sm:$0xff]
      %v420 = vld [vmem:[%s169 + $0x798] sm:$0xff]
      %v421 = vld [vmem:[%s169 + $0x7a0] sm:$0xff]
      %v422 = vld [vmem:[%s169 + $0x7a8] sm:$0xff]
      %v423 = vld [vmem:[%s169 + $0x7b0] sm:$0xff]
      %v424 = vld [vmem:[%s169 + $0x7b8] sm:$0xff]
      %v425 = vld [vmem:[%s169 + $0x7c0] sm:$0xff]
      %v426 = vld [vmem:[%s169 + $0x7c8] sm:$0xff]
      %v427 = vld [vmem:[%s169 + $0x7d0] sm:$0xff]
      %v428 = vld [vmem:[%s169 + $0x7d8] sm:$0xff]
      %v429 = vld [vmem:[%s169 + $0x7e0] sm:$0xff]
      %v430 = vld [vmem:[%s169 + $0x7e8] sm:$0xff]
      %v431 = vld [vmem:[%s169 + $0x7f0] sm:$0xff]
      %v432 = vld [vmem:[%s169 + $0x7f8] sm:$0xff]
      %v433 = vld [vmem:[%s169 + $0x800] sm:$0xff]
      %v434 = vld [vmem:[%s169 + $0x808] sm:$0xff]
      %v435 = vld [vmem:[%s169 + $0x810] sm:$0xff]
      %v436 = vld [vmem:[%s169 + $0x818] sm:$0xff]
      %v437 = vld [vmem:[%s169 + $0x820] sm:$0xff]
      %v438 = vld [vmem:[%s169 + $0x828] sm:$0xff]
      %v439 = vld [vmem:[%s169 + $0x830] sm:$0xff]
      %v440 = vld [vmem:[%s169 + $0x838] sm:$0xff]
      %v441 = vld [vmem:[%s169 + $0x840] sm:$0xff]
      %v442 = vld [vmem:[%s169 + $0x848] sm:$0xff]
      %v443 = vld [vmem:[%s169 + $0x850] sm:$0xff]
      %v444 = vld [vmem:[%s169 + $0x858] sm:$0xff]
      %v445 = vld [vmem:[%s169 + $0x860] sm:$0xff]
      %v446 = vld [vmem:[%s169 + $0x868] sm:$0xff]
      %v447 = vld [vmem:[%s169 + $0x870] sm:$0xff]
      %v448 = vld [vmem:[%s169 + $0x878] sm:$0xff]
      %v449 = vld [vmem:[%s169 + $0x880] sm:$0xff]
      %v450 = vld [vmem:[%s169 + $0x888] sm:$0xff]
      %v451 = vld [vmem:[%s169 + $0x890] sm:$0xff]
      %v452 = vld [vmem:[%s169 + $0x898] sm:$0xff]
      %v453 = vld [vmem:[%s169 + $0x8a0] sm:$0xff]
      %v454 = vld [vmem:[%s169 + $0x8a8] sm:$0xff]
      %v455 = vld [vmem:[%s169 + $0x8b0] sm:$0xff]
      %v456 = vld [vmem:[%s169 + $0x8b8] sm:$0xff]
      %v457 = vld [vmem:[%s169 + $0x8c0] sm:$0xff]
      %v458 = vld [vmem:[%s169 + $0x8c8] sm:$0xff]
      %v459 = vld [vmem:[%s169 + $0x8d0] sm:$0xff]
      %v460 = vld [vmem:[%s169 + $0x8d8] sm:$0xff]
      %v461 = vld [vmem:[%s169 + $0x8e0] sm:$0xff]
      %v462 = vld [vmem:[%s169 + $0x8e8] sm:$0xff]
      %v463 = vld [vmem:[%s169 + $0x8f0] sm:$0xff]
      %v464 = vld [vmem:[%s169 + $0x8f8] sm:$0xff]
      %v465 = vld [vmem:[%s169 + $0x900] sm:$0xff]
      %v466 = vld [vmem:[%s169 + $0x908] sm:$0xff]
      %v467 = vld [vmem:[%s169 + $0x910] sm:$0xff]
      %v468 = vld [vmem:[%s169 + $0x918] sm:$0xff]
      %v469 = vld [vmem:[%s169 + $0x920] sm:$0xff]
      %v470 = vld [vmem:[%s169 + $0x928] sm:$0xff]
      %v471 = vld [vmem:[%s169 + $0x930] sm:$0xff]
      %v472 = vld [vmem:[%s169 + $0x938] sm:$0xff]
      %v473 = vld [vmem:[%s169 + $0x940] sm:$0xff]
      %v474 = vld [vmem:[%s169 + $0x948] sm:$0xff]
      %v475 = vld [vmem:[%s169 + $0x950] sm:$0xff]
      %v476 = vld [vmem:[%s169 + $0x958] sm:$0xff]
      %v477 = vld [vmem:[%s169 + $0x960] sm:$0xff]
      %v478 = vld [vmem:[%s169 + $0x968] sm:$0xff]
      %v479 = vld [vmem:[%s169 + $0x970] sm:$0xff]
      %v480 = vld [vmem:[%s169 + $0x978] sm:$0xff]
      %v481 = vld [vmem:[%s169 + $0x980] sm:$0xff]
      %v482 = vld [vmem:[%s169 + $0x988] sm:$0xff]
      %v483 = vld [vmem:[%s169 + $0x990] sm:$0xff]
      %v484 = vld [vmem:[%s169 + $0x998] sm:$0xff]
      %v485 = vld [vmem:[%s169 + $0x9a0] sm:$0xff]
      %v486 = vld [vmem:[%s169 + $0x9a8] sm:$0xff]
      %v487 = vld [vmem:[%s169 + $0x9b0] sm:$0xff]
      %v488 = vld [vmem:[%s169 + $0x9b8] sm:$0xff]
      %v489 = vld [vmem:[%s169 + $0x9c0] sm:$0xff]
      %v490 = vld [vmem:[%s169 + $0x9c8] sm:$0xff]
      %v491 = vld [vmem:[%s169 + $0x9d0] sm:$0xff]
      %v492 = vld [vmem:[%s169 + $0x9d8] sm:$0xff]
      %v493 = vld [vmem:[%s169 + $0x9e0] sm:$0xff]
      %v494 = vld [vmem:[%s169 + $0x9e8] sm:$0xff]
      %v495 = vld [vmem:[%s169 + $0x9f0] sm:$0xff]
      %v496 = vld [vmem:[%s169 + $0x9f8] sm:$0xff]
      %v497 = vld [vmem:[%s169 + $0xa00] sm:$0xff]
      %v498 = vld [vmem:[%s169 + $0xa08] sm:$0xff]
      %v499 = vld [vmem:[%s169 + $0xa10] sm:$0xff]
      %v500 = vld [vmem:[%s169 + $0xa18] sm:$0xff]
      %v501 = vld [vmem:[%s169 + $0xa20] sm:$0xff]
      %v502 = vld [vmem:[%s169 + $0xa28] sm:$0xff]
      %v503 = vld [vmem:[%s169 + $0xa30] sm:$0xff]
      %v504 = vld [vmem:[%s169 + $0xa38] sm:$0xff]
      %v505 = vld [vmem:[%s169 + $0xa40] sm:$0xff]
      %v506 = vld [vmem:[%s169 + $0xa48] sm:$0xff]
      %v507 = vld [vmem:[%s169 + $0xa50] sm:$0xff]
      %v508 = vld [vmem:[%s169 + $0xa58] sm:$0xff]
      %v509 = vld [vmem:[%s169 + $0xa60] sm:$0xff]
      %v510 = vld [vmem:[%s169 + $0xa68] sm:$0xff]
      %v511 = vld [vmem:[%s169 + $0xa70] sm:$0xff]
      %v512 = vld [vmem:[%s169 + $0xa78] sm:$0xff]
      %v513 = vld [vmem:[%s169 + $0xa80] sm:$0xff]
      %v514 = vld [vmem:[%s169 + $0xa88] sm:$0xff]
      %v515 = vld [vmem:[%s169 + $0xa90] sm:$0xff]
      %v516 = vld [vmem:[%s169 + $0xa98] sm:$0xff]
      %v517 = vld [vmem:[%s169 + $0xaa0] sm:$0xff]
      %v518 = vld [vmem:[%s169 + $0xaa8] sm:$0xff]
      %v519 = vld [vmem:[%s169 + $0xab0] sm:$0xff]
      %v520 = vld [vmem:[%s169 + $0xab8] sm:$0xff]
      %v521 = vld [vmem:[%s169 + $0xac0] sm:$0xff]
      %v522 = vld [vmem:[%s169 + $0xac8] sm:$0xff]
      %v523 = vld [vmem:[%s169 + $0xad0] sm:$0xff]
      %v524 = vld [vmem:[%s169 + $0xad8] sm:$0xff]
      %v525 = vld [vmem:[%s169 + $0xae0] sm:$0xff]
      %v526 = vld [vmem:[%s169 + $0xae8] sm:$0xff]
      %v527 = vld [vmem:[%s169 + $0xaf0] sm:$0xff]
      %v528 = vld [vmem:[%s169 + $0xaf8] sm:$0xff]
      %v529 = vld [vmem:[%s169 + $0xb00] sm:$0xff]
      %v530 = vld [vmem:[%s169 + $0xb08] sm:$0xff]
      %v531 = vld [vmem:[%s169 + $0xb10] sm:$0xff]
      %v532 = vld [vmem:[%s169 + $0xb18] sm:$0xff]
      %v533 = vld [vmem:[%s169 + $0xb20] sm:$0xff]
      %v534 = vld [vmem:[%s169 + $0xb28] sm:$0xff]
      %v535 = vld [vmem:[%s169 + $0xb30] sm:$0xff]
      %v536 = vld [vmem:[%s169 + $0xb38] sm:$0xff]
      %v537 = vld [vmem:[%s169 + $0xb40] sm:$0xff]
      %v538 = vld [vmem:[%s169 + $0xb48] sm:$0xff]
      %v539 = vld [vmem:[%s169 + $0xb50] sm:$0xff]
      %v540 = vld [vmem:[%s169 + $0xb58] sm:$0xff]
      %v541 = vld [vmem:[%s169 + $0xb60] sm:$0xff]
      %v542 = vld [vmem:[%s169 + $0xb68] sm:$0xff]
      %v543 = vld [vmem:[%s169 + $0xb70] sm:$0xff]
      %v544 = vld [vmem:[%s169 + $0xb78] sm:$0xff]
      %v545 = vld [vmem:[%s169 + $0xb80] sm:$0xff]
      %v546 = vld [vmem:[%s169 + $0xb88] sm:$0xff]
      %v547 = vld [vmem:[%s169 + $0xb90] sm:$0xff]
      %v548 = vld [vmem:[%s169 + $0xb98] sm:$0xff]
      %v549 = vld [vmem:[%s169 + $0xba0] sm:$0xff]
      %v550 = vld [vmem:[%s169 + $0xba8] sm:$0xff]
      %v551 = vld [vmem:[%s169 + $0xbb0] sm:$0xff]
      %v552 = vld [vmem:[%s169 + $0xbb8] sm:$0xff]
      %v553 = vld [vmem:[%s169 + $0xbc0] sm:$0xff]
      %v554 = vld [vmem:[%s169 + $0xbc8] sm:$0xff]
      %v555 = vld [vmem:[%s169 + $0xbd0] sm:$0xff]
      %v556 = vld [vmem:[%s169 + $0xbd8] sm:$0xff]
      %v557 = vld [vmem:[%s169 + $0xbe0] sm:$0xff]
      %v558 = vld [vmem:[%s169 + $0xbe8] sm:$0xff]
      %v559 = vld [vmem:[%s169 + $0xbf0] sm:$0xff]
      %v560 = vld [vmem:[%s169 + $0xbf8] sm:$0xff]
      %v561 = vld [vmem:[%s169 + $0xc00] sm:$0xff]
      %v562 = vld [vmem:[%s169 + $0xc08] sm:$0xff]
      %v563 = vld [vmem:[%s169 + $0xc10] sm:$0xff]
      %v564 = vld [vmem:[%s169 + $0xc18] sm:$0xff]
      %v565 = vld [vmem:[%s169 + $0xc20] sm:$0xff]
      %v566 = vld [vmem:[%s169 + $0xc28] sm:$0xff]
      %v567 = vld [vmem:[%s169 + $0xc30] sm:$0xff]
      %v568 = vld [vmem:[%s169 + $0xc38] sm:$0xff]
      %v569 = vld [vmem:[%s169 + $0xc40] sm:$0xff]
      %v570 = vld [vmem:[%s169 + $0xc48] sm:$0xff]
      %v571 = vld [vmem:[%s169 + $0xc50] sm:$0xff]
      %v572 = vld [vmem:[%s169 + $0xc58] sm:$0xff]
      %v573 = vld [vmem:[%s169 + $0xc60] sm:$0xff]
      %v574 = vld [vmem:[%s169 + $0xc68] sm:$0xff]
      %v575 = vld [vmem:[%s169 + $0xc70] sm:$0xff]
      %v576 = vld [vmem:[%s169 + $0xc78] sm:$0xff]
      %v577 = vld [vmem:[%s169 + $0xc80] sm:$0xff]
      %v578 = vld [vmem:[%s169 + $0xc88] sm:$0xff]
      %v579 = vld [vmem:[%s169 + $0xc90] sm:$0xff]
      %v580 = vld [vmem:[%s169 + $0xc98] sm:$0xff]
      %v581 = vld [vmem:[%s169 + $0xca0] sm:$0xff]
      %v582 = vld [vmem:[%s169 + $0xca8] sm:$0xff]
      %v583 = vld [vmem:[%s169 + $0xcb0] sm:$0xff]
      %v584 = vld [vmem:[%s169 + $0xcb8] sm:$0xff]
      %v585 = vld [vmem:[%s169 + $0xcc0] sm:$0xff]
      %v586 = vld [vmem:[%s169 + $0xcc8] sm:$0xff]
      %v587 = vld [vmem:[%s169 + $0xcd0] sm:$0xff]
      %v588 = vld [vmem:[%s169 + $0xcd8] sm:$0xff]
      %v589 = vld [vmem:[%s169 + $0xce0] sm:$0xff]
      %v590 = vld [vmem:[%s169 + $0xce8] sm:$0xff]
      %v591 = vld [vmem:[%s169 + $0xcf0] sm:$0xff]
      %v592 = vld [vmem:[%s169 + $0xcf8] sm:$0xff]
      %v593 = vld [vmem:[%s169 + $0xd00] sm:$0xff]
      %v594 = vld [vmem:[%s169 + $0xd08] sm:$0xff]
      %v595 = vld [vmem:[%s169 + $0xd10] sm:$0xff]
      %v596 = vld [vmem:[%s169 + $0xd18] sm:$0xff]
      %v597 = vld [vmem:[%s169 + $0xd20] sm:$0xff]
      %v598 = vld [vmem:[%s169 + $0xd28] sm:$0xff]
      %v599 = vld [vmem:[%s169 + $0xd30] sm:$0xff]
      %v600 = vld [vmem:[%s169 + $0xd38] sm:$0xff]
      %v601 = vld [vmem:[%s169 + $0xd40] sm:$0xff]
      %v602 = vld [vmem:[%s169 + $0xd48] sm:$0xff]
      %v603 = vld [vmem:[%s169 + $0xd50] sm:$0xff]
      %v604 = vld [vmem:[%s169 + $0xd58] sm:$0xff]
      %v605 = vld [vmem:[%s169 + $0xd60] sm:$0xff]
      %v606 = vld [vmem:[%s169 + $0xd68] sm:$0xff]
      %v607 = vld [vmem:[%s169 + $0xd70] sm:$0xff]
      %v608 = vld [vmem:[%s169 + $0xd78] sm:$0xff]
      %v609 = vld [vmem:[%s169 + $0xd80] sm:$0xff]
      %v610 = vld [vmem:[%s169 + $0xd88] sm:$0xff]
      %v611 = vld [vmem:[%s169 + $0xd90] sm:$0xff]
      %v612 = vld [vmem:[%s169 + $0xd98] sm:$0xff]
      %v613 = vld [vmem:[%s169 + $0xda0] sm:$0xff]
      %v614 = vld [vmem:[%s169 + $0xda8] sm:$0xff]
      %v615 = vld [vmem:[%s169 + $0xdb0] sm:$0xff]
      %v616 = vld [vmem:[%s169 + $0xdb8] sm:$0xff]
      %v617 = vld [vmem:[%s169 + $0xdc0] sm:$0xff]
      %v618 = vld [vmem:[%s169 + $0xdc8] sm:$0xff]
      %v619 = vld [vmem:[%s169 + $0xdd0] sm:$0xff]
      %v620 = vld [vmem:[%s169 + $0xdd8] sm:$0xff]
      %v621 = vld [vmem:[%s169 + $0xde0] sm:$0xff]
      %v622 = vld [vmem:[%s169 + $0xde8] sm:$0xff]
      %v623 = vld [vmem:[%s169 + $0xdf0] sm:$0xff]
      %v624 = vld [vmem:[%s169 + $0xdf8] sm:$0xff]
      %v625 = vld [vmem:[%s169 + $0xe00] sm:$0xff]
      %v626 = vld [vmem:[%s169 + $0xe08] sm:$0xff]
      %v627 = vld [vmem:[%s169 + $0xe10] sm:$0xff]
      %v628 = vld [vmem:[%s169 + $0xe18] sm:$0xff]
      %v629 = vld [vmem:[%s169 + $0xe20] sm:$0xff]
      %v630 = vld [vmem:[%s169 + $0xe28] sm:$0xff]
      %v631 = vld [vmem:[%s169 + $0xe30] sm:$0xff]
      %v632 = vld [vmem:[%s169 + $0xe38] sm:$0xff]
      %v633 = vld [vmem:[%s169 + $0xe40] sm:$0xff]
      %v634 = vld [vmem:[%s169 + $0xe48] sm:$0xff]
      %v635 = vld [vmem:[%s169 + $0xe50] sm:$0xff]
      %v636 = vld [vmem:[%s169 + $0xe58] sm:$0xff]
      %v637 = vld [vmem:[%s169 + $0xe60] sm:$0xff]
      %v638 = vld [vmem:[%s169 + $0xe68] sm:$0xff]
      %v639 = vld [vmem:[%s169 + $0xe70] sm:$0xff]
      %v640 = vld [vmem:[%s169 + $0xe78] sm:$0xff]
      %v641 = vld [vmem:[%s169 + $0xe80] sm:$0xff]
      %v642 = vld [vmem:[%s169 + $0xe88] sm:$0xff]
      %v643 = vld [vmem:[%s169 + $0xe90] sm:$0xff]
      %v644 = vld [vmem:[%s169 + $0xe98] sm:$0xff]
      %v645 = vld [vmem:[%s169 + $0xea0] sm:$0xff]
      %v646 = vld [vmem:[%s169 + $0xea8] sm:$0xff]
      %v647 = vld [vmem:[%s169 + $0xeb0] sm:$0xff]
      %v648 = vld [vmem:[%s169 + $0xeb8] sm:$0xff]
      %v649 = vld [vmem:[%s169 + $0xec0] sm:$0xff]
      %v650 = vld [vmem:[%s169 + $0xec8] sm:$0xff]
      %v651 = vld [vmem:[%s169 + $0xed0] sm:$0xff]
      %v652 = vld [vmem:[%s169 + $0xed8] sm:$0xff]
      %v653 = vld [vmem:[%s169 + $0xee0] sm:$0xff]
      %v654 = vld [vmem:[%s169 + $0xee8] sm:$0xff]
      %v655 = vld [vmem:[%s169 + $0xef0] sm:$0xff]
      %v656 = vld [vmem:[%s169 + $0xef8] sm:$0xff]
      %v657 = vld [vmem:[%s169 + $0xf00] sm:$0xff]
      %v658 = vld [vmem:[%s169 + $0xf08] sm:$0xff]
      %v659 = vld [vmem:[%s169 + $0xf10] sm:$0xff]
      %v660 = vld [vmem:[%s169 + $0xf18] sm:$0xff]
      %v661 = vld [vmem:[%s169 + $0xf20] sm:$0xff]
      %v662 = vld [vmem:[%s169 + $0xf28] sm:$0xff]
      %v663 = vld [vmem:[%s169 + $0xf30] sm:$0xff]
      %v664 = vld [vmem:[%s169 + $0xf38] sm:$0xff]
      %v665 = vld [vmem:[%s169 + $0xf40] sm:$0xff]
      %v666 = vld [vmem:[%s169 + $0xf48] sm:$0xff]
      %v667 = vld [vmem:[%s169 + $0xf50] sm:$0xff]
      %v668 = vld [vmem:[%s169 + $0xf58] sm:$0xff]
      %v669 = vld [vmem:[%s169 + $0xf60] sm:$0xff]
      %v670 = vld [vmem:[%s169 + $0xf68] sm:$0xff]
      %v671 = vld [vmem:[%s169 + $0xf70] sm:$0xff]
      %v672 = vld [vmem:[%s169 + $0xf78] sm:$0xff]
      %v673 = vld [vmem:[%s169 + $0xf80] sm:$0xff]
      %v674 = vld [vmem:[%s169 + $0xf88] sm:$0xff]
      %v675 = vld [vmem:[%s169 + $0xf90] sm:$0xff]
      %v676 = vld [vmem:[%s169 + $0xf98] sm:$0xff]
      %v677 = vld [vmem:[%s169 + $0xfa0] sm:$0xff]
      %v678 = vld [vmem:[%s169 + $0xfa8] sm:$0xff]
      %v679 = vld [vmem:[%s169 + $0xfb0] sm:$0xff]
      %v680 = vld [vmem:[%s169 + $0xfb8] sm:$0xff]
      %v681 = vld [vmem:[%s169 + $0xfc0] sm:$0xff]
      %v682 = vld [vmem:[%s169 + $0xfc8] sm:$0xff]
      %v683 = vld [vmem:[%s169 + $0xfd0] sm:$0xff]
      %v684 = vld [vmem:[%s169 + $0xfd8] sm:$0xff]
      %v685 = vld [vmem:[%s169 + $0xfe0] sm:$0xff]
      %v686 = vld [vmem:[%s169 + $0xfe8] sm:$0xff]
      %v687 = vld [vmem:[%s169 + $0xff0] sm:$0xff]
      %v688 = vld [vmem:[%s169 + $0xff8] sm:$0xff]
      %v689 = vld [vmem:[%s169 + $0x1000] sm:$0xff]
      %v690 = vld [vmem:[%s169 + $0x1008] sm:$0xff]
      %v691 = vld [vmem:[%s169 + $0x1010] sm:$0xff]
      %v692 = vld [vmem:[%s169 + $0x1018] sm:$0xff]
      %v693 = vld [vmem:[%s169 + $0x1020] sm:$0xff]
      %v694 = vld [vmem:[%s169 + $0x1028] sm:$0xff]
      %v695 = vld [vmem:[%s169 + $0x1030] sm:$0xff]
      %v696 = vld [vmem:[%s169 + $0x1038] sm:$0xff]
      %v697 = vld [vmem:[%s169 + $0x1040] sm:$0xff]
      %v698 = vld [vmem:[%s169 + $0x1048] sm:$0xff]
      %v699 = vld [vmem:[%s169 + $0x1050] sm:$0xff]
      %v700 = vld [vmem:[%s169 + $0x1058] sm:$0xff]
      %v701 = vld [vmem:[%s169 + $0x1060] sm:$0xff]
      %v702 = vld [vmem:[%s169 + $0x1068] sm:$0xff]
      %v703 = vld [vmem:[%s169 + $0x1070] sm:$0xff]
      %v704 = vld [vmem:[%s169 + $0x1078] sm:$0xff]
      %v705 = vld [vmem:[%s169 + $0x1080] sm:$0xff]
      %v706 = vld [vmem:[%s169 + $0x1088] sm:$0xff]
      %v707 = vld [vmem:[%s169 + $0x1090] sm:$0xff]
      %v708 = vld [vmem:[%s169 + $0x1098] sm:$0xff]
      %v709 = vld [vmem:[%s169 + $0x10a0] sm:$0xff]
      %v710 = vld [vmem:[%s169 + $0x10a8] sm:$0xff]
      %v711 = vld [vmem:[%s169 + $0x10b0] sm:$0xff]
      %v712 = vld [vmem:[%s169 + $0x10b8] sm:$0xff]
      %v713 = vld [vmem:[%s169 + $0x10c0] sm:$0xff]
      %v714 = vld [vmem:[%s169 + $0x10c8] sm:$0xff]
      %v715 = vld [vmem:[%s169 + $0x10d0] sm:$0xff]
      %v716 = vld [vmem:[%s169 + $0x10d8] sm:$0xff]
      %v717 = vld [vmem:[%s169 + $0x10e0] sm:$0xff]
      %v718 = vld [vmem:[%s169 + $0x10e8] sm:$0xff]
      %v719 = vld [vmem:[%s169 + $0x10f0] sm:$0xff]
      %v720 = vld [vmem:[%s169 + $0x10f8] sm:$0xff]
      %v721 = vld [vmem:[%s169 + $0x1100] sm:$0xff]
      %v722 = vld [vmem:[%s169 + $0x1108] sm:$0xff]
      %v723 = vld [vmem:[%s169 + $0x1110] sm:$0xff]
      %v724 = vld [vmem:[%s169 + $0x1118] sm:$0xff]
      %v725 = vld [vmem:[%s169 + $0x1120] sm:$0xff]
      %v726 = vld [vmem:[%s169 + $0x1128] sm:$0xff]
      %v727 = vld [vmem:[%s169 + $0x1130] sm:$0xff]
      %v728 = vld [vmem:[%s169 + $0x1138] sm:$0xff]
      %v729 = vld [vmem:[%s169 + $0x1140] sm:$0xff]
      %v730 = vld [vmem:[%s169 + $0x1148] sm:$0xff]
      %v731 = vld [vmem:[%s169 + $0x1150] sm:$0xff]
      %v732 = vld [vmem:[%s169 + $0x1158] sm:$0xff]
      %v733 = vld [vmem:[%s169 + $0x1160] sm:$0xff]
      %v734 = vld [vmem:[%s169 + $0x1168] sm:$0xff]
      %v735 = vld [vmem:[%s169 + $0x1170] sm:$0xff]
      %v736 = vld [vmem:[%s169 + $0x1178] sm:$0xff]
      %v737 = vld [vmem:[%s169 + $0x1180] sm:$0xff]
      %v738 = vld [vmem:[%s169 + $0x1188] sm:$0xff]
      %v739 = vld [vmem:[%s169 + $0x1190] sm:$0xff]
      %v740 = vld [vmem:[%s169 + $0x1198] sm:$0xff]
      %v741 = vld [vmem:[%s169 + $0x11a0] sm:$0xff]
      %v742 = vld [vmem:[%s169 + $0x11a8] sm:$0xff]
      %v743 = vld [vmem:[%s169 + $0x11b0] sm:$0xff]
      %v744 = vld [vmem:[%s169 + $0x11b8] sm:$0xff]
      %v745 = vld [vmem:[%s169 + $0x11c0] sm:$0xff]
      %v746 = vld [vmem:[%s169 + $0x11c8] sm:$0xff]
      %v747 = vld [vmem:[%s169 + $0x11d0] sm:$0xff]
      %v748 = vld [vmem:[%s169 + $0x11d8] sm:$0xff]
      %v749 = vld [vmem:[%s169 + $0x11e0] sm:$0xff]
      %v750 = vld [vmem:[%s169 + $0x11e8] sm:$0xff]
      %v751 = vld [vmem:[%s169 + $0x11f0] sm:$0xff]
      %v752 = vld [vmem:[%s169 + $0x11f8] sm:$0xff]
      %v753 = vld [vmem:[%s169 + $0x1200] sm:$0xff]
      %v754 = vld [vmem:[%s169 + $0x1208] sm:$0xff]
      %v755 = vld [vmem:[%s169 + $0x1210] sm:$0xff]
      %v756 = vld [vmem:[%s169 + $0x1218] sm:$0xff]
      %v757 = vld [vmem:[%s169 + $0x1220] sm:$0xff]
      %v758 = vld [vmem:[%s169 + $0x1228] sm:$0xff]
      %v759 = vld [vmem:[%s169 + $0x1230] sm:$0xff]
      %v760 = vld [vmem:[%s169 + $0x1238] sm:$0xff]
      %v761 = vld [vmem:[%s169 + $0x1240] sm:$0xff]
      %v762 = vld [vmem:[%s169 + $0x1248] sm:$0xff]
      %v763 = vld [vmem:[%s169 + $0x1250] sm:$0xff]
      %v764 = vld [vmem:[%s169 + $0x1258] sm:$0xff]
      %v765 = vld [vmem:[%s169 + $0x1260] sm:$0xff]
      %v766 = vld [vmem:[%s169 + $0x1268] sm:$0xff]
      %v767 = vld [vmem:[%s169 + $0x1270] sm:$0xff]
      %v768 = vld [vmem:[%s169 + $0x1278] sm:$0xff]
      %v769 = vld [vmem:[%s169 + $0x1280] sm:$0xff]
      %v770 = vld [vmem:[%s169 + $0x1288] sm:$0xff]
      %v771 = vld [vmem:[%s169 + $0x1290] sm:$0xff]
      %v772 = vld [vmem:[%s169 + $0x1298] sm:$0xff]
      %v773 = vld [vmem:[%s169 + $0x12a0] sm:$0xff]
      %v774 = vld [vmem:[%s169 + $0x12a8] sm:$0xff]
      %v775 = vld [vmem:[%s169 + $0x12b0] sm:$0xff]
      %v776 = vld [vmem:[%s169 + $0x12b8] sm:$0xff]
      %v777 = vld [vmem:[%s169 + $0x12c0] sm:$0xff]
      %v778 = vld [vmem:[%s169 + $0x12c8] sm:$0xff]
      %v779 = vld [vmem:[%s169 + $0x12d0] sm:$0xff]
      %v780 = vld [vmem:[%s169 + $0x12d8] sm:$0xff]
      %v781 = vld [vmem:[%s169 + $0x12e0] sm:$0xff]
      %v782 = vld [vmem:[%s169 + $0x12e8] sm:$0xff]
      %v783 = vld [vmem:[%s169 + $0x12f0] sm:$0xff]
      %v784 = vld [vmem:[%s169 + $0x12f8] sm:$0xff]
      %v785 = vld [vmem:[%s169 + $0x1300] sm:$0xff]
      %v786 = vld [vmem:[%s169 + $0x1308] sm:$0xff]
      %v787 = vld [vmem:[%s169 + $0x1310] sm:$0xff]
      %v788 = vld [vmem:[%s169 + $0x1318] sm:$0xff]
      %v789 = vld [vmem:[%s169 + $0x1320] sm:$0xff]
      %v790 = vld [vmem:[%s169 + $0x1328] sm:$0xff]
      %v791 = vld [vmem:[%s169 + $0x1330] sm:$0xff]
      %v792 = vld [vmem:[%s169 + $0x1338] sm:$0xff]
      %v793 = vld [vmem:[%s169 + $0x1340] sm:$0xff]
      %v794 = vld [vmem:[%s169 + $0x1348] sm:$0xff]
      %v795 = vld [vmem:[%s169 + $0x1350] sm:$0xff]
      %v796 = vld [vmem:[%s169 + $0x1358] sm:$0xff]
      %v797 = vld [vmem:[%s169 + $0x1360] sm:$0xff]
      %v798 = vld [vmem:[%s169 + $0x1368] sm:$0xff]
      %v799 = vld [vmem:[%s169 + $0x1370] sm:$0xff]
      %v800 = vld [vmem:[%s169 + $0x1378] sm:$0xff]
      %v801 = vld [vmem:[%s169 + $0x1380] sm:$0xff]
      %v802 = vld [vmem:[%s169 + $0x1388] sm:$0xff]
      %v803 = vld [vmem:[%s169 + $0x1390] sm:$0xff]
      %v804 = vld [vmem:[%s169 + $0x1398] sm:$0xff]
      %v805 = vld [vmem:[%s169 + $0x13a0] sm:$0xff]
      %v806 = vld [vmem:[%s169 + $0x13a8] sm:$0xff]
      %v807 = vld [vmem:[%s169 + $0x13b0] sm:$0xff]
      %v808 = vld [vmem:[%s169 + $0x13b8] sm:$0xff]
      %v809 = vld [vmem:[%s169 + $0x13c0] sm:$0xff]
      %v810 = vld [vmem:[%s169 + $0x13c8] sm:$0xff]
      %v811 = vld [vmem:[%s169 + $0x13d0] sm:$0xff]
      %v812 = vld [vmem:[%s169 + $0x13d8] sm:$0xff]
      %v813 = vld [vmem:[%s169 + $0x13e0] sm:$0xff]
      %v814 = vld [vmem:[%s169 + $0x13e8] sm:$0xff]
      %v815 = vld [vmem:[%s169 + $0x13f0] sm:$0xff]
      %v816 = vld [vmem:[%s169 + $0x13f8] sm:$0xff]
      %v817 = vld [vmem:[%s169 + $0x1400] sm:$0xff]
      %v818 = vld [vmem:[%s169 + $0x1408] sm:$0xff]
      %v819 = vld [vmem:[%s169 + $0x1410] sm:$0xff]
      %v820 = vld [vmem:[%s169 + $0x1418] sm:$0xff]
      %v821 = vld [vmem:[%s169 + $0x1420] sm:$0xff]
      %v822 = vld [vmem:[%s169 + $0x1428] sm:$0xff]
      %v823 = vld [vmem:[%s169 + $0x1430] sm:$0xff]
      %v824 = vld [vmem:[%s169 + $0x1438] sm:$0xff]
      %v825 = vld [vmem:[%s169 + $0x1440] sm:$0xff]
      %v826 = vld [vmem:[%s169 + $0x1448] sm:$0xff]
      %v827 = vld [vmem:[%s169 + $0x1450] sm:$0xff]
      %v828 = vld [vmem:[%s169 + $0x1458] sm:$0xff]
      %v829 = vld [vmem:[%s169 + $0x1460] sm:$0xff]
      %v830 = vld [vmem:[%s169 + $0x1468] sm:$0xff]
      %v831 = vld [vmem:[%s169 + $0x1470] sm:$0xff]
      %v832 = vld [vmem:[%s169 + $0x1478] sm:$0xff]
      %v833 = vld [vmem:[%s169 + $0x1480] sm:$0xff]
      %v834 = vld [vmem:[%s169 + $0x1488] sm:$0xff]
      %v835 = vld [vmem:[%s169 + $0x1490] sm:$0xff]
      %v836 = vld [vmem:[%s169 + $0x1498] sm:$0xff]
      %v837 = vld [vmem:[%s169 + $0x14a0] sm:$0xff]
      %v838 = vld [vmem:[%s169 + $0x14a8] sm:$0xff]
      %v839 = vld [vmem:[%s169 + $0x14b0] sm:$0xff]
      %v840 = vld [vmem:[%s169 + $0x14b8] sm:$0xff]
      %v841 = vld [vmem:[%s169 + $0x14c0] sm:$0xff]
      %v842 = vld [vmem:[%s169 + $0x14c8] sm:$0xff]
      %v843 = vld [vmem:[%s169 + $0x14d0] sm:$0xff]
      %v844 = vld [vmem:[%s169 + $0x14d8] sm:$0xff]
      %v845 = vld [vmem:[%s1] sm:$0xff]
      %v846 = vld [vmem:[%s1 + $0x8] sm:$0xff]
      %v847 = vld [vmem:[%s1 + $0x10] sm:$0xff]
      %v848 = vld [vmem:[%s1 + $0x18] sm:$0xff]
      %v849 = vld [vmem:[%s1 + $0x20] sm:$0xff]
      %v850 = vld [vmem:[%s1 + $0x28] sm:$0xff]
      %v851 = vld [vmem:[%s1 + $0x30] sm:$0xff]
      %v852 = vld [vmem:[%s1 + $0x38] sm:$0xff]
      %v853 = vld [vmem:[%s1 + $0x40] sm:$0xff]
      %v854 = vld [vmem:[%s1 + $0x48] sm:$0xff]
      %v855 = vld [vmem:[%s1 + $0x50] sm:$0xff]
      %v856 = vld [vmem:[%s1 + $0x58] sm:$0xff]
      %v857 = vld [vmem:[%s1 + $0x60] sm:$0xff]
      %v858 = vld [vmem:[%s1 + $0x68] sm:$0xff]
      %v859 = vld [vmem:[%s1 + $0x70] sm:$0xff]
      %v860 = vld [vmem:[%s1 + $0x78] sm:$0xff]
      %v861 = vld [vmem:[%s1 + $0x80] sm:$0xff]
      %v862 = vld [vmem:[%s1 + $0x88] sm:$0xff]
      %v863 = vld [vmem:[%s1 + $0x90] sm:$0xff]
      %v864 = vld [vmem:[%s1 + $0x98] sm:$0xff]
      %v865 = vld [vmem:[%s1 + $0xa0] sm:$0xff]
      %v866 = vld [vmem:[%s1 + $0xa8] sm:$0xff]
      %v867 = vld [vmem:[%s1 + $0xb0] sm:$0xff]
      %v868 = vld [vmem:[%s1 + $0xb8] sm:$0xff]
      %v869 = vld [vmem:[%s1 + $0xc0] sm:$0xf]
      %v870 = vld [vmem:[%s2] sm:$0x1]
      %v872 = vlaneseq
      %v873 = vshrl.u32 %v872, 7
      %v874 = vsub.s32 0, %v873
      %v875 = vrot.slane %v870, %v874
      %vm877 = vcmask 556032
      %v879 = vsel %vm877, %v178, 0
      %v882 = vsel %vm877, %v180, 0
      %v885 = vsel %vm877, %v182, 0
      %v888 = vsel %vm877, %v184, 0
      %v891 = vsel %vm877, %v186, 0
      %v894 = vsel %vm877, %v188, 0
      %v897 = vsel %vm877, %v190, 0
      %v900 = vsel %vm877, %v192, 0
      %v903 = vsel %vm877, %v194, 0
      %v906 = vsel %vm877, %v196, 0
      %v909 = vsel %vm877, %v198, 0
      %v912 = vsel %vm877, %v200, 0
      %v915 = vsel %vm877, %v202, 0
      %v918 = vsel %vm877, %v204, 0
      %v921 = vsel %vm877, %v206, 0
      %v924 = vsel %vm877, %v208, 0
      %v927 = vsel %vm877, %v210, 0
      %v930 = vsel %vm877, %v212, 0
      %v933 = vsel %vm877, %v214, 0
      %v936 = vsel %vm877, %v216, 0
      %v939 = vsel %vm877, %v218, 0
      %v942 = vsel %vm877, %v220, 0
      %v945 = vsel %vm877, %v222, 0
      %v948 = vsel %vm877, %v224, 0
      %v951 = vsel %vm877, %v226, 0
      %v954 = vsel %vm877, %v228, 0
      %v957 = vsel %vm877, %v230, 0
      %v960 = vsel %vm877, %v232, 0
      %v963 = vsel %vm877, %v234, 0
      %v966 = vsel %vm877, %v236, 0
      %v969 = vsel %vm877, %v238, 0
      %v972 = vsel %vm877, %v240, 0
      %v975 = vsel %vm877, %v242, 0
      %v978 = vsel %vm877, %v244, 0
      %v981 = vsel %vm877, %v246, 0
      %v984 = vsel %vm877, %v248, 0
      %v987 = vsel %vm877, %v250, 0
      %v990 = vsel %vm877, %v252, 0
      %v993 = vsel %vm877, %v254, 0
      %v996 = vsel %vm877, %v256, 0
      %v999 = vsel %vm877, %v258, 0
      %v1002 = vsel %vm877, %v260, 0
      %v1005 = vsel %vm877, %v262, 0
      %v1008 = vsel %vm877, %v264, 0
      %v1011 = vsel %vm877, %v266, 0
      %v1014 = vsel %vm877, %v268, 0
      %v1017 = vsel %vm877, %v270, 0
      %v1020 = vsel %vm877, %v272, 0
      %v1023 = vsel %vm877, %v274, 0
      %v1026 = vsel %vm877, %v276, 0
      %v1029 = vsel %vm877, %v278, 0
      %v1032 = vsel %vm877, %v280, 0
      %v1035 = vsel %vm877, %v282, 0
      %v1038 = vsel %vm877, %v284, 0
      %v1041 = vsel %vm877, %v286, 0
      %v1044 = vsel %vm877, %v288, 0
      %v1047 = vsel %vm877, %v290, 0
      %v1050 = vsel %vm877, %v292, 0
      %v1053 = vsel %vm877, %v294, 0
      %v1056 = vsel %vm877, %v296, 0
      %v1059 = vsel %vm877, %v298, 0
      %v1062 = vsel %vm877, %v300, 0
      %v1065 = vsel %vm877, %v302, 0
      %v1068 = vsel %vm877, %v304, 0
      %v1071 = vsel %vm877, %v306, 0
      %v1074 = vsel %vm877, %v308, 0
      %v1077 = vsel %vm877, %v310, 0
      %v1080 = vsel %vm877, %v312, 0
      %v1083 = vsel %vm877, %v314, 0
      %v1086 = vsel %vm877, %v316, 0
      %v1089 = vsel %vm877, %v318, 0
      %v1092 = vsel %vm877, %v320, 0
      %v1095 = vsel %vm877, %v322, 0
      %v1098 = vsel %vm877, %v324, 0
      %v1101 = vsel %vm877, %v326, 0
      %v1104 = vsel %vm877, %v328, 0
      %v1107 = vsel %vm877, %v330, 0
      %v1110 = vsel %vm877, %v332, 0
      %v1113 = vsel %vm877, %v334, 0
      %v1116 = vsel %vm877, %v336, 0
      %v1119 = vsel %vm877, %v338, 0
      %v1122 = vsel %vm877, %v340, 0
      %v1125 = vsel %vm877, %v342, 0
      %v1128 = vsel %vm877, %v344, 0
      %v1131 = vsel %vm877, %v346, 0
      %v1134 = vsel %vm877, %v348, 0
      %v1137 = vsel %vm877, %v350, 0
      %v1140 = vsel %vm877, %v352, 0
      %v1143 = vsel %vm877, %v354, 0
      %v1146 = vsel %vm877, %v356, 0
      %v1149 = vsel %vm877, %v358, 0
      %v1152 = vsel %vm877, %v360, 0
      %v1155 = vsel %vm877, %v362, 0
      %v1158 = vsel %vm877, %v364, 0
      %v1161 = vsel %vm877, %v366, 0
      %v1164 = vsel %vm877, %v368, 0
      %v1167 = vsel %vm877, %v370, 0
      %v1170 = vsel %vm877, %v372, 0
      %v1173 = vsel %vm877, %v374, 0
      %v1176 = vsel %vm877, %v376, 0
      %v1179 = vsel %vm877, %v378, 0
      %v1182 = vsel %vm877, %v380, 0
      %v1185 = vsel %vm877, %v382, 0
      %v1188 = vsel %vm877, %v384, 0
      %v1191 = vsel %vm877, %v386, 0
      %v1194 = vsel %vm877, %v388, 0
      %v1197 = vsel %vm877, %v390, 0
      %v1200 = vsel %vm877, %v392, 0
      %v1203 = vsel %vm877, %v394, 0
      %v1206 = vsel %vm877, %v396, 0
      %v1209 = vsel %vm877, %v398, 0
      %v1212 = vsel %vm877, %v400, 0
      %v1215 = vsel %vm877, %v402, 0
      %v1218 = vsel %vm877, %v404, 0
      %v1221 = vsel %vm877, %v406, 0
      %v1224 = vsel %vm877, %v408, 0
      %v1227 = vsel %vm877, %v410, 0
      %v1230 = vsel %vm877, %v412, 0
      %v1233 = vsel %vm877, %v414, 0
      %v1236 = vsel %vm877, %v416, 0
      %v1239 = vsel %vm877, %v418, 0
      %v1242 = vsel %vm877, %v420, 0
      %v1245 = vsel %vm877, %v422, 0
      %v1248 = vsel %vm877, %v424, 0
      %v1251 = vsel %vm877, %v426, 0
      %v1254 = vsel %vm877, %v428, 0
      %v1257 = vsel %vm877, %v430, 0
      %v1260 = vsel %vm877, %v432, 0
      %v1263 = vsel %vm877, %v434, 0
      %v1266 = vsel %vm877, %v436, 0
      %v1269 = vsel %vm877, %v438, 0
      %v1272 = vsel %vm877, %v440, 0
      %v1275 = vsel %vm877, %v442, 0
      %v1278 = vsel %vm877, %v444, 0
      %v1281 = vsel %vm877, %v446, 0
      %v1284 = vsel %vm877, %v448, 0
      %v1287 = vsel %vm877, %v450, 0
      %v1290 = vsel %vm877, %v452, 0
      %v1293 = vsel %vm877, %v454, 0
      %v1296 = vsel %vm877, %v456, 0
      %v1299 = vsel %vm877, %v458, 0
      %v1302 = vsel %vm877, %v460, 0
      %v1305 = vsel %vm877, %v462, 0
      %v1308 = vsel %vm877, %v464, 0
      %v1311 = vsel %vm877, %v466, 0
      %v1314 = vsel %vm877, %v468, 0
      %v1317 = vsel %vm877, %v470, 0
      %v1320 = vsel %vm877, %v472, 0
      %v1323 = vsel %vm877, %v474, 0
      %v1326 = vsel %vm877, %v476, 0
      %v1329 = vsel %vm877, %v478, 0
      %v1332 = vsel %vm877, %v480, 0
      %v1335 = vsel %vm877, %v482, 0
      %v1338 = vsel %vm877, %v484, 0
      %v1341 = vsel %vm877, %v486, 0
      %v1344 = vsel %vm877, %v488, 0
      %v1347 = vsel %vm877, %v490, 0
      %v1350 = vsel %vm877, %v492, 0
      %v1353 = vsel %vm877, %v494, 0
      %v1356 = vsel %vm877, %v496, 0
      %v1359 = vsel %vm877, %v498, 0
      %v1362 = vsel %vm877, %v500, 0
      %v1365 = vsel %vm877, %v502, 0
      %v1368 = vsel %vm877, %v504, 0
      %v1371 = vsel %vm877, %v506, 0
      %v1374 = vsel %vm877, %v508, 0
      %v1377 = vsel %vm877, %v510, 0
      %v1380 = vsel %vm877, %v512, 0
      %v1383 = vsel %vm877, %v514, 0
      %v1386 = vsel %vm877, %v516, 0
      %v1389 = vsel %vm877, %v518, 0
      %v1392 = vsel %vm877, %v520, 0
      %v1395 = vsel %vm877, %v522, 0
      %v1398 = vsel %vm877, %v524, 0
      %v1401 = vsel %vm877, %v526, 0
      %v1404 = vsel %vm877, %v528, 0
      %v1407 = vsel %vm877, %v530, 0
      %v1410 = vsel %vm877, %v532, 0
      %v1413 = vsel %vm877, %v534, 0
      %v1416 = vsel %vm877, %v536, 0
      %v1419 = vsel %vm877, %v538, 0
      %v1422 = vsel %vm877, %v540, 0
      %v1425 = vsel %vm877, %v542, 0
      %v1428 = vsel %vm877, %v544, 0
      %v1431 = vsel %vm877, %v546, 0
      %v1434 = vsel %vm877, %v548, 0
      %v1437 = vsel %vm877, %v550, 0
      %v1440 = vsel %vm877, %v552, 0
      %v1443 = vsel %vm877, %v554, 0
      %v1446 = vsel %vm877, %v556, 0
      %v1449 = vsel %vm877, %v558, 0
      %v1452 = vsel %vm877, %v560, 0
      %v1455 = vsel %vm877, %v562, 0
      %v1458 = vsel %vm877, %v564, 0
      %v1461 = vsel %vm877, %v566, 0
      %v1464 = vsel %vm877, %v568, 0
      %v1467 = vsel %vm877, %v570, 0
      %v1470 = vsel %vm877, %v572, 0
      %v1473 = vsel %vm877, %v574, 0
      %v1476 = vsel %vm877, %v576, 0
      %v1479 = vsel %vm877, %v578, 0
      %v1482 = vsel %vm877, %v580, 0
      %v1485 = vsel %vm877, %v582, 0
      %v1488 = vsel %vm877, %v584, 0
      %v1491 = vsel %vm877, %v586, 0
      %v1494 = vsel %vm877, %v588, 0
      %v1497 = vsel %vm877, %v590, 0
      %v1500 = vsel %vm877, %v592, 0
      %v1503 = vsel %vm877, %v594, 0
      %v1506 = vsel %vm877, %v596, 0
      %v1509 = vsel %vm877, %v598, 0
      %v1512 = vsel %vm877, %v600, 0
      %v1515 = vsel %vm877, %v602, 0
      %v1518 = vsel %vm877, %v604, 0
      %v1521 = vsel %vm877, %v606, 0
      %v1524 = vsel %vm877, %v608, 0
      %v1527 = vsel %vm877, %v610, 0
      %v1530 = vsel %vm877, %v612, 0
      %v1533 = vsel %vm877, %v614, 0
      %v1536 = vsel %vm877, %v616, 0
      %v1539 = vsel %vm877, %v618, 0
      %v1542 = vsel %vm877, %v620, 0
      %v1545 = vsel %vm877, %v622, 0
      %v1548 = vsel %vm877, %v624, 0
      %v1551 = vsel %vm877, %v626, 0
      %v1554 = vsel %vm877, %v628, 0
      %v1557 = vsel %vm877, %v630, 0
      %v1560 = vsel %vm877, %v632, 0
      %v1563 = vsel %vm877, %v634, 0
      %v1566 = vsel %vm877, %v636, 0
      %v1569 = vsel %vm877, %v638, 0
      %v1572 = vsel %vm877, %v640, 0
      %v1575 = vsel %vm877, %v642, 0
      %v1578 = vsel %vm877, %v644, 0
      %v1581 = vsel %vm877, %v646, 0
      %v1584 = vsel %vm877, %v648, 0
      %v1587 = vsel %vm877, %v650, 0
      %v1590 = vsel %vm877, %v652, 0
      %v1593 = vsel %vm877, %v654, 0
      %v1596 = vsel %vm877, %v656, 0
      %v1599 = vsel %vm877, %v658, 0
      %v1602 = vsel %vm877, %v660, 0
      %v1605 = vsel %vm877, %v662, 0
      %v1608 = vsel %vm877, %v664, 0
      %v1611 = vsel %vm877, %v666, 0
      %v1614 = vsel %vm877, %v668, 0
      %v1617 = vsel %vm877, %v670, 0
      %v1620 = vsel %vm877, %v672, 0
      %v1623 = vsel %vm877, %v674, 0
      %v1626 = vsel %vm877, %v676, 0
      %v1629 = vsel %vm877, %v678, 0
      %v1632 = vsel %vm877, %v680, 0
      %v1635 = vsel %vm877, %v682, 0
      %v1638 = vsel %vm877, %v684, 0
      %v1641 = vsel %vm877, %v686, 0
      %v1644 = vsel %vm877, %v688, 0
      %v1647 = vsel %vm877, %v690, 0
      %v1650 = vsel %vm877, %v692, 0
      %v1653 = vsel %vm877, %v694, 0
      %v1656 = vsel %vm877, %v696, 0
      %v1659 = vsel %vm877, %v698, 0
      %v1662 = vsel %vm877, %v700, 0
      %v1665 = vsel %vm877, %v702, 0
      %v1668 = vsel %vm877, %v704, 0
      %v1671 = vsel %vm877, %v706, 0
      %v1674 = vsel %vm877, %v708, 0
      %v1677 = vsel %vm877, %v710, 0
      %v1680 = vsel %vm877, %v712, 0
      %v1683 = vsel %vm877, %v714, 0
      %v1686 = vsel %vm877, %v716, 0
      %v1689 = vsel %vm877, %v718, 0
      %v1692 = vsel %vm877, %v720, 0
      %v1695 = vsel %vm877, %v722, 0
      %v1698 = vsel %vm877, %v724, 0
      %v1701 = vsel %vm877, %v726, 0
      %v1704 = vsel %vm877, %v728, 0
      %v1707 = vsel %vm877, %v730, 0
      %v1710 = vsel %vm877, %v732, 0
      %v1713 = vsel %vm877, %v734, 0
      %v1716 = vsel %vm877, %v736, 0
      %v1719 = vsel %vm877, %v738, 0
      %v1722 = vsel %vm877, %v740, 0
      %v1725 = vsel %vm877, %v742, 0
      %v1728 = vsel %vm877, %v744, 0
      %v1731 = vsel %vm877, %v746, 0
      %v1734 = vsel %vm877, %v748, 0
      %v1737 = vsel %vm877, %v750, 0
      %v1740 = vsel %vm877, %v752, 0
      %v1743 = vsel %vm877, %v754, 0
      %v1746 = vsel %vm877, %v756, 0
      %v1749 = vsel %vm877, %v758, 0
      %v1752 = vsel %vm877, %v760, 0
      %v1755 = vsel %vm877, %v762, 0
      %v1758 = vsel %vm877, %v764, 0
      %v1761 = vsel %vm877, %v766, 0
      %v1764 = vsel %vm877, %v768, 0
      %v1767 = vsel %vm877, %v770, 0
      %v1770 = vsel %vm877, %v772, 0
      %v1773 = vsel %vm877, %v774, 0
      %v1776 = vsel %vm877, %v776, 0
      %v1779 = vsel %vm877, %v778, 0
      %v1782 = vsel %vm877, %v780, 0
      %v1785 = vsel %vm877, %v782, 0
      %v1788 = vsel %vm877, %v784, 0
      %v1791 = vsel %vm877, %v786, 0
      %v1794 = vsel %vm877, %v788, 0
      %v1797 = vsel %vm877, %v790, 0
      %v1800 = vsel %vm877, %v792, 0
      %v1803 = vsel %vm877, %v794, 0
      %v1806 = vsel %vm877, %v796, 0
      %v1809 = vsel %vm877, %v798, 0
      %v1812 = vsel %vm877, %v800, 0
      %v1815 = vsel %vm877, %v802, 0
      %v1818 = vsel %vm877, %v804, 0
      %v1821 = vsel %vm877, %v806, 0
      %v1824 = vsel %vm877, %v808, 0
      %v1827 = vsel %vm877, %v810, 0
      %v1830 = vsel %vm877, %v812, 0
      %v1833 = vsel %vm877, %v814, 0
      %v1836 = vsel %vm877, %v816, 0
      %v1839 = vsel %vm877, %v818, 0
      %v1842 = vsel %vm877, %v820, 0
      %v1845 = vsel %vm877, %v822, 0
      %v1848 = vsel %vm877, %v824, 0
      %v1851 = vsel %vm877, %v826, 0
      %v1854 = vsel %vm877, %v828, 0
      %v1857 = vsel %vm877, %v830, 0
      %v1860 = vsel %vm877, %v832, 0
      %v1863 = vsel %vm877, %v834, 0
      %v1866 = vsel %vm877, %v836, 0
      %v1869 = vsel %vm877, %v838, 0
      %v1872 = vsel %vm877, %v840, 0
      %v1875 = vsel %vm877, %v842, 0
      %v1878 = vsel %vm877, %v844, 0
      %vm1880 = vcmask 1043456
      %v1882 = vsel %vm1880, %v869, 0
      %1884 = vmatprep.subr.mxu0 0.0
      %1885 = vmatpush1.msra.mxu0 %v845
      %1886 = vmatprep.subr.mxu0 0.0
      %1887 = vmatpush1.msra.mxu0 %v846
      %1888 = vmatprep.subr.mxu0 0.0
      %1889 = vmatpush1.msra.mxu0 %v847
      %1890 = vmatprep.subr.mxu0 0.0
      %1891 = vmatpush1.msra.mxu0 %v848
      %1892 = vmatprep.subr.mxu0 0.0
      %1893 = vmatpush1.msra.mxu0 %v849
      %1894 = vmatprep.subr.mxu0 0.0
      %1895 = vmatpush1.msra.mxu0 %v850
      %1896 = vmatprep.subr.mxu0 0.0
      %1897 = vmatpush1.msra.mxu0 %v851
      %1898 = vmatprep.subr.mxu0 0.0
      %1899 = vmatpush1.msra.mxu0 %v852
      %1900 = vmatprep.subr.mxu0 0.0
      %1901 = vmatpush1.msra.mxu0 %v853
      %1902 = vmatprep.subr.mxu0 0.0
      %1903 = vmatpush1.msra.mxu0 %v854
      %1904 = vmatprep.subr.mxu0 0.0
      %1905 = vmatpush1.msra.mxu0 %v855
      %1906 = vmatprep.subr.mxu0 0.0
      %1907 = vmatpush1.msra.mxu0 %v856
      %1908 = vmatprep.subr.mxu0 0.0
      %1909 = vmatpush1.msra.mxu0 %v857
      %1910 = vmatprep.subr.mxu0 0.0
      %1911 = vmatpush1.msra.mxu0 %v858
      %1912 = vmatprep.subr.mxu0 0.0
      %1913 = vmatpush1.msra.mxu0 %v859
      %1914 = vmatprep.subr.mxu0 0.0
      %1915 = vmatpush1.msra.mxu0 %v860
      %1916 = vmatprep.subr.mxu0 0.0
      %1917 = vmatpush1.msra.mxu0 %v861
      %1918 = vmatprep.subr.mxu0 0.0
      %1919 = vmatpush1.msra.mxu0 %v862
      %1920 = vmatprep.subr.mxu0 0.0
      %1921 = vmatpush1.msra.mxu0 %v863
      %1922 = vmatprep.subr.mxu0 0.0
      %1923 = vmatpush1.msra.mxu0 %v864
      %1924 = vmatprep.subr.mxu0 0.0
      %1925 = vmatpush1.msra.mxu0 %v865
      %1926 = vmatprep.subr.mxu0 0.0
      %1927 = vmatpush1.msra.mxu0 %v866
      %1928 = vmatprep.subr.mxu0 0.0
      %1929 = vmatpush1.msra.mxu0 %v867
      %1930 = vmatprep.subr.mxu0 0.0
      %1931 = vmatpush1.msra.mxu0 %v868
      %1932 = vmatprep.subr.mxu0 0.0
      %1933 = vmatpush1.msra.mxu0 %v1882
      %1934 = vmatprep.subr.mxu0 0.0
      %1935 = vmatpush1.msra.mxu0 0.0
      %1936 = vmatprep.subr.mxu0 0.0
      %1937 = vmatpush1.msra.mxu0 0.0
      %1938 = vmatprep.subr.mxu0 0.0
      %1939 = vmatpush1.msra.mxu0 0.0
      %1940 = vmatprep.subr.mxu0 0.0
      %1941 = vmatpush1.msra.mxu0 0.0
      %1942 = vmatprep.subr.mxu0 0.0
      %1943 = vmatpush1.msra.mxu0 0.0
      %1944 = vmatprep.subr.mxu0 0.0
      %1945 = vmatpush1.msra.mxu0 0.0
      %1946 = vmatprep.subr.mxu0 0.0
      %1947 = vmatpush1.msra.mxu0 0.0
      %1948 = vmatprep.mubr.f32.mxu0 %v879
      %1949 = vmatmul.mubr.f32.gmra.mrb[0].mxu0 %v177
      %v1950 = vpop.f32.mrb[0].mxu0
      %v1951 = vadd.f32 %v875, %v1950
      %v1952 = vpop.f32.mrb[0].mxu0
      %1953 = vmatprep.mubr.f32.mxu0 %v882
      %1954 = vmatmul.mubr.f32.gmra.mrb[0].mxu0 %v179
      %v1955 = vpop.f32.mrb[0].mxu0
      %v1956 = vadd.f32 %v875, %v1955
      %v1957 = vpop.f32.mrb[0].mxu0
      %1958 = vmatprep.mubr.f32.mxu0 %v885
      %1959 = vmatmul.mubr.f32.gmra.mrb[0].mxu0 %v181
      %v1960 = vpop.f32.mrb[0].mxu0
      %v1961 = vadd.f32 %v875, %v1960
      %v1962 = vpop.f32.mrb[0].mxu0
      %1963 = vmatprep.mubr.f32.mxu0 %v888
      %1964 = vmatmul.mubr.f32.gmra.mrb[0].mxu0 %v183
      %v1965 = vpop.f32.mrb[0].mxu0
      %v1966 = vadd.f32 %v875, %v1965
      %v1967 = vpop.f32.mrb[0].mxu0
      %1968 = vmatprep.mubr.f32.mxu0 %v891
      %1969 = vmatmul.mubr.f32.gmra.mrb[0].mxu0 %v185
      %v1970 = vpop.f32.mrb[0].mxu0
      %v1971 = vadd.f32 %v875, %v1970
      %v1972 = vpop.f32.mrb[0].mxu0
      %1973 = vmatprep.mubr.f32.mxu0 %v894
      %1974 = vmatmul.mubr.f32.gmra.mrb[0].mxu0 %v187
      %v1975 = vpop.f32.mrb[0].mxu0
      %v1976 = vadd.f32 %v875, %v1975
      %v1977 = vpop.f32.mrb[0].mxu0
      %1978 = vmatprep.mubr.f32.mxu0 %v897
      %1979 = vmatmul.mubr.f32.gmra.mrb[0].mxu0 %v189
      %v1980 = vpop.f32.mrb[0].mxu0
      %v1981 = vadd.f32 %v875, %v1980
      %v1982 = vpop.f32.mrb[0].mxu0
      %1983 = vmatprep.mubr.f32.mxu0 %v900
      %1984 = vmatmul.mubr.f32.gmra.mrb[0].mxu0 %v191
      %v1985 = vpop.f32.mrb[0].mxu0
      %v1986 = vadd.f32 %v875, %v1985
      %v1987 = vpop.f32.mrb[0].mxu0
      %1988 = vmatprep.mubr.f32.mxu0 %v903
      %1989 = vmatmul.mubr.f32.gmra.mrb[0].mxu0 %v193
      %v1990 = vpop.f32.mrb[0].mxu0
      %v1991 = vadd.f32 %v875, %v1990
      %v1992 = vpop.f32.mrb[0].mxu0
      %1993 = vmatprep.mubr.f32.mxu0 %v906
      %1994 = vmatmul.mubr.f32.gmra.mrb[0].mxu0 %v195
      %v1995 = vpop.f32.mrb[0].mxu0
      %v1996 = vadd.f32 %v875, %v1995
      %v1997 = vpop.f32.mrb[0].mxu0
      %1998 = vmatprep.mubr.f32.mxu0 %v909
      %1999 = vmatmul.mubr.f32.gmra.mrb[0].mxu0 %v197
      %v2000 = vpop.f32.mrb[0].mxu0
      %v2001 = vadd.f32 %v875, %v2000
      %v2002 = vpop.f32.mrb[0].mxu0
      %2003 = vmatprep.mubr.f32.mxu0 %v912
      %2004 = vmatmul.mubr.f32.gmra.mrb[0].mxu0 %v199
      %v2005 = vpop.f32.mrb[0].mxu0
      %v2006 = vadd.f32 %v875, %v2005
      %v2007 = vpop.f32.mrb[0].mxu0
      %2008 = vmatprep.mubr.f32.mxu0 %v915
      %2009 = vmatmul.mubr.f32.gmra.mrb[0].mxu0 %v201
      %v2010 = vpop.f32.mrb[0].mxu0
      %v2011 = vadd.f32 %v875, %v2010
      %v2012 = vpop.f32.mrb[0].mxu0
      %2013 = vmatprep.mubr.f32.mxu0 %v918
      %2014 = vmatmul.mubr.f32.gmra.mrb[0].mxu0 %v203
      %v2015 = vpop.f32.mrb[0].mxu0
      %v2016 = vadd.f32 %v875, %v2015
      %v2017 = vpop.f32.mrb[0].mxu0
      %2018 = vmatprep.mubr.f32.mxu0 %v921
      %2019 = vmatmul.mubr.f32.gmra.mrb[0].mxu0 %v205
      %v2020 = vpop.f32.mrb[0].mxu0
      %v2021 = vadd.f32 %v875, %v2020
      %v2022 = vpop.f32.mrb[0].mxu0
      %2023 = vmatprep.mubr.f32.mxu0 %v924
      %2024 = vmatmul.mubr.f32.gmra.mrb[0].mxu0 %v207
      %v2025 = vpop.f32.mrb[0].mxu0
      %v2026 = vadd.f32 %v875, %v2025
      %v2027 = vpop.f32.mrb[0].mxu0
      %2028 = vmatprep.mubr.f32.mxu0 %v927
      %2029 = vmatmul.mubr.f32.gmra.mrb[0].mxu0 %v209
      %v2030 = vpop.f32.mrb[0].mxu0
      %v2031 = vadd.f32 %v875, %v2030
      %v2032 = vpop.f32.mrb[0].mxu0
      %2033 = vmatprep.mubr.f32.mxu0 %v930
      %2034 = vmatmul.mubr.f32.gmra.mrb[0].mxu0 %v211
      %v2035 = vpop.f32.mrb[0].mxu0
      %v2036 = vadd.f32 %v875, %v2035
      %v2037 = vpop.f32.mrb[0].mxu0
      %2038 = vmatprep.mubr.f32.mxu0 %v933
      %2039 = vmatmul.mubr.f32.gmra.mrb[0].mxu0 %v213
      %v2040 = vpop.f32.mrb[0].mxu0
      %v2041 = vadd.f32 %v875, %v2040
      %v2042 = vpop.f32.mrb[0].mxu0
      %2043 = vmatprep.mubr.f32.mxu0 %v936
      %2044 = vmatmul.mubr.f32.gmra.mrb[0].mxu0 %v215
      %v2045 = vpop.f32.mrb[0].mxu0
      %v2046 = vadd.f32 %v875, %v2045
      %v2047 = vpop.f32.mrb[0].mxu0
      %2048 = vmatprep.mubr.f32.mxu0 %v939
      %2049 = vmatmul.mubr.f32.gmra.mrb[0].mxu0 %v217
      %v2050 = vpop.f32.mrb[0].mxu0
      %v2051 = vadd.f32 %v875, %v2050
      %v2052 = vpop.f32.mrb[0].mxu0
      %2053 = vmatprep.mubr.f32.mxu0 %v942
      %2054 = vmatmul.mubr.f32.gmra.mrb[0].mxu0 %v219
      %v2055 = vpop.f32.mrb[0].mxu0
      %v2056 = vadd.f32 %v875, %v2055
      %v2057 = vpop.f32.mrb[0].mxu0
      %2058 = vmatprep.mubr.f32.mxu0 %v945
      %2059 = vmatmul.mubr.f32.gmra.mrb[0].mxu0 %v221
      %v2060 = vpop.f32.mrb[0].mxu0
      %v2061 = vadd.f32 %v875, %v2060
      %v2062 = vpop.f32.mrb[0].mxu0
      %2063 = vmatprep.mubr.f32.mxu0 %v948
      %2064 = vmatmul.mubr.f32.gmra.mrb[0].mxu0 %v223
      %v2065 = vpop.f32.mrb[0].mxu0
      %v2066 = vadd.f32 %v875, %v2065
      %v2067 = vpop.f32.mrb[0].mxu0
      %2068 = vmatprep.mubr.f32.mxu0 %v951
      %2069 = vmatmul.mubr.f32.gmra.mrb[0].mxu0 %v225
      %v2070 = vpop.f32.mrb[0].mxu0
      %v2071 = vadd.f32 %v875, %v2070
      %v2072 = vpop.f32.mrb[0].mxu0
      %2073 = vmatprep.mubr.f32.mxu0 %v954
      %2074 = vmatmul.mubr.f32.gmra.mrb[0].mxu0 %v227
      %v2075 = vpop.f32.mrb[0].mxu0
      %v2076 = vadd.f32 %v875, %v2075
      %v2077 = vpop.f32.mrb[0].mxu0
      %2078 = vmatprep.mubr.f32.mxu0 %v957
      %2079 = vmatmul.mubr.f32.gmra.mrb[0].mxu0 %v229
      %v2080 = vpop.f32.mrb[0].mxu0
      %v2081 = vadd.f32 %v875, %v2080
      %v2082 = vpop.f32.mrb[0].mxu0
      %2083 = vmatprep.mubr.f32.mxu0 %v960
      %2084 = vmatmul.mubr.f32.gmra.mrb[0].mxu0 %v231
      %v2085 = vpop.f32.mrb[0].mxu0
      %v2086 = vadd.f32 %v875, %v2085
      %v2087 = vpop.f32.mrb[0].mxu0
      %2088 = vmatprep.mubr.f32.mxu0 %v963
      %2089 = vmatmul.mubr.f32.gmra.mrb[0].mxu0 %v233
      %v2090 = vpop.f32.mrb[0].mxu0
      %v2091 = vadd.f32 %v875, %v2090
      %v2092 = vpop.f32.mrb[0].mxu0
      %2093 = vmatprep.mubr.f32.mxu0 %v966
      %2094 = vmatmul.mubr.f32.gmra.mrb[0].mxu0 %v235
      %v2095 = vpop.f32.mrb[0].mxu0
      %v2096 = vadd.f32 %v875, %v2095
      %v2097 = vpop.f32.mrb[0].mxu0
      %2098 = vmatprep.mubr.f32.mxu0 %v969
      %2099 = vmatmul.mubr.f32.gmra.mrb[0].mxu0 %v237
      %v2100 = vpop.f32.mrb[0].mxu0
      %v2101 = vadd.f32 %v875, %v2100
      %v2102 = vpop.f32.mrb[0].mxu0
      %2103 = vmatprep.mubr.f32.mxu0 %v972
      %2104 = vmatmul.mubr.f32.gmra.mrb[0].mxu0 %v239
      %v2105 = vpop.f32.mrb[0].mxu0
      %v2106 = vadd.f32 %v875, %v2105
      %v2107 = vpop.f32.mrb[0].mxu0
      %2108 = vmatprep.mubr.f32.mxu0 %v975
      %2109 = vmatmul.mubr.f32.gmra.mrb[0].mxu0 %v241
      %v2110 = vpop.f32.mrb[0].mxu0
      %v2111 = vadd.f32 %v875, %v2110
      %v2112 = vpop.f32.mrb[0].mxu0
      %2113 = vmatprep.mubr.f32.mxu0 %v978
      %2114 = vmatmul.mubr.f32.gmra.mrb[0].mxu0 %v243
      %v2115 = vpop.f32.mrb[0].mxu0
      %v2116 = vadd.f32 %v875, %v2115
      %v2117 = vpop.f32.mrb[0].mxu0
      %2118 = vmatprep.mubr.f32.mxu0 %v981
      %2119 = vmatmul.mubr.f32.gmra.mrb[0].mxu0 %v245
      %v2120 = vpop.f32.mrb[0].mxu0
      %v2121 = vadd.f32 %v875, %v2120
      %v2122 = vpop.f32.mrb[0].mxu0
      %2123 = vmatprep.mubr.f32.mxu0 %v984
      %2124 = vmatmul.mubr.f32.gmra.mrb[0].mxu0 %v247
      %v2125 = vpop.f32.mrb[0].mxu0
      %v2126 = vadd.f32 %v875, %v2125
      %v2127 = vpop.f32.mrb[0].mxu0
      %2128 = vmatprep.mubr.f32.mxu0 %v987
      %2129 = vmatmul.mubr.f32.gmra.mrb[0].mxu0 %v249
      %v2130 = vpop.f32.mrb[0].mxu0
      %v2131 = vadd.f32 %v875, %v2130
      %v2132 = vpop.f32.mrb[0].mxu0
      %2133 = vmatprep.mubr.f32.mxu0 %v990
      %2134 = vmatmul.mubr.f32.gmra.mrb[0].mxu0 %v251
      %v2135 = vpop.f32.mrb[0].mxu0
      %v2136 = vadd.f32 %v875, %v2135
      %v2137 = vpop.f32.mrb[0].mxu0
      %2138 = vmatprep.mubr.f32.mxu0 %v993
      %2139 = vmatmul.mubr.f32.gmra.mrb[0].mxu0 %v253
      %v2140 = vpop.f32.mrb[0].mxu0
      %v2141 = vadd.f32 %v875, %v2140
      %v2142 = vpop.f32.mrb[0].mxu0
      %2143 = vmatprep.mubr.f32.mxu0 %v996
      %2144 = vmatmul.mubr.f32.gmra.mrb[0].mxu0 %v255
      %v2145 = vpop.f32.mrb[0].mxu0
      %v2146 = vadd.f32 %v875, %v2145
      %v2147 = vpop.f32.mrb[0].mxu0
      %2148 = vmatprep.mubr.f32.mxu0 %v999
      %2149 = vmatmul.mubr.f32.gmra.mrb[0].mxu0 %v257
      %v2150 = vpop.f32.mrb[0].mxu0
      %v2151 = vadd.f32 %v875, %v2150
      %v2152 = vpop.f32.mrb[0].mxu0
      %2153 = vmatprep.mubr.f32.mxu0 %v1002
      %2154 = vmatmul.mubr.f32.gmra.mrb[0].mxu0 %v259
      %v2155 = vpop.f32.mrb[0].mxu0
      %v2156 = vadd.f32 %v875, %v2155
      %v2157 = vpop.f32.mrb[0].mxu0
      %2158 = vmatprep.mubr.f32.mxu0 %v1005
      %2159 = vmatmul.mubr.f32.gmra.mrb[0].mxu0 %v261
      %v2160 = vpop.f32.mrb[0].mxu0
      %v2161 = vadd.f32 %v875, %v2160
      %v2162 = vpop.f32.mrb[0].mxu0
      %2163 = vmatprep.mubr.f32.mxu0 %v1008
      %2164 = vmatmul.mubr.f32.gmra.mrb[0].mxu0 %v263
      %v2165 = vpop.f32.mrb[0].mxu0
      %v2166 = vadd.f32 %v875, %v2165
      %v2167 = vpop.f32.mrb[0].mxu0
      %2168 = vmatprep.mubr.f32.mxu0 %v1011
      %2169 = vmatmul.mubr.f32.gmra.mrb[0].mxu0 %v265
      %v2170 = vpop.f32.mrb[0].mxu0
      %v2171 = vadd.f32 %v875, %v2170
      %v2172 = vpop.f32.mrb[0].mxu0
      %2173 = vmatprep.mubr.f32.mxu0 %v1014
      %2174 = vmatmul.mubr.f32.gmra.mrb[0].mxu0 %v267
      %v2175 = vpop.f32.mrb[0].mxu0
      %v2176 = vadd.f32 %v875, %v2175
      %v2177 = vpop.f32.mrb[0].mxu0
      %2178 = vmatprep.mubr.f32.mxu0 %v1017
      %2179 = vmatmul.mubr.f32.gmra.mrb[0].mxu0 %v269
      %v2180 = vpop.f32.mrb[0].mxu0
      %v2181 = vadd.f32 %v875, %v2180
      %v2182 = vpop.f32.mrb[0].mxu0
      %2183 = vmatprep.mubr.f32.mxu0 %v1020
      %2184 = vmatmul.mubr.f32.gmra.mrb[0].mxu0 %v271
      %v2185 = vpop.f32.mrb[0].mxu0
      %v2186 = vadd.f32 %v875, %v2185
      %v2187 = vpop.f32.mrb[0].mxu0
      %2188 = vmatprep.mubr.f32.mxu0 %v1023
      %2189 = vmatmul.mubr.f32.gmra.mrb[0].mxu0 %v273
      %v2190 = vpop.f32.mrb[0].mxu0
      %v2191 = vadd.f32 %v875, %v2190
      %v2192 = vpop.f32.mrb[0].mxu0
      %2193 = vmatprep.mubr.f32.mxu0 %v1026
      %2194 = vmatmul.mubr.f32.gmra.mrb[0].mxu0 %v275
      %v2195 = vpop.f32.mrb[0].mxu0
      %v2196 = vadd.f32 %v875, %v2195
      %v2197 = vpop.f32.mrb[0].mxu0
      %2198 = vmatprep.mubr.f32.mxu0 %v1029
      %2199 = vmatmul.mubr.f32.gmra.mrb[0].mxu0 %v277
      %v2200 = vpop.f32.mrb[0].mxu0
      %v2201 = vadd.f32 %v875, %v2200
      %v2202 = vpop.f32.mrb[0].mxu0
      %2203 = vmatprep.mubr.f32.mxu0 %v1032
      %2204 = vmatmul.mubr.f32.gmra.mrb[0].mxu0 %v279
      %v2205 = vpop.f32.mrb[0].mxu0
      %v2206 = vadd.f32 %v875, %v2205
      %v2207 = vpop.f32.mrb[0].mxu0
      %2208 = vmatprep.mubr.f32.mxu0 %v1035
      %2209 = vmatmul.mubr.f32.gmra.mrb[0].mxu0 %v281
      %v2210 = vpop.f32.mrb[0].mxu0
      %v2211 = vadd.f32 %v875, %v2210
      %v2212 = vpop.f32.mrb[0].mxu0
      %2213 = vmatprep.mubr.f32.mxu0 %v1038
      %2214 = vmatmul.mubr.f32.gmra.mrb[0].mxu0 %v283
      %v2215 = vpop.f32.mrb[0].mxu0
      %v2216 = vadd.f32 %v875, %v2215
      %v2217 = vpop.f32.mrb[0].mxu0
      %2218 = vmatprep.mubr.f32.mxu0 %v1041
      %2219 = vmatmul.mubr.f32.gmra.mrb[0].mxu0 %v285
      %v2220 = vpop.f32.mrb[0].mxu0
      %v2221 = vadd.f32 %v875, %v2220
      %v2222 = vpop.f32.mrb[0].mxu0
      %2223 = vmatprep.mubr.f32.mxu0 %v1044
      %2224 = vmatmul.mubr.f32.gmra.mrb[0].mxu0 %v287
      %v2225 = vpop.f32.mrb[0].mxu0
      %v2226 = vadd.f32 %v875, %v2225
      %v2227 = vpop.f32.mrb[0].mxu0
      %2228 = vmatprep.mubr.f32.mxu0 %v1047
      %2229 = vmatmul.mubr.f32.gmra.mrb[0].mxu0 %v289
      %v2230 = vpop.f32.mrb[0].mxu0
      %v2231 = vadd.f32 %v875, %v2230
      %v2232 = vpop.f32.mrb[0].mxu0
      %2233 = vmatprep.mubr.f32.mxu0 %v1050
      %2234 = vmatmul.mubr.f32.gmra.mrb[0].mxu0 %v291
      %v2235 = vpop.f32.mrb[0].mxu0
      %v2236 = vadd.f32 %v875, %v2235
      %v2237 = vpop.f32.mrb[0].mxu0
      %2238 = vmatprep.mubr.f32.mxu0 %v1053
      %2239 = vmatmul.mubr.f32.gmra.mrb[0].mxu0 %v293
      %v2240 = vpop.f32.mrb[0].mxu0
      %v2241 = vadd.f32 %v875, %v2240
      %v2242 = vpop.f32.mrb[0].mxu0
      %2243 = vmatprep.mubr.f32.mxu0 %v1056
      %2244 = vmatmul.mubr.f32.gmra.mrb[0].mxu0 %v295
      %v2245 = vpop.f32.mrb[0].mxu0
      %v2246 = vadd.f32 %v875, %v2245
      %v2247 = vpop.f32.mrb[0].mxu0
      %2248 = vmatprep.mubr.f32.mxu0 %v1059
      %2249 = vmatmul.mubr.f32.gmra.mrb[0].mxu0 %v297
      %v2250 = vpop.f32.mrb[0].mxu0
      %v2251 = vadd.f32 %v875, %v2250
      %v2252 = vpop.f32.mrb[0].mxu0
      %2253 = vmatprep.mubr.f32.mxu0 %v1062
      %2254 = vmatmul.mubr.f32.gmra.mrb[0].mxu0 %v299
      %v2255 = vpop.f32.mrb[0].mxu0
      %v2256 = vadd.f32 %v875, %v2255
      %v2257 = vpop.f32.mrb[0].mxu0
      %2258 = vmatprep.mubr.f32.mxu0 %v1065
      %2259 = vmatmul.mubr.f32.gmra.mrb[0].mxu0 %v301
      %v2260 = vpop.f32.mrb[0].mxu0
      %v2261 = vadd.f32 %v875, %v2260
      %v2262 = vpop.f32.mrb[0].mxu0
      %2263 = vmatprep.mubr.f32.mxu0 %v1068
      %2264 = vmatmul.mubr.f32.gmra.mrb[0].mxu0 %v303
      %v2265 = vpop.f32.mrb[0].mxu0
      %v2266 = vadd.f32 %v875, %v2265
      %v2267 = vpop.f32.mrb[0].mxu0
      %2268 = vmatprep.mubr.f32.mxu0 %v1071
      %2269 = vmatmul.mubr.f32.gmra.mrb[0].mxu0 %v305
      %v2270 = vpop.f32.mrb[0].mxu0
      %v2271 = vadd.f32 %v875, %v2270
      %v2272 = vpop.f32.mrb[0].mxu0
      %2273 = vmatprep.mubr.f32.mxu0 %v1074
      %2274 = vmatmul.mubr.f32.gmra.mrb[0].mxu0 %v307
      %v2275 = vpop.f32.mrb[0].mxu0
      %v2276 = vadd.f32 %v875, %v2275
      %v2277 = vpop.f32.mrb[0].mxu0
      %2278 = vmatprep.mubr.f32.mxu0 %v1077
      %2279 = vmatmul.mubr.f32.gmra.mrb[0].mxu0 %v309
      %v2280 = vpop.f32.mrb[0].mxu0
      %v2281 = vadd.f32 %v875, %v2280
      %v2282 = vpop.f32.mrb[0].mxu0
      %2283 = vmatprep.mubr.f32.mxu0 %v1080
      %2284 = vmatmul.mubr.f32.gmra.mrb[0].mxu0 %v311
      %v2285 = vpop.f32.mrb[0].mxu0
      %v2286 = vadd.f32 %v875, %v2285
      %v2287 = vpop.f32.mrb[0].mxu0
      %2288 = vmatprep.mubr.f32.mxu0 %v1083
      %2289 = vmatmul.mubr.f32.gmra.mrb[0].mxu0 %v313
      %v2290 = vpop.f32.mrb[0].mxu0
      %v2291 = vadd.f32 %v875, %v2290
      %v2292 = vpop.f32.mrb[0].mxu0
      %2293 = vmatprep.mubr.f32.mxu0 %v1086
      %2294 = vmatmul.mubr.f32.gmra.mrb[0].mxu0 %v315
      %v2295 = vpop.f32.mrb[0].mxu0
      %v2296 = vadd.f32 %v875, %v2295
      %v2297 = vpop.f32.mrb[0].mxu0
      %2298 = vmatprep.mubr.f32.mxu0 %v1089
      %2299 = vmatmul.mubr.f32.gmra.mrb[0].mxu0 %v317
      %v2300 = vpop.f32.mrb[0].mxu0
      %v2301 = vadd.f32 %v875, %v2300
      %v2302 = vpop.f32.mrb[0].mxu0
      %2303 = vmatprep.mubr.f32.mxu0 %v1092
      %2304 = vmatmul.mubr.f32.gmra.mrb[0].mxu0 %v319
      %v2305 = vpop.f32.mrb[0].mxu0
      %v2306 = vadd.f32 %v875, %v2305
      %v2307 = vpop.f32.mrb[0].mxu0
      %2308 = vmatprep.mubr.f32.mxu0 %v1095
      %2309 = vmatmul.mubr.f32.gmra.mrb[0].mxu0 %v321
      %v2310 = vpop.f32.mrb[0].mxu0
      %v2311 = vadd.f32 %v875, %v2310
      %v2312 = vpop.f32.mrb[0].mxu0
      %2313 = vmatprep.mubr.f32.mxu0 %v1098
      %2314 = vmatmul.mubr.f32.gmra.mrb[0].mxu0 %v323
      %v2315 = vpop.f32.mrb[0].mxu0
      %v2316 = vadd.f32 %v875, %v2315
      %v2317 = vpop.f32.mrb[0].mxu0
      %2318 = vmatprep.mubr.f32.mxu0 %v1101
      %2319 = vmatmul.mubr.f32.gmra.mrb[0].mxu0 %v325
      %v2320 = vpop.f32.mrb[0].mxu0
      %v2321 = vadd.f32 %v875, %v2320
      %v2322 = vpop.f32.mrb[0].mxu0
      %2323 = vmatprep.mubr.f32.mxu0 %v1104
      %2324 = vmatmul.mubr.f32.gmra.mrb[0].mxu0 %v327
      %v2325 = vpop.f32.mrb[0].mxu0
      %v2326 = vadd.f32 %v875, %v2325
      %v2327 = vpop.f32.mrb[0].mxu0
      %2328 = vmatprep.mubr.f32.mxu0 %v1107
      %2329 = vmatmul.mubr.f32.gmra.mrb[0].mxu0 %v329
      %v2330 = vpop.f32.mrb[0].mxu0
      %v2331 = vadd.f32 %v875, %v2330
      %v2332 = vpop.f32.mrb[0].mxu0
      %2333 = vmatprep.mubr.f32.mxu0 %v1110
      %2334 = vmatmul.mubr.f32.gmra.mrb[0].mxu0 %v331
      %v2335 = vpop.f32.mrb[0].mxu0
      %v2336 = vadd.f32 %v875, %v2335
      %v2337 = vpop.f32.mrb[0].mxu0
      %2338 = vmatprep.mubr.f32.mxu0 %v1113
      %2339 = vmatmul.mubr.f32.gmra.mrb[0].mxu0 %v333
      %v2340 = vpop.f32.mrb[0].mxu0
      %v2341 = vadd.f32 %v875, %v2340
      %v2342 = vpop.f32.mrb[0].mxu0
      %2343 = vmatprep.mubr.f32.mxu0 %v1116
      %2344 = vmatmul.mubr.f32.gmra.mrb[0].mxu0 %v335
      %v2345 = vpop.f32.mrb[0].mxu0
      %v2346 = vadd.f32 %v875, %v2345
      %v2347 = vpop.f32.mrb[0].mxu0
      %2348 = vmatprep.mubr.f32.mxu0 %v1119
      %2349 = vmatmul.mubr.f32.gmra.mrb[0].mxu0 %v337
      %v2350 = vpop.f32.mrb[0].mxu0
      %v2351 = vadd.f32 %v875, %v2350
      %v2352 = vpop.f32.mrb[0].mxu0
      %2353 = vmatprep.mubr.f32.mxu0 %v1122
      %2354 = vmatmul.mubr.f32.gmra.mrb[0].mxu0 %v339
      %v2355 = vpop.f32.mrb[0].mxu0
      %v2356 = vadd.f32 %v875, %v2355
      %v2357 = vpop.f32.mrb[0].mxu0
      %2358 = vmatprep.mubr.f32.mxu0 %v1125
      %2359 = vmatmul.mubr.f32.gmra.mrb[0].mxu0 %v341
      %v2360 = vpop.f32.mrb[0].mxu0
      %v2361 = vadd.f32 %v875, %v2360
      %v2362 = vpop.f32.mrb[0].mxu0
      %2363 = vmatprep.mubr.f32.mxu0 %v1128
      %2364 = vmatmul.mubr.f32.gmra.mrb[0].mxu0 %v343
      %v2365 = vpop.f32.mrb[0].mxu0
      %v2366 = vadd.f32 %v875, %v2365
      %v2367 = vpop.f32.mrb[0].mxu0
      %2368 = vmatprep.mubr.f32.mxu0 %v1131
      %2369 = vmatmul.mubr.f32.gmra.mrb[0].mxu0 %v345
      %v2370 = vpop.f32.mrb[0].mxu0
      %v2371 = vadd.f32 %v875, %v2370
      %v2372 = vpop.f32.mrb[0].mxu0
      %2373 = vmatprep.mubr.f32.mxu0 %v1134
      %2374 = vmatmul.mubr.f32.gmra.mrb[0].mxu0 %v347
      %v2375 = vpop.f32.mrb[0].mxu0
      %v2376 = vadd.f32 %v875, %v2375
      %v2377 = vpop.f32.mrb[0].mxu0
      %2378 = vmatprep.mubr.f32.mxu0 %v1137
      %2379 = vmatmul.mubr.f32.gmra.mrb[0].mxu0 %v349
      %v2380 = vpop.f32.mrb[0].mxu0
      %v2381 = vadd.f32 %v875, %v2380
      %v2382 = vpop.f32.mrb[0].mxu0
      %2383 = vmatprep.mubr.f32.mxu0 %v1140
      %2384 = vmatmul.mubr.f32.gmra.mrb[0].mxu0 %v351
      %v2385 = vpop.f32.mrb[0].mxu0
      %v2386 = vadd.f32 %v875, %v2385
      %v2387 = vpop.f32.mrb[0].mxu0
      %2388 = vmatprep.mubr.f32.mxu0 %v1143
      %2389 = vmatmul.mubr.f32.gmra.mrb[0].mxu0 %v353
      %v2390 = vpop.f32.mrb[0].mxu0
      %v2391 = vadd.f32 %v875, %v2390
      %v2392 = vpop.f32.mrb[0].mxu0
      %2393 = vmatprep.mubr.f32.mxu0 %v1146
      %2394 = vmatmul.mubr.f32.gmra.mrb[0].mxu0 %v355
      %v2395 = vpop.f32.mrb[0].mxu0
      %v2396 = vadd.f32 %v875, %v2395
      %v2397 = vpop.f32.mrb[0].mxu0
      %2398 = vmatprep.mubr.f32.mxu0 %v1149
      %2399 = vmatmul.mubr.f32.gmra.mrb[0].mxu0 %v357
      %v2400 = vpop.f32.mrb[0].mxu0
      %v2401 = vadd.f32 %v875, %v2400
      %v2402 = vpop.f32.mrb[0].mxu0
      %2403 = vmatprep.mubr.f32.mxu0 %v1152
      %2404 = vmatmul.mubr.f32.gmra.mrb[0].mxu0 %v359
      %v2405 = vpop.f32.mrb[0].mxu0
      %v2406 = vadd.f32 %v875, %v2405
      %v2407 = vpop.f32.mrb[0].mxu0
      %2408 = vmatprep.mubr.f32.mxu0 %v1155
      %2409 = vmatmul.mubr.f32.gmra.mrb[0].mxu0 %v361
      %v2410 = vpop.f32.mrb[0].mxu0
      %v2411 = vadd.f32 %v875, %v2410
      %v2412 = vpop.f32.mrb[0].mxu0
      %2413 = vmatprep.mubr.f32.mxu0 %v1158
      %2414 = vmatmul.mubr.f32.gmra.mrb[0].mxu0 %v363
      %v2415 = vpop.f32.mrb[0].mxu0
      %v2416 = vadd.f32 %v875, %v2415
      %v2417 = vpop.f32.mrb[0].mxu0
      %2418 = vmatprep.mubr.f32.mxu0 %v1161
      %2419 = vmatmul.mubr.f32.gmra.mrb[0].mxu0 %v365
      %v2420 = vpop.f32.mrb[0].mxu0
      %v2421 = vadd.f32 %v875, %v2420
      %v2422 = vpop.f32.mrb[0].mxu0
      %2423 = vmatprep.mubr.f32.mxu0 %v1164
      %2424 = vmatmul.mubr.f32.gmra.mrb[0].mxu0 %v367
      %v2425 = vpop.f32.mrb[0].mxu0
      %v2426 = vadd.f32 %v875, %v2425
      %v2427 = vpop.f32.mrb[0].mxu0
      %2428 = vmatprep.mubr.f32.mxu0 %v1167
      %2429 = vmatmul.mubr.f32.gmra.mrb[0].mxu0 %v369
      %v2430 = vpop.f32.mrb[0].mxu0
      %v2431 = vadd.f32 %v875, %v2430
      %v2432 = vpop.f32.mrb[0].mxu0
      %2433 = vmatprep.mubr.f32.mxu0 %v1170
      %2434 = vmatmul.mubr.f32.gmra.mrb[0].mxu0 %v371
      %v2435 = vpop.f32.mrb[0].mxu0
      %v2436 = vadd.f32 %v875, %v2435
      %v2437 = vpop.f32.mrb[0].mxu0
      %2438 = vmatprep.mubr.f32.mxu0 %v1173
      %2439 = vmatmul.mubr.f32.gmra.mrb[0].mxu0 %v373
      %v2440 = vpop.f32.mrb[0].mxu0
      %v2441 = vadd.f32 %v875, %v2440
      %v2442 = vpop.f32.mrb[0].mxu0
      %2443 = vmatprep.mubr.f32.mxu0 %v1176
      %2444 = vmatmul.mubr.f32.gmra.mrb[0].mxu0 %v375
      %v2445 = vpop.f32.mrb[0].mxu0
      %v2446 = vadd.f32 %v875, %v2445
      %v2447 = vpop.f32.mrb[0].mxu0
      %2448 = vmatprep.mubr.f32.mxu0 %v1179
      %2449 = vmatmul.mubr.f32.gmra.mrb[0].mxu0 %v377
      %v2450 = vpop.f32.mrb[0].mxu0
      %v2451 = vadd.f32 %v875, %v2450
      %v2452 = vpop.f32.mrb[0].mxu0
      %2453 = vmatprep.mubr.f32.mxu0 %v1182
      %2454 = vmatmul.mubr.f32.gmra.mrb[0].mxu0 %v379
      %v2455 = vpop.f32.mrb[0].mxu0
      %v2456 = vadd.f32 %v875, %v2455
      %v2457 = vpop.f32.mrb[0].mxu0
      %2458 = vmatprep.mubr.f32.mxu0 %v1185
      %2459 = vmatmul.mubr.f32.gmra.mrb[0].mxu0 %v381
      %v2460 = vpop.f32.mrb[0].mxu0
      %v2461 = vadd.f32 %v875, %v2460
      %v2462 = vpop.f32.mrb[0].mxu0
      %2463 = vmatprep.mubr.f32.mxu0 %v1188
      %2464 = vmatmul.mubr.f32.gmra.mrb[0].mxu0 %v383
      %v2465 = vpop.f32.mrb[0].mxu0
      %v2466 = vadd.f32 %v875, %v2465
      %v2467 = vpop.f32.mrb[0].mxu0
      %2468 = vmatprep.mubr.f32.mxu0 %v1191
      %2469 = vmatmul.mubr.f32.gmra.mrb[0].mxu0 %v385
      %v2470 = vpop.f32.mrb[0].mxu0
      %v2471 = vadd.f32 %v875, %v2470
      %v2472 = vpop.f32.mrb[0].mxu0
      %2473 = vmatprep.mubr.f32.mxu0 %v1194
      %2474 = vmatmul.mubr.f32.gmra.mrb[0].mxu0 %v387
      %v2475 = vpop.f32.mrb[0].mxu0
      %v2476 = vadd.f32 %v875, %v2475
      %v2477 = vpop.f32.mrb[0].mxu0
      %2478 = vmatprep.mubr.f32.mxu0 %v1197
      %2479 = vmatmul.mubr.f32.gmra.mrb[0].mxu0 %v389
      %v2480 = vpop.f32.mrb[0].mxu0
      %v2481 = vadd.f32 %v875, %v2480
      %v2482 = vpop.f32.mrb[0].mxu0
      %2483 = vmatprep.mubr.f32.mxu0 %v1200
      %2484 = vmatmul.mubr.f32.gmra.mrb[0].mxu0 %v391
      %v2485 = vpop.f32.mrb[0].mxu0
      %v2486 = vadd.f32 %v875, %v2485
      %v2487 = vpop.f32.mrb[0].mxu0
      %2488 = vmatprep.mubr.f32.mxu0 %v1203
      %2489 = vmatmul.mubr.f32.gmra.mrb[0].mxu0 %v393
      %v2490 = vpop.f32.mrb[0].mxu0
      %v2491 = vadd.f32 %v875, %v2490
      %v2492 = vpop.f32.mrb[0].mxu0
      %2493 = vmatprep.mubr.f32.mxu0 %v1206
      %2494 = vmatmul.mubr.f32.gmra.mrb[0].mxu0 %v395
      %v2495 = vpop.f32.mrb[0].mxu0
      %v2496 = vadd.f32 %v875, %v2495
      %v2497 = vpop.f32.mrb[0].mxu0
      %2498 = vmatprep.mubr.f32.mxu0 %v1209
      %2499 = vmatmul.mubr.f32.gmra.mrb[0].mxu0 %v397
      %v2500 = vpop.f32.mrb[0].mxu0
      %v2501 = vadd.f32 %v875, %v2500
      %v2502 = vpop.f32.mrb[0].mxu0
      %2503 = vmatprep.mubr.f32.mxu0 %v1212
      %2504 = vmatmul.mubr.f32.gmra.mrb[0].mxu0 %v399
      %v2505 = vpop.f32.mrb[0].mxu0
      %v2506 = vadd.f32 %v875, %v2505
      %v2507 = vpop.f32.mrb[0].mxu0
      %2508 = vmatprep.mubr.f32.mxu0 %v1215
      %2509 = vmatmul.mubr.f32.gmra.mrb[0].mxu0 %v401
      %v2510 = vpop.f32.mrb[0].mxu0
      %v2511 = vadd.f32 %v875, %v2510
      %v2512 = vpop.f32.mrb[0].mxu0
      %2513 = vmatprep.mubr.f32.mxu0 %v1218
      %2514 = vmatmul.mubr.f32.gmra.mrb[0].mxu0 %v403
      %v2515 = vpop.f32.mrb[0].mxu0
      %v2516 = vadd.f32 %v875, %v2515
      %v2517 = vpop.f32.mrb[0].mxu0
      %2518 = vmatprep.mubr.f32.mxu0 %v1221
      %2519 = vmatmul.mubr.f32.gmra.mrb[0].mxu0 %v405
      %v2520 = vpop.f32.mrb[0].mxu0
      %v2521 = vadd.f32 %v875, %v2520
      %v2522 = vpop.f32.mrb[0].mxu0
      %2523 = vmatprep.mubr.f32.mxu0 %v1224
      %2524 = vmatmul.mubr.f32.gmra.mrb[0].mxu0 %v407
      %v2525 = vpop.f32.mrb[0].mxu0
      %v2526 = vadd.f32 %v875, %v2525
      %v2527 = vpop.f32.mrb[0].mxu0
      %2528 = vmatprep.mubr.f32.mxu0 %v1227
      %2529 = vmatmul.mubr.f32.gmra.mrb[0].mxu0 %v409
      %v2530 = vpop.f32.mrb[0].mxu0
      %v2531 = vadd.f32 %v875, %v2530
      %v2532 = vpop.f32.mrb[0].mxu0
      %2533 = vmatprep.mubr.f32.mxu0 %v1230
      %2534 = vmatmul.mubr.f32.gmra.mrb[0].mxu0 %v411
      %v2535 = vpop.f32.mrb[0].mxu0
      %v2536 = vadd.f32 %v875, %v2535
      %v2537 = vpop.f32.mrb[0].mxu0
      %2538 = vmatprep.mubr.f32.mxu0 %v1233
      %2539 = vmatmul.mubr.f32.gmra.mrb[0].mxu0 %v413
      %v2540 = vpop.f32.mrb[0].mxu0
      %v2541 = vadd.f32 %v875, %v2540
      %v2542 = vpop.f32.mrb[0].mxu0
      %2543 = vmatprep.mubr.f32.mxu0 %v1236
      %2544 = vmatmul.mubr.f32.gmra.mrb[0].mxu0 %v415
      %v2545 = vpop.f32.mrb[0].mxu0
      %v2546 = vadd.f32 %v875, %v2545
      %v2547 = vpop.f32.mrb[0].mxu0
      %2548 = vmatprep.mubr.f32.mxu0 %v1239
      %2549 = vmatmul.mubr.f32.gmra.mrb[0].mxu0 %v417
      %v2550 = vpop.f32.mrb[0].mxu0
      %v2551 = vadd.f32 %v875, %v2550
      %v2552 = vpop.f32.mrb[0].mxu0
      %2553 = vmatprep.mubr.f32.mxu0 %v1242
      %2554 = vmatmul.mubr.f32.gmra.mrb[0].mxu0 %v419
      %v2555 = vpop.f32.mrb[0].mxu0
      %v2556 = vadd.f32 %v875, %v2555
      %v2557 = vpop.f32.mrb[0].mxu0
      %2558 = vmatprep.mubr.f32.mxu0 %v1245
      %2559 = vmatmul.mubr.f32.gmra.mrb[0].mxu0 %v421
      %v2560 = vpop.f32.mrb[0].mxu0
      %v2561 = vadd.f32 %v875, %v2560
      %v2562 = vpop.f32.mrb[0].mxu0
      %2563 = vmatprep.mubr.f32.mxu0 %v1248
      %2564 = vmatmul.mubr.f32.gmra.mrb[0].mxu0 %v423
      %v2565 = vpop.f32.mrb[0].mxu0
      %v2566 = vadd.f32 %v875, %v2565
      %v2567 = vpop.f32.mrb[0].mxu0
      %2568 = vmatprep.mubr.f32.mxu0 %v1251
      %2569 = vmatmul.mubr.f32.gmra.mrb[0].mxu0 %v425
      %v2570 = vpop.f32.mrb[0].mxu0
      %v2571 = vadd.f32 %v875, %v2570
      %v2572 = vpop.f32.mrb[0].mxu0
      %2573 = vmatprep.mubr.f32.mxu0 %v1254
      %2574 = vmatmul.mubr.f32.gmra.mrb[0].mxu0 %v427
      %v2575 = vpop.f32.mrb[0].mxu0
      %v2576 = vadd.f32 %v875, %v2575
      %v2577 = vpop.f32.mrb[0].mxu0
      %2578 = vmatprep.mubr.f32.mxu0 %v1257
      %2579 = vmatmul.mubr.f32.gmra.mrb[0].mxu0 %v429
      %v2580 = vpop.f32.mrb[0].mxu0
      %v2581 = vadd.f32 %v875, %v2580
      %v2582 = vpop.f32.mrb[0].mxu0
      %2583 = vmatprep.mubr.f32.mxu0 %v1260
      %2584 = vmatmul.mubr.f32.gmra.mrb[0].mxu0 %v431
      %v2585 = vpop.f32.mrb[0].mxu0
      %v2586 = vadd.f32 %v875, %v2585
      %v2587 = vpop.f32.mrb[0].mxu0
      %2588 = vmatprep.mubr.f32.mxu0 %v1263
      %2589 = vmatmul.mubr.f32.gmra.mrb[0].mxu0 %v433
      %v2590 = vpop.f32.mrb[0].mxu0
      %v2591 = vadd.f32 %v875, %v2590
      %v2592 = vpop.f32.mrb[0].mxu0
      %2593 = vmatprep.mubr.f32.mxu0 %v1266
      %2594 = vmatmul.mubr.f32.gmra.mrb[0].mxu0 %v435
      %v2595 = vpop.f32.mrb[0].mxu0
      %v2596 = vadd.f32 %v875, %v2595
      %v2597 = vpop.f32.mrb[0].mxu0
      %2598 = vmatprep.mubr.f32.mxu0 %v1269
      %2599 = vmatmul.mubr.f32.gmra.mrb[0].mxu0 %v437
      %v2600 = vpop.f32.mrb[0].mxu0
      %v2601 = vadd.f32 %v875, %v2600
      %v2602 = vpop.f32.mrb[0].mxu0
      %2603 = vmatprep.mubr.f32.mxu0 %v1272
      %2604 = vmatmul.mubr.f32.gmra.mrb[0].mxu0 %v439
      %v2605 = vpop.f32.mrb[0].mxu0
      %v2606 = vadd.f32 %v875, %v2605
      %v2607 = vpop.f32.mrb[0].mxu0
      %2608 = vmatprep.mubr.f32.mxu0 %v1275
      %2609 = vmatmul.mubr.f32.gmra.mrb[0].mxu0 %v441
      %v2610 = vpop.f32.mrb[0].mxu0
      %v2611 = vadd.f32 %v875, %v2610
      %v2612 = vpop.f32.mrb[0].mxu0
      %2613 = vmatprep.mubr.f32.mxu0 %v1278
      %2614 = vmatmul.mubr.f32.gmra.mrb[0].mxu0 %v443
      %v2615 = vpop.f32.mrb[0].mxu0
      %v2616 = vadd.f32 %v875, %v2615
      %v2617 = vpop.f32.mrb[0].mxu0
      %2618 = vmatprep.mubr.f32.mxu0 %v1281
      %2619 = vmatmul.mubr.f32.gmra.mrb[0].mxu0 %v445
      %v2620 = vpop.f32.mrb[0].mxu0
      %v2621 = vadd.f32 %v875, %v2620
      %v2622 = vpop.f32.mrb[0].mxu0
      %2623 = vmatprep.mubr.f32.mxu0 %v1284
      %2624 = vmatmul.mubr.f32.gmra.mrb[0].mxu0 %v447
      %v2625 = vpop.f32.mrb[0].mxu0
      %v2626 = vadd.f32 %v875, %v2625
      %v2627 = vpop.f32.mrb[0].mxu0
      %2628 = vmatprep.mubr.f32.mxu0 %v1287
      %2629 = vmatmul.mubr.f32.gmra.mrb[0].mxu0 %v449
      %v2630 = vpop.f32.mrb[0].mxu0
      %v2631 = vadd.f32 %v875, %v2630
      %v2632 = vpop.f32.mrb[0].mxu0
      %2633 = vmatprep.mubr.f32.mxu0 %v1290
      %2634 = vmatmul.mubr.f32.gmra.mrb[0].mxu0 %v451
      %v2635 = vpop.f32.mrb[0].mxu0
      %v2636 = vadd.f32 %v875, %v2635
      %v2637 = vpop.f32.mrb[0].mxu0
      %2638 = vmatprep.mubr.f32.mxu0 %v1293
      %2639 = vmatmul.mubr.f32.gmra.mrb[0].mxu0 %v453
      %v2640 = vpop.f32.mrb[0].mxu0
      %v2641 = vadd.f32 %v875, %v2640
      %v2642 = vpop.f32.mrb[0].mxu0
      %2643 = vmatprep.mubr.f32.mxu0 %v1296
      %2644 = vmatmul.mubr.f32.gmra.mrb[0].mxu0 %v455
      %v2645 = vpop.f32.mrb[0].mxu0
      %v2646 = vadd.f32 %v875, %v2645
      %v2647 = vpop.f32.mrb[0].mxu0
      %2648 = vmatprep.mubr.f32.mxu0 %v1299
      %2649 = vmatmul.mubr.f32.gmra.mrb[0].mxu0 %v457
      %v2650 = vpop.f32.mrb[0].mxu0
      %v2651 = vadd.f32 %v875, %v2650
      %v2652 = vpop.f32.mrb[0].mxu0
      %2653 = vmatprep.mubr.f32.mxu0 %v1302
      %2654 = vmatmul.mubr.f32.gmra.mrb[0].mxu0 %v459
      %v2655 = vpop.f32.mrb[0].mxu0
      %v2656 = vadd.f32 %v875, %v2655
      %v2657 = vpop.f32.mrb[0].mxu0
      %2658 = vmatprep.mubr.f32.mxu0 %v1305
      %2659 = vmatmul.mubr.f32.gmra.mrb[0].mxu0 %v461
      %v2660 = vpop.f32.mrb[0].mxu0
      %v2661 = vadd.f32 %v875, %v2660
      %v2662 = vpop.f32.mrb[0].mxu0
      %2663 = vmatprep.mubr.f32.mxu0 %v1308
      %2664 = vmatmul.mubr.f32.gmra.mrb[0].mxu0 %v463
      %v2665 = vpop.f32.mrb[0].mxu0
      %v2666 = vadd.f32 %v875, %v2665
      %v2667 = vpop.f32.mrb[0].mxu0
      %2668 = vmatprep.mubr.f32.mxu0 %v1311
      %2669 = vmatmul.mubr.f32.gmra.mrb[0].mxu0 %v465
      %v2670 = vpop.f32.mrb[0].mxu0
      %v2671 = vadd.f32 %v875, %v2670
      %v2672 = vpop.f32.mrb[0].mxu0
      %2673 = vmatprep.mubr.f32.mxu0 %v1314
      %2674 = vmatmul.mubr.f32.gmra.mrb[0].mxu0 %v467
      %v2675 = vpop.f32.mrb[0].mxu0
      %v2676 = vadd.f32 %v875, %v2675
      %v2677 = vpop.f32.mrb[0].mxu0
      %2678 = vmatprep.mubr.f32.mxu0 %v1317
      %2679 = vmatmul.mubr.f32.gmra.mrb[0].mxu0 %v469
      %v2680 = vpop.f32.mrb[0].mxu0
      %v2681 = vadd.f32 %v875, %v2680
      %v2682 = vpop.f32.mrb[0].mxu0
      %2683 = vmatprep.mubr.f32.mxu0 %v1320
      %2684 = vmatmul.mubr.f32.gmra.mrb[0].mxu0 %v471
      %v2685 = vpop.f32.mrb[0].mxu0
      %v2686 = vadd.f32 %v875, %v2685
      %v2687 = vpop.f32.mrb[0].mxu0
      %2688 = vmatprep.mubr.f32.mxu0 %v1323
      %2689 = vmatmul.mubr.f32.gmra.mrb[0].mxu0 %v473
      %v2690 = vpop.f32.mrb[0].mxu0
      %v2691 = vadd.f32 %v875, %v2690
      %v2692 = vpop.f32.mrb[0].mxu0
      %2693 = vmatprep.mubr.f32.mxu0 %v1326
      %2694 = vmatmul.mubr.f32.gmra.mrb[0].mxu0 %v475
      %v2695 = vpop.f32.mrb[0].mxu0
      %v2696 = vadd.f32 %v875, %v2695
      %v2697 = vpop.f32.mrb[0].mxu0
      %2698 = vmatprep.mubr.f32.mxu0 %v1329
      %2699 = vmatmul.mubr.f32.gmra.mrb[0].mxu0 %v477
      %v2700 = vpop.f32.mrb[0].mxu0
      %v2701 = vadd.f32 %v875, %v2700
      %v2702 = vpop.f32.mrb[0].mxu0
      %2703 = vmatprep.mubr.f32.mxu0 %v1332
      %2704 = vmatmul.mubr.f32.gmra.mrb[0].mxu0 %v479
      %v2705 = vpop.f32.mrb[0].mxu0
      %v2706 = vadd.f32 %v875, %v2705
      %v2707 = vpop.f32.mrb[0].mxu0
      %2708 = vmatprep.mubr.f32.mxu0 %v1335
      %2709 = vmatmul.mubr.f32.gmra.mrb[0].mxu0 %v481
      %v2710 = vpop.f32.mrb[0].mxu0
      %v2711 = vadd.f32 %v875, %v2710
      %v2712 = vpop.f32.mrb[0].mxu0
      %2713 = vmatprep.mubr.f32.mxu0 %v1338
      %2714 = vmatmul.mubr.f32.gmra.mrb[0].mxu0 %v483
      %v2715 = vpop.f32.mrb[0].mxu0
      %v2716 = vadd.f32 %v875, %v2715
      %v2717 = vpop.f32.mrb[0].mxu0
      %2718 = vmatprep.mubr.f32.mxu0 %v1341
      %2719 = vmatmul.mubr.f32.gmra.mrb[0].mxu0 %v485
      %v2720 = vpop.f32.mrb[0].mxu0
      %v2721 = vadd.f32 %v875, %v2720
      %v2722 = vpop.f32.mrb[0].mxu0
      %2723 = vmatprep.mubr.f32.mxu0 %v1344
      %2724 = vmatmul.mubr.f32.gmra.mrb[0].mxu0 %v487
      %v2725 = vpop.f32.mrb[0].mxu0
      %v2726 = vadd.f32 %v875, %v2725
      %v2727 = vpop.f32.mrb[0].mxu0
      %2728 = vmatprep.mubr.f32.mxu0 %v1347
      %2729 = vmatmul.mubr.f32.gmra.mrb[0].mxu0 %v489
      %v2730 = vpop.f32.mrb[0].mxu0
      %v2731 = vadd.f32 %v875, %v2730
      %v2732 = vpop.f32.mrb[0].mxu0
      %2733 = vmatprep.mubr.f32.mxu0 %v1350
      %2734 = vmatmul.mubr.f32.gmra.mrb[0].mxu0 %v491
      %v2735 = vpop.f32.mrb[0].mxu0
      %v2736 = vadd.f32 %v875, %v2735
      %v2737 = vpop.f32.mrb[0].mxu0
      %2738 = vmatprep.mubr.f32.mxu0 %v1353
      %2739 = vmatmul.mubr.f32.gmra.mrb[0].mxu0 %v493
      %v2740 = vpop.f32.mrb[0].mxu0
      %v2741 = vadd.f32 %v875, %v2740
      %v2742 = vpop.f32.mrb[0].mxu0
      %2743 = vmatprep.mubr.f32.mxu0 %v1356
      %2744 = vmatmul.mubr.f32.gmra.mrb[0].mxu0 %v495
      %v2745 = vpop.f32.mrb[0].mxu0
      %v2746 = vadd.f32 %v875, %v2745
      %v2747 = vpop.f32.mrb[0].mxu0
      %2748 = vmatprep.mubr.f32.mxu0 %v1359
      %2749 = vmatmul.mubr.f32.gmra.mrb[0].mxu0 %v497
      %v2750 = vpop.f32.mrb[0].mxu0
      %v2751 = vadd.f32 %v875, %v2750
      %v2752 = vpop.f32.mrb[0].mxu0
      %2753 = vmatprep.mubr.f32.mxu0 %v1362
      %2754 = vmatmul.mubr.f32.gmra.mrb[0].mxu0 %v499
      %v2755 = vpop.f32.mrb[0].mxu0
      %v2756 = vadd.f32 %v875, %v2755
      %v2757 = vpop.f32.mrb[0].mxu0
      %2758 = vmatprep.mubr.f32.mxu0 %v1365
      %2759 = vmatmul.mubr.f32.gmra.mrb[0].mxu0 %v501
      %v2760 = vpop.f32.mrb[0].mxu0
      %v2761 = vadd.f32 %v875, %v2760
      %v2762 = vpop.f32.mrb[0].mxu0
      %2763 = vmatprep.mubr.f32.mxu0 %v1368
      %2764 = vmatmul.mubr.f32.gmra.mrb[0].mxu0 %v503
      %v2765 = vpop.f32.mrb[0].mxu0
      %v2766 = vadd.f32 %v875, %v2765
      %v2767 = vpop.f32.mrb[0].mxu0
      %2768 = vmatprep.mubr.f32.mxu0 %v1371
      %2769 = vmatmul.mubr.f32.gmra.mrb[0].mxu0 %v505
      %v2770 = vpop.f32.mrb[0].mxu0
      %v2771 = vadd.f32 %v875, %v2770
      %v2772 = vpop.f32.mrb[0].mxu0
      %2773 = vmatprep.mubr.f32.mxu0 %v1374
      %2774 = vmatmul.mubr.f32.gmra.mrb[0].mxu0 %v507
      %v2775 = vpop.f32.mrb[0].mxu0
      %v2776 = vadd.f32 %v875, %v2775
      %v2777 = vpop.f32.mrb[0].mxu0
      %2778 = vmatprep.mubr.f32.mxu0 %v1377
      %2779 = vmatmul.mubr.f32.gmra.mrb[0].mxu0 %v509
      %v2780 = vpop.f32.mrb[0].mxu0
      %v2781 = vadd.f32 %v875, %v2780
      %v2782 = vpop.f32.mrb[0].mxu0
      %2783 = vmatprep.mubr.f32.mxu0 %v1380
      %2784 = vmatmul.mubr.f32.gmra.mrb[0].mxu0 %v511
      %v2785 = vpop.f32.mrb[0].mxu0
      %v2786 = vadd.f32 %v875, %v2785
      %v2787 = vpop.f32.mrb[0].mxu0
      %2788 = vmatprep.mubr.f32.mxu0 %v1383
      %2789 = vmatmul.mubr.f32.gmra.mrb[0].mxu0 %v513
      %v2790 = vpop.f32.mrb[0].mxu0
      %v2791 = vadd.f32 %v875, %v2790
      %v2792 = vpop.f32.mrb[0].mxu0
      %2793 = vmatprep.mubr.f32.mxu0 %v1386
      %2794 = vmatmul.mubr.f32.gmra.mrb[0].mxu0 %v515
      %v2795 = vpop.f32.mrb[0].mxu0
      %v2796 = vadd.f32 %v875, %v2795
      %v2797 = vpop.f32.mrb[0].mxu0
      %2798 = vmatprep.mubr.f32.mxu0 %v1389
      %2799 = vmatmul.mubr.f32.gmra.mrb[0].mxu0 %v517
      %v2800 = vpop.f32.mrb[0].mxu0
      %v2801 = vadd.f32 %v875, %v2800
      %v2802 = vpop.f32.mrb[0].mxu0
      %2803 = vmatprep.mubr.f32.mxu0 %v1392
      %2804 = vmatmul.mubr.f32.gmra.mrb[0].mxu0 %v519
      %v2805 = vpop.f32.mrb[0].mxu0
      %v2806 = vadd.f32 %v875, %v2805
      %v2807 = vpop.f32.mrb[0].mxu0
      %2808 = vmatprep.mubr.f32.mxu0 %v1395
      %2809 = vmatmul.mubr.f32.gmra.mrb[0].mxu0 %v521
      %v2810 = vpop.f32.mrb[0].mxu0
      %v2811 = vadd.f32 %v875, %v2810
      %v2812 = vpop.f32.mrb[0].mxu0
      %2813 = vmatprep.mubr.f32.mxu0 %v1398
      %2814 = vmatmul.mubr.f32.gmra.mrb[0].mxu0 %v523
      %v2815 = vpop.f32.mrb[0].mxu0
      %v2816 = vadd.f32 %v875, %v2815
      %v2817 = vpop.f32.mrb[0].mxu0
      %2818 = vmatprep.mubr.f32.mxu0 %v1401
      %2819 = vmatmul.mubr.f32.gmra.mrb[0].mxu0 %v525
      %v2820 = vpop.f32.mrb[0].mxu0
      %v2821 = vadd.f32 %v875, %v2820
      %v2822 = vpop.f32.mrb[0].mxu0
      %2823 = vmatprep.mubr.f32.mxu0 %v1404
      %2824 = vmatmul.mubr.f32.gmra.mrb[0].mxu0 %v527
      %v2825 = vpop.f32.mrb[0].mxu0
      %v2826 = vadd.f32 %v875, %v2825
      %v2827 = vpop.f32.mrb[0].mxu0
      %2828 = vmatprep.mubr.f32.mxu0 %v1407
      %2829 = vmatmul.mubr.f32.gmra.mrb[0].mxu0 %v529
      %v2830 = vpop.f32.mrb[0].mxu0
      %v2831 = vadd.f32 %v875, %v2830
      %v2832 = vpop.f32.mrb[0].mxu0
      %2833 = vmatprep.mubr.f32.mxu0 %v1410
      %2834 = vmatmul.mubr.f32.gmra.mrb[0].mxu0 %v531
      %v2835 = vpop.f32.mrb[0].mxu0
      %v2836 = vadd.f32 %v875, %v2835
      %v2837 = vpop.f32.mrb[0].mxu0
      %2838 = vmatprep.mubr.f32.mxu0 %v1413
      %2839 = vmatmul.mubr.f32.gmra.mrb[0].mxu0 %v533
      %v2840 = vpop.f32.mrb[0].mxu0
      %v2841 = vadd.f32 %v875, %v2840
      %v2842 = vpop.f32.mrb[0].mxu0
      %2843 = vmatprep.mubr.f32.mxu0 %v1416
      %2844 = vmatmul.mubr.f32.gmra.mrb[0].mxu0 %v535
      %v2845 = vpop.f32.mrb[0].mxu0
      %v2846 = vadd.f32 %v875, %v2845
      %v2847 = vpop.f32.mrb[0].mxu0
      %2848 = vmatprep.mubr.f32.mxu0 %v1419
      %2849 = vmatmul.mubr.f32.gmra.mrb[0].mxu0 %v537
      %v2850 = vpop.f32.mrb[0].mxu0
      %v2851 = vadd.f32 %v875, %v2850
      %v2852 = vpop.f32.mrb[0].mxu0
      %2853 = vmatprep.mubr.f32.mxu0 %v1422
      %2854 = vmatmul.mubr.f32.gmra.mrb[0].mxu0 %v539
      %v2855 = vpop.f32.mrb[0].mxu0
      %v2856 = vadd.f32 %v875, %v2855
      %v2857 = vpop.f32.mrb[0].mxu0
      %2858 = vmatprep.mubr.f32.mxu0 %v1425
      %2859 = vmatmul.mubr.f32.gmra.mrb[0].mxu0 %v541
      %v2860 = vpop.f32.mrb[0].mxu0
      %v2861 = vadd.f32 %v875, %v2860
      %v2862 = vpop.f32.mrb[0].mxu0
      %2863 = vmatprep.mubr.f32.mxu0 %v1428
      %2864 = vmatmul.mubr.f32.gmra.mrb[0].mxu0 %v543
      %v2865 = vpop.f32.mrb[0].mxu0
      %v2866 = vadd.f32 %v875, %v2865
      %v2867 = vpop.f32.mrb[0].mxu0
      %2868 = vmatprep.mubr.f32.mxu0 %v1431
      %2869 = vmatmul.mubr.f32.gmra.mrb[0].mxu0 %v545
      %v2870 = vpop.f32.mrb[0].mxu0
      %v2871 = vadd.f32 %v875, %v2870
      %v2872 = vpop.f32.mrb[0].mxu0
      %2873 = vmatprep.mubr.f32.mxu0 %v1434
      %2874 = vmatmul.mubr.f32.gmra.mrb[0].mxu0 %v547
      %v2875 = vpop.f32.mrb[0].mxu0
      %v2876 = vadd.f32 %v875, %v2875
      %v2877 = vpop.f32.mrb[0].mxu0
      %2878 = vmatprep.mubr.f32.mxu0 %v1437
      %2879 = vmatmul.mubr.f32.gmra.mrb[0].mxu0 %v549
      %v2880 = vpop.f32.mrb[0].mxu0
      %v2881 = vadd.f32 %v875, %v2880
      %v2882 = vpop.f32.mrb[0].mxu0
      %2883 = vmatprep.mubr.f32.mxu0 %v1440
      %2884 = vmatmul.mubr.f32.gmra.mrb[0].mxu0 %v551
      %v2885 = vpop.f32.mrb[0].mxu0
      %v2886 = vadd.f32 %v875, %v2885
      %v2887 = vpop.f32.mrb[0].mxu0
      %2888 = vmatprep.mubr.f32.mxu0 %v1443
      %2889 = vmatmul.mubr.f32.gmra.mrb[0].mxu0 %v553
      %v2890 = vpop.f32.mrb[0].mxu0
      %v2891 = vadd.f32 %v875, %v2890
      %v2892 = vpop.f32.mrb[0].mxu0
      %2893 = vmatprep.mubr.f32.mxu0 %v1446
      %2894 = vmatmul.mubr.f32.gmra.mrb[0].mxu0 %v555
      %v2895 = vpop.f32.mrb[0].mxu0
      %v2896 = vadd.f32 %v875, %v2895
      %v2897 = vpop.f32.mrb[0].mxu0
      %2898 = vmatprep.mubr.f32.mxu0 %v1449
      %2899 = vmatmul.mubr.f32.gmra.mrb[0].mxu0 %v557
      %v2900 = vpop.f32.mrb[0].mxu0
      %v2901 = vadd.f32 %v875, %v2900
      %v2902 = vpop.f32.mrb[0].mxu0
      %2903 = vmatprep.mubr.f32.mxu0 %v1452
      %2904 = vmatmul.mubr.f32.gmra.mrb[0].mxu0 %v559
      %v2905 = vpop.f32.mrb[0].mxu0
      %v2906 = vadd.f32 %v875, %v2905
      %v2907 = vpop.f32.mrb[0].mxu0
      %2908 = vmatprep.mubr.f32.mxu0 %v1455
      %2909 = vmatmul.mubr.f32.gmra.mrb[0].mxu0 %v561
      %v2910 = vpop.f32.mrb[0].mxu0
      %v2911 = vadd.f32 %v875, %v2910
      %v2912 = vpop.f32.mrb[0].mxu0
      %2913 = vmatprep.mubr.f32.mxu0 %v1458
      %2914 = vmatmul.mubr.f32.gmra.mrb[0].mxu0 %v563
      %v2915 = vpop.f32.mrb[0].mxu0
      %v2916 = vadd.f32 %v875, %v2915
      %v2917 = vpop.f32.mrb[0].mxu0
      %2918 = vmatprep.mubr.f32.mxu0 %v1461
      %2919 = vmatmul.mubr.f32.gmra.mrb[0].mxu0 %v565
      %v2920 = vpop.f32.mrb[0].mxu0
      %v2921 = vadd.f32 %v875, %v2920
      %v2922 = vpop.f32.mrb[0].mxu0
      %2923 = vmatprep.mubr.f32.mxu0 %v1464
      %2924 = vmatmul.mubr.f32.gmra.mrb[0].mxu0 %v567
      %v2925 = vpop.f32.mrb[0].mxu0
      %v2926 = vadd.f32 %v875, %v2925
      %v2927 = vpop.f32.mrb[0].mxu0
      %2928 = vmatprep.mubr.f32.mxu0 %v1467
      %2929 = vmatmul.mubr.f32.gmra.mrb[0].mxu0 %v569
      %v2930 = vpop.f32.mrb[0].mxu0
      %v2931 = vadd.f32 %v875, %v2930
      %v2932 = vpop.f32.mrb[0].mxu0
      %2933 = vmatprep.mubr.f32.mxu0 %v1470
      %2934 = vmatmul.mubr.f32.gmra.mrb[0].mxu0 %v571
      %v2935 = vpop.f32.mrb[0].mxu0
      %v2936 = vadd.f32 %v875, %v2935
      %v2937 = vpop.f32.mrb[0].mxu0
      %2938 = vmatprep.mubr.f32.mxu0 %v1473
      %2939 = vmatmul.mubr.f32.gmra.mrb[0].mxu0 %v573
      %v2940 = vpop.f32.mrb[0].mxu0
      %v2941 = vadd.f32 %v875, %v2940
      %v2942 = vpop.f32.mrb[0].mxu0
      %2943 = vmatprep.mubr.f32.mxu0 %v1476
      %2944 = vmatmul.mubr.f32.gmra.mrb[0].mxu0 %v575
      %v2945 = vpop.f32.mrb[0].mxu0
      %v2946 = vadd.f32 %v875, %v2945
      %v2947 = vpop.f32.mrb[0].mxu0
      %2948 = vmatprep.mubr.f32.mxu0 %v1479
      %2949 = vmatmul.mubr.f32.gmra.mrb[0].mxu0 %v577
      %v2950 = vpop.f32.mrb[0].mxu0
      %v2951 = vadd.f32 %v875, %v2950
      %v2952 = vpop.f32.mrb[0].mxu0
      %2953 = vmatprep.mubr.f32.mxu0 %v1482
      %2954 = vmatmul.mubr.f32.gmra.mrb[0].mxu0 %v579
      %v2955 = vpop.f32.mrb[0].mxu0
      %v2956 = vadd.f32 %v875, %v2955
      %v2957 = vpop.f32.mrb[0].mxu0
      %2958 = vmatprep.mubr.f32.mxu0 %v1485
      %2959 = vmatmul.mubr.f32.gmra.mrb[0].mxu0 %v581
      %v2960 = vpop.f32.mrb[0].mxu0
      %v2961 = vadd.f32 %v875, %v2960
      %v2962 = vpop.f32.mrb[0].mxu0
      %2963 = vmatprep.mubr.f32.mxu0 %v1488
      %2964 = vmatmul.mubr.f32.gmra.mrb[0].mxu0 %v583
      %v2965 = vpop.f32.mrb[0].mxu0
      %v2966 = vadd.f32 %v875, %v2965
      %v2967 = vpop.f32.mrb[0].mxu0
      %2968 = vmatprep.mubr.f32.mxu0 %v1491
      %2969 = vmatmul.mubr.f32.gmra.mrb[0].mxu0 %v585
      %v2970 = vpop.f32.mrb[0].mxu0
      %v2971 = vadd.f32 %v875, %v2970
      %v2972 = vpop.f32.mrb[0].mxu0
      %2973 = vmatprep.mubr.f32.mxu0 %v1494
      %2974 = vmatmul.mubr.f32.gmra.mrb[0].mxu0 %v587
      %v2975 = vpop.f32.mrb[0].mxu0
      %v2976 = vadd.f32 %v875, %v2975
      %v2977 = vpop.f32.mrb[0].mxu0
      %2978 = vmatprep.mubr.f32.mxu0 %v1497
      %2979 = vmatmul.mubr.f32.gmra.mrb[0].mxu0 %v589
      %v2980 = vpop.f32.mrb[0].mxu0
      %v2981 = vadd.f32 %v875, %v2980
      %v2982 = vpop.f32.mrb[0].mxu0
      %2983 = vmatprep.mubr.f32.mxu0 %v1500
      %2984 = vmatmul.mubr.f32.gmra.mrb[0].mxu0 %v591
      %v2985 = vpop.f32.mrb[0].mxu0
      %v2986 = vadd.f32 %v875, %v2985
      %v2987 = vpop.f32.mrb[0].mxu0
      %2988 = vmatprep.mubr.f32.mxu0 %v1503
      %2989 = vmatmul.mubr.f32.gmra.mrb[0].mxu0 %v593
      %v2990 = vpop.f32.mrb[0].mxu0
      %v2991 = vadd.f32 %v875, %v2990
      %v2992 = vpop.f32.mrb[0].mxu0
      %2993 = vmatprep.mubr.f32.mxu0 %v1506
      %2994 = vmatmul.mubr.f32.gmra.mrb[0].mxu0 %v595
      %v2995 = vpop.f32.mrb[0].mxu0
      %v2996 = vadd.f32 %v875, %v2995
      %v2997 = vpop.f32.mrb[0].mxu0
      %2998 = vmatprep.mubr.f32.mxu0 %v1509
      %2999 = vmatmul.mubr.f32.gmra.mrb[0].mxu0 %v597
      %v3000 = vpop.f32.mrb[0].mxu0
      %v3001 = vadd.f32 %v875, %v3000
      %v3002 = vpop.f32.mrb[0].mxu0
      %3003 = vmatprep.mubr.f32.mxu0 %v1512
      %3004 = vmatmul.mubr.f32.gmra.mrb[0].mxu0 %v599
      %v3005 = vpop.f32.mrb[0].mxu0
      %v3006 = vadd.f32 %v875, %v3005
      %v3007 = vpop.f32.mrb[0].mxu0
      %3008 = vmatprep.mubr.f32.mxu0 %v1515
      %3009 = vmatmul.mubr.f32.gmra.mrb[0].mxu0 %v601
      %v3010 = vpop.f32.mrb[0].mxu0
      %v3011 = vadd.f32 %v875, %v3010
      %v3012 = vpop.f32.mrb[0].mxu0
      %3013 = vmatprep.mubr.f32.mxu0 %v1518
      %3014 = vmatmul.mubr.f32.gmra.mrb[0].mxu0 %v603
      %v3015 = vpop.f32.mrb[0].mxu0
      %v3016 = vadd.f32 %v875, %v3015
      %v3017 = vpop.f32.mrb[0].mxu0
      %3018 = vmatprep.mubr.f32.mxu0 %v1521
      %3019 = vmatmul.mubr.f32.gmra.mrb[0].mxu0 %v605
      %v3020 = vpop.f32.mrb[0].mxu0
      %v3021 = vadd.f32 %v875, %v3020
      %v3022 = vpop.f32.mrb[0].mxu0
      %3023 = vmatprep.mubr.f32.mxu0 %v1524
      %3024 = vmatmul.mubr.f32.gmra.mrb[0].mxu0 %v607
      %v3025 = vpop.f32.mrb[0].mxu0
      %v3026 = vadd.f32 %v875, %v3025
      %v3027 = vpop.f32.mrb[0].mxu0
      %3028 = vmatprep.mubr.f32.mxu0 %v1527
      %3029 = vmatmul.mubr.f32.gmra.mrb[0].mxu0 %v609
      %v3030 = vpop.f32.mrb[0].mxu0
      %v3031 = vadd.f32 %v875, %v3030
      %v3032 = vpop.f32.mrb[0].mxu0
      %3033 = vmatprep.mubr.f32.mxu0 %v1530
      %3034 = vmatmul.mubr.f32.gmra.mrb[0].mxu0 %v611
      %v3035 = vpop.f32.mrb[0].mxu0
      %v3036 = vadd.f32 %v875, %v3035
      %v3037 = vpop.f32.mrb[0].mxu0
      %3038 = vmatprep.mubr.f32.mxu0 %v1533
      %3039 = vmatmul.mubr.f32.gmra.mrb[0].mxu0 %v613
      %v3040 = vpop.f32.mrb[0].mxu0
      %v3041 = vadd.f32 %v875, %v3040
      %v3042 = vpop.f32.mrb[0].mxu0
      %3043 = vmatprep.mubr.f32.mxu0 %v1536
      %3044 = vmatmul.mubr.f32.gmra.mrb[0].mxu0 %v615
      %v3045 = vpop.f32.mrb[0].mxu0
      %v3046 = vadd.f32 %v875, %v3045
      %v3047 = vpop.f32.mrb[0].mxu0
      %3048 = vmatprep.mubr.f32.mxu0 %v1539
      %3049 = vmatmul.mubr.f32.gmra.mrb[0].mxu0 %v617
      %v3050 = vpop.f32.mrb[0].mxu0
      %v3051 = vadd.f32 %v875, %v3050
      %v3052 = vpop.f32.mrb[0].mxu0
      %3053 = vmatprep.mubr.f32.mxu0 %v1542
      %3054 = vmatmul.mubr.f32.gmra.mrb[0].mxu0 %v619
      %v3055 = vpop.f32.mrb[0].mxu0
      %v3056 = vadd.f32 %v875, %v3055
      %v3057 = vpop.f32.mrb[0].mxu0
      %3058 = vmatprep.mubr.f32.mxu0 %v1545
      %3059 = vmatmul.mubr.f32.gmra.mrb[0].mxu0 %v621
      %v3060 = vpop.f32.mrb[0].mxu0
      %v3061 = vadd.f32 %v875, %v3060
      %v3062 = vpop.f32.mrb[0].mxu0
      %3063 = vmatprep.mubr.f32.mxu0 %v1548
      %3064 = vmatmul.mubr.f32.gmra.mrb[0].mxu0 %v623
      %v3065 = vpop.f32.mrb[0].mxu0
      %v3066 = vadd.f32 %v875, %v3065
      %v3067 = vpop.f32.mrb[0].mxu0
      %3068 = vmatprep.mubr.f32.mxu0 %v1551
      %3069 = vmatmul.mubr.f32.gmra.mrb[0].mxu0 %v625
      %v3070 = vpop.f32.mrb[0].mxu0
      %v3071 = vadd.f32 %v875, %v3070
      %v3072 = vpop.f32.mrb[0].mxu0
      %3073 = vmatprep.mubr.f32.mxu0 %v1554
      %3074 = vmatmul.mubr.f32.gmra.mrb[0].mxu0 %v627
      %v3075 = vpop.f32.mrb[0].mxu0
      %v3076 = vadd.f32 %v875, %v3075
      %v3077 = vpop.f32.mrb[0].mxu0
      %3078 = vmatprep.mubr.f32.mxu0 %v1557
      %3079 = vmatmul.mubr.f32.gmra.mrb[0].mxu0 %v629
      %v3080 = vpop.f32.mrb[0].mxu0
      %v3081 = vadd.f32 %v875, %v3080
      %v3082 = vpop.f32.mrb[0].mxu0
      %3083 = vmatprep.mubr.f32.mxu0 %v1560
      %3084 = vmatmul.mubr.f32.gmra.mrb[0].mxu0 %v631
      %v3085 = vpop.f32.mrb[0].mxu0
      %v3086 = vadd.f32 %v875, %v3085
      %v3087 = vpop.f32.mrb[0].mxu0
      %3088 = vmatprep.mubr.f32.mxu0 %v1563
      %3089 = vmatmul.mubr.f32.gmra.mrb[0].mxu0 %v633
      %v3090 = vpop.f32.mrb[0].mxu0
      %v3091 = vadd.f32 %v875, %v3090
      %v3092 = vpop.f32.mrb[0].mxu0
      %3093 = vmatprep.mubr.f32.mxu0 %v1566
      %3094 = vmatmul.mubr.f32.gmra.mrb[0].mxu0 %v635
      %v3095 = vpop.f32.mrb[0].mxu0
      %v3096 = vadd.f32 %v875, %v3095
      %v3097 = vpop.f32.mrb[0].mxu0
      %3098 = vmatprep.mubr.f32.mxu0 %v1569
      %3099 = vmatmul.mubr.f32.gmra.mrb[0].mxu0 %v637
      %v3100 = vpop.f32.mrb[0].mxu0
      %v3101 = vadd.f32 %v875, %v3100
      %v3102 = vpop.f32.mrb[0].mxu0
      %3103 = vmatprep.mubr.f32.mxu0 %v1572
      %3104 = vmatmul.mubr.f32.gmra.mrb[0].mxu0 %v639
      %v3105 = vpop.f32.mrb[0].mxu0
      %v3106 = vadd.f32 %v875, %v3105
      %v3107 = vpop.f32.mrb[0].mxu0
      %3108 = vmatprep.mubr.f32.mxu0 %v1575
      %3109 = vmatmul.mubr.f32.gmra.mrb[0].mxu0 %v641
      %v3110 = vpop.f32.mrb[0].mxu0
      %v3111 = vadd.f32 %v875, %v3110
      %v3112 = vpop.f32.mrb[0].mxu0
      %3113 = vmatprep.mubr.f32.mxu0 %v1578
      %3114 = vmatmul.mubr.f32.gmra.mrb[0].mxu0 %v643
      %v3115 = vpop.f32.mrb[0].mxu0
      %v3116 = vadd.f32 %v875, %v3115
      %v3117 = vpop.f32.mrb[0].mxu0
      %3118 = vmatprep.mubr.f32.mxu0 %v1581
      %3119 = vmatmul.mubr.f32.gmra.mrb[0].mxu0 %v645
      %v3120 = vpop.f32.mrb[0].mxu0
      %v3121 = vadd.f32 %v875, %v3120
      %v3122 = vpop.f32.mrb[0].mxu0
      %3123 = vmatprep.mubr.f32.mxu0 %v1584
      %3124 = vmatmul.mubr.f32.gmra.mrb[0].mxu0 %v647
      %v3125 = vpop.f32.mrb[0].mxu0
      %v3126 = vadd.f32 %v875, %v3125
      %v3127 = vpop.f32.mrb[0].mxu0
      %3128 = vmatprep.mubr.f32.mxu0 %v1587
      %3129 = vmatmul.mubr.f32.gmra.mrb[0].mxu0 %v649
      %v3130 = vpop.f32.mrb[0].mxu0
      %v3131 = vadd.f32 %v875, %v3130
      %v3132 = vpop.f32.mrb[0].mxu0
      %3133 = vmatprep.mubr.f32.mxu0 %v1590
      %3134 = vmatmul.mubr.f32.gmra.mrb[0].mxu0 %v651
      %v3135 = vpop.f32.mrb[0].mxu0
      %v3136 = vadd.f32 %v875, %v3135
      %v3137 = vpop.f32.mrb[0].mxu0
      %3138 = vmatprep.mubr.f32.mxu0 %v1593
      %3139 = vmatmul.mubr.f32.gmra.mrb[0].mxu0 %v653
      %v3140 = vpop.f32.mrb[0].mxu0
      %v3141 = vadd.f32 %v875, %v3140
      %v3142 = vpop.f32.mrb[0].mxu0
      %3143 = vmatprep.mubr.f32.mxu0 %v1596
      %3144 = vmatmul.mubr.f32.gmra.mrb[0].mxu0 %v655
      %v3145 = vpop.f32.mrb[0].mxu0
      %v3146 = vadd.f32 %v875, %v3145
      %v3147 = vpop.f32.mrb[0].mxu0
      %3148 = vmatprep.mubr.f32.mxu0 %v1599
      %3149 = vmatmul.mubr.f32.gmra.mrb[0].mxu0 %v657
      %v3150 = vpop.f32.mrb[0].mxu0
      %v3151 = vadd.f32 %v875, %v3150
      %v3152 = vpop.f32.mrb[0].mxu0
      %3153 = vmatprep.mubr.f32.mxu0 %v1602
      %3154 = vmatmul.mubr.f32.gmra.mrb[0].mxu0 %v659
      %v3155 = vpop.f32.mrb[0].mxu0
      %v3156 = vadd.f32 %v875, %v3155
      %v3157 = vpop.f32.mrb[0].mxu0
      %3158 = vmatprep.mubr.f32.mxu0 %v1605
      %3159 = vmatmul.mubr.f32.gmra.mrb[0].mxu0 %v661
      %v3160 = vpop.f32.mrb[0].mxu0
      %v3161 = vadd.f32 %v875, %v3160
      %v3162 = vpop.f32.mrb[0].mxu0
      %3163 = vmatprep.mubr.f32.mxu0 %v1608
      %3164 = vmatmul.mubr.f32.gmra.mrb[0].mxu0 %v663
      %v3165 = vpop.f32.mrb[0].mxu0
      %v3166 = vadd.f32 %v875, %v3165
      %v3167 = vpop.f32.mrb[0].mxu0
      %3168 = vmatprep.mubr.f32.mxu0 %v1611
      %3169 = vmatmul.mubr.f32.gmra.mrb[0].mxu0 %v665
      %v3170 = vpop.f32.mrb[0].mxu0
      %v3171 = vadd.f32 %v875, %v3170
      %v3172 = vpop.f32.mrb[0].mxu0
      %3173 = vmatprep.mubr.f32.mxu0 %v1614
      %3174 = vmatmul.mubr.f32.gmra.mrb[0].mxu0 %v667
      %v3175 = vpop.f32.mrb[0].mxu0
      %v3176 = vadd.f32 %v875, %v3175
      %v3177 = vpop.f32.mrb[0].mxu0
      %3178 = vmatprep.mubr.f32.mxu0 %v1617
      %3179 = vmatmul.mubr.f32.gmra.mrb[0].mxu0 %v669
      %v3180 = vpop.f32.mrb[0].mxu0
      %v3181 = vadd.f32 %v875, %v3180
      %v3182 = vpop.f32.mrb[0].mxu0
      %3183 = vmatprep.mubr.f32.mxu0 %v1620
      %3184 = vmatmul.mubr.f32.gmra.mrb[0].mxu0 %v671
      %v3185 = vpop.f32.mrb[0].mxu0
      %v3186 = vadd.f32 %v875, %v3185
      %v3187 = vpop.f32.mrb[0].mxu0
      %3188 = vmatprep.mubr.f32.mxu0 %v1623
      %3189 = vmatmul.mubr.f32.gmra.mrb[0].mxu0 %v673
      %v3190 = vpop.f32.mrb[0].mxu0
      %v3191 = vadd.f32 %v875, %v3190
      %v3192 = vpop.f32.mrb[0].mxu0
      %3193 = vmatprep.mubr.f32.mxu0 %v1626
      %3194 = vmatmul.mubr.f32.gmra.mrb[0].mxu0 %v675
      %v3195 = vpop.f32.mrb[0].mxu0
      %v3196 = vadd.f32 %v875, %v3195
      %v3197 = vpop.f32.mrb[0].mxu0
      %3198 = vmatprep.mubr.f32.mxu0 %v1629
      %3199 = vmatmul.mubr.f32.gmra.mrb[0].mxu0 %v677
      %v3200 = vpop.f32.mrb[0].mxu0
      %v3201 = vadd.f32 %v875, %v3200
      %v3202 = vpop.f32.mrb[0].mxu0
      %3203 = vmatprep.mubr.f32.mxu0 %v1632
      %3204 = vmatmul.mubr.f32.gmra.mrb[0].mxu0 %v679
      %v3205 = vpop.f32.mrb[0].mxu0
      %v3206 = vadd.f32 %v875, %v3205
      %v3207 = vpop.f32.mrb[0].mxu0
      %3208 = vmatprep.mubr.f32.mxu0 %v1635
      %3209 = vmatmul.mubr.f32.gmra.mrb[0].mxu0 %v681
      %v3210 = vpop.f32.mrb[0].mxu0
      %v3211 = vadd.f32 %v875, %v3210
      %v3212 = vpop.f32.mrb[0].mxu0
      %3213 = vmatprep.mubr.f32.mxu0 %v1638
      %3214 = vmatmul.mubr.f32.gmra.mrb[0].mxu0 %v683
      %v3215 = vpop.f32.mrb[0].mxu0
      %v3216 = vadd.f32 %v875, %v3215
      %v3217 = vpop.f32.mrb[0].mxu0
      %3218 = vmatprep.mubr.f32.mxu0 %v1641
      %3219 = vmatmul.mubr.f32.gmra.mrb[0].mxu0 %v685
      %v3220 = vpop.f32.mrb[0].mxu0
      %v3221 = vadd.f32 %v875, %v3220
      %v3222 = vpop.f32.mrb[0].mxu0
      %3223 = vmatprep.mubr.f32.mxu0 %v1644
      %3224 = vmatmul.mubr.f32.gmra.mrb[0].mxu0 %v687
      %v3225 = vpop.f32.mrb[0].mxu0
      %v3226 = vadd.f32 %v875, %v3225
      %v3227 = vpop.f32.mrb[0].mxu0
      %3228 = vmatprep.mubr.f32.mxu0 %v1647
      %3229 = vmatmul.mubr.f32.gmra.mrb[0].mxu0 %v689
      %v3230 = vpop.f32.mrb[0].mxu0
      %v3231 = vadd.f32 %v875, %v3230
      %v3232 = vpop.f32.mrb[0].mxu0
      %3233 = vmatprep.mubr.f32.mxu0 %v1650
      %3234 = vmatmul.mubr.f32.gmra.mrb[0].mxu0 %v691
      %v3235 = vpop.f32.mrb[0].mxu0
      %v3236 = vadd.f32 %v875, %v3235
      %v3237 = vpop.f32.mrb[0].mxu0
      %3238 = vmatprep.mubr.f32.mxu0 %v1653
      %3239 = vmatmul.mubr.f32.gmra.mrb[0].mxu0 %v693
      %v3240 = vpop.f32.mrb[0].mxu0
      %v3241 = vadd.f32 %v875, %v3240
      %v3242 = vpop.f32.mrb[0].mxu0
      %3243 = vmatprep.mubr.f32.mxu0 %v1656
      %3244 = vmatmul.mubr.f32.gmra.mrb[0].mxu0 %v695
      %v3245 = vpop.f32.mrb[0].mxu0
      %v3246 = vadd.f32 %v875, %v3245
      %v3247 = vpop.f32.mrb[0].mxu0
      %3248 = vmatprep.mubr.f32.mxu0 %v1659
      %3249 = vmatmul.mubr.f32.gmra.mrb[0].mxu0 %v697
      %v3250 = vpop.f32.mrb[0].mxu0
      %v3251 = vadd.f32 %v875, %v3250
      %v3252 = vpop.f32.mrb[0].mxu0
      %3253 = vmatprep.mubr.f32.mxu0 %v1662
      %3254 = vmatmul.mubr.f32.gmra.mrb[0].mxu0 %v699
      %v3255 = vpop.f32.mrb[0].mxu0
      %v3256 = vadd.f32 %v875, %v3255
      %v3257 = vpop.f32.mrb[0].mxu0
      %3258 = vmatprep.mubr.f32.mxu0 %v1665
      %3259 = vmatmul.mubr.f32.gmra.mrb[0].mxu0 %v701
      %v3260 = vpop.f32.mrb[0].mxu0
      %v3261 = vadd.f32 %v875, %v3260
      %v3262 = vpop.f32.mrb[0].mxu0
      %3263 = vmatprep.mubr.f32.mxu0 %v1668
      %3264 = vmatmul.mubr.f32.gmra.mrb[0].mxu0 %v703
      %v3265 = vpop.f32.mrb[0].mxu0
      %v3266 = vadd.f32 %v875, %v3265
      %v3267 = vpop.f32.mrb[0].mxu0
      %3268 = vmatprep.mubr.f32.mxu0 %v1671
      %3269 = vmatmul.mubr.f32.gmra.mrb[0].mxu0 %v705
      %v3270 = vpop.f32.mrb[0].mxu0
      %v3271 = vadd.f32 %v875, %v3270
      %v3272 = vpop.f32.mrb[0].mxu0
      %3273 = vmatprep.mubr.f32.mxu0 %v1674
      %3274 = vmatmul.mubr.f32.gmra.mrb[0].mxu0 %v707
      %v3275 = vpop.f32.mrb[0].mxu0
      %v3276 = vadd.f32 %v875, %v3275
      %v3277 = vpop.f32.mrb[0].mxu0
      %3278 = vmatprep.mubr.f32.mxu0 %v1677
      %3279 = vmatmul.mubr.f32.gmra.mrb[0].mxu0 %v709
      %v3280 = vpop.f32.mrb[0].mxu0
      %v3281 = vadd.f32 %v875, %v3280
      %v3282 = vpop.f32.mrb[0].mxu0
      %3283 = vmatprep.mubr.f32.mxu0 %v1680
      %3284 = vmatmul.mubr.f32.gmra.mrb[0].mxu0 %v711
      %v3285 = vpop.f32.mrb[0].mxu0
      %v3286 = vadd.f32 %v875, %v3285
      %v3287 = vpop.f32.mrb[0].mxu0
      %3288 = vmatprep.mubr.f32.mxu0 %v1683
      %3289 = vmatmul.mubr.f32.gmra.mrb[0].mxu0 %v713
      %v3290 = vpop.f32.mrb[0].mxu0
      %v3291 = vadd.f32 %v875, %v3290
      %v3292 = vpop.f32.mrb[0].mxu0
      %3293 = vmatprep.mubr.f32.mxu0 %v1686
      %3294 = vmatmul.mubr.f32.gmra.mrb[0].mxu0 %v715
      %v3295 = vpop.f32.mrb[0].mxu0
      %v3296 = vadd.f32 %v875, %v3295
      %v3297 = vpop.f32.mrb[0].mxu0
      %3298 = vmatprep.mubr.f32.mxu0 %v1689
      %3299 = vmatmul.mubr.f32.gmra.mrb[0].mxu0 %v717
      %v3300 = vpop.f32.mrb[0].mxu0
      %v3301 = vadd.f32 %v875, %v3300
      %v3302 = vpop.f32.mrb[0].mxu0
      %3303 = vmatprep.mubr.f32.mxu0 %v1692
      %3304 = vmatmul.mubr.f32.gmra.mrb[0].mxu0 %v719
      %v3305 = vpop.f32.mrb[0].mxu0
      %v3306 = vadd.f32 %v875, %v3305
      %v3307 = vpop.f32.mrb[0].mxu0
      %3308 = vmatprep.mubr.f32.mxu0 %v1695
      %3309 = vmatmul.mubr.f32.gmra.mrb[0].mxu0 %v721
      %v3310 = vpop.f32.mrb[0].mxu0
      %v3311 = vadd.f32 %v875, %v3310
      %v3312 = vpop.f32.mrb[0].mxu0
      %3313 = vmatprep.mubr.f32.mxu0 %v1698
      %3314 = vmatmul.mubr.f32.gmra.mrb[0].mxu0 %v723
      %v3315 = vpop.f32.mrb[0].mxu0
      %v3316 = vadd.f32 %v875, %v3315
      %v3317 = vpop.f32.mrb[0].mxu0
      %3318 = vmatprep.mubr.f32.mxu0 %v1701
      %3319 = vmatmul.mubr.f32.gmra.mrb[0].mxu0 %v725
      %v3320 = vpop.f32.mrb[0].mxu0
      %v3321 = vadd.f32 %v875, %v3320
      %v3322 = vpop.f32.mrb[0].mxu0
      %3323 = vmatprep.mubr.f32.mxu0 %v1704
      %3324 = vmatmul.mubr.f32.gmra.mrb[0].mxu0 %v727
      %v3325 = vpop.f32.mrb[0].mxu0
      %v3326 = vadd.f32 %v875, %v3325
      %v3327 = vpop.f32.mrb[0].mxu0
      %3328 = vmatprep.mubr.f32.mxu0 %v1707
      %3329 = vmatmul.mubr.f32.gmra.mrb[0].mxu0 %v729
      %v3330 = vpop.f32.mrb[0].mxu0
      %v3331 = vadd.f32 %v875, %v3330
      %v3332 = vpop.f32.mrb[0].mxu0
      %3333 = vmatprep.mubr.f32.mxu0 %v1710
      %3334 = vmatmul.mubr.f32.gmra.mrb[0].mxu0 %v731
      %v3335 = vpop.f32.mrb[0].mxu0
      %v3336 = vadd.f32 %v875, %v3335
      %v3337 = vpop.f32.mrb[0].mxu0
      %3338 = vmatprep.mubr.f32.mxu0 %v1713
      %3339 = vmatmul.mubr.f32.gmra.mrb[0].mxu0 %v733
      %v3340 = vpop.f32.mrb[0].mxu0
      %v3341 = vadd.f32 %v875, %v3340
      %v3342 = vpop.f32.mrb[0].mxu0
      %3343 = vmatprep.mubr.f32.mxu0 %v1716
      %3344 = vmatmul.mubr.f32.gmra.mrb[0].mxu0 %v735
      %v3345 = vpop.f32.mrb[0].mxu0
      %v3346 = vadd.f32 %v875, %v3345
      %v3347 = vpop.f32.mrb[0].mxu0
      %3348 = vmatprep.mubr.f32.mxu0 %v1719
      %3349 = vmatmul.mubr.f32.gmra.mrb[0].mxu0 %v737
      %v3350 = vpop.f32.mrb[0].mxu0
      %v3351 = vadd.f32 %v875, %v3350
      %v3352 = vpop.f32.mrb[0].mxu0
      %3353 = vmatprep.mubr.f32.mxu0 %v1722
      %3354 = vmatmul.mubr.f32.gmra.mrb[0].mxu0 %v739
      %v3355 = vpop.f32.mrb[0].mxu0
      %v3356 = vadd.f32 %v875, %v3355
      %v3357 = vpop.f32.mrb[0].mxu0
      %3358 = vmatprep.mubr.f32.mxu0 %v1725
      %3359 = vmatmul.mubr.f32.gmra.mrb[0].mxu0 %v741
      %v3360 = vpop.f32.mrb[0].mxu0
      %v3361 = vadd.f32 %v875, %v3360
      %v3362 = vpop.f32.mrb[0].mxu0
      %3363 = vmatprep.mubr.f32.mxu0 %v1728
      %3364 = vmatmul.mubr.f32.gmra.mrb[0].mxu0 %v743
      %v3365 = vpop.f32.mrb[0].mxu0
      %v3366 = vadd.f32 %v875, %v3365
      %v3367 = vpop.f32.mrb[0].mxu0
      %3368 = vmatprep.mubr.f32.mxu0 %v1731
      %3369 = vmatmul.mubr.f32.gmra.mrb[0].mxu0 %v745
      %v3370 = vpop.f32.mrb[0].mxu0
      %v3371 = vadd.f32 %v875, %v3370
      %v3372 = vpop.f32.mrb[0].mxu0
      %3373 = vmatprep.mubr.f32.mxu0 %v1734
      %3374 = vmatmul.mubr.f32.gmra.mrb[0].mxu0 %v747
      %v3375 = vpop.f32.mrb[0].mxu0
      %v3376 = vadd.f32 %v875, %v3375
      %v3377 = vpop.f32.mrb[0].mxu0
      %3378 = vmatprep.mubr.f32.mxu0 %v1737
      %3379 = vmatmul.mubr.f32.gmra.mrb[0].mxu0 %v749
      %v3380 = vpop.f32.mrb[0].mxu0
      %v3381 = vadd.f32 %v875, %v3380
      %v3382 = vpop.f32.mrb[0].mxu0
      %3383 = vmatprep.mubr.f32.mxu0 %v1740
      %3384 = vmatmul.mubr.f32.gmra.mrb[0].mxu0 %v751
      %v3385 = vpop.f32.mrb[0].mxu0
      %v3386 = vadd.f32 %v875, %v3385
      %v3387 = vpop.f32.mrb[0].mxu0
      %3388 = vmatprep.mubr.f32.mxu0 %v1743
      %3389 = vmatmul.mubr.f32.gmra.mrb[0].mxu0 %v753
      %v3390 = vpop.f32.mrb[0].mxu0
      %v3391 = vadd.f32 %v875, %v3390
      %v3392 = vpop.f32.mrb[0].mxu0
      %3393 = vmatprep.mubr.f32.mxu0 %v1746
      %3394 = vmatmul.mubr.f32.gmra.mrb[0].mxu0 %v755
      %v3395 = vpop.f32.mrb[0].mxu0
      %v3396 = vadd.f32 %v875, %v3395
      %v3397 = vpop.f32.mrb[0].mxu0
      %3398 = vmatprep.mubr.f32.mxu0 %v1749
      %3399 = vmatmul.mubr.f32.gmra.mrb[0].mxu0 %v757
      %v3400 = vpop.f32.mrb[0].mxu0
      %v3401 = vadd.f32 %v875, %v3400
      %v3402 = vpop.f32.mrb[0].mxu0
      %3403 = vmatprep.mubr.f32.mxu0 %v1752
      %3404 = vmatmul.mubr.f32.gmra.mrb[0].mxu0 %v759
      %v3405 = vpop.f32.mrb[0].mxu0
      %v3406 = vadd.f32 %v875, %v3405
      %v3407 = vpop.f32.mrb[0].mxu0
      %3408 = vmatprep.mubr.f32.mxu0 %v1755
      %3409 = vmatmul.mubr.f32.gmra.mrb[0].mxu0 %v761
      %v3410 = vpop.f32.mrb[0].mxu0
      %v3411 = vadd.f32 %v875, %v3410
      %v3412 = vpop.f32.mrb[0].mxu0
      %3413 = vmatprep.mubr.f32.mxu0 %v1758
      %3414 = vmatmul.mubr.f32.gmra.mrb[0].mxu0 %v763
      %v3415 = vpop.f32.mrb[0].mxu0
      %v3416 = vadd.f32 %v875, %v3415
      %v3417 = vpop.f32.mrb[0].mxu0
      %3418 = vmatprep.mubr.f32.mxu0 %v1761
      %3419 = vmatmul.mubr.f32.gmra.mrb[0].mxu0 %v765
      %v3420 = vpop.f32.mrb[0].mxu0
      %v3421 = vadd.f32 %v875, %v3420
      %v3422 = vpop.f32.mrb[0].mxu0
      %3423 = vmatprep.mubr.f32.mxu0 %v1764
      %3424 = vmatmul.mubr.f32.gmra.mrb[0].mxu0 %v767
      %v3425 = vpop.f32.mrb[0].mxu0
      %v3426 = vadd.f32 %v875, %v3425
      %v3427 = vpop.f32.mrb[0].mxu0
      %3428 = vmatprep.mubr.f32.mxu0 %v1767
      %3429 = vmatmul.mubr.f32.gmra.mrb[0].mxu0 %v769
      %v3430 = vpop.f32.mrb[0].mxu0
      %v3431 = vadd.f32 %v875, %v3430
      %v3432 = vpop.f32.mrb[0].mxu0
      %3433 = vmatprep.mubr.f32.mxu0 %v1770
      %3434 = vmatmul.mubr.f32.gmra.mrb[0].mxu0 %v771
      %v3435 = vpop.f32.mrb[0].mxu0
      %v3436 = vadd.f32 %v875, %v3435
      %v3437 = vpop.f32.mrb[0].mxu0
      %3438 = vmatprep.mubr.f32.mxu0 %v1773
      %3439 = vmatmul.mubr.f32.gmra.mrb[0].mxu0 %v773
      %v3440 = vpop.f32.mrb[0].mxu0
      %v3441 = vadd.f32 %v875, %v3440
      %v3442 = vpop.f32.mrb[0].mxu0
      %3443 = vmatprep.mubr.f32.mxu0 %v1776
      %3444 = vmatmul.mubr.f32.gmra.mrb[0].mxu0 %v775
      %v3445 = vpop.f32.mrb[0].mxu0
      %v3446 = vadd.f32 %v875, %v3445
      %v3447 = vpop.f32.mrb[0].mxu0
      %3448 = vmatprep.mubr.f32.mxu0 %v1779
      %3449 = vmatmul.mubr.f32.gmra.mrb[0].mxu0 %v777
      %v3450 = vpop.f32.mrb[0].mxu0
      %v3451 = vadd.f32 %v875, %v3450
      %v3452 = vpop.f32.mrb[0].mxu0
      %3453 = vmatprep.mubr.f32.mxu0 %v1782
      %3454 = vmatmul.mubr.f32.gmra.mrb[0].mxu0 %v779
      %v3455 = vpop.f32.mrb[0].mxu0
      %v3456 = vadd.f32 %v875, %v3455
      %v3457 = vpop.f32.mrb[0].mxu0
      %3458 = vmatprep.mubr.f32.mxu0 %v1785
      %3459 = vmatmul.mubr.f32.gmra.mrb[0].mxu0 %v781
      %v3460 = vpop.f32.mrb[0].mxu0
      %v3461 = vadd.f32 %v875, %v3460
      %v3462 = vpop.f32.mrb[0].mxu0
      %3463 = vmatprep.mubr.f32.mxu0 %v1788
      %3464 = vmatmul.mubr.f32.gmra.mrb[0].mxu0 %v783
      %v3465 = vpop.f32.mrb[0].mxu0
      %v3466 = vadd.f32 %v875, %v3465
      %v3467 = vpop.f32.mrb[0].mxu0
      %3468 = vmatprep.mubr.f32.mxu0 %v1791
      %3469 = vmatmul.mubr.f32.gmra.mrb[0].mxu0 %v785
      %v3470 = vpop.f32.mrb[0].mxu0
      %v3471 = vadd.f32 %v875, %v3470
      %v3472 = vpop.f32.mrb[0].mxu0
      %3473 = vmatprep.mubr.f32.mxu0 %v1794
      %3474 = vmatmul.mubr.f32.gmra.mrb[0].mxu0 %v787
      %v3475 = vpop.f32.mrb[0].mxu0
      %v3476 = vadd.f32 %v875, %v3475
      %v3477 = vpop.f32.mrb[0].mxu0
      %3478 = vmatprep.mubr.f32.mxu0 %v1797
      %3479 = vmatmul.mubr.f32.gmra.mrb[0].mxu0 %v789
      %v3480 = vpop.f32.mrb[0].mxu0
      %v3481 = vadd.f32 %v875, %v3480
      %v3482 = vpop.f32.mrb[0].mxu0
      %3483 = vmatprep.mubr.f32.mxu0 %v1800
      %3484 = vmatmul.mubr.f32.gmra.mrb[0].mxu0 %v791
      %v3485 = vpop.f32.mrb[0].mxu0
      %v3486 = vadd.f32 %v875, %v3485
      %v3487 = vpop.f32.mrb[0].mxu0
      %3488 = vmatprep.mubr.f32.mxu0 %v1803
      %3489 = vmatmul.mubr.f32.gmra.mrb[0].mxu0 %v793
      %v3490 = vpop.f32.mrb[0].mxu0
      %v3491 = vadd.f32 %v875, %v3490
      %v3492 = vpop.f32.mrb[0].mxu0
      %3493 = vmatprep.mubr.f32.mxu0 %v1806
      %3494 = vmatmul.mubr.f32.gmra.mrb[0].mxu0 %v795
      %v3495 = vpop.f32.mrb[0].mxu0
      %v3496 = vadd.f32 %v875, %v3495
      %v3497 = vpop.f32.mrb[0].mxu0
      %3498 = vmatprep.mubr.f32.mxu0 %v1809
      %3499 = vmatmul.mubr.f32.gmra.mrb[0].mxu0 %v797
      %v3500 = vpop.f32.mrb[0].mxu0
      %v3501 = vadd.f32 %v875, %v3500
      %v3502 = vpop.f32.mrb[0].mxu0
      %3503 = vmatprep.mubr.f32.mxu0 %v1812
      %3504 = vmatmul.mubr.f32.gmra.mrb[0].mxu0 %v799
      %v3505 = vpop.f32.mrb[0].mxu0
      %v3506 = vadd.f32 %v875, %v3505
      %v3507 = vpop.f32.mrb[0].mxu0
      %3508 = vmatprep.mubr.f32.mxu0 %v1815
      %3509 = vmatmul.mubr.f32.gmra.mrb[0].mxu0 %v801
      %v3510 = vpop.f32.mrb[0].mxu0
      %v3511 = vadd.f32 %v875, %v3510
      %v3512 = vpop.f32.mrb[0].mxu0
      %3513 = vmatprep.mubr.f32.mxu0 %v1818
      %3514 = vmatmul.mubr.f32.gmra.mrb[0].mxu0 %v803
      %v3515 = vpop.f32.mrb[0].mxu0
      %v3516 = vadd.f32 %v875, %v3515
      %v3517 = vpop.f32.mrb[0].mxu0
      %3518 = vmatprep.mubr.f32.mxu0 %v1821
      %3519 = vmatmul.mubr.f32.gmra.mrb[0].mxu0 %v805
      %v3520 = vpop.f32.mrb[0].mxu0
      %v3521 = vadd.f32 %v875, %v3520
      %v3522 = vpop.f32.mrb[0].mxu0
      %3523 = vmatprep.mubr.f32.mxu0 %v1824
      %3524 = vmatmul.mubr.f32.gmra.mrb[0].mxu0 %v807
      %v3525 = vpop.f32.mrb[0].mxu0
      %v3526 = vadd.f32 %v875, %v3525
      %v3527 = vpop.f32.mrb[0].mxu0
      %3528 = vmatprep.mubr.f32.mxu0 %v1827
      %3529 = vmatmul.mubr.f32.gmra.mrb[0].mxu0 %v809
      %v3530 = vpop.f32.mrb[0].mxu0
      %v3531 = vadd.f32 %v875, %v3530
      %v3532 = vpop.f32.mrb[0].mxu0
      %3533 = vmatprep.mubr.f32.mxu0 %v1830
      %3534 = vmatmul.mubr.f32.gmra.mrb[0].mxu0 %v811
      %v3535 = vpop.f32.mrb[0].mxu0
      %v3536 = vadd.f32 %v875, %v3535
      %v3537 = vpop.f32.mrb[0].mxu0
      %3538 = vmatprep.mubr.f32.mxu0 %v1833
      %3539 = vmatmul.mubr.f32.gmra.mrb[0].mxu0 %v813
      %v3540 = vpop.f32.mrb[0].mxu0
      %v3541 = vadd.f32 %v875, %v3540
      %v3542 = vpop.f32.mrb[0].mxu0
      %3543 = vmatprep.mubr.f32.mxu0 %v1836
      %3544 = vmatmul.mubr.f32.gmra.mrb[0].mxu0 %v815
      %v3545 = vpop.f32.mrb[0].mxu0
      %v3546 = vadd.f32 %v875, %v3545
      %v3547 = vpop.f32.mrb[0].mxu0
      %3548 = vmatprep.mubr.f32.mxu0 %v1839
      %3549 = vmatmul.mubr.f32.gmra.mrb[0].mxu0 %v817
      %v3550 = vpop.f32.mrb[0].mxu0
      %v3551 = vadd.f32 %v875, %v3550
      %v3552 = vpop.f32.mrb[0].mxu0
      %3553 = vmatprep.mubr.f32.mxu0 %v1842
      %3554 = vmatmul.mubr.f32.gmra.mrb[0].mxu0 %v819
      %v3555 = vpop.f32.mrb[0].mxu0
      %v3556 = vadd.f32 %v875, %v3555
      %v3557 = vpop.f32.mrb[0].mxu0
      %3558 = vmatprep.mubr.f32.mxu0 %v1845
      %3559 = vmatmul.mubr.f32.gmra.mrb[0].mxu0 %v821
      %v3560 = vpop.f32.mrb[0].mxu0
      %v3561 = vadd.f32 %v875, %v3560
      %v3562 = vpop.f32.mrb[0].mxu0
      %3563 = vmatprep.mubr.f32.mxu0 %v1848
      %3564 = vmatmul.mubr.f32.gmra.mrb[0].mxu0 %v823
      %v3565 = vpop.f32.mrb[0].mxu0
      %v3566 = vadd.f32 %v875, %v3565
      %v3567 = vpop.f32.mrb[0].mxu0
      %3568 = vmatprep.mubr.f32.mxu0 %v1851
      %3569 = vmatmul.mubr.f32.gmra.mrb[0].mxu0 %v825
      %v3570 = vpop.f32.mrb[0].mxu0
      %v3571 = vadd.f32 %v875, %v3570
      %v3572 = vpop.f32.mrb[0].mxu0
      %3573 = vmatprep.mubr.f32.mxu0 %v1854
      %3574 = vmatmul.mubr.f32.gmra.mrb[0].mxu0 %v827
      %v3575 = vpop.f32.mrb[0].mxu0
      %v3576 = vadd.f32 %v875, %v3575
      %v3577 = vpop.f32.mrb[0].mxu0
      %3578 = vmatprep.mubr.f32.mxu0 %v1857
      %3579 = vmatmul.mubr.f32.gmra.mrb[0].mxu0 %v829
      %v3580 = vpop.f32.mrb[0].mxu0
      %v3581 = vadd.f32 %v875, %v3580
      %v3582 = vpop.f32.mrb[0].mxu0
      %3583 = vmatprep.mubr.f32.mxu0 %v1860
      %3584 = vmatmul.mubr.f32.gmra.mrb[0].mxu0 %v831
      %v3585 = vpop.f32.mrb[0].mxu0
      %v3586 = vadd.f32 %v875, %v3585
      %v3587 = vpop.f32.mrb[0].mxu0
      %3588 = vmatprep.mubr.f32.mxu0 %v1863
      %3589 = vmatmul.mubr.f32.gmra.mrb[0].mxu0 %v833
      %v3590 = vpop.f32.mrb[0].mxu0
      %v3591 = vadd.f32 %v875, %v3590
      %v3592 = vpop.f32.mrb[0].mxu0
      %3593 = vmatprep.mubr.f32.mxu0 %v1866
      %3594 = vmatmul.mubr.f32.gmra.mrb[0].mxu0 %v835
      %v3595 = vpop.f32.mrb[0].mxu0
      %v3596 = vadd.f32 %v875, %v3595
      %v3597 = vpop.f32.mrb[0].mxu0
      %3598 = vmatprep.mubr.f32.mxu0 %v1869
      %3599 = vmatmul.mubr.f32.gmra.mrb[0].mxu0 %v837
      %v3600 = vpop.f32.mrb[0].mxu0
      %v3601 = vadd.f32 %v875, %v3600
      %v3602 = vpop.f32.mrb[0].mxu0
      %3603 = vmatprep.mubr.f32.mxu0 %v1872
      %3604 = vmatmul.mubr.f32.gmra.mrb[0].mxu0 %v839
      %v3605 = vpop.f32.mrb[0].mxu0
      %v3606 = vadd.f32 %v875, %v3605
      %v3607 = vpop.f32.mrb[0].mxu0
      %3608 = vmatprep.mubr.f32.mxu0 %v1875
      %3609 = vmatmul.mubr.f32.gmra.mrb[0].mxu0 %v841
      %v3610 = vpop.f32.mrb[0].mxu0
      %v3611 = vadd.f32 %v875, %v3610
      %v3612 = vpop.f32.mrb[0].mxu0
      %3613 = vmatprep.mubr.f32.mxu0 %v1878
      %3614 = vmatmul.mubr.f32.gmra.mrb[0].mxu0 %v843
      %v3615 = vpop.f32.mrb[0].mxu0
      %v3616 = vadd.f32 %v875, %v3615
      %v3617 = vpop.f32.mrb[0].mxu0
      %3618 = vdwg.mxu0
      %v3619 = vmax.f32 %v1951, 0.0
      %v3620 = vmax.f32 %v1956, 0.0
      %v3621 = vmax.f32 %v1961, 0.0
      %v3622 = vmax.f32 %v1966, 0.0
      %v3623 = vmax.f32 %v1971, 0.0
      %v3624 = vmax.f32 %v1976, 0.0
      %v3625 = vmax.f32 %v1981, 0.0
      %v3626 = vmax.f32 %v1986, 0.0
      %v3627 = vmax.f32 %v1991, 0.0
      %v3628 = vmax.f32 %v1996, 0.0
      %v3629 = vmax.f32 %v2001, 0.0
      %v3630 = vmax.f32 %v2006, 0.0
      %v3631 = vmax.f32 %v2011, 0.0
      %v3632 = vmax.f32 %v2016, 0.0
      %v3633 = vmax.f32 %v2021, 0.0
      %v3634 = vmax.f32 %v2026, 0.0
      %v3635 = vmax.f32 %v2031, 0.0
      %v3636 = vmax.f32 %v2036, 0.0
      %v3637 = vmax.f32 %v2041, 0.0
      %v3638 = vmax.f32 %v2046, 0.0
      %v3639 = vmax.f32 %v2051, 0.0
      %v3640 = vmax.f32 %v2056, 0.0
      %v3641 = vmax.f32 %v2061, 0.0
      %v3642 = vmax.f32 %v2066, 0.0
      %v3643 = vmax.f32 %v2071, 0.0
      %v3644 = vmax.f32 %v2076, 0.0
      %v3645 = vmax.f32 %v2081, 0.0
      %v3646 = vmax.f32 %v2086, 0.0
      %v3647 = vmax.f32 %v2091, 0.0
      %v3648 = vmax.f32 %v2096, 0.0
      %v3649 = vmax.f32 %v2101, 0.0
      %v3650 = vmax.f32 %v2106, 0.0
      %v3651 = vmax.f32 %v2111, 0.0
      %v3652 = vmax.f32 %v2116, 0.0
      %v3653 = vmax.f32 %v2121, 0.0
      %v3654 = vmax.f32 %v2126, 0.0
      %v3655 = vmax.f32 %v2131, 0.0
      %v3656 = vmax.f32 %v2136, 0.0
      %v3657 = vmax.f32 %v2141, 0.0
      %v3658 = vmax.f32 %v2146, 0.0
      %v3659 = vmax.f32 %v2151, 0.0
      %v3660 = vmax.f32 %v2156, 0.0
      %v3661 = vmax.f32 %v2161, 0.0
      %v3662 = vmax.f32 %v2166, 0.0
      %v3663 = vmax.f32 %v2171, 0.0
      %v3664 = vmax.f32 %v2176, 0.0
      %v3665 = vmax.f32 %v2181, 0.0
      %v3666 = vmax.f32 %v2186, 0.0
      %v3667 = vmax.f32 %v2191, 0.0
      %v3668 = vmax.f32 %v2196, 0.0
      %v3669 = vmax.f32 %v2201, 0.0
      %v3670 = vmax.f32 %v2206, 0.0
      %v3671 = vmax.f32 %v2211, 0.0
      %v3672 = vmax.f32 %v2216, 0.0
      %v3673 = vmax.f32 %v2221, 0.0
      %v3674 = vmax.f32 %v2226, 0.0
      %v3675 = vmax.f32 %v2231, 0.0
      %v3676 = vmax.f32 %v2236, 0.0
      %v3677 = vmax.f32 %v2241, 0.0
      %v3678 = vmax.f32 %v2246, 0.0
      %v3679 = vmax.f32 %v2251, 0.0
      %v3680 = vmax.f32 %v2256, 0.0
      %v3681 = vmax.f32 %v2261, 0.0
      %v3682 = vmax.f32 %v2266, 0.0
      %v3683 = vmax.f32 %v2271, 0.0
      %v3684 = vmax.f32 %v2276, 0.0
      %v3685 = vmax.f32 %v2281, 0.0
      %v3686 = vmax.f32 %v2286, 0.0
      %v3687 = vmax.f32 %v2291, 0.0
      %v3688 = vmax.f32 %v2296, 0.0
      %v3689 = vmax.f32 %v2301, 0.0
      %v3690 = vmax.f32 %v2306, 0.0
      %v3691 = vmax.f32 %v2311, 0.0
      %v3692 = vmax.f32 %v2316, 0.0
      %v3693 = vmax.f32 %v2321, 0.0
      %v3694 = vmax.f32 %v2326, 0.0
      %v3695 = vmax.f32 %v2331, 0.0
      %v3696 = vmax.f32 %v2336, 0.0
      %v3697 = vmax.f32 %v2341, 0.0
      %v3698 = vmax.f32 %v2346, 0.0
      %v3699 = vmax.f32 %v2351, 0.0
      %v3700 = vmax.f32 %v2356, 0.0
      %v3701 = vmax.f32 %v2361, 0.0
      %v3702 = vmax.f32 %v2366, 0.0
      %v3703 = vmax.f32 %v2371, 0.0
      %v3704 = vmax.f32 %v2376, 0.0
      %v3705 = vmax.f32 %v2381, 0.0
      %v3706 = vmax.f32 %v2386, 0.0
      %v3707 = vmax.f32 %v2391, 0.0
      %v3708 = vmax.f32 %v2396, 0.0
      %v3709 = vmax.f32 %v2401, 0.0
      %v3710 = vmax.f32 %v2406, 0.0
      %v3711 = vmax.f32 %v2411, 0.0
      %v3712 = vmax.f32 %v2416, 0.0
      %v3713 = vmax.f32 %v2421, 0.0
      %v3714 = vmax.f32 %v2426, 0.0
      %v3715 = vmax.f32 %v2431, 0.0
      %v3716 = vmax.f32 %v2436, 0.0
      %v3717 = vmax.f32 %v2441, 0.0
      %v3718 = vmax.f32 %v2446, 0.0
      %v3719 = vmax.f32 %v2451, 0.0
      %v3720 = vmax.f32 %v2456, 0.0
      %v3721 = vmax.f32 %v2461, 0.0
      %v3722 = vmax.f32 %v2466, 0.0
      %v3723 = vmax.f32 %v2471, 0.0
      %v3724 = vmax.f32 %v2476, 0.0
      %v3725 = vmax.f32 %v2481, 0.0
      %v3726 = vmax.f32 %v2486, 0.0
      %v3727 = vmax.f32 %v2491, 0.0
      %v3728 = vmax.f32 %v2496, 0.0
      %v3729 = vmax.f32 %v2501, 0.0
      %v3730 = vmax.f32 %v2506, 0.0
      %v3731 = vmax.f32 %v2511, 0.0
      %v3732 = vmax.f32 %v2516, 0.0
      %v3733 = vmax.f32 %v2521, 0.0
      %v3734 = vmax.f32 %v2526, 0.0
      %v3735 = vmax.f32 %v2531, 0.0
      %v3736 = vmax.f32 %v2536, 0.0
      %v3737 = vmax.f32 %v2541, 0.0
      %v3738 = vmax.f32 %v2546, 0.0
      %v3739 = vmax.f32 %v2551, 0.0
      %v3740 = vmax.f32 %v2556, 0.0
      %v3741 = vmax.f32 %v2561, 0.0
      %v3742 = vmax.f32 %v2566, 0.0
      %v3743 = vmax.f32 %v2571, 0.0
      %v3744 = vmax.f32 %v2576, 0.0
      %v3745 = vmax.f32 %v2581, 0.0
      %v3746 = vmax.f32 %v2586, 0.0
      %v3747 = vmax.f32 %v2591, 0.0
      %v3748 = vmax.f32 %v2596, 0.0
      %v3749 = vmax.f32 %v2601, 0.0
      %v3750 = vmax.f32 %v2606, 0.0
      %v3751 = vmax.f32 %v2611, 0.0
      %v3752 = vmax.f32 %v2616, 0.0
      %v3753 = vmax.f32 %v2621, 0.0
      %v3754 = vmax.f32 %v2626, 0.0
      %v3755 = vmax.f32 %v2631, 0.0
      %v3756 = vmax.f32 %v2636, 0.0
      %v3757 = vmax.f32 %v2641, 0.0
      %v3758 = vmax.f32 %v2646, 0.0
      %v3759 = vmax.f32 %v2651, 0.0
      %v3760 = vmax.f32 %v2656, 0.0
      %v3761 = vmax.f32 %v2661, 0.0
      %v3762 = vmax.f32 %v2666, 0.0
      %v3763 = vmax.f32 %v2671, 0.0
      %v3764 = vmax.f32 %v2676, 0.0
      %v3765 = vmax.f32 %v2681, 0.0
      %v3766 = vmax.f32 %v2686, 0.0
      %v3767 = vmax.f32 %v2691, 0.0
      %v3768 = vmax.f32 %v2696, 0.0
      %v3769 = vmax.f32 %v2701, 0.0
      %v3770 = vmax.f32 %v2706, 0.0
      %v3771 = vmax.f32 %v2711, 0.0
      %v3772 = vmax.f32 %v2716, 0.0
      %v3773 = vmax.f32 %v2721, 0.0
      %v3774 = vmax.f32 %v2726, 0.0
      %v3775 = vmax.f32 %v2731, 0.0
      %v3776 = vmax.f32 %v2736, 0.0
      %v3777 = vmax.f32 %v2741, 0.0
      %v3778 = vmax.f32 %v2746, 0.0
      %v3779 = vmax.f32 %v2751, 0.0
      %v3780 = vmax.f32 %v2756, 0.0
      %v3781 = vmax.f32 %v2761, 0.0
      %v3782 = vmax.f32 %v2766, 0.0
      %v3783 = vmax.f32 %v2771, 0.0
      %v3784 = vmax.f32 %v2776, 0.0
      %v3785 = vmax.f32 %v2781, 0.0
      %v3786 = vmax.f32 %v2786, 0.0
      %v3787 = vmax.f32 %v2791, 0.0
      %v3788 = vmax.f32 %v2796, 0.0
      %v3789 = vmax.f32 %v2801, 0.0
      %v3790 = vmax.f32 %v2806, 0.0
      %v3791 = vmax.f32 %v2811, 0.0
      %v3792 = vmax.f32 %v2816, 0.0
      %v3793 = vmax.f32 %v2821, 0.0
      %v3794 = vmax.f32 %v2826, 0.0
      %v3795 = vmax.f32 %v2831, 0.0
      %v3796 = vmax.f32 %v2836, 0.0
      %v3797 = vmax.f32 %v2841, 0.0
      %v3798 = vmax.f32 %v2846, 0.0
      %v3799 = vmax.f32 %v2851, 0.0
      %v3800 = vmax.f32 %v2856, 0.0
      %v3801 = vmax.f32 %v2861, 0.0
      %v3802 = vmax.f32 %v2866, 0.0
      %v3803 = vmax.f32 %v2871, 0.0
      %v3804 = vmax.f32 %v2876, 0.0
      %v3805 = vmax.f32 %v2881, 0.0
      %v3806 = vmax.f32 %v2886, 0.0
      %v3807 = vmax.f32 %v2891, 0.0
      %v3808 = vmax.f32 %v2896, 0.0
      %v3809 = vmax.f32 %v2901, 0.0
      %v3810 = vmax.f32 %v2906, 0.0
      %v3811 = vmax.f32 %v2911, 0.0
      %v3812 = vmax.f32 %v2916, 0.0
      %v3813 = vmax.f32 %v2921, 0.0
      %v3814 = vmax.f32 %v2926, 0.0
      %v3815 = vmax.f32 %v2931, 0.0
      %v3816 = vmax.f32 %v2936, 0.0
      %v3817 = vmax.f32 %v2941, 0.0
      %v3818 = vmax.f32 %v2946, 0.0
      %v3819 = vmax.f32 %v2951, 0.0
      %v3820 = vmax.f32 %v2956, 0.0
      %v3821 = vmax.f32 %v2961, 0.0
      %v3822 = vmax.f32 %v2966, 0.0
      %v3823 = vmax.f32 %v2971, 0.0
      %v3824 = vmax.f32 %v2976, 0.0
      %v3825 = vmax.f32 %v2981, 0.0
      %v3826 = vmax.f32 %v2986, 0.0
      %v3827 = vmax.f32 %v2991, 0.0
      %v3828 = vmax.f32 %v2996, 0.0
      %v3829 = vmax.f32 %v3001, 0.0
      %v3830 = vmax.f32 %v3006, 0.0
      %v3831 = vmax.f32 %v3011, 0.0
      %v3832 = vmax.f32 %v3016, 0.0
      %v3833 = vmax.f32 %v3021, 0.0
      %v3834 = vmax.f32 %v3026, 0.0
      %v3835 = vmax.f32 %v3031, 0.0
      %v3836 = vmax.f32 %v3036, 0.0
      %v3837 = vmax.f32 %v3041, 0.0
      %v3838 = vmax.f32 %v3046, 0.0
      %v3839 = vmax.f32 %v3051, 0.0
      %v3840 = vmax.f32 %v3056, 0.0
      %v3841 = vmax.f32 %v3061, 0.0
      %v3842 = vmax.f32 %v3066, 0.0
      %v3843 = vmax.f32 %v3071, 0.0
      %v3844 = vmax.f32 %v3076, 0.0
      %v3845 = vmax.f32 %v3081, 0.0
      %v3846 = vmax.f32 %v3086, 0.0
      %v3847 = vmax.f32 %v3091, 0.0
      %v3848 = vmax.f32 %v3096, 0.0
      %v3849 = vmax.f32 %v3101, 0.0
      %v3850 = vmax.f32 %v3106, 0.0
      %v3851 = vmax.f32 %v3111, 0.0
      %v3852 = vmax.f32 %v3116, 0.0
      %v3853 = vmax.f32 %v3121, 0.0
      %v3854 = vmax.f32 %v3126, 0.0
      %v3855 = vmax.f32 %v3131, 0.0
      %v3856 = vmax.f32 %v3136, 0.0
      %v3857 = vmax.f32 %v3141, 0.0
      %v3858 = vmax.f32 %v3146, 0.0
      %v3859 = vmax.f32 %v3151, 0.0
      %v3860 = vmax.f32 %v3156, 0.0
      %v3861 = vmax.f32 %v3161, 0.0
      %v3862 = vmax.f32 %v3166, 0.0
      %v3863 = vmax.f32 %v3171, 0.0
      %v3864 = vmax.f32 %v3176, 0.0
      %v3865 = vmax.f32 %v3181, 0.0
      %v3866 = vmax.f32 %v3186, 0.0
      %v3867 = vmax.f32 %v3191, 0.0
      %v3868 = vmax.f32 %v3196, 0.0
      %v3869 = vmax.f32 %v3201, 0.0
      %v3870 = vmax.f32 %v3206, 0.0
      %v3871 = vmax.f32 %v3211, 0.0
      %v3872 = vmax.f32 %v3216, 0.0
      %v3873 = vmax.f32 %v3221, 0.0
      %v3874 = vmax.f32 %v3226, 0.0
      %v3875 = vmax.f32 %v3231, 0.0
      %v3876 = vmax.f32 %v3236, 0.0
      %v3877 = vmax.f32 %v3241, 0.0
      %v3878 = vmax.f32 %v3246, 0.0
      %v3879 = vmax.f32 %v3251, 0.0
      %v3880 = vmax.f32 %v3256, 0.0
      %v3881 = vmax.f32 %v3261, 0.0
      %v3882 = vmax.f32 %v3266, 0.0
      %v3883 = vmax.f32 %v3271, 0.0
      %v3884 = vmax.f32 %v3276, 0.0
      %v3885 = vmax.f32 %v3281, 0.0
      %v3886 = vmax.f32 %v3286, 0.0
      %v3887 = vmax.f32 %v3291, 0.0
      %v3888 = vmax.f32 %v3296, 0.0
      %v3889 = vmax.f32 %v3301, 0.0
      %v3890 = vmax.f32 %v3306, 0.0
      %v3891 = vmax.f32 %v3311, 0.0
      %v3892 = vmax.f32 %v3316, 0.0
      %v3893 = vmax.f32 %v3321, 0.0
      %v3894 = vmax.f32 %v3326, 0.0
      %v3895 = vmax.f32 %v3331, 0.0
      %v3896 = vmax.f32 %v3336, 0.0
      %v3897 = vmax.f32 %v3341, 0.0
      %v3898 = vmax.f32 %v3346, 0.0
      %v3899 = vmax.f32 %v3351, 0.0
      %v3900 = vmax.f32 %v3356, 0.0
      %v3901 = vmax.f32 %v3361, 0.0
      %v3902 = vmax.f32 %v3366, 0.0
      %v3903 = vmax.f32 %v3371, 0.0
      %v3904 = vmax.f32 %v3376, 0.0
      %v3905 = vmax.f32 %v3381, 0.0
      %v3906 = vmax.f32 %v3386, 0.0
      %v3907 = vmax.f32 %v3391, 0.0
      %v3908 = vmax.f32 %v3396, 0.0
      %v3909 = vmax.f32 %v3401, 0.0
      %v3910 = vmax.f32 %v3406, 0.0
      %v3911 = vmax.f32 %v3411, 0.0
      %v3912 = vmax.f32 %v3416, 0.0
      %v3913 = vmax.f32 %v3421, 0.0
      %v3914 = vmax.f32 %v3426, 0.0
      %v3915 = vmax.f32 %v3431, 0.0
      %v3916 = vmax.f32 %v3436, 0.0
      %v3917 = vmax.f32 %v3441, 0.0
      %v3918 = vmax.f32 %v3446, 0.0
      %v3919 = vmax.f32 %v3451, 0.0
      %v3920 = vmax.f32 %v3456, 0.0
      %v3921 = vmax.f32 %v3461, 0.0
      %v3922 = vmax.f32 %v3466, 0.0
      %v3923 = vmax.f32 %v3471, 0.0
      %v3924 = vmax.f32 %v3476, 0.0
      %v3925 = vmax.f32 %v3481, 0.0
      %v3926 = vmax.f32 %v3486, 0.0
      %v3927 = vmax.f32 %v3491, 0.0
      %v3928 = vmax.f32 %v3496, 0.0
      %v3929 = vmax.f32 %v3501, 0.0
      %v3930 = vmax.f32 %v3506, 0.0
      %v3931 = vmax.f32 %v3511, 0.0
      %v3932 = vmax.f32 %v3516, 0.0
      %v3933 = vmax.f32 %v3521, 0.0
      %v3934 = vmax.f32 %v3526, 0.0
      %v3935 = vmax.f32 %v3531, 0.0
      %v3936 = vmax.f32 %v3536, 0.0
      %v3937 = vmax.f32 %v3541, 0.0
      %v3938 = vmax.f32 %v3546, 0.0
      %v3939 = vmax.f32 %v3551, 0.0
      %v3940 = vmax.f32 %v3556, 0.0
      %v3941 = vmax.f32 %v3561, 0.0
      %v3942 = vmax.f32 %v3566, 0.0
      %v3943 = vmax.f32 %v3571, 0.0
      %v3944 = vmax.f32 %v3576, 0.0
      %v3945 = vmax.f32 %v3581, 0.0
      %v3946 = vmax.f32 %v3586, 0.0
      %v3947 = vmax.f32 %v3591, 0.0
      %v3948 = vmax.f32 %v3596, 0.0
      %v3949 = vmax.f32 %v3601, 0.0
      %v3950 = vmax.f32 %v3606, 0.0
      %v3951 = vmax.f32 %v3611, 0.0
      %v3952 = vmax.f32 %v3616, 0.0
      %vm3953 = vcmask 64512
      %3954 = vst.msk [vmem:[%s175] sm:$0xff] %vm3953, %v3619
      %3955 = vst.msk [vmem:[%s175 + $0x8] sm:$0xff] %vm3953, %v3620
      %3956 = vst.msk [vmem:[%s175 + $0x10] sm:$0xff] %vm3953, %v3621
      %3957 = vst.msk [vmem:[%s175 + $0x18] sm:$0xff] %vm3953, %v3622
      %3958 = vst.msk [vmem:[%s175 + $0x20] sm:$0xff] %vm3953, %v3623
      %3959 = vst.msk [vmem:[%s175 + $0x28] sm:$0xff] %vm3953, %v3624
      %3960 = vst.msk [vmem:[%s175 + $0x30] sm:$0xff] %vm3953, %v3625
      %3961 = vst.msk [vmem:[%s175 + $0x38] sm:$0xff] %vm3953, %v3626
      %3962 = vst.msk [vmem:[%s175 + $0x40] sm:$0xff] %vm3953, %v3627
      %3963 = vst.msk [vmem:[%s175 + $0x48] sm:$0xff] %vm3953, %v3628
      %3964 = vst.msk [vmem:[%s175 + $0x50] sm:$0xff] %vm3953, %v3629
      %3965 = vst.msk [vmem:[%s175 + $0x58] sm:$0xff] %vm3953, %v3630
      %3966 = vst.msk [vmem:[%s175 + $0x60] sm:$0xff] %vm3953, %v3631
      %3967 = vst.msk [vmem:[%s175 + $0x68] sm:$0xff] %vm3953, %v3632
      %3968 = vst.msk [vmem:[%s175 + $0x70] sm:$0xff] %vm3953, %v3633
      %3969 = vst.msk [vmem:[%s175 + $0x78] sm:$0xff] %vm3953, %v3634
      %3970 = vst.msk [vmem:[%s175 + $0x80] sm:$0xff] %vm3953, %v3635
      %3971 = vst.msk [vmem:[%s175 + $0x88] sm:$0xff] %vm3953, %v3636
      %3972 = vst.msk [vmem:[%s175 + $0x90] sm:$0xff] %vm3953, %v3637
      %3973 = vst.msk [vmem:[%s175 + $0x98] sm:$0xff] %vm3953, %v3638
      %3974 = vst.msk [vmem:[%s175 + $0xa0] sm:$0xff] %vm3953, %v3639
      %3975 = vst.msk [vmem:[%s175 + $0xa8] sm:$0xff] %vm3953, %v3640
      %3976 = vst.msk [vmem:[%s175 + $0xb0] sm:$0xff] %vm3953, %v3641
      %3977 = vst.msk [vmem:[%s175 + $0xb8] sm:$0xff] %vm3953, %v3642
      %3978 = vst.msk [vmem:[%s175 + $0xc0] sm:$0xff] %vm3953, %v3643
      %3979 = vst.msk [vmem:[%s175 + $0xc8] sm:$0xff] %vm3953, %v3644
      %3980 = vst.msk [vmem:[%s175 + $0xd0] sm:$0xff] %vm3953, %v3645
      %3981 = vst.msk [vmem:[%s175 + $0xd8] sm:$0xff] %vm3953, %v3646
      %3982 = vst.msk [vmem:[%s175 + $0xe0] sm:$0xff] %vm3953, %v3647
      %3983 = vst.msk [vmem:[%s175 + $0xe8] sm:$0xff] %vm3953, %v3648
      %3984 = vst.msk [vmem:[%s175 + $0xf0] sm:$0xff] %vm3953, %v3649
      %3985 = vst.msk [vmem:[%s175 + $0xf8] sm:$0xff] %vm3953, %v3650
      %3986 = vst.msk [vmem:[%s175 + $0x100] sm:$0xff] %vm3953, %v3651
      %3987 = vst.msk [vmem:[%s175 + $0x108] sm:$0xff] %vm3953, %v3652
      %3988 = vst.msk [vmem:[%s175 + $0x110] sm:$0xff] %vm3953, %v3653
      %3989 = vst.msk [vmem:[%s175 + $0x118] sm:$0xff] %vm3953, %v3654
      %3990 = vst.msk [vmem:[%s175 + $0x120] sm:$0xff] %vm3953, %v3655
      %3991 = vst.msk [vmem:[%s175 + $0x128] sm:$0xff] %vm3953, %v3656
      %3992 = vst.msk [vmem:[%s175 + $0x130] sm:$0xff] %vm3953, %v3657
      %3993 = vst.msk [vmem:[%s175 + $0x138] sm:$0xff] %vm3953, %v3658
      %3994 = vst.msk [vmem:[%s175 + $0x140] sm:$0xff] %vm3953, %v3659
      %3995 = vst.msk [vmem:[%s175 + $0x148] sm:$0xff] %vm3953, %v3660
      %3996 = vst.msk [vmem:[%s175 + $0x150] sm:$0xff] %vm3953, %v3661
      %3997 = vst.msk [vmem:[%s175 + $0x158] sm:$0xff] %vm3953, %v3662
      %3998 = vst.msk [vmem:[%s175 + $0x160] sm:$0xff] %vm3953, %v3663
      %3999 = vst.msk [vmem:[%s175 + $0x168] sm:$0xff] %vm3953, %v3664
      %4000 = vst.msk [vmem:[%s175 + $0x170] sm:$0xff] %vm3953, %v3665
      %4001 = vst.msk [vmem:[%s175 + $0x178] sm:$0xff] %vm3953, %v3666
      %4002 = vst.msk [vmem:[%s175 + $0x180] sm:$0xff] %vm3953, %v3667
      %4003 = vst.msk [vmem:[%s175 + $0x188] sm:$0xff] %vm3953, %v3668
      %4004 = vst.msk [vmem:[%s175 + $0x190] sm:$0xff] %vm3953, %v3669
      %4005 = vst.msk [vmem:[%s175 + $0x198] sm:$0xff] %vm3953, %v3670
      %4006 = vst.msk [vmem:[%s175 + $0x1a0] sm:$0xff] %vm3953, %v3671
      %4007 = vst.msk [vmem:[%s175 + $0x1a8] sm:$0xff] %vm3953, %v3672
      %4008 = vst.msk [vmem:[%s175 + $0x1b0] sm:$0xff] %vm3953, %v3673
      %4009 = vst.msk [vmem:[%s175 + $0x1b8] sm:$0xff] %vm3953, %v3674
      %4010 = vst.msk [vmem:[%s175 + $0x1c0] sm:$0xff] %vm3953, %v3675
      %4011 = vst.msk [vmem:[%s175 + $0x1c8] sm:$0xff] %vm3953, %v3676
      %4012 = vst.msk [vmem:[%s175 + $0x1d0] sm:$0xff] %vm3953, %v3677
      %4013 = vst.msk [vmem:[%s175 + $0x1d8] sm:$0xff] %vm3953, %v3678
      %4014 = vst.msk [vmem:[%s175 + $0x1e0] sm:$0xff] %vm3953, %v3679
      %4015 = vst.msk [vmem:[%s175 + $0x1e8] sm:$0xff] %vm3953, %v3680
      %4016 = vst.msk [vmem:[%s175 + $0x1f0] sm:$0xff] %vm3953, %v3681
      %4017 = vst.msk [vmem:[%s175 + $0x1f8] sm:$0xff] %vm3953, %v3682
      %4018 = vst.msk [vmem:[%s175 + $0x200] sm:$0xff] %vm3953, %v3683
      %4019 = vst.msk [vmem:[%s175 + $0x208] sm:$0xff] %vm3953, %v3684
      %4020 = vst.msk [vmem:[%s175 + $0x210] sm:$0xff] %vm3953, %v3685
      %4021 = vst.msk [vmem:[%s175 + $0x218] sm:$0xff] %vm3953, %v3686
      %4022 = vst.msk [vmem:[%s175 + $0x220] sm:$0xff] %vm3953, %v3687
      %4023 = vst.msk [vmem:[%s175 + $0x228] sm:$0xff] %vm3953, %v3688
      %4024 = vst.msk [vmem:[%s175 + $0x230] sm:$0xff] %vm3953, %v3689
      %4025 = vst.msk [vmem:[%s175 + $0x238] sm:$0xff] %vm3953, %v3690
      %4026 = vst.msk [vmem:[%s175 + $0x240] sm:$0xff] %vm3953, %v3691
      %4027 = vst.msk [vmem:[%s175 + $0x248] sm:$0xff] %vm3953, %v3692
      %4028 = vst.msk [vmem:[%s175 + $0x250] sm:$0xff] %vm3953, %v3693
      %4029 = vst.msk [vmem:[%s175 + $0x258] sm:$0xff] %vm3953, %v3694
      %4030 = vst.msk [vmem:[%s175 + $0x260] sm:$0xff] %vm3953, %v3695
      %4031 = vst.msk [vmem:[%s175 + $0x268] sm:$0xff] %vm3953, %v3696
      %4032 = vst.msk [vmem:[%s175 + $0x270] sm:$0xff] %vm3953, %v3697
      %4033 = vst.msk [vmem:[%s175 + $0x278] sm:$0xff] %vm3953, %v3698
      %4034 = vst.msk [vmem:[%s175 + $0x280] sm:$0xff] %vm3953, %v3699
      %4035 = vst.msk [vmem:[%s175 + $0x288] sm:$0xff] %vm3953, %v3700
      %4036 = vst.msk [vmem:[%s175 + $0x290] sm:$0xff] %vm3953, %v3701
      %4037 = vst.msk [vmem:[%s175 + $0x298] sm:$0xff] %vm3953, %v3702
      %4038 = vst.msk [vmem:[%s175 + $0x2a0] sm:$0xff] %vm3953, %v3703
      %4039 = vst.msk [vmem:[%s175 + $0x2a8] sm:$0xff] %vm3953, %v3704
      %4040 = vst.msk [vmem:[%s175 + $0x2b0] sm:$0xff] %vm3953, %v3705
      %4041 = vst.msk [vmem:[%s175 + $0x2b8] sm:$0xff] %vm3953, %v3706
      %4042 = vst.msk [vmem:[%s175 + $0x2c0] sm:$0xff] %vm3953, %v3707
      %4043 = vst.msk [vmem:[%s175 + $0x2c8] sm:$0xff] %vm3953, %v3708
      %4044 = vst.msk [vmem:[%s175 + $0x2d0] sm:$0xff] %vm3953, %v3709
      %4045 = vst.msk [vmem:[%s175 + $0x2d8] sm:$0xff] %vm3953, %v3710
      %4046 = vst.msk [vmem:[%s175 + $0x2e0] sm:$0xff] %vm3953, %v3711
      %4047 = vst.msk [vmem:[%s175 + $0x2e8] sm:$0xff] %vm3953, %v3712
      %4048 = vst.msk [vmem:[%s175 + $0x2f0] sm:$0xff] %vm3953, %v3713
      %4049 = vst.msk [vmem:[%s175 + $0x2f8] sm:$0xff] %vm3953, %v3714
      %4050 = vst.msk [vmem:[%s175 + $0x300] sm:$0xff] %vm3953, %v3715
      %4051 = vst.msk [vmem:[%s175 + $0x308] sm:$0xff] %vm3953, %v3716
      %4052 = vst.msk [vmem:[%s175 + $0x310] sm:$0xff] %vm3953, %v3717
      %4053 = vst.msk [vmem:[%s175 + $0x318] sm:$0xff] %vm3953, %v3718
      %4054 = vst.msk [vmem:[%s175 + $0x320] sm:$0xff] %vm3953, %v3719
      %4055 = vst.msk [vmem:[%s175 + $0x328] sm:$0xff] %vm3953, %v3720
      %4056 = vst.msk [vmem:[%s175 + $0x330] sm:$0xff] %vm3953, %v3721
      %4057 = vst.msk [vmem:[%s175 + $0x338] sm:$0xff] %vm3953, %v3722
      %4058 = vst.msk [vmem:[%s175 + $0x340] sm:$0xff] %vm3953, %v3723
      %4059 = vst.msk [vmem:[%s175 + $0x348] sm:$0xff] %vm3953, %v3724
      %4060 = vst.msk [vmem:[%s175 + $0x350] sm:$0xff] %vm3953, %v3725
      %4061 = vst.msk [vmem:[%s175 + $0x358] sm:$0xff] %vm3953, %v3726
      %4062 = vst.msk [vmem:[%s175 + $0x360] sm:$0xff] %vm3953, %v3727
      %4063 = vst.msk [vmem:[%s175 + $0x368] sm:$0xff] %vm3953, %v3728
      %4064 = vst.msk [vmem:[%s175 + $0x370] sm:$0xff] %vm3953, %v3729
      %4065 = vst.msk [vmem:[%s175 + $0x378] sm:$0xff] %vm3953, %v3730
      %4066 = vst.msk [vmem:[%s175 + $0x380] sm:$0xff] %vm3953, %v3731
      %4067 = vst.msk [vmem:[%s175 + $0x388] sm:$0xff] %vm3953, %v3732
      %4068 = vst.msk [vmem:[%s175 + $0x390] sm:$0xff] %vm3953, %v3733
      %4069 = vst.msk [vmem:[%s175 + $0x398] sm:$0xff] %vm3953, %v3734
      %4070 = vst.msk [vmem:[%s175 + $0x3a0] sm:$0xff] %vm3953, %v3735
      %4071 = vst.msk [vmem:[%s175 + $0x3a8] sm:$0xff] %vm3953, %v3736
      %4072 = vst.msk [vmem:[%s175 + $0x3b0] sm:$0xff] %vm3953, %v3737
      %4073 = vst.msk [vmem:[%s175 + $0x3b8] sm:$0xff] %vm3953, %v3738
      %4074 = vst.msk [vmem:[%s175 + $0x3c0] sm:$0xff] %vm3953, %v3739
      %4075 = vst.msk [vmem:[%s175 + $0x3c8] sm:$0xff] %vm3953, %v3740
      %4076 = vst.msk [vmem:[%s175 + $0x3d0] sm:$0xff] %vm3953, %v3741
      %4077 = vst.msk [vmem:[%s175 + $0x3d8] sm:$0xff] %vm3953, %v3742
      %4078 = vst.msk [vmem:[%s175 + $0x3e0] sm:$0xff] %vm3953, %v3743
      %4079 = vst.msk [vmem:[%s175 + $0x3e8] sm:$0xff] %vm3953, %v3744
      %4080 = vst.msk [vmem:[%s175 + $0x3f0] sm:$0xff] %vm3953, %v3745
      %4081 = vst.msk [vmem:[%s175 + $0x3f8] sm:$0xff] %vm3953, %v3746
      %4082 = vst.msk [vmem:[%s175 + $0x400] sm:$0xff] %vm3953, %v3747
      %4083 = vst.msk [vmem:[%s175 + $0x408] sm:$0xff] %vm3953, %v3748
      %4084 = vst.msk [vmem:[%s175 + $0x410] sm:$0xff] %vm3953, %v3749
      %4085 = vst.msk [vmem:[%s175 + $0x418] sm:$0xff] %vm3953, %v3750
      %4086 = vst.msk [vmem:[%s175 + $0x420] sm:$0xff] %vm3953, %v3751
      %4087 = vst.msk [vmem:[%s175 + $0x428] sm:$0xff] %vm3953, %v3752
      %4088 = vst.msk [vmem:[%s175 + $0x430] sm:$0xff] %vm3953, %v3753
      %4089 = vst.msk [vmem:[%s175 + $0x438] sm:$0xff] %vm3953, %v3754
      %4090 = vst.msk [vmem:[%s175 + $0x440] sm:$0xff] %vm3953, %v3755
      %4091 = vst.msk [vmem:[%s175 + $0x448] sm:$0xff] %vm3953, %v3756
      %4092 = vst.msk [vmem:[%s175 + $0x450] sm:$0xff] %vm3953, %v3757
      %4093 = vst.msk [vmem:[%s175 + $0x458] sm:$0xff] %vm3953, %v3758
      %4094 = vst.msk [vmem:[%s175 + $0x460] sm:$0xff] %vm3953, %v3759
      %4095 = vst.msk [vmem:[%s175 + $0x468] sm:$0xff] %vm3953, %v3760
      %4096 = vst.msk [vmem:[%s175 + $0x470] sm:$0xff] %vm3953, %v3761
      %4097 = vst.msk [vmem:[%s175 + $0x478] sm:$0xff] %vm3953, %v3762
      %4098 = vst.msk [vmem:[%s175 + $0x480] sm:$0xff] %vm3953, %v3763
      %4099 = vst.msk [vmem:[%s175 + $0x488] sm:$0xff] %vm3953, %v3764
      %4100 = vst.msk [vmem:[%s175 + $0x490] sm:$0xff] %vm3953, %v3765
      %4101 = vst.msk [vmem:[%s175 + $0x498] sm:$0xff] %vm3953, %v3766
      %4102 = vst.msk [vmem:[%s175 + $0x4a0] sm:$0xff] %vm3953, %v3767
      %4103 = vst.msk [vmem:[%s175 + $0x4a8] sm:$0xff] %vm3953, %v3768
      %4104 = vst.msk [vmem:[%s175 + $0x4b0] sm:$0xff] %vm3953, %v3769
      %4105 = vst.msk [vmem:[%s175 + $0x4b8] sm:$0xff] %vm3953, %v3770
      %4106 = vst.msk [vmem:[%s175 + $0x4c0] sm:$0xff] %vm3953, %v3771
      %4107 = vst.msk [vmem:[%s175 + $0x4c8] sm:$0xff] %vm3953, %v3772
      %4108 = vst.msk [vmem:[%s175 + $0x4d0] sm:$0xff] %vm3953, %v3773
      %4109 = vst.msk [vmem:[%s175 + $0x4d8] sm:$0xff] %vm3953, %v3774
      %4110 = vst.msk [vmem:[%s175 + $0x4e0] sm:$0xff] %vm3953, %v3775
      %4111 = vst.msk [vmem:[%s175 + $0x4e8] sm:$0xff] %vm3953, %v3776
      %4112 = vst.msk [vmem:[%s175 + $0x4f0] sm:$0xff] %vm3953, %v3777
      %4113 = vst.msk [vmem:[%s175 + $0x4f8] sm:$0xff] %vm3953, %v3778
      %4114 = vst.msk [vmem:[%s175 + $0x500] sm:$0xff] %vm3953, %v3779
      %4115 = vst.msk [vmem:[%s175 + $0x508] sm:$0xff] %vm3953, %v3780
      %4116 = vst.msk [vmem:[%s175 + $0x510] sm:$0xff] %vm3953, %v3781
      %4117 = vst.msk [vmem:[%s175 + $0x518] sm:$0xff] %vm3953, %v3782
      %4118 = vst.msk [vmem:[%s175 + $0x520] sm:$0xff] %vm3953, %v3783
      %4119 = vst.msk [vmem:[%s175 + $0x528] sm:$0xff] %vm3953, %v3784
      %4120 = vst.msk [vmem:[%s175 + $0x530] sm:$0xff] %vm3953, %v3785
      %4121 = vst.msk [vmem:[%s175 + $0x538] sm:$0xff] %vm3953, %v3786
      %4122 = vst.msk [vmem:[%s175 + $0x540] sm:$0xff] %vm3953, %v3787
      %4123 = vst.msk [vmem:[%s175 + $0x548] sm:$0xff] %vm3953, %v3788
      %4124 = vst.msk [vmem:[%s175 + $0x550] sm:$0xff] %vm3953, %v3789
      %4125 = vst.msk [vmem:[%s175 + $0x558] sm:$0xff] %vm3953, %v3790
      %4126 = vst.msk [vmem:[%s175 + $0x560] sm:$0xff] %vm3953, %v3791
      %4127 = vst.msk [vmem:[%s175 + $0x568] sm:$0xff] %vm3953, %v3792
      %4128 = vst.msk [vmem:[%s175 + $0x570] sm:$0xff] %vm3953, %v3793
      %4129 = vst.msk [vmem:[%s175 + $0x578] sm:$0xff] %vm3953, %v3794
      %4130 = vst.msk [vmem:[%s175 + $0x580] sm:$0xff] %vm3953, %v3795
      %4131 = vst.msk [vmem:[%s175 + $0x588] sm:$0xff] %vm3953, %v3796
      %4132 = vst.msk [vmem:[%s175 + $0x590] sm:$0xff] %vm3953, %v3797
      %4133 = vst.msk [vmem:[%s175 + $0x598] sm:$0xff] %vm3953, %v3798
      %4134 = vst.msk [vmem:[%s175 + $0x5a0] sm:$0xff] %vm3953, %v3799
      %4135 = vst.msk [vmem:[%s175 + $0x5a8] sm:$0xff] %vm3953, %v3800
      %4136 = vst.msk [vmem:[%s175 + $0x5b0] sm:$0xff] %vm3953, %v3801
      %4137 = vst.msk [vmem:[%s175 + $0x5b8] sm:$0xff] %vm3953, %v3802
      %4138 = vst.msk [vmem:[%s175 + $0x5c0] sm:$0xff] %vm3953, %v3803
      %4139 = vst.msk [vmem:[%s175 + $0x5c8] sm:$0xff] %vm3953, %v3804
      %4140 = vst.msk [vmem:[%s175 + $0x5d0] sm:$0xff] %vm3953, %v3805
      %4141 = vst.msk [vmem:[%s175 + $0x5d8] sm:$0xff] %vm3953, %v3806
      %4142 = vst.msk [vmem:[%s175 + $0x5e0] sm:$0xff] %vm3953, %v3807
      %4143 = vst.msk [vmem:[%s175 + $0x5e8] sm:$0xff] %vm3953, %v3808
      %4144 = vst.msk [vmem:[%s175 + $0x5f0] sm:$0xff] %vm3953, %v3809
      %4145 = vst.msk [vmem:[%s175 + $0x5f8] sm:$0xff] %vm3953, %v3810
      %4146 = vst.msk [vmem:[%s175 + $0x600] sm:$0xff] %vm3953, %v3811
      %4147 = vst.msk [vmem:[%s175 + $0x608] sm:$0xff] %vm3953, %v3812
      %4148 = vst.msk [vmem:[%s175 + $0x610] sm:$0xff] %vm3953, %v3813
      %4149 = vst.msk [vmem:[%s175 + $0x618] sm:$0xff] %vm3953, %v3814
      %4150 = vst.msk [vmem:[%s175 + $0x620] sm:$0xff] %vm3953, %v3815
      %4151 = vst.msk [vmem:[%s175 + $0x628] sm:$0xff] %vm3953, %v3816
      %4152 = vst.msk [vmem:[%s175 + $0x630] sm:$0xff] %vm3953, %v3817
      %4153 = vst.msk [vmem:[%s175 + $0x638] sm:$0xff] %vm3953, %v3818
      %4154 = vst.msk [vmem:[%s175 + $0x640] sm:$0xff] %vm3953, %v3819
      %4155 = vst.msk [vmem:[%s175 + $0x648] sm:$0xff] %vm3953, %v3820
      %4156 = vst.msk [vmem:[%s175 + $0x650] sm:$0xff] %vm3953, %v3821
      %4157 = vst.msk [vmem:[%s175 + $0x658] sm:$0xff] %vm3953, %v3822
      %4158 = vst.msk [vmem:[%s175 + $0x660] sm:$0xff] %vm3953, %v3823
      %4159 = vst.msk [vmem:[%s175 + $0x668] sm:$0xff] %vm3953, %v3824
      %4160 = vst.msk [vmem:[%s175 + $0x670] sm:$0xff] %vm3953, %v3825
      %4161 = vst.msk [vmem:[%s175 + $0x678] sm:$0xff] %vm3953, %v3826
      %4162 = vst.msk [vmem:[%s175 + $0x680] sm:$0xff] %vm3953, %v3827
      %4163 = vst.msk [vmem:[%s175 + $0x688] sm:$0xff] %vm3953, %v3828
      %4164 = vst.msk [vmem:[%s175 + $0x690] sm:$0xff] %vm3953, %v3829
      %4165 = vst.msk [vmem:[%s175 + $0x698] sm:$0xff] %vm3953, %v3830
      %4166 = vst.msk [vmem:[%s175 + $0x6a0] sm:$0xff] %vm3953, %v3831
      %4167 = vst.msk [vmem:[%s175 + $0x6a8] sm:$0xff] %vm3953, %v3832
      %4168 = vst.msk [vmem:[%s175 + $0x6b0] sm:$0xff] %vm3953, %v3833
      %4169 = vst.msk [vmem:[%s175 + $0x6b8] sm:$0xff] %vm3953, %v3834
      %4170 = vst.msk [vmem:[%s175 + $0x6c0] sm:$0xff] %vm3953, %v3835
      %4171 = vst.msk [vmem:[%s175 + $0x6c8] sm:$0xff] %vm3953, %v3836
      %4172 = vst.msk [vmem:[%s175 + $0x6d0] sm:$0xff] %vm3953, %v3837
      %4173 = vst.msk [vmem:[%s175 + $0x6d8] sm:$0xff] %vm3953, %v3838
      %4174 = vst.msk [vmem:[%s175 + $0x6e0] sm:$0xff] %vm3953, %v3839
      %4175 = vst.msk [vmem:[%s175 + $0x6e8] sm:$0xff] %vm3953, %v3840
      %4176 = vst.msk [vmem:[%s175 + $0x6f0] sm:$0xff] %vm3953, %v3841
      %4177 = vst.msk [vmem:[%s175 + $0x6f8] sm:$0xff] %vm3953, %v3842
      %4178 = vst.msk [vmem:[%s175 + $0x700] sm:$0xff] %vm3953, %v3843
      %4179 = vst.msk [vmem:[%s175 + $0x708] sm:$0xff] %vm3953, %v3844
      %4180 = vst.msk [vmem:[%s175 + $0x710] sm:$0xff] %vm3953, %v3845
      %4181 = vst.msk [vmem:[%s175 + $0x718] sm:$0xff] %vm3953, %v3846
      %4182 = vst.msk [vmem:[%s175 + $0x720] sm:$0xff] %vm3953, %v3847
      %4183 = vst.msk [vmem:[%s175 + $0x728] sm:$0xff] %vm3953, %v3848
      %4184 = vst.msk [vmem:[%s175 + $0x730] sm:$0xff] %vm3953, %v3849
      %4185 = vst.msk [vmem:[%s175 + $0x738] sm:$0xff] %vm3953, %v3850
      %4186 = vst.msk [vmem:[%s175 + $0x740] sm:$0xff] %vm3953, %v3851
      %4187 = vst.msk [vmem:[%s175 + $0x748] sm:$0xff] %vm3953, %v3852
      %4188 = vst.msk [vmem:[%s175 + $0x750] sm:$0xff] %vm3953, %v3853
      %4189 = vst.msk [vmem:[%s175 + $0x758] sm:$0xff] %vm3953, %v3854
      %4190 = vst.msk [vmem:[%s175 + $0x760] sm:$0xff] %vm3953, %v3855
      %4191 = vst.msk [vmem:[%s175 + $0x768] sm:$0xff] %vm3953, %v3856
      %4192 = vst.msk [vmem:[%s175 + $0x770] sm:$0xff] %vm3953, %v3857
      %4193 = vst.msk [vmem:[%s175 + $0x778] sm:$0xff] %vm3953, %v3858
      %4194 = vst.msk [vmem:[%s175 + $0x780] sm:$0xff] %vm3953, %v3859
      %4195 = vst.msk [vmem:[%s175 + $0x788] sm:$0xff] %vm3953, %v3860
      %4196 = vst.msk [vmem:[%s175 + $0x790] sm:$0xff] %vm3953, %v3861
      %4197 = vst.msk [vmem:[%s175 + $0x798] sm:$0xff] %vm3953, %v3862
      %4198 = vst.msk [vmem:[%s175 + $0x7a0] sm:$0xff] %vm3953, %v3863
      %4199 = vst.msk [vmem:[%s175 + $0x7a8] sm:$0xff] %vm3953, %v3864
      %4200 = vst.msk [vmem:[%s175 + $0x7b0] sm:$0xff] %vm3953, %v3865
      %4201 = vst.msk [vmem:[%s175 + $0x7b8] sm:$0xff] %vm3953, %v3866
      %4202 = vst.msk [vmem:[%s175 + $0x7c0] sm:$0xff] %vm3953, %v3867
      %4203 = vst.msk [vmem:[%s175 + $0x7c8] sm:$0xff] %vm3953, %v3868
      %4204 = vst.msk [vmem:[%s175 + $0x7d0] sm:$0xff] %vm3953, %v3869
      %4205 = vst.msk [vmem:[%s175 + $0x7d8] sm:$0xff] %vm3953, %v3870
      %4206 = vst.msk [vmem:[%s175 + $0x7e0] sm:$0xff] %vm3953, %v3871
      %4207 = vst.msk [vmem:[%s175 + $0x7e8] sm:$0xff] %vm3953, %v3872
      %4208 = vst.msk [vmem:[%s175 + $0x7f0] sm:$0xff] %vm3953, %v3873
      %4209 = vst.msk [vmem:[%s175 + $0x7f8] sm:$0xff] %vm3953, %v3874
      %4210 = vst.msk [vmem:[%s175 + $0x800] sm:$0xff] %vm3953, %v3875
      %4211 = vst.msk [vmem:[%s175 + $0x808] sm:$0xff] %vm3953, %v3876
      %4212 = vst.msk [vmem:[%s175 + $0x810] sm:$0xff] %vm3953, %v3877
      %4213 = vst.msk [vmem:[%s175 + $0x818] sm:$0xff] %vm3953, %v3878
      %4214 = vst.msk [vmem:[%s175 + $0x820] sm:$0xff] %vm3953, %v3879
      %4215 = vst.msk [vmem:[%s175 + $0x828] sm:$0xff] %vm3953, %v3880
      %4216 = vst.msk [vmem:[%s175 + $0x830] sm:$0xff] %vm3953, %v3881
      %4217 = vst.msk [vmem:[%s175 + $0x838] sm:$0xff] %vm3953, %v3882
      %4218 = vst.msk [vmem:[%s175 + $0x840] sm:$0xff] %vm3953, %v3883
      %4219 = vst.msk [vmem:[%s175 + $0x848] sm:$0xff] %vm3953, %v3884
      %4220 = vst.msk [vmem:[%s175 + $0x850] sm:$0xff] %vm3953, %v3885
      %4221 = vst.msk [vmem:[%s175 + $0x858] sm:$0xff] %vm3953, %v3886
      %4222 = vst.msk [vmem:[%s175 + $0x860] sm:$0xff] %vm3953, %v3887
      %4223 = vst.msk [vmem:[%s175 + $0x868] sm:$0xff] %vm3953, %v3888
      %4224 = vst.msk [vmem:[%s175 + $0x870] sm:$0xff] %vm3953, %v3889
      %4225 = vst.msk [vmem:[%s175 + $0x878] sm:$0xff] %vm3953, %v3890
      %4226 = vst.msk [vmem:[%s175 + $0x880] sm:$0xff] %vm3953, %v3891
      %4227 = vst.msk [vmem:[%s175 + $0x888] sm:$0xff] %vm3953, %v3892
      %4228 = vst.msk [vmem:[%s175 + $0x890] sm:$0xff] %vm3953, %v3893
      %4229 = vst.msk [vmem:[%s175 + $0x898] sm:$0xff] %vm3953, %v3894
      %4230 = vst.msk [vmem:[%s175 + $0x8a0] sm:$0xff] %vm3953, %v3895
      %4231 = vst.msk [vmem:[%s175 + $0x8a8] sm:$0xff] %vm3953, %v3896
      %4232 = vst.msk [vmem:[%s175 + $0x8b0] sm:$0xff] %vm3953, %v3897
      %4233 = vst.msk [vmem:[%s175 + $0x8b8] sm:$0xff] %vm3953, %v3898
      %4234 = vst.msk [vmem:[%s175 + $0x8c0] sm:$0xff] %vm3953, %v3899
      %4235 = vst.msk [vmem:[%s175 + $0x8c8] sm:$0xff] %vm3953, %v3900
      %4236 = vst.msk [vmem:[%s175 + $0x8d0] sm:$0xff] %vm3953, %v3901
      %4237 = vst.msk [vmem:[%s175 + $0x8d8] sm:$0xff] %vm3953, %v3902
      %4238 = vst.msk [vmem:[%s175 + $0x8e0] sm:$0xff] %vm3953, %v3903
      %4239 = vst.msk [vmem:[%s175 + $0x8e8] sm:$0xff] %vm3953, %v3904
      %4240 = vst.msk [vmem:[%s175 + $0x8f0] sm:$0xff] %vm3953, %v3905
      %4241 = vst.msk [vmem:[%s175 + $0x8f8] sm:$0xff] %vm3953, %v3906
      %4242 = vst.msk [vmem:[%s175 + $0x900] sm:$0xff] %vm3953, %v3907
      %4243 = vst.msk [vmem:[%s175 + $0x908] sm:$0xff] %vm3953, %v3908
      %4244 = vst.msk [vmem:[%s175 + $0x910] sm:$0xff] %vm3953, %v3909
      %4245 = vst.msk [vmem:[%s175 + $0x918] sm:$0xff] %vm3953, %v3910
      %4246 = vst.msk [vmem:[%s175 + $0x920] sm:$0xff] %vm3953, %v3911
      %4247 = vst.msk [vmem:[%s175 + $0x928] sm:$0xff] %vm3953, %v3912
      %4248 = vst.msk [vmem:[%s175 + $0x930] sm:$0xff] %vm3953, %v3913
      %4249 = vst.msk [vmem:[%s175 + $0x938] sm:$0xff] %vm3953, %v3914
      %4250 = vst.msk [vmem:[%s175 + $0x940] sm:$0xff] %vm3953, %v3915
      %4251 = vst.msk [vmem:[%s175 + $0x948] sm:$0xff] %vm3953, %v3916
      %4252 = vst.msk [vmem:[%s175 + $0x950] sm:$0xff] %vm3953, %v3917
      %4253 = vst.msk [vmem:[%s175 + $0x958] sm:$0xff] %vm3953, %v3918
      %4254 = vst.msk [vmem:[%s175 + $0x960] sm:$0xff] %vm3953, %v3919
      %4255 = vst.msk [vmem:[%s175 + $0x968] sm:$0xff] %vm3953, %v3920
      %4256 = vst.msk [vmem:[%s175 + $0x970] sm:$0xff] %vm3953, %v3921
      %4257 = vst.msk [vmem:[%s175 + $0x978] sm:$0xff] %vm3953, %v3922
      %4258 = vst.msk [vmem:[%s175 + $0x980] sm:$0xff] %vm3953, %v3923
      %4259 = vst.msk [vmem:[%s175 + $0x988] sm:$0xff] %vm3953, %v3924
      %4260 = vst.msk [vmem:[%s175 + $0x990] sm:$0xff] %vm3953, %v3925
      %4261 = vst.msk [vmem:[%s175 + $0x998] sm:$0xff] %vm3953, %v3926
      %4262 = vst.msk [vmem:[%s175 + $0x9a0] sm:$0xff] %vm3953, %v3927
      %4263 = vst.msk [vmem:[%s175 + $0x9a8] sm:$0xff] %vm3953, %v3928
      %4264 = vst.msk [vmem:[%s175 + $0x9b0] sm:$0xff] %vm3953, %v3929
      %4265 = vst.msk [vmem:[%s175 + $0x9b8] sm:$0xff] %vm3953, %v3930
      %4266 = vst.msk [vmem:[%s175 + $0x9c0] sm:$0xff] %vm3953, %v3931
      %4267 = vst.msk [vmem:[%s175 + $0x9c8] sm:$0xff] %vm3953, %v3932
      %4268 = vst.msk [vmem:[%s175 + $0x9d0] sm:$0xff] %vm3953, %v3933
      %4269 = vst.msk [vmem:[%s175 + $0x9d8] sm:$0xff] %vm3953, %v3934
      %4270 = vst.msk [vmem:[%s175 + $0x9e0] sm:$0xff] %vm3953, %v3935
      %4271 = vst.msk [vmem:[%s175 + $0x9e8] sm:$0xff] %vm3953, %v3936
      %4272 = vst.msk [vmem:[%s175 + $0x9f0] sm:$0xff] %vm3953, %v3937
      %4273 = vst.msk [vmem:[%s175 + $0x9f8] sm:$0xff] %vm3953, %v3938
      %4274 = vst.msk [vmem:[%s175 + $0xa00] sm:$0xff] %vm3953, %v3939
      %4275 = vst.msk [vmem:[%s175 + $0xa08] sm:$0xff] %vm3953, %v3940
      %4276 = vst.msk [vmem:[%s175 + $0xa10] sm:$0xff] %vm3953, %v3941
      %4277 = vst.msk [vmem:[%s175 + $0xa18] sm:$0xff] %vm3953, %v3942
      %4278 = vst.msk [vmem:[%s175 + $0xa20] sm:$0xff] %vm3953, %v3943
      %4279 = vst.msk [vmem:[%s175 + $0xa28] sm:$0xff] %vm3953, %v3944
      %4280 = vst.msk [vmem:[%s175 + $0xa30] sm:$0xff] %vm3953, %v3945
      %4281 = vst.msk [vmem:[%s175 + $0xa38] sm:$0xff] %vm3953, %v3946
      %4282 = vst.msk [vmem:[%s175 + $0xa40] sm:$0xff] %vm3953, %v3947
      %4283 = vst.msk [vmem:[%s175 + $0xa48] sm:$0xff] %vm3953, %v3948
      %4284 = vst.msk [vmem:[%s175 + $0xa50] sm:$0xff] %vm3953, %v3949
      %4285 = vst.msk [vmem:[%s175 + $0xa58] sm:$0xff] %vm3953, %v3950
      %4286 = vst.msk [vmem:[%s175 + $0xa60] sm:$0xff] %vm3953, %v3951
      %4287 = vst.msk [vmem:[%s175 + $0xa68] sm:$0xff] %vm3953, %v3952
      %s4288 = smul.u32 334, %s14
      %p4289 = scmp.lt.s32.totalorder %s4288, 667
      %s4290 = scalar_select %p4289, %s4288, 667
      %s4291 = smul.addr %s4290, 8
      %s4292 = scalar_lea.vmem %s3, %s4291
      // Predicated region
      $region33: #{patch_stn_apply.8} parent=31 // pred_check
        %p4293 = pneg %p100
      $region34: #{patch_stn_apply.8} parent=31 // pred_check_branch
        %4295 = sbr.rel (%p4293) target = $region36
      $region35: #{patch_stn_apply.8} parent=31 // pred_region
        %s4296 = smul.u32 334, %s14
      $region36: #{patch_stn_apply.8} parent=31 // pred_fallthru
        _
    $region32: #{patch_stn_apply.8} parent=5 // pred_fallthru
      _
    %p4297 = scmp.le.s32.totalorder 2, %s9
    // Predicated region
    $region37: #{patch_stn_apply.8} parent=5 // pred_check
      %p4298 = pneg %p4297
    $region38: #{patch_stn_apply.8} parent=5 // pred_check_branch
      %4300 = sbr.rel (%p4298) target = $region40
    $region39: #{patch_stn_apply.8} parent=5 // pred_region
      %s4301 = ssub.s32 %s9, 2
      // Predicated region
      $region41: #{patch_stn_apply.8} parent=39 // pred_check
        %p4302 = pneg %p106
      $region42: #{patch_stn_apply.8} parent=39 // pred_check_branch
        %4304 = sbr.rel (%p4302) target = $region44
      $region43: #{patch_stn_apply.8} parent=39 // pred_region
        %s4305 = smul.u32 334, %s15
        %p4306 = scmp.lt.s32.totalorder %s4305, 667
        %s4307 = scalar_select %p4306, %s4305, 667
        %s4308 = smul.addr %s4307, 8
        %s4309 = scalar_lea.vmem %s3, %s4308
      $region44: #{patch_stn_apply.8} parent=39 // pred_fallthru
        _
    $region40: #{patch_stn_apply.8} parent=5 // pred_fallthru
      _
  $region6: #{patch_stn_apply.8} parent=0 // loop_footer
    %s13 = sadd.s32 1, %s9
  $region7: #{patch_stn_apply.8} parent=0 // loop_footer_branch
    %8 = sbr.rel target = $region3
  $region8: #{patch_stn_apply.8} parent=0 // loop_exit
    _

// kernel: patch_stn_apply.9
$region0: #{patch_stn_apply.9}
  #allocation0 [shape = 'u32[]', space=smem, size = 0x4, offset = 0x4, fixed_abs, tag = 'smem constant byte address 0x4 - core index']
  #allocation1 [shape = 'u32[144,128]{1,0:T(1,128)}', space=vmem, size = 0x12000, scoped, tag = 'internal scratch']
  %s0 = inlined_call_operand.vmem [shape: f32[4,648,8], index: 0, kind: input, shape index: {}]
  %s1 = inlined_call_operand.vmem [shape: f32[648,8], index: 1, kind: output, shape index: {}]
  %s2 = sld [smem:[#allocation0]]
  $region14: #{patch_stn_apply.9} parent=0
    _
  %s4 = ssub.s32 1, %s2
  %s5 = scalar_select 0, %s4, %s2
  // Predicated region
  $region2: #{patch_stn_apply.9} parent=0 // pred_check
    _
  $region3: #{patch_stn_apply.9} parent=0 // pred_check_branch
    %7 = sbr.rel (0) target = $region5
  $region4: #{patch_stn_apply.9} parent=0 // pred_region
    _
  $region5: #{patch_stn_apply.9} parent=0 // pred_fallthru
    _
  %v8 = vld [vmem:[%s0] sm:$0xff]
  %v9 = vld [vmem:[%s0 + $0x8] sm:$0xff]
  %v10 = vld [vmem:[%s0 + $0x10] sm:$0xff]
  %v11 = vld [vmem:[%s0 + $0x18] sm:$0xff]
  %v12 = vld [vmem:[%s0 + $0x20] sm:$0xff]
  %v13 = vld [vmem:[%s0 + $0x28] sm:$0xff]
  %v14 = vld [vmem:[%s0 + $0x30] sm:$0xff]
  %v15 = vld [vmem:[%s0 + $0x38] sm:$0xff]
  %v16 = vld [vmem:[%s0 + $0x40] sm:$0xff]
  %v17 = vld [vmem:[%s0 + $0x48] sm:$0xff]
  %v18 = vld [vmem:[%s0 + $0x50] sm:$0xff]
  %v19 = vld [vmem:[%s0 + $0x58] sm:$0xff]
  %v20 = vld [vmem:[%s0 + $0x60] sm:$0xff]
  %v21 = vld [vmem:[%s0 + $0x68] sm:$0xff]
  %v22 = vld [vmem:[%s0 + $0x70] sm:$0xff]
  %v23 = vld [vmem:[%s0 + $0x78] sm:$0xff]
  %v24 = vld [vmem:[%s0 + $0x80] sm:$0xff]
  %v25 = vld [vmem:[%s0 + $0x88] sm:$0xff]
  %v26 = vld [vmem:[%s0 + $0x90] sm:$0xff]
  %v27 = vld [vmem:[%s0 + $0x98] sm:$0xff]
  %v28 = vld [vmem:[%s0 + $0xa0] sm:$0xff]
  %v29 = vld [vmem:[%s0 + $0xa8] sm:$0xff]
  %v30 = vld [vmem:[%s0 + $0xb0] sm:$0xff]
  %v31 = vld [vmem:[%s0 + $0xb8] sm:$0xff]
  %v32 = vld [vmem:[%s0 + $0xc0] sm:$0xff]
  %v33 = vld [vmem:[%s0 + $0xc8] sm:$0xff]
  %v34 = vld [vmem:[%s0 + $0xd0] sm:$0xff]
  %v35 = vld [vmem:[%s0 + $0xd8] sm:$0xff]
  %v36 = vld [vmem:[%s0 + $0xe0] sm:$0xff]
  %v37 = vld [vmem:[%s0 + $0xe8] sm:$0xff]
  %v38 = vld [vmem:[%s0 + $0xf0] sm:$0xff]
  %v39 = vld [vmem:[%s0 + $0xf8] sm:$0xff]
  %v40 = vld [vmem:[%s0 + $0x100] sm:$0xff]
  %v41 = vld [vmem:[%s0 + $0x108] sm:$0xff]
  %v42 = vld [vmem:[%s0 + $0x110] sm:$0xff]
  %v43 = vld [vmem:[%s0 + $0x118] sm:$0xff]
  %v44 = vld [vmem:[%s0 + $0x120] sm:$0xff]
  %v45 = vld [vmem:[%s0 + $0x128] sm:$0xff]
  %v46 = vld [vmem:[%s0 + $0x130] sm:$0xff]
  %v47 = vld [vmem:[%s0 + $0x138] sm:$0xff]
  %v48 = vld [vmem:[%s0 + $0x140] sm:$0xff]
  %v49 = vld [vmem:[%s0 + $0x148] sm:$0xff]
  %v50 = vld [vmem:[%s0 + $0x150] sm:$0xff]
  %v51 = vld [vmem:[%s0 + $0x158] sm:$0xff]
  %v52 = vld [vmem:[%s0 + $0x160] sm:$0xff]
  %v53 = vld [vmem:[%s0 + $0x168] sm:$0xff]
  %v54 = vld [vmem:[%s0 + $0x170] sm:$0xff]
  %v55 = vld [vmem:[%s0 + $0x178] sm:$0xff]
  %v56 = vld [vmem:[%s0 + $0x180] sm:$0xff]
  %v57 = vld [vmem:[%s0 + $0x188] sm:$0xff]
  %v58 = vld [vmem:[%s0 + $0x190] sm:$0xff]
  %v59 = vld [vmem:[%s0 + $0x198] sm:$0xff]
  %v60 = vld [vmem:[%s0 + $0x1a0] sm:$0xff]
  %v61 = vld [vmem:[%s0 + $0x1a8] sm:$0xff]
  %v62 = vld [vmem:[%s0 + $0x1b0] sm:$0xff]
  %v63 = vld [vmem:[%s0 + $0x1b8] sm:$0xff]
  %v64 = vld [vmem:[%s0 + $0x1c0] sm:$0xff]
  %v65 = vld [vmem:[%s0 + $0x1c8] sm:$0xff]
  %v66 = vld [vmem:[%s0 + $0x1d0] sm:$0xff]
  %v67 = vld [vmem:[%s0 + $0x1d8] sm:$0xff]
  %v68 = vld [vmem:[%s0 + $0x1e0] sm:$0xff]
  %v69 = vld [vmem:[%s0 + $0x1e8] sm:$0xff]
  %v70 = vld [vmem:[%s0 + $0x1f0] sm:$0xff]
  %v71 = vld [vmem:[%s0 + $0x1f8] sm:$0xff]
  %v72 = vld [vmem:[%s0 + $0x200] sm:$0xff]
  %v73 = vld [vmem:[%s0 + $0x208] sm:$0xff]
  %v74 = vld [vmem:[%s0 + $0x210] sm:$0xff]
  %v75 = vld [vmem:[%s0 + $0x218] sm:$0xff]
  %v76 = vld [vmem:[%s0 + $0x220] sm:$0xff]
  %v77 = vld [vmem:[%s0 + $0x228] sm:$0xff]
  %v78 = vld [vmem:[%s0 + $0x230] sm:$0xff]
  %v79 = vld [vmem:[%s0 + $0x238] sm:$0xff]
  %v80 = vld [vmem:[%s0 + $0x240] sm:$0xff]
  %v81 = vld [vmem:[%s0 + $0x248] sm:$0xff]
  %v82 = vld [vmem:[%s0 + $0x250] sm:$0xff]
  %v83 = vld [vmem:[%s0 + $0x258] sm:$0xff]
  %v84 = vld [vmem:[%s0 + $0x260] sm:$0xff]
  %v85 = vld [vmem:[%s0 + $0x268] sm:$0xff]
  %v86 = vld [vmem:[%s0 + $0x270] sm:$0xff]
  %v87 = vld [vmem:[%s0 + $0x278] sm:$0xff]
  %v88 = vld [vmem:[%s0 + $0x280] sm:$0xff]
  %v89 = vld [vmem:[%s0 + $0x288] sm:$0xff]
  %v90 = vld [vmem:[%s0 + $0x290] sm:$0xff]
  %v91 = vld [vmem:[%s0 + $0x298] sm:$0xff]
  %v92 = vld [vmem:[%s0 + $0x2a0] sm:$0xff]
  %v93 = vld [vmem:[%s0 + $0x2a8] sm:$0xff]
  %v94 = vld [vmem:[%s0 + $0x2b0] sm:$0xff]
  %v95 = vld [vmem:[%s0 + $0x2b8] sm:$0xff]
  %v96 = vld [vmem:[%s0 + $0x2c0] sm:$0xff]
  %v97 = vld [vmem:[%s0 + $0x2c8] sm:$0xff]
  %v98 = vld [vmem:[%s0 + $0x2d0] sm:$0xff]
  %v99 = vld [vmem:[%s0 + $0x2d8] sm:$0xff]
  %v100 = vld [vmem:[%s0 + $0x2e0] sm:$0xff]
  %v101 = vld [vmem:[%s0 + $0x2e8] sm:$0xff]
  %v102 = vld [vmem:[%s0 + $0x2f0] sm:$0xff]
  %v103 = vld [vmem:[%s0 + $0x2f8] sm:$0xff]
  %v104 = vld [vmem:[%s0 + $0x300] sm:$0xff]
  %v105 = vld [vmem:[%s0 + $0x308] sm:$0xff]
  %v106 = vld [vmem:[%s0 + $0x310] sm:$0xff]
  %v107 = vld [vmem:[%s0 + $0x318] sm:$0xff]
  %v108 = vld [vmem:[%s0 + $0x320] sm:$0xff]
  %v109 = vld [vmem:[%s0 + $0x328] sm:$0xff]
  %v110 = vld [vmem:[%s0 + $0x330] sm:$0xff]
  %v111 = vld [vmem:[%s0 + $0x338] sm:$0xff]
  %v112 = vld [vmem:[%s0 + $0x340] sm:$0xff]
  %v113 = vld [vmem:[%s0 + $0x348] sm:$0xff]
  %v114 = vld [vmem:[%s0 + $0x350] sm:$0xff]
  %v115 = vld [vmem:[%s0 + $0x358] sm:$0xff]
  %v116 = vld [vmem:[%s0 + $0x360] sm:$0xff]
  %v117 = vld [vmem:[%s0 + $0x368] sm:$0xff]
  %v118 = vld [vmem:[%s0 + $0x370] sm:$0xff]
  %v119 = vld [vmem:[%s0 + $0x378] sm:$0xff]
  %v120 = vld [vmem:[%s0 + $0x380] sm:$0xff]
  %v121 = vld [vmem:[%s0 + $0x388] sm:$0xff]
  %v122 = vld [vmem:[%s0 + $0x390] sm:$0xff]
  %v123 = vld [vmem:[%s0 + $0x398] sm:$0xff]
  %v124 = vld [vmem:[%s0 + $0x3a0] sm:$0xff]
  %v125 = vld [vmem:[%s0 + $0x3a8] sm:$0xff]
  %v126 = vld [vmem:[%s0 + $0x3b0] sm:$0xff]
  %v127 = vld [vmem:[%s0 + $0x3b8] sm:$0xff]
  %v128 = vld [vmem:[%s0 + $0x3c0] sm:$0xff]
  %v129 = vld [vmem:[%s0 + $0x3c8] sm:$0xff]
  %v130 = vld [vmem:[%s0 + $0x3d0] sm:$0xff]
  %v131 = vld [vmem:[%s0 + $0x3d8] sm:$0xff]
  %v132 = vld [vmem:[%s0 + $0x3e0] sm:$0xff]
  %v133 = vld [vmem:[%s0 + $0x3e8] sm:$0xff]
  %v134 = vld [vmem:[%s0 + $0x3f0] sm:$0xff]
  %v135 = vld [vmem:[%s0 + $0x3f8] sm:$0xff]
  %v136 = vld [vmem:[%s0 + $0x400] sm:$0xff]
  %v137 = vld [vmem:[%s0 + $0x408] sm:$0xff]
  %v138 = vld [vmem:[%s0 + $0x410] sm:$0xff]
  %v139 = vld [vmem:[%s0 + $0x418] sm:$0xff]
  %v140 = vld [vmem:[%s0 + $0x420] sm:$0xff]
  %v141 = vld [vmem:[%s0 + $0x428] sm:$0xff]
  %v142 = vld [vmem:[%s0 + $0x430] sm:$0xff]
  %v143 = vld [vmem:[%s0 + $0x438] sm:$0xff]
  %v144 = vld [vmem:[%s0 + $0x440] sm:$0xff]
  %v145 = vld [vmem:[%s0 + $0x448] sm:$0xff]
  %v146 = vld [vmem:[%s0 + $0x450] sm:$0xff]
  %v147 = vld [vmem:[%s0 + $0x458] sm:$0xff]
  %v148 = vld [vmem:[%s0 + $0x460] sm:$0xff]
  %v149 = vld [vmem:[%s0 + $0x468] sm:$0xff]
  %v150 = vld [vmem:[%s0 + $0x470] sm:$0xff]
  %v151 = vld [vmem:[%s0 + $0x478] sm:$0xff]
  %v152 = vld [vmem:[%s0 + $0x480] sm:$0xff]
  %v153 = vld [vmem:[%s0 + $0x488] sm:$0xff]
  %v154 = vld [vmem:[%s0 + $0x490] sm:$0xff]
  %v155 = vld [vmem:[%s0 + $0x498] sm:$0xff]
  %v156 = vld [vmem:[%s0 + $0x4a0] sm:$0xff]
  %v157 = vld [vmem:[%s0 + $0x4a8] sm:$0xff]
  %v158 = vld [vmem:[%s0 + $0x4b0] sm:$0xff]
  %v159 = vld [vmem:[%s0 + $0x4b8] sm:$0xff]
  %v160 = vld [vmem:[%s0 + $0x4c0] sm:$0xff]
  %v161 = vld [vmem:[%s0 + $0x4c8] sm:$0xff]
  %v162 = vld [vmem:[%s0 + $0x4d0] sm:$0xff]
  %v163 = vld [vmem:[%s0 + $0x4d8] sm:$0xff]
  %v164 = vld [vmem:[%s0 + $0x4e0] sm:$0xff]
  %v165 = vld [vmem:[%s0 + $0x4e8] sm:$0xff]
  %v166 = vld [vmem:[%s0 + $0x4f0] sm:$0xff]
  %v167 = vld [vmem:[%s0 + $0x4f8] sm:$0xff]
  %v168 = vld [vmem:[%s0 + $0x500] sm:$0xff]
  %v169 = vld [vmem:[%s0 + $0x508] sm:$0xff]
  %v170 = vld [vmem:[%s0 + $0x510] sm:$0xff]
  %v171 = vld [vmem:[%s0 + $0x518] sm:$0xff]
  %v172 = vld [vmem:[%s0 + $0x520] sm:$0xff]
  %v173 = vld [vmem:[%s0 + $0x528] sm:$0xff]
  %v174 = vld [vmem:[%s0 + $0x530] sm:$0xff]
  %v175 = vld [vmem:[%s0 + $0x538] sm:$0xff]
  %v176 = vld [vmem:[%s0 + $0x540] sm:$0xff]
  %v177 = vld [vmem:[%s0 + $0x548] sm:$0xff]
  %v178 = vld [vmem:[%s0 + $0x550] sm:$0xff]
  %v179 = vld [vmem:[%s0 + $0x558] sm:$0xff]
  %v180 = vld [vmem:[%s0 + $0x560] sm:$0xff]
  %v181 = vld [vmem:[%s0 + $0x568] sm:$0xff]
  %v182 = vld [vmem:[%s0 + $0x570] sm:$0xff]
  %v183 = vld [vmem:[%s0 + $0x578] sm:$0xff]
  %v184 = vld [vmem:[%s0 + $0x580] sm:$0xff]
  %v185 = vld [vmem:[%s0 + $0x588] sm:$0xff]
  %v186 = vld [vmem:[%s0 + $0x590] sm:$0xff]
  %v187 = vld [vmem:[%s0 + $0x598] sm:$0xff]
  %v188 = vld [vmem:[%s0 + $0x5a0] sm:$0xff]
  %v189 = vld [vmem:[%s0 + $0x5a8] sm:$0xff]
  %v190 = vld [vmem:[%s0 + $0x5b0] sm:$0xff]
  %v191 = vld [vmem:[%s0 + $0x5b8] sm:$0xff]
  %v192 = vld [vmem:[%s0 + $0x5c0] sm:$0xff]
  %v193 = vld [vmem:[%s0 + $0x5c8] sm:$0xff]
  %v194 = vld [vmem:[%s0 + $0x5d0] sm:$0xff]
  %v195 = vld [vmem:[%s0 + $0x5d8] sm:$0xff]
  %v196 = vld [vmem:[%s0 + $0x5e0] sm:$0xff]
  %v197 = vld [vmem:[%s0 + $0x5e8] sm:$0xff]
  %v198 = vld [vmem:[%s0 + $0x5f0] sm:$0xff]
  %v199 = vld [vmem:[%s0 + $0x5f8] sm:$0xff]
  %v200 = vld [vmem:[%s0 + $0x600] sm:$0xff]
  %v201 = vld [vmem:[%s0 + $0x608] sm:$0xff]
  %v202 = vld [vmem:[%s0 + $0x610] sm:$0xff]
  %v203 = vld [vmem:[%s0 + $0x618] sm:$0xff]
  %v204 = vld [vmem:[%s0 + $0x620] sm:$0xff]
  %v205 = vld [vmem:[%s0 + $0x628] sm:$0xff]
  %v206 = vld [vmem:[%s0 + $0x630] sm:$0xff]
  %v207 = vld [vmem:[%s0 + $0x638] sm:$0xff]
  %v208 = vld [vmem:[%s0 + $0x640] sm:$0xff]
  %v209 = vld [vmem:[%s0 + $0x648] sm:$0xff]
  %v210 = vld [vmem:[%s0 + $0x650] sm:$0xff]
  %v211 = vld [vmem:[%s0 + $0x658] sm:$0xff]
  %v212 = vld [vmem:[%s0 + $0x660] sm:$0xff]
  %v213 = vld [vmem:[%s0 + $0x668] sm:$0xff]
  %v214 = vld [vmem:[%s0 + $0x670] sm:$0xff]
  %v215 = vld [vmem:[%s0 + $0x678] sm:$0xff]
  %v216 = vld [vmem:[%s0 + $0x680] sm:$0xff]
  %v217 = vld [vmem:[%s0 + $0x688] sm:$0xff]
  %v218 = vld [vmem:[%s0 + $0x690] sm:$0xff]
  %v219 = vld [vmem:[%s0 + $0x698] sm:$0xff]
  %v220 = vld [vmem:[%s0 + $0x6a0] sm:$0xff]
  %v221 = vld [vmem:[%s0 + $0x6a8] sm:$0xff]
  %v222 = vld [vmem:[%s0 + $0x6b0] sm:$0xff]
  %v223 = vld [vmem:[%s0 + $0x6b8] sm:$0xff]
  %v224 = vld [vmem:[%s0 + $0x6c0] sm:$0xff]
  %v225 = vld [vmem:[%s0 + $0x6c8] sm:$0xff]
  %v226 = vld [vmem:[%s0 + $0x6d0] sm:$0xff]
  %v227 = vld [vmem:[%s0 + $0x6d8] sm:$0xff]
  %v228 = vld [vmem:[%s0 + $0x6e0] sm:$0xff]
  %v229 = vld [vmem:[%s0 + $0x6e8] sm:$0xff]
  %v230 = vld [vmem:[%s0 + $0x6f0] sm:$0xff]
  %v231 = vld [vmem:[%s0 + $0x6f8] sm:$0xff]
  %v232 = vld [vmem:[%s0 + $0x700] sm:$0xff]
  %v233 = vld [vmem:[%s0 + $0x708] sm:$0xff]
  %v234 = vld [vmem:[%s0 + $0x710] sm:$0xff]
  %v235 = vld [vmem:[%s0 + $0x718] sm:$0xff]
  %v236 = vld [vmem:[%s0 + $0x720] sm:$0xff]
  %v237 = vld [vmem:[%s0 + $0x728] sm:$0xff]
  %v238 = vld [vmem:[%s0 + $0x730] sm:$0xff]
  %v239 = vld [vmem:[%s0 + $0x738] sm:$0xff]
  %v240 = vld [vmem:[%s0 + $0x740] sm:$0xff]
  %v241 = vld [vmem:[%s0 + $0x748] sm:$0xff]
  %v242 = vld [vmem:[%s0 + $0x750] sm:$0xff]
  %v243 = vld [vmem:[%s0 + $0x758] sm:$0xff]
  %v244 = vld [vmem:[%s0 + $0x760] sm:$0xff]
  %v245 = vld [vmem:[%s0 + $0x768] sm:$0xff]
  %v246 = vld [vmem:[%s0 + $0x770] sm:$0xff]
  %v247 = vld [vmem:[%s0 + $0x778] sm:$0xff]
  %v248 = vld [vmem:[%s0 + $0x780] sm:$0xff]
  %v249 = vld [vmem:[%s0 + $0x788] sm:$0xff]
  %v250 = vld [vmem:[%s0 + $0x790] sm:$0xff]
  %v251 = vld [vmem:[%s0 + $0x798] sm:$0xff]
  %v252 = vld [vmem:[%s0 + $0x7a0] sm:$0xff]
  %v253 = vld [vmem:[%s0 + $0x7a8] sm:$0xff]
  %v254 = vld [vmem:[%s0 + $0x7b0] sm:$0xff]
  %v255 = vld [vmem:[%s0 + $0x7b8] sm:$0xff]
  %v256 = vld [vmem:[%s0 + $0x7c0] sm:$0xff]
  %v257 = vld [vmem:[%s0 + $0x7c8] sm:$0xff]
  %v258 = vld [vmem:[%s0 + $0x7d0] sm:$0xff]
  %v259 = vld [vmem:[%s0 + $0x7d8] sm:$0xff]
  %v260 = vld [vmem:[%s0 + $0x7e0] sm:$0xff]
  %v261 = vld [vmem:[%s0 + $0x7e8] sm:$0xff]
  %v262 = vld [vmem:[%s0 + $0x7f0] sm:$0xff]
  %v263 = vld [vmem:[%s0 + $0x7f8] sm:$0xff]
  %v264 = vld [vmem:[%s0 + $0x800] sm:$0xff]
  %v265 = vld [vmem:[%s0 + $0x808] sm:$0xff]
  %v266 = vld [vmem:[%s0 + $0x810] sm:$0xff]
  %v267 = vld [vmem:[%s0 + $0x818] sm:$0xff]
  %v268 = vld [vmem:[%s0 + $0x820] sm:$0xff]
  %v269 = vld [vmem:[%s0 + $0x828] sm:$0xff]
  %v270 = vld [vmem:[%s0 + $0x830] sm:$0xff]
  %v271 = vld [vmem:[%s0 + $0x838] sm:$0xff]
  %v272 = vld [vmem:[%s0 + $0x840] sm:$0xff]
  %v273 = vld [vmem:[%s0 + $0x848] sm:$0xff]
  %v274 = vld [vmem:[%s0 + $0x850] sm:$0xff]
  %v275 = vld [vmem:[%s0 + $0x858] sm:$0xff]
  %v276 = vld [vmem:[%s0 + $0x860] sm:$0xff]
  %v277 = vld [vmem:[%s0 + $0x868] sm:$0xff]
  %v278 = vld [vmem:[%s0 + $0x870] sm:$0xff]
  %v279 = vld [vmem:[%s0 + $0x878] sm:$0xff]
  %v280 = vld [vmem:[%s0 + $0x880] sm:$0xff]
  %v281 = vld [vmem:[%s0 + $0x888] sm:$0xff]
  %v282 = vld [vmem:[%s0 + $0x890] sm:$0xff]
  %v283 = vld [vmem:[%s0 + $0x898] sm:$0xff]
  %v284 = vld [vmem:[%s0 + $0x8a0] sm:$0xff]
  %v285 = vld [vmem:[%s0 + $0x8a8] sm:$0xff]
  %v286 = vld [vmem:[%s0 + $0x8b0] sm:$0xff]
  %v287 = vld [vmem:[%s0 + $0x8b8] sm:$0xff]
  %v288 = vld [vmem:[%s0 + $0x8c0] sm:$0xff]
  %v289 = vld [vmem:[%s0 + $0x8c8] sm:$0xff]
  %v290 = vld [vmem:[%s0 + $0x8d0] sm:$0xff]
  %v291 = vld [vmem:[%s0 + $0x8d8] sm:$0xff]
  %v292 = vld [vmem:[%s0 + $0x8e0] sm:$0xff]
  %v293 = vld [vmem:[%s0 + $0x8e8] sm:$0xff]
  %v294 = vld [vmem:[%s0 + $0x8f0] sm:$0xff]
  %v295 = vld [vmem:[%s0 + $0x8f8] sm:$0xff]
  %v296 = vld [vmem:[%s0 + $0x900] sm:$0xff]
  %v297 = vld [vmem:[%s0 + $0x908] sm:$0xff]
  %v298 = vld [vmem:[%s0 + $0x910] sm:$0xff]
  %v299 = vld [vmem:[%s0 + $0x918] sm:$0xff]
  %v300 = vld [vmem:[%s0 + $0x920] sm:$0xff]
  %v301 = vld [vmem:[%s0 + $0x928] sm:$0xff]
  %v302 = vld [vmem:[%s0 + $0x930] sm:$0xff]
  %v303 = vld [vmem:[%s0 + $0x938] sm:$0xff]
  %v304 = vld [vmem:[%s0 + $0x940] sm:$0xff]
  %v305 = vld [vmem:[%s0 + $0x948] sm:$0xff]
  %v306 = vld [vmem:[%s0 + $0x950] sm:$0xff]
  %v307 = vld [vmem:[%s0 + $0x958] sm:$0xff]
  %v308 = vld [vmem:[%s0 + $0x960] sm:$0xff]
  %v309 = vld [vmem:[%s0 + $0x968] sm:$0xff]
  %v310 = vld [vmem:[%s0 + $0x970] sm:$0xff]
  %v311 = vld [vmem:[%s0 + $0x978] sm:$0xff]
  %v312 = vld [vmem:[%s0 + $0x980] sm:$0xff]
  %v313 = vld [vmem:[%s0 + $0x988] sm:$0xff]
  %v314 = vld [vmem:[%s0 + $0x990] sm:$0xff]
  %v315 = vld [vmem:[%s0 + $0x998] sm:$0xff]
  %v316 = vld [vmem:[%s0 + $0x9a0] sm:$0xff]
  %v317 = vld [vmem:[%s0 + $0x9a8] sm:$0xff]
  %v318 = vld [vmem:[%s0 + $0x9b0] sm:$0xff]
  %v319 = vld [vmem:[%s0 + $0x9b8] sm:$0xff]
  %v320 = vld [vmem:[%s0 + $0x9c0] sm:$0xff]
  %v321 = vld [vmem:[%s0 + $0x9c8] sm:$0xff]
  %v322 = vld [vmem:[%s0 + $0x9d0] sm:$0xff]
  %v323 = vld [vmem:[%s0 + $0x9d8] sm:$0xff]
  %v324 = vld [vmem:[%s0 + $0x9e0] sm:$0xff]
  %v325 = vld [vmem:[%s0 + $0x9e8] sm:$0xff]
  %v326 = vld [vmem:[%s0 + $0x9f0] sm:$0xff]
  %v327 = vld [vmem:[%s0 + $0x9f8] sm:$0xff]
  %v328 = vld [vmem:[%s0 + $0xa00] sm:$0xff]
  %v329 = vld [vmem:[%s0 + $0xa08] sm:$0xff]
  %v330 = vld [vmem:[%s0 + $0xa10] sm:$0xff]
  %v331 = vld [vmem:[%s0 + $0xa18] sm:$0xff]
  %vm332 = vcmask 64512
  %v333 = vsel %vm332, %v8, -inf
  %v334 = vsel %vm332, %v89, -inf
  %v335 = vmax.f32 %v333, %v334
  %v336 = vsel %vm332, %v170, -inf
  %v337 = vmax.f32 %v335, %v336
  %v338 = vsel %vm332, %v251, -inf
  %v339 = vmax.f32 %v337, %v338
  %v340 = vsel %vm332, %v9, -inf
  %v341 = vsel %vm332, %v90, -inf
  %v342 = vmax.f32 %v340, %v341
  %v343 = vsel %vm332, %v171, -inf
  %v344 = vmax.f32 %v342, %v343
  %v345 = vsel %vm332, %v252, -inf
  %v346 = vmax.f32 %v344, %v345
  %v347 = vsel %vm332, %v10, -inf
  %v348 = vsel %vm332, %v91, -inf
  %v349 = vmax.f32 %v347, %v348
  %v350 = vsel %vm332, %v172, -inf
  %v351 = vmax.f32 %v349, %v350
  %v352 = vsel %vm332, %v253, -inf
  %v353 = vmax.f32 %v351, %v352
  %v354 = vsel %vm332, %v11, -inf
  %v355 = vsel %vm332, %v92, -inf
  %v356 = vmax.f32 %v354, %v355
  %v357 = vsel %vm332, %v173, -inf
  %v358 = vmax.f32 %v356, %v357
  %v359 = vsel %vm332, %v254, -inf
  %v360 = vmax.f32 %v358, %v359
  %v361 = vsel %vm332, %v12, -inf
  %v362 = vsel %vm332, %v93, -inf
  %v363 = vmax.f32 %v361, %v362
  %v364 = vsel %vm332, %v174, -inf
  %v365 = vmax.f32 %v363, %v364
  %v366 = vsel %vm332, %v255, -inf
  %v367 = vmax.f32 %v365, %v366
  %v368 = vsel %vm332, %v13, -inf
  %v369 = vsel %vm332, %v94, -inf
  %v370 = vmax.f32 %v368, %v369
  %v371 = vsel %vm332, %v175, -inf
  %v372 = vmax.f32 %v370, %v371
  %v373 = vsel %vm332, %v256, -inf
  %v374 = vmax.f32 %v372, %v373
  %v375 = vsel %vm332, %v14, -inf
  %v376 = vsel %vm332, %v95, -inf
  %v377 = vmax.f32 %v375, %v376
  %v378 = vsel %vm332, %v176, -inf
  %v379 = vmax.f32 %v377, %v378
  %v380 = vsel %vm332, %v257, -inf
  %v381 = vmax.f32 %v379, %v380
  %v382 = vsel %vm332, %v15, -inf
  %v383 = vsel %vm332, %v96, -inf
  %v384 = vmax.f32 %v382, %v383
  %v385 = vsel %vm332, %v177, -inf
  %v386 = vmax.f32 %v384, %v385
  %v387 = vsel %vm332, %v258, -inf
  %v388 = vmax.f32 %v386, %v387
  %v389 = vsel %vm332, %v16, -inf
  %v390 = vsel %vm332, %v97, -inf
  %v391 = vmax.f32 %v389, %v390
  %v392 = vsel %vm332, %v178, -inf
  %v393 = vmax.f32 %v391, %v392
  %v394 = vsel %vm332, %v259, -inf
  %v395 = vmax.f32 %v393, %v394
  %v396 = vsel %vm332, %v17, -inf
  %v397 = vsel %vm332, %v98, -inf
  %v398 = vmax.f32 %v396, %v397
  %v399 = vsel %vm332, %v179, -inf
  %v400 = vmax.f32 %v398, %v399
  %v401 = vsel %vm332, %v260, -inf
  %v402 = vmax.f32 %v400, %v401
  %v403 = vsel %vm332, %v18, -inf
  %v404 = vsel %vm332, %v99, -inf
  %v405 = vmax.f32 %v403, %v404
  %v406 = vsel %vm332, %v180, -inf
  %v407 = vmax.f32 %v405, %v406
  %v408 = vsel %vm332, %v261, -inf
  %v409 = vmax.f32 %v407, %v408
  %v410 = vsel %vm332, %v19, -inf
  %v411 = vsel %vm332, %v100, -inf
  %v412 = vmax.f32 %v410, %v411
  %v413 = vsel %vm332, %v181, -inf
  %v414 = vmax.f32 %v412, %v413
  %v415 = vsel %vm332, %v262, -inf
  %v416 = vmax.f32 %v414, %v415
  %v417 = vsel %vm332, %v20, -inf
  %v418 = vsel %vm332, %v101, -inf
  %v419 = vmax.f32 %v417, %v418
  %v420 = vsel %vm332, %v182, -inf
  %v421 = vmax.f32 %v419, %v420
  %v422 = vsel %vm332, %v263, -inf
  %v423 = vmax.f32 %v421, %v422
  %v424 = vsel %vm332, %v21, -inf
  %v425 = vsel %vm332, %v102, -inf
  %v426 = vmax.f32 %v424, %v425
  %v427 = vsel %vm332, %v183, -inf
  %v428 = vmax.f32 %v426, %v427
  %v429 = vsel %vm332, %v264, -inf
  %v430 = vmax.f32 %v428, %v429
  %v431 = vsel %vm332, %v22, -inf
  %v432 = vsel %vm332, %v103, -inf
  %v433 = vmax.f32 %v431, %v432
  %v434 = vsel %vm332, %v184, -inf
  %v435 = vmax.f32 %v433, %v434
  %v436 = vsel %vm332, %v265, -inf
  %v437 = vmax.f32 %v435, %v436
  %v438 = vsel %vm332, %v23, -inf
  %v439 = vsel %vm332, %v104, -inf
  %v440 = vmax.f32 %v438, %v439
  %v441 = vsel %vm332, %v185, -inf
  %v442 = vmax.f32 %v440, %v441
  %v443 = vsel %vm332, %v266, -inf
  %v444 = vmax.f32 %v442, %v443
  %v445 = vsel %vm332, %v24, -inf
  %v446 = vsel %vm332, %v105, -inf
  %v447 = vmax.f32 %v445, %v446
  %v448 = vsel %vm332, %v186, -inf
  %v449 = vmax.f32 %v447, %v448
  %v450 = vsel %vm332, %v267, -inf
  %v451 = vmax.f32 %v449, %v450
  %v452 = vsel %vm332, %v25, -inf
  %v453 = vsel %vm332, %v106, -inf
  %v454 = vmax.f32 %v452, %v453
  %v455 = vsel %vm332, %v187, -inf
  %v456 = vmax.f32 %v454, %v455
  %v457 = vsel %vm332, %v268, -inf
  %v458 = vmax.f32 %v456, %v457
  %v459 = vsel %vm332, %v26, -inf
  %v460 = vsel %vm332, %v107, -inf
  %v461 = vmax.f32 %v459, %v460
  %v462 = vsel %vm332, %v188, -inf
  %v463 = vmax.f32 %v461, %v462
  %v464 = vsel %vm332, %v269, -inf
  %v465 = vmax.f32 %v463, %v464
  %v466 = vsel %vm332, %v27, -inf
  %v467 = vsel %vm332, %v108, -inf
  %v468 = vmax.f32 %v466, %v467
  %v469 = vsel %vm332, %v189, -inf
  %v470 = vmax.f32 %v468, %v469
  %v471 = vsel %vm332, %v270, -inf
  %v472 = vmax.f32 %v470, %v471
  %v473 = vsel %vm332, %v28, -inf
  %v474 = vsel %vm332, %v109, -inf
  %v475 = vmax.f32 %v473, %v474
  %v476 = vsel %vm332, %v190, -inf
  %v477 = vmax.f32 %v475, %v476
  %v478 = vsel %vm332, %v271, -inf
  %v479 = vmax.f32 %v477, %v478
  %v480 = vsel %vm332, %v29, -inf
  %v481 = vsel %vm332, %v110, -inf
  %v482 = vmax.f32 %v480, %v481
  %v483 = vsel %vm332, %v191, -inf
  %v484 = vmax.f32 %v482, %v483
  %v485 = vsel %vm332, %v272, -inf
  %v486 = vmax.f32 %v484, %v485
  %v487 = vsel %vm332, %v30, -inf
  %v488 = vsel %vm332, %v111, -inf
  %v489 = vmax.f32 %v487, %v488
  %v490 = vsel %vm332, %v192, -inf
  %v491 = vmax.f32 %v489, %v490
  %v492 = vsel %vm332, %v273, -inf
  %v493 = vmax.f32 %v491, %v492
  %v494 = vsel %vm332, %v31, -inf
  %v495 = vsel %vm332, %v112, -inf
  %v496 = vmax.f32 %v494, %v495
  %v497 = vsel %vm332, %v193, -inf
  %v498 = vmax.f32 %v496, %v497
  %v499 = vsel %vm332, %v274, -inf
  %v500 = vmax.f32 %v498, %v499
  %v501 = vsel %vm332, %v32, -inf
  %v502 = vsel %vm332, %v113, -inf
  %v503 = vmax.f32 %v501, %v502
  %v504 = vsel %vm332, %v194, -inf
  %v505 = vmax.f32 %v503, %v504
  %v506 = vsel %vm332, %v275, -inf
  %v507 = vmax.f32 %v505, %v506
  %v508 = vsel %vm332, %v33, -inf
  %v509 = vsel %vm332, %v114, -inf
  %v510 = vmax.f32 %v508, %v509
  %v511 = vsel %vm332, %v195, -inf
  %v512 = vmax.f32 %v510, %v511
  %v513 = vsel %vm332, %v276, -inf
  %v514 = vmax.f32 %v512, %v513
  %v515 = vsel %vm332, %v34, -inf
  %v516 = vsel %vm332, %v115, -inf
  %v517 = vmax.f32 %v515, %v516
  %v518 = vsel %vm332, %v196, -inf
  %v519 = vmax.f32 %v517, %v518
  %v520 = vsel %vm332, %v277, -inf
  %v521 = vmax.f32 %v519, %v520
  %v522 = vsel %vm332, %v35, -inf
  %v523 = vsel %vm332, %v116, -inf
  %v524 = vmax.f32 %v522, %v523
  %v525 = vsel %vm332, %v197, -inf
  %v526 = vmax.f32 %v524, %v525
  %v527 = vsel %vm332, %v278, -inf
  %v528 = vmax.f32 %v526, %v527
  %v529 = vsel %vm332, %v36, -inf
  %v530 = vsel %vm332, %v117, -inf
  %v531 = vmax.f32 %v529, %v530
  %v532 = vsel %vm332, %v198, -inf
  %v533 = vmax.f32 %v531, %v532
  %v534 = vsel %vm332, %v279, -inf
  %v535 = vmax.f32 %v533, %v534
  %v536 = vsel %vm332, %v37, -inf
  %v537 = vsel %vm332, %v118, -inf
  %v538 = vmax.f32 %v536, %v537
  %v539 = vsel %vm332, %v199, -inf
  %v540 = vmax.f32 %v538, %v539
  %v541 = vsel %vm332, %v280, -inf
  %v542 = vmax.f32 %v540, %v541
  %v543 = vsel %vm332, %v38, -inf
  %v544 = vsel %vm332, %v119, -inf
  %v545 = vmax.f32 %v543, %v544
  %v546 = vsel %vm332, %v200, -inf
  %v547 = vmax.f32 %v545, %v546
  %v548 = vsel %vm332, %v281, -inf
  %v549 = vmax.f32 %v547, %v548
  %v550 = vsel %vm332, %v39, -inf
  %v551 = vsel %vm332, %v120, -inf
  %v552 = vmax.f32 %v550, %v551
  %v553 = vsel %vm332, %v201, -inf
  %v554 = vmax.f32 %v552, %v553
  %v555 = vsel %vm332, %v282, -inf
  %v556 = vmax.f32 %v554, %v555
  %v557 = vsel %vm332, %v40, -inf
  %v558 = vsel %vm332, %v121, -inf
  %v559 = vmax.f32 %v557, %v558
  %v560 = vsel %vm332, %v202, -inf
  %v561 = vmax.f32 %v559, %v560
  %v562 = vsel %vm332, %v283, -inf
  %v563 = vmax.f32 %v561, %v562
  %v564 = vsel %vm332, %v41, -inf
  %v565 = vsel %vm332, %v122, -inf
  %v566 = vmax.f32 %v564, %v565
  %v567 = vsel %vm332, %v203, -inf
  %v568 = vmax.f32 %v566, %v567
  %v569 = vsel %vm332, %v284, -inf
  %v570 = vmax.f32 %v568, %v569
  %v571 = vsel %vm332, %v42, -inf
  %v572 = vsel %vm332, %v123, -inf
  %v573 = vmax.f32 %v571, %v572
  %v574 = vsel %vm332, %v204, -inf
  %v575 = vmax.f32 %v573, %v574
  %v576 = vsel %vm332, %v285, -inf
  %v577 = vmax.f32 %v575, %v576
  %v578 = vsel %vm332, %v43, -inf
  %v579 = vsel %vm332, %v124, -inf
  %v580 = vmax.f32 %v578, %v579
  %v581 = vsel %vm332, %v205, -inf
  %v582 = vmax.f32 %v580, %v581
  %v583 = vsel %vm332, %v286, -inf
  %v584 = vmax.f32 %v582, %v583
  %v585 = vsel %vm332, %v44, -inf
  %v586 = vsel %vm332, %v125, -inf
  %v587 = vmax.f32 %v585, %v586
  %v588 = vsel %vm332, %v206, -inf
  %v589 = vmax.f32 %v587, %v588
  %v590 = vsel %vm332, %v287, -inf
  %v591 = vmax.f32 %v589, %v590
  %v592 = vsel %vm332, %v45, -inf
  %v593 = vsel %vm332, %v126, -inf
  %v594 = vmax.f32 %v592, %v593
  %v595 = vsel %vm332, %v207, -inf
  %v596 = vmax.f32 %v594, %v595
  %v597 = vsel %vm332, %v288, -inf
  %v598 = vmax.f32 %v596, %v597
  %v599 = vsel %vm332, %v46, -inf
  %v600 = vsel %vm332, %v127, -inf
  %v601 = vmax.f32 %v599, %v600
  %v602 = vsel %vm332, %v208, -inf
  %v603 = vmax.f32 %v601, %v602
  %v604 = vsel %vm332, %v289, -inf
  %v605 = vmax.f32 %v603, %v604
  %v606 = vsel %vm332, %v47, -inf
  %v607 = vsel %vm332, %v128, -inf
  %v608 = vmax.f32 %v606, %v607
  %v609 = vsel %vm332, %v209, -inf
  %v610 = vmax.f32 %v608, %v609
  %v611 = vsel %vm332, %v290, -inf
  %v612 = vmax.f32 %v610, %v611
  %v613 = vsel %vm332, %v48, -inf
  %v614 = vsel %vm332, %v129, -inf
  %v615 = vmax.f32 %v613, %v614
  %v616 = vsel %vm332, %v210, -inf
  %v617 = vmax.f32 %v615, %v616
  %v618 = vsel %vm332, %v291, -inf
  %v619 = vmax.f32 %v617, %v618
  %v620 = vsel %vm332, %v49, -inf
  %v621 = vsel %vm332, %v130, -inf
  %v622 = vmax.f32 %v620, %v621
  %v623 = vsel %vm332, %v211, -inf
  %v624 = vmax.f32 %v622, %v623
  %v625 = vsel %vm332, %v292, -inf
  %v626 = vmax.f32 %v624, %v625
  %v627 = vsel %vm332, %v50, -inf
  %v628 = vsel %vm332, %v131, -inf
  %v629 = vmax.f32 %v627, %v628
  %v630 = vsel %vm332, %v212, -inf
  %v631 = vmax.f32 %v629, %v630
  %v632 = vsel %vm332, %v293, -inf
  %v633 = vmax.f32 %v631, %v632
  %v634 = vsel %vm332, %v51, -inf
  %v635 = vsel %vm332, %v132, -inf
  %v636 = vmax.f32 %v634, %v635
  %v637 = vsel %vm332, %v213, -inf
  %v638 = vmax.f32 %v636, %v637
  %v639 = vsel %vm332, %v294, -inf
  %v640 = vmax.f32 %v638, %v639
  %v641 = vsel %vm332, %v52, -inf
  %v642 = vsel %vm332, %v133, -inf
  %v643 = vmax.f32 %v641, %v642
  %v644 = vsel %vm332, %v214, -inf
  %v645 = vmax.f32 %v643, %v644
  %v646 = vsel %vm332, %v295, -inf
  %v647 = vmax.f32 %v645, %v646
  %v648 = vsel %vm332, %v53, -inf
  %v649 = vsel %vm332, %v134, -inf
  %v650 = vmax.f32 %v648, %v649
  %v651 = vsel %vm332, %v215, -inf
  %v652 = vmax.f32 %v650, %v651
  %v653 = vsel %vm332, %v296, -inf
  %v654 = vmax.f32 %v652, %v653
  %v655 = vsel %vm332, %v54, -inf
  %v656 = vsel %vm332, %v135, -inf
  %v657 = vmax.f32 %v655, %v656
  %v658 = vsel %vm332, %v216, -inf
  %v659 = vmax.f32 %v657, %v658
  %v660 = vsel %vm332, %v297, -inf
  %v661 = vmax.f32 %v659, %v660
  %v662 = vsel %vm332, %v55, -inf
  %v663 = vsel %vm332, %v136, -inf
  %v664 = vmax.f32 %v662, %v663
  %v665 = vsel %vm332, %v217, -inf
  %v666 = vmax.f32 %v664, %v665
  %v667 = vsel %vm332, %v298, -inf
  %v668 = vmax.f32 %v666, %v667
  %v669 = vsel %vm332, %v56, -inf
  %v670 = vsel %vm332, %v137, -inf
  %v671 = vmax.f32 %v669, %v670
  %v672 = vsel %vm332, %v218, -inf
  %v673 = vmax.f32 %v671, %v672
  %v674 = vsel %vm332, %v299, -inf
  %v675 = vmax.f32 %v673, %v674
  %v676 = vsel %vm332, %v57, -inf
  %v677 = vsel %vm332, %v138, -inf
  %v678 = vmax.f32 %v676, %v677
  %v679 = vsel %vm332, %v219, -inf
  %v680 = vmax.f32 %v678, %v679
  %v681 = vsel %vm332, %v300, -inf
  %v682 = vmax.f32 %v680, %v681
  %v683 = vsel %vm332, %v58, -inf
  %v684 = vsel %vm332, %v139, -inf
  %v685 = vmax.f32 %v683, %v684
  %v686 = vsel %vm332, %v220, -inf
  %v687 = vmax.f32 %v685, %v686
  %v688 = vsel %vm332, %v301, -inf
  %v689 = vmax.f32 %v687, %v688
  %v690 = vsel %vm332, %v59, -inf
  %v691 = vsel %vm332, %v140, -inf
  %v692 = vmax.f32 %v690, %v691
  %v693 = vsel %vm332, %v221, -inf
  %v694 = vmax.f32 %v692, %v693
  %v695 = vsel %vm332, %v302, -inf
  %v696 = vmax.f32 %v694, %v695
  %v697 = vsel %vm332, %v60, -inf
  %v698 = vsel %vm332, %v141, -inf
  %v699 = vmax.f32 %v697, %v698
  %v700 = vsel %vm332, %v222, -inf
  %v701 = vmax.f32 %v699, %v700
  %v702 = vsel %vm332, %v303, -inf
  %v703 = vmax.f32 %v701, %v702
  %v704 = vsel %vm332, %v61, -inf
  %v705 = vsel %vm332, %v142, -inf
  %v706 = vmax.f32 %v704, %v705
  %v707 = vsel %vm332, %v223, -inf
  %v708 = vmax.f32 %v706, %v707
  %v709 = vsel %vm332, %v304, -inf
  %v710 = vmax.f32 %v708, %v709
  %v711 = vsel %vm332, %v62, -inf
  %v712 = vsel %vm332, %v143, -inf
  %v713 = vmax.f32 %v711, %v712
  %v714 = vsel %vm332, %v224, -inf
  %v715 = vmax.f32 %v713, %v714
  %v716 = vsel %vm332, %v305, -inf
  %v717 = vmax.f32 %v715, %v716
  %v718 = vsel %vm332, %v63, -inf
  %v719 = vsel %vm332, %v144, -inf
  %v720 = vmax.f32 %v718, %v719
  %v721 = vsel %vm332, %v225, -inf
  %v722 = vmax.f32 %v720, %v721
  %v723 = vsel %vm332, %v306, -inf
  %v724 = vmax.f32 %v722, %v723
  %v725 = vsel %vm332, %v64, -inf
  %v726 = vsel %vm332, %v145, -inf
  %v727 = vmax.f32 %v725, %v726
  %v728 = vsel %vm332, %v226, -inf
  %v729 = vmax.f32 %v727, %v728
  %v730 = vsel %vm332, %v307, -inf
  %v731 = vmax.f32 %v729, %v730
  %v732 = vsel %vm332, %v65, -inf
  %v733 = vsel %vm332, %v146, -inf
  %v734 = vmax.f32 %v732, %v733
  %v735 = vsel %vm332, %v227, -inf
  %v736 = vmax.f32 %v734, %v735
  %v737 = vsel %vm332, %v308, -inf
  %v738 = vmax.f32 %v736, %v737
  %v739 = vsel %vm332, %v66, -inf
  %v740 = vsel %vm332, %v147, -inf
  %v741 = vmax.f32 %v739, %v740
  %v742 = vsel %vm332, %v228, -inf
  %v743 = vmax.f32 %v741, %v742
  %v744 = vsel %vm332, %v309, -inf
  %v745 = vmax.f32 %v743, %v744
  %v746 = vsel %vm332, %v67, -inf
  %v747 = vsel %vm332, %v148, -inf
  %v748 = vmax.f32 %v746, %v747
  %v749 = vsel %vm332, %v229, -inf
  %v750 = vmax.f32 %v748, %v749
  %v751 = vsel %vm332, %v310, -inf
  %v752 = vmax.f32 %v750, %v751
  %v753 = vsel %vm332, %v68, -inf
  %v754 = vsel %vm332, %v149, -inf
  %v755 = vmax.f32 %v753, %v754
  %v756 = vsel %vm332, %v230, -inf
  %v757 = vmax.f32 %v755, %v756
  %v758 = vsel %vm332, %v311, -inf
  %v759 = vmax.f32 %v757, %v758
  %v760 = vsel %vm332, %v69, -inf
  %v761 = vsel %vm332, %v150, -inf
  %v762 = vmax.f32 %v760, %v761
  %v763 = vsel %vm332, %v231, -inf
  %v764 = vmax.f32 %v762, %v763
  %v765 = vsel %vm332, %v312, -inf
  %v766 = vmax.f32 %v764, %v765
  %v767 = vsel %vm332, %v70, -inf
  %v768 = vsel %vm332, %v151, -inf
  %v769 = vmax.f32 %v767, %v768
  %v770 = vsel %vm332, %v232, -inf
  %v771 = vmax.f32 %v769, %v770
  %v772 = vsel %vm332, %v313, -inf
  %v773 = vmax.f32 %v771, %v772
  %v774 = vsel %vm332, %v71, -inf
  %v775 = vsel %vm332, %v152, -inf
  %v776 = vmax.f32 %v774, %v775
  %v777 = vsel %vm332, %v233, -inf
  %v778 = vmax.f32 %v776, %v777
  %v779 = vsel %vm332, %v314, -inf
  %v780 = vmax.f32 %v778, %v779
  %v781 = vsel %vm332, %v72, -inf
  %v782 = vsel %vm332, %v153, -inf
  %v783 = vmax.f32 %v781, %v782
  %v784 = vsel %vm332, %v234, -inf
  %v785 = vmax.f32 %v783, %v784
  %v786 = vsel %vm332, %v315, -inf
  %v787 = vmax.f32 %v785, %v786
  %v788 = vsel %vm332, %v73, -inf
  %v789 = vsel %vm332, %v154, -inf
  %v790 = vmax.f32 %v788, %v789
  %v791 = vsel %vm332, %v235, -inf
  %v792 = vmax.f32 %v790, %v791
  %v793 = vsel %vm332, %v316, -inf
  %v794 = vmax.f32 %v792, %v793
  %v795 = vsel %vm332, %v74, -inf
  %v796 = vsel %vm332, %v155, -inf
  %v797 = vmax.f32 %v795, %v796
  %v798 = vsel %vm332, %v236, -inf
  %v799 = vmax.f32 %v797, %v798
  %v800 = vsel %vm332, %v317, -inf
  %v801 = vmax.f32 %v799, %v800
  %v802 = vsel %vm332, %v75, -inf
  %v803 = vsel %vm332, %v156, -inf
  %v804 = vmax.f32 %v802, %v803
  %v805 = vsel %vm332, %v237, -inf
  %v806 = vmax.f32 %v804, %v805
  %v807 = vsel %vm332, %v318, -inf
  %v808 = vmax.f32 %v806, %v807
  %v809 = vsel %vm332, %v76, -inf
  %v810 = vsel %vm332, %v157, -inf
  %v811 = vmax.f32 %v809, %v810
  %v812 = vsel %vm332, %v238, -inf
  %v813 = vmax.f32 %v811, %v812
  %v814 = vsel %vm332, %v319, -inf
  %v815 = vmax.f32 %v813, %v814
  %v816 = vsel %vm332, %v77, -inf
  %v817 = vsel %vm332, %v158, -inf
  %v818 = vmax.f32 %v816, %v817
  %v819 = vsel %vm332, %v239, -inf
  %v820 = vmax.f32 %v818, %v819
  %v821 = vsel %vm332, %v320, -inf
  %v822 = vmax.f32 %v820, %v821
  %v823 = vsel %vm332, %v78, -inf
  %v824 = vsel %vm332, %v159, -inf
  %v825 = vmax.f32 %v823, %v824
  %v826 = vsel %vm332, %v240, -inf
  %v827 = vmax.f32 %v825, %v826
  %v828 = vsel %vm332, %v321, -inf
  %v829 = vmax.f32 %v827, %v828
  %v830 = vsel %vm332, %v79, -inf
  %v831 = vsel %vm332, %v160, -inf
  %v832 = vmax.f32 %v830, %v831
  %v833 = vsel %vm332, %v241, -inf
  %v834 = vmax.f32 %v832, %v833
  %v835 = vsel %vm332, %v322, -inf
  %v836 = vmax.f32 %v834, %v835
  %v837 = vsel %vm332, %v80, -inf
  %v838 = vsel %vm332, %v161, -inf
  %v839 = vmax.f32 %v837, %v838
  %v840 = vsel %vm332, %v242, -inf
  %v841 = vmax.f32 %v839, %v840
  %v842 = vsel %vm332, %v323, -inf
  %v843 = vmax.f32 %v841, %v842
  %v844 = vsel %vm332, %v81, -inf
  %v845 = vsel %vm332, %v162, -inf
  %v846 = vmax.f32 %v844, %v845
  %v847 = vsel %vm332, %v243, -inf
  %v848 = vmax.f32 %v846, %v847
  %v849 = vsel %vm332, %v324, -inf
  %v850 = vmax.f32 %v848, %v849
  %v851 = vsel %vm332, %v82, -inf
  %v852 = vsel %vm332, %v163, -inf
  %v853 = vmax.f32 %v851, %v852
  %v854 = vsel %vm332, %v244, -inf
  %v855 = vmax.f32 %v853, %v854
  %v856 = vsel %vm332, %v325, -inf
  %v857 = vmax.f32 %v855, %v856
  %v858 = vsel %vm332, %v83, -inf
  %v859 = vsel %vm332, %v164, -inf
  %v860 = vmax.f32 %v858, %v859
  %v861 = vsel %vm332, %v245, -inf
  %v862 = vmax.f32 %v860, %v861
  %v863 = vsel %vm332, %v326, -inf
  %v864 = vmax.f32 %v862, %v863
  %v865 = vsel %vm332, %v84, -inf
  %v866 = vsel %vm332, %v165, -inf
  %v867 = vmax.f32 %v865, %v866
  %v868 = vsel %vm332, %v246, -inf
  %v869 = vmax.f32 %v867, %v868
  %v870 = vsel %vm332, %v327, -inf
  %v871 = vmax.f32 %v869, %v870
  %v872 = vsel %vm332, %v85, -inf
  %v873 = vsel %vm332, %v166, -inf
  %v874 = vmax.f32 %v872, %v873
  %v875 = vsel %vm332, %v247, -inf
  %v876 = vmax.f32 %v874, %v875
  %v877 = vsel %vm332, %v328, -inf
  %v878 = vmax.f32 %v876, %v877
  %v879 = vsel %vm332, %v86, -inf
  %v880 = vsel %vm332, %v167, -inf
  %v881 = vmax.f32 %v879, %v880
  %v882 = vsel %vm332, %v248, -inf
  %v883 = vmax.f32 %v881, %v882
  %v884 = vsel %vm332, %v329, -inf
  %v885 = vmax.f32 %v883, %v884
  %v886 = vsel %vm332, %v87, -inf
  %v887 = vsel %vm332, %v168, -inf
  %v888 = vmax.f32 %v886, %v887
  %v889 = vsel %vm332, %v249, -inf
  %v890 = vmax.f32 %v888, %v889
  %v891 = vsel %vm332, %v330, -inf
  %v892 = vmax.f32 %v890, %v891
  %v893 = vsel %vm332, %v88, -inf
  %v894 = vsel %vm332, %v169, -inf
  %v895 = vmax.f32 %v893, %v894
  %v896 = vsel %vm332, %v250, -inf
  %v897 = vmax.f32 %v895, %v896
  %v898 = vsel %vm332, %v331, -inf
  %v899 = vmax.f32 %v897, %v898
  %900 = vst.msk [vmem:[%s1] sm:$0xff] %vm332, %v339
  %901 = vst.msk [vmem:[%s1 + $0x8] sm:$0xff] %vm332, %v346
  %902 = vst.msk [vmem:[%s1 + $0x10] sm:$0xff] %vm332, %v353
  %903 = vst.msk [vmem:[%s1 + $0x18] sm:$0xff] %vm332, %v360
  %904 = vst.msk [vmem:[%s1 + $0x20] sm:$0xff] %vm332, %v367
  %905 = vst.msk [vmem:[%s1 + $0x28] sm:$0xff] %vm332, %v374
  %906 = vst.msk [vmem:[%s1 + $0x30] sm:$0xff] %vm332, %v381
  %907 = vst.msk [vmem:[%s1 + $0x38] sm:$0xff] %vm332, %v388
  %908 = vst.msk [vmem:[%s1 + $0x40] sm:$0xff] %vm332, %v395
  %909 = vst.msk [vmem:[%s1 + $0x48] sm:$0xff] %vm332, %v402
  %910 = vst.msk [vmem:[%s1 + $0x50] sm:$0xff] %vm332, %v409
  %911 = vst.msk [vmem:[%s1 + $0x58] sm:$0xff] %vm332, %v416
  %912 = vst.msk [vmem:[%s1 + $0x60] sm:$0xff] %vm332, %v423
  %913 = vst.msk [vmem:[%s1 + $0x68] sm:$0xff] %vm332, %v430
  %914 = vst.msk [vmem:[%s1 + $0x70] sm:$0xff] %vm332, %v437
  %915 = vst.msk [vmem:[%s1 + $0x78] sm:$0xff] %vm332, %v444
  %916 = vst.msk [vmem:[%s1 + $0x80] sm:$0xff] %vm332, %v451
  %917 = vst.msk [vmem:[%s1 + $0x88] sm:$0xff] %vm332, %v458
  %918 = vst.msk [vmem:[%s1 + $0x90] sm:$0xff] %vm332, %v465
  %919 = vst.msk [vmem:[%s1 + $0x98] sm:$0xff] %vm332, %v472
  %920 = vst.msk [vmem:[%s1 + $0xa0] sm:$0xff] %vm332, %v479
  %921 = vst.msk [vmem:[%s1 + $0xa8] sm:$0xff] %vm332, %v486
  %922 = vst.msk [vmem:[%s1 + $0xb0] sm:$0xff] %vm332, %v493
  %923 = vst.msk [vmem:[%s1 + $0xb8] sm:$0xff] %vm332, %v500
  %924 = vst.msk [vmem:[%s1 + $0xc0] sm:$0xff] %vm332, %v507
  %925 = vst.msk [vmem:[%s1 + $0xc8] sm:$0xff] %vm332, %v514
  %926 = vst.msk [vmem:[%s1 + $0xd0] sm:$0xff] %vm332, %v521
  %927 = vst.msk [vmem:[%s1 + $0xd8] sm:$0xff] %vm332, %v528
  %928 = vst.msk [vmem:[%s1 + $0xe0] sm:$0xff] %vm332, %v535
  %929 = vst.msk [vmem:[%s1 + $0xe8] sm:$0xff] %vm332, %v542
  %930 = vst.msk [vmem:[%s1 + $0xf0] sm:$0xff] %vm332, %v549
  %931 = vst.msk [vmem:[%s1 + $0xf8] sm:$0xff] %vm332, %v556
  %932 = vst.msk [vmem:[%s1 + $0x100] sm:$0xff] %vm332, %v563
  %933 = vst.msk [vmem:[%s1 + $0x108] sm:$0xff] %vm332, %v570
  %934 = vst.msk [vmem:[%s1 + $0x110] sm:$0xff] %vm332, %v577
  %935 = vst.msk [vmem:[%s1 + $0x118] sm:$0xff] %vm332, %v584
  %936 = vst.msk [vmem:[%s1 + $0x120] sm:$0xff] %vm332, %v591
  %937 = vst.msk [vmem:[%s1 + $0x128] sm:$0xff] %vm332, %v598
  %938 = vst.msk [vmem:[%s1 + $0x130] sm:$0xff] %vm332, %v605
  %939 = vst.msk [vmem:[%s1 + $0x138] sm:$0xff] %vm332, %v612
  %940 = vst.msk [vmem:[%s1 + $0x140] sm:$0xff] %vm332, %v619
  %941 = vst.msk [vmem:[%s1 + $0x148] sm:$0xff] %vm332, %v626
  %942 = vst.msk [vmem:[%s1 + $0x150] sm:$0xff] %vm332, %v633
  %943 = vst.msk [vmem:[%s1 + $0x158] sm:$0xff] %vm332, %v640
  %944 = vst.msk [vmem:[%s1 + $0x160] sm:$0xff] %vm332, %v647
  %945 = vst.msk [vmem:[%s1 + $0x168] sm:$0xff] %vm332, %v654
  %946 = vst.msk [vmem:[%s1 + $0x170] sm:$0xff] %vm332, %v661
  %947 = vst.msk [vmem:[%s1 + $0x178] sm:$0xff] %vm332, %v668
  %948 = vst.msk [vmem:[%s1 + $0x180] sm:$0xff] %vm332, %v675
  %949 = vst.msk [vmem:[%s1 + $0x188] sm:$0xff] %vm332, %v682
  %950 = vst.msk [vmem:[%s1 + $0x190] sm:$0xff] %vm332, %v689
  %951 = vst.msk [vmem:[%s1 + $0x198] sm:$0xff] %vm332, %v696
  %952 = vst.msk [vmem:[%s1 + $0x1a0] sm:$0xff] %vm332, %v703
  %953 = vst.msk [vmem:[%s1 + $0x1a8] sm:$0xff] %vm332, %v710
  %954 = vst.msk [vmem:[%s1 + $0x1b0] sm:$0xff] %vm332, %v717
  %955 = vst.msk [vmem:[%s1 + $0x1b8] sm:$0xff] %vm332, %v724
  %956 = vst.msk [vmem:[%s1 + $0x1c0] sm:$0xff] %vm332, %v731
  %957 = vst.msk [vmem:[%s1 + $0x1c8] sm:$0xff] %vm332, %v738
  %958 = vst.msk [vmem:[%s1 + $0x1d0] sm:$0xff] %vm332, %v745
  %959 = vst.msk [vmem:[%s1 + $0x1d8] sm:$0xff] %vm332, %v752
  %960 = vst.msk [vmem:[%s1 + $0x1e0] sm:$0xff] %vm332, %v759
  %961 = vst.msk [vmem:[%s1 + $0x1e8] sm:$0xff] %vm332, %v766
  %962 = vst.msk [vmem:[%s1 + $0x1f0] sm:$0xff] %vm332, %v773
  %963 = vst.msk [vmem:[%s1 + $0x1f8] sm:$0xff] %vm332, %v780
  %964 = vst.msk [vmem:[%s1 + $0x200] sm:$0xff] %vm332, %v787
  %965 = vst.msk [vmem:[%s1 + $0x208] sm:$0xff] %vm332, %v794
  %966 = vst.msk [vmem:[%s1 + $0x210] sm:$0xff] %vm332, %v801
  %967 = vst.msk [vmem:[%s1 + $0x218] sm:$0xff] %vm332, %v808
  %968 = vst.msk [vmem:[%s1 + $0x220] sm:$0xff] %vm332, %v815
  %969 = vst.msk [vmem:[%s1 + $0x228] sm:$0xff] %vm332, %v822
  %970 = vst.msk [vmem:[%s1 + $0x230] sm:$0xff] %vm332, %v829
  %971 = vst.msk [vmem:[%s1 + $0x238] sm:$0xff] %vm332, %v836
  %972 = vst.msk [vmem:[%s1 + $0x240] sm:$0xff] %vm332, %v843
  %973 = vst.msk [vmem:[%s1 + $0x248] sm:$0xff] %vm332, %v850
  %974 = vst.msk [vmem:[%s1 + $0x250] sm:$0xff] %vm332, %v857
  %975 = vst.msk [vmem:[%s1 + $0x258] sm:$0xff] %vm332, %v864
  %976 = vst.msk [vmem:[%s1 + $0x260] sm:$0xff] %vm332, %v871
  %977 = vst.msk [vmem:[%s1 + $0x268] sm:$0xff] %vm332, %v878
  %978 = vst.msk [vmem:[%s1 + $0x270] sm:$0xff] %vm332, %v885
  %979 = vst.msk [vmem:[%s1 + $0x278] sm:$0xff] %vm332, %v892
  %980 = vst.msk [vmem:[%s1 + $0x280] sm:$0xff] %vm332, %v899
  // Predicated region
  $region6: #{patch_stn_apply.9} parent=0 // pred_check
    _
  $region7: #{patch_stn_apply.9} parent=0 // pred_check_branch
    %982 = sbr.rel (0) target = $region9
  $region8: #{patch_stn_apply.9} parent=0 // pred_region
    _
  $region9: #{patch_stn_apply.9} parent=0 // pred_fallthru
    _
  // Predicated region
  $region10: #{patch_stn_apply.9} parent=0 // pred_check
    _
  $region11: #{patch_stn_apply.9} parent=0 // pred_check_branch
    %984 = sbr.rel (0) target = $region13
  $region12: #{patch_stn_apply.9} parent=0 // pred_region
    _
  $region13: #{patch_stn_apply.9} parent=0 // pred_fallthru
    _

// kernel: patch_stn_apply.10
$region0: #{patch_stn_apply.10}
  #allocation0 [shape = 'u32[]', space=smem, size = 0x4, offset = 0x4, fixed_abs, tag = 'smem constant byte address 0x4 - core index']
  #allocation1 [shape = 'u32[144,128]{1,0:T(1,128)}', space=vmem, size = 0x12000, scoped, tag = 'internal scratch']
  %s0 = inlined_call_operand.vmem [shape: f32[392,200], index: 0, kind: input, shape index: {}]
  %s1 = inlined_call_operand.vmem [shape: f32[200,12], index: 1, kind: input, shape index: {}]
  %s2 = inlined_call_operand.vmem [shape: f32[1,12], index: 2, kind: input, shape index: {}]
  %s3 = inlined_call_operand.vmem [shape: f32[392,12], index: 3, kind: output, shape index: {}]
  %s4 = sld [smem:[#allocation0]]
  $region22: #{patch_stn_apply.10} parent=0
    _
  %s6 = ssub.s32 1, %s4
  %s7 = scalar_select 0, %s6, %s4
  // Predicated region
  $region2: #{patch_stn_apply.10} parent=0 // pred_check
    _
  $region3: #{patch_stn_apply.10} parent=0 // pred_check_branch
    %9 = sbr.rel (0) target = $region5
  $region4: #{patch_stn_apply.10} parent=0 // pred_region
    _
  $region5: #{patch_stn_apply.10} parent=0 // pred_fallthru
    _
  // Predicated region
  $region6: #{patch_stn_apply.10} parent=0 // pred_check
    _
  $region7: #{patch_stn_apply.10} parent=0 // pred_check_branch
    %11 = sbr.rel (0) target = $region9
  $region8: #{patch_stn_apply.10} parent=0 // pred_region
    _
  $region9: #{patch_stn_apply.10} parent=0 // pred_fallthru
    _
  // Predicated region
  $region10: #{patch_stn_apply.10} parent=0 // pred_check
    _
  $region11: #{patch_stn_apply.10} parent=0 // pred_check_branch
    %13 = sbr.rel (0) target = $region13
  $region12: #{patch_stn_apply.10} parent=0 // pred_region
    _
  $region13: #{patch_stn_apply.10} parent=0 // pred_fallthru
    _
  %v14 = vld [vmem:[%s0] sm:$0xff]
  %v15 = vld [vmem:[%s0 + $0x8] sm:$0xff]
  %v16 = vld [vmem:[%s0 + $0x10] sm:$0xff]
  %v17 = vld [vmem:[%s0 + $0x18] sm:$0xff]
  %v18 = vld [vmem:[%s0 + $0x20] sm:$0xff]
  %v19 = vld [vmem:[%s0 + $0x28] sm:$0xff]
  %v20 = vld [vmem:[%s0 + $0x30] sm:$0xff]
  %v21 = vld [vmem:[%s0 + $0x38] sm:$0xff]
  %v22 = vld [vmem:[%s0 + $0x40] sm:$0xff]
  %v23 = vld [vmem:[%s0 + $0x48] sm:$0xff]
  %v24 = vld [vmem:[%s0 + $0x50] sm:$0xff]
  %v25 = vld [vmem:[%s0 + $0x58] sm:$0xff]
  %v26 = vld [vmem:[%s0 + $0x60] sm:$0xff]
  %v27 = vld [vmem:[%s0 + $0x68] sm:$0xff]
  %v28 = vld [vmem:[%s0 + $0x70] sm:$0xff]
  %v29 = vld [vmem:[%s0 + $0x78] sm:$0xff]
  %v30 = vld [vmem:[%s0 + $0x80] sm:$0xff]
  %v31 = vld [vmem:[%s0 + $0x88] sm:$0xff]
  %v32 = vld [vmem:[%s0 + $0x90] sm:$0xff]
  %v33 = vld [vmem:[%s0 + $0x98] sm:$0xff]
  %v34 = vld [vmem:[%s0 + $0xa0] sm:$0xff]
  %v35 = vld [vmem:[%s0 + $0xa8] sm:$0xff]
  %v36 = vld [vmem:[%s0 + $0xb0] sm:$0xff]
  %v37 = vld [vmem:[%s0 + $0xb8] sm:$0xff]
  %v38 = vld [vmem:[%s0 + $0xc0] sm:$0xff]
  %v39 = vld [vmem:[%s0 + $0xc8] sm:$0xff]
  %v40 = vld [vmem:[%s0 + $0xd0] sm:$0xff]
  %v41 = vld [vmem:[%s0 + $0xd8] sm:$0xff]
  %v42 = vld [vmem:[%s0 + $0xe0] sm:$0xff]
  %v43 = vld [vmem:[%s0 + $0xe8] sm:$0xff]
  %v44 = vld [vmem:[%s0 + $0xf0] sm:$0xff]
  %v45 = vld [vmem:[%s0 + $0xf8] sm:$0xff]
  %v46 = vld [vmem:[%s0 + $0x100] sm:$0xff]
  %v47 = vld [vmem:[%s0 + $0x108] sm:$0xff]
  %v48 = vld [vmem:[%s0 + $0x110] sm:$0xff]
  %v49 = vld [vmem:[%s0 + $0x118] sm:$0xff]
  %v50 = vld [vmem:[%s0 + $0x120] sm:$0xff]
  %v51 = vld [vmem:[%s0 + $0x128] sm:$0xff]
  %v52 = vld [vmem:[%s0 + $0x130] sm:$0xff]
  %v53 = vld [vmem:[%s0 + $0x138] sm:$0xff]
  %v54 = vld [vmem:[%s0 + $0x140] sm:$0xff]
  %v55 = vld [vmem:[%s0 + $0x148] sm:$0xff]
  %v56 = vld [vmem:[%s0 + $0x150] sm:$0xff]
  %v57 = vld [vmem:[%s0 + $0x158] sm:$0xff]
  %v58 = vld [vmem:[%s0 + $0x160] sm:$0xff]
  %v59 = vld [vmem:[%s0 + $0x168] sm:$0xff]
  %v60 = vld [vmem:[%s0 + $0x170] sm:$0xff]
  %v61 = vld [vmem:[%s0 + $0x178] sm:$0xff]
  %v62 = vld [vmem:[%s0 + $0x180] sm:$0xff]
  %v63 = vld [vmem:[%s0 + $0x188] sm:$0xff]
  %v64 = vld [vmem:[%s0 + $0x190] sm:$0xff]
  %v65 = vld [vmem:[%s0 + $0x198] sm:$0xff]
  %v66 = vld [vmem:[%s0 + $0x1a0] sm:$0xff]
  %v67 = vld [vmem:[%s0 + $0x1a8] sm:$0xff]
  %v68 = vld [vmem:[%s0 + $0x1b0] sm:$0xff]
  %v69 = vld [vmem:[%s0 + $0x1b8] sm:$0xff]
  %v70 = vld [vmem:[%s0 + $0x1c0] sm:$0xff]
  %v71 = vld [vmem:[%s0 + $0x1c8] sm:$0xff]
  %v72 = vld [vmem:[%s0 + $0x1d0] sm:$0xff]
  %v73 = vld [vmem:[%s0 + $0x1d8] sm:$0xff]
  %v74 = vld [vmem:[%s0 + $0x1e0] sm:$0xff]
  %v75 = vld [vmem:[%s0 + $0x1e8] sm:$0xff]
  %v76 = vld [vmem:[%s0 + $0x1f0] sm:$0xff]
  %v77 = vld [vmem:[%s0 + $0x1f8] sm:$0xff]
  %v78 = vld [vmem:[%s0 + $0x200] sm:$0xff]
  %v79 = vld [vmem:[%s0 + $0x208] sm:$0xff]
  %v80 = vld [vmem:[%s0 + $0x210] sm:$0xff]
  %v81 = vld [vmem:[%s0 + $0x218] sm:$0xff]
  %v82 = vld [vmem:[%s0 + $0x220] sm:$0xff]
  %v83 = vld [vmem:[%s0 + $0x228] sm:$0xff]
  %v84 = vld [vmem:[%s0 + $0x230] sm:$0xff]
  %v85 = vld [vmem:[%s0 + $0x238] sm:$0xff]
  %v86 = vld [vmem:[%s0 + $0x240] sm:$0xff]
  %v87 = vld [vmem:[%s0 + $0x248] sm:$0xff]
  %v88 = vld [vmem:[%s0 + $0x250] sm:$0xff]
  %v89 = vld [vmem:[%s0 + $0x258] sm:$0xff]
  %v90 = vld [vmem:[%s0 + $0x260] sm:$0xff]
  %v91 = vld [vmem:[%s0 + $0x268] sm:$0xff]
  %v92 = vld [vmem:[%s0 + $0x270] sm:$0xff]
  %v93 = vld [vmem:[%s0 + $0x278] sm:$0xff]
  %v94 = vld [vmem:[%s0 + $0x280] sm:$0xff]
  %v95 = vld [vmem:[%s0 + $0x288] sm:$0xff]
  %v96 = vld [vmem:[%s0 + $0x290] sm:$0xff]
  %v97 = vld [vmem:[%s0 + $0x298] sm:$0xff]
  %v98 = vld [vmem:[%s0 + $0x2a0] sm:$0xff]
  %v99 = vld [vmem:[%s0 + $0x2a8] sm:$0xff]
  %v100 = vld [vmem:[%s0 + $0x2b0] sm:$0xff]
  %v101 = vld [vmem:[%s0 + $0x2b8] sm:$0xff]
  %v102 = vld [vmem:[%s0 + $0x2c0] sm:$0xff]
  %v103 = vld [vmem:[%s0 + $0x2c8] sm:$0xff]
  %v104 = vld [vmem:[%s0 + $0x2d0] sm:$0xff]
  %v105 = vld [vmem:[%s0 + $0x2d8] sm:$0xff]
  %v106 = vld [vmem:[%s0 + $0x2e0] sm:$0xff]
  %v107 = vld [vmem:[%s0 + $0x2e8] sm:$0xff]
  %v108 = vld [vmem:[%s0 + $0x2f0] sm:$0xff]
  %v109 = vld [vmem:[%s0 + $0x2f8] sm:$0xff]
  %v110 = vld [vmem:[%s0 + $0x300] sm:$0xff]
  %v111 = vld [vmem:[%s0 + $0x308] sm:$0xff]
  %v112 = vld [vmem:[%s1] sm:$0xff]
  %v113 = vld [vmem:[%s1 + $0x8] sm:$0xff]
  %v114 = vld [vmem:[%s1 + $0x10] sm:$0xff]
  %v115 = vld [vmem:[%s1 + $0x18] sm:$0xff]
  %v116 = vld [vmem:[%s1 + $0x20] sm:$0xff]
  %v117 = vld [vmem:[%s1 + $0x28] sm:$0xff]
  %v118 = vld [vmem:[%s1 + $0x30] sm:$0xff]
  %v119 = vld [vmem:[%s1 + $0x38] sm:$0xff]
  %v120 = vld [vmem:[%s1 + $0x40] sm:$0xff]
  %v121 = vld [vmem:[%s1 + $0x48] sm:$0xff]
  %v122 = vld [vmem:[%s1 + $0x50] sm:$0xff]
  %v123 = vld [vmem:[%s1 + $0x58] sm:$0xff]
  %v124 = vld [vmem:[%s1 + $0x60] sm:$0xff]
  %v125 = vld [vmem:[%s1 + $0x68] sm:$0xff]
  %v126 = vld [vmem:[%s1 + $0x70] sm:$0xff]
  %v127 = vld [vmem:[%s1 + $0x78] sm:$0xff]
  %v128 = vld [vmem:[%s1 + $0x80] sm:$0xff]
  %v129 = vld [vmem:[%s1 + $0x88] sm:$0xff]
  %v130 = vld [vmem:[%s1 + $0x90] sm:$0xff]
  %v131 = vld [vmem:[%s1 + $0x98] sm:$0xff]
  %v132 = vld [vmem:[%s1 + $0xa0] sm:$0xff]
  %v133 = vld [vmem:[%s1 + $0xa8] sm:$0xff]
  %v134 = vld [vmem:[%s1 + $0xb0] sm:$0xff]
  %v135 = vld [vmem:[%s1 + $0xb8] sm:$0xff]
  %v136 = vld [vmem:[%s1 + $0xc0] sm:$0xff]
  %v137 = vld [vmem:[%s2] sm:$0x1]
  %v139 = vlaneseq
  %v140 = vshrl.u32 %v139, 7
  %v141 = vsub.s32 0, %v140
  %v142 = vrot.slane %v137, %v141
  %vm144 = vcmask 588800
  %v146 = vsel %vm144, %v15, 0
  %v149 = vsel %vm144, %v17, 0
  %v152 = vsel %vm144, %v19, 0
  %v155 = vsel %vm144, %v21, 0
  %v158 = vsel %vm144, %v23, 0
  %v161 = vsel %vm144, %v25, 0
  %v164 = vsel %vm144, %v27, 0
  %v167 = vsel %vm144, %v29, 0
  %v170 = vsel %vm144, %v31, 0
  %v173 = vsel %vm144, %v33, 0
  %v176 = vsel %vm144, %v35, 0
  %v179 = vsel %vm144, %v37, 0
  %v182 = vsel %vm144, %v39, 0
  %v185 = vsel %vm144, %v41, 0
  %v188 = vsel %vm144, %v43, 0
  %v191 = vsel %vm144, %v45, 0
  %v194 = vsel %vm144, %v47, 0
  %v197 = vsel %vm144, %v49, 0
  %v200 = vsel %vm144, %v51, 0
  %v203 = vsel %vm144, %v53, 0
  %v206 = vsel %vm144, %v55, 0
  %v209 = vsel %vm144, %v57, 0
  %v212 = vsel %vm144, %v59, 0
  %v215 = vsel %vm144, %v61, 0
  %v218 = vsel %vm144, %v63, 0
  %v221 = vsel %vm144, %v65, 0
  %v224 = vsel %vm144, %v67, 0
  %v227 = vsel %vm144, %v69, 0
  %v230 = vsel %vm144, %v71, 0
  %v233 = vsel %vm144, %v73, 0
  %v236 = vsel %vm144, %v75, 0
  %v239 = vsel %vm144, %v77, 0
  %v242 = vsel %vm144, %v79, 0
  %v245 = vsel %vm144, %v81, 0
  %v248 = vsel %vm144, %v83, 0
  %v251 = vsel %vm144, %v85, 0
  %v254 = vsel %vm144, %v87, 0
  %v257 = vsel %vm144, %v89, 0
  %v260 = vsel %vm144, %v91, 0
  %v263 = vsel %vm144, %v93, 0
  %v266 = vsel %vm144, %v95, 0
  %v269 = vsel %vm144, %v97, 0
  %v272 = vsel %vm144, %v99, 0
  %v275 = vsel %vm144, %v101, 0
  %v278 = vsel %vm144, %v103, 0
  %v281 = vsel %vm144, %v105, 0
  %v284 = vsel %vm144, %v107, 0
  %v287 = vsel %vm144, %v109, 0
  %v290 = vsel %vm144, %v111, 0
  %292 = vmatprep.subr.mxu0 0.0
  %293 = vmatpush1.msra.mxu0 %v112
  %294 = vmatprep.subr.mxu0 0.0
  %295 = vmatpush1.msra.mxu0 %v113
  %296 = vmatprep.subr.mxu0 0.0
  %297 = vmatpush1.msra.mxu0 %v114
  %298 = vmatprep.subr.mxu0 0.0
  %299 = vmatpush1.msra.mxu0 %v115
  %300 = vmatprep.subr.mxu0 0.0
  %301 = vmatpush1.msra.mxu0 %v116
  %302 = vmatprep.subr.mxu0 0.0
  %303 = vmatpush1.msra.mxu0 %v117
  %304 = vmatprep.subr.mxu0 0.0
  %305 = vmatpush1.msra.mxu0 %v118
  %306 = vmatprep.subr.mxu0 0.0
  %307 = vmatpush1.msra.mxu0 %v119
  %308 = vmatprep.subr.mxu0 0.0
  %309 = vmatpush1.msra.mxu0 %v120
  %310 = vmatprep.subr.mxu0 0.0
  %311 = vmatpush1.msra.mxu0 %v121
  %312 = vmatprep.subr.mxu0 0.0
  %313 = vmatpush1.msra.mxu0 %v122
  %314 = vmatprep.subr.mxu0 0.0
  %315 = vmatpush1.msra.mxu0 %v123
  %316 = vmatprep.subr.mxu0 0.0
  %317 = vmatpush1.msra.mxu0 %v124
  %318 = vmatprep.subr.mxu0 0.0
  %319 = vmatpush1.msra.mxu0 %v125
  %320 = vmatprep.subr.mxu0 0.0
  %321 = vmatpush1.msra.mxu0 %v126
  %322 = vmatprep.subr.mxu0 0.0
  %323 = vmatpush1.msra.mxu0 %v127
  %324 = vmatprep.subr.mxu0 0.0
  %325 = vmatpush1.msra.mxu0 %v128
  %326 = vmatprep.subr.mxu0 0.0
  %327 = vmatpush1.msra.mxu0 %v129
  %328 = vmatprep.subr.mxu0 0.0
  %329 = vmatpush1.msra.mxu0 %v130
  %330 = vmatprep.subr.mxu0 0.0
  %331 = vmatpush1.msra.mxu0 %v131
  %332 = vmatprep.subr.mxu0 0.0
  %333 = vmatpush1.msra.mxu0 %v132
  %334 = vmatprep.subr.mxu0 0.0
  %335 = vmatpush1.msra.mxu0 %v133
  %336 = vmatprep.subr.mxu0 0.0
  %337 = vmatpush1.msra.mxu0 %v134
  %338 = vmatprep.subr.mxu0 0.0
  %339 = vmatpush1.msra.mxu0 %v135
  %340 = vmatprep.subr.mxu0 0.0
  %341 = vmatpush1.msra.mxu0 %v136
  %342 = vmatprep.subr.mxu0 0.0
  %343 = vmatpush1.msra.mxu0 0.0
  %344 = vmatprep.subr.mxu0 0.0
  %345 = vmatpush1.msra.mxu0 0.0
  %346 = vmatprep.subr.mxu0 0.0
  %347 = vmatpush1.msra.mxu0 0.0
  %348 = vmatprep.subr.mxu0 0.0
  %349 = vmatpush1.msra.mxu0 0.0
  %350 = vmatprep.subr.mxu0 0.0
  %351 = vmatpush1.msra.mxu0 0.0
  %352 = vmatprep.subr.mxu0 0.0
  %353 = vmatpush1.msra.mxu0 0.0
  %354 = vmatprep.subr.mxu0 0.0
  %355 = vmatpush1.msra.mxu0 0.0
  %356 = vmatprep.mubr.f32.mxu0 %v146
  %357 = vmatmul.mubr.f32.gmra.mrb[0].mxu0 %v14
  %v358 = vpop.f32.mrb[0].mxu0
  %v359 = vadd.f32 %v142, %v358
  %v360 = vpop.f32.mrb[0].mxu0
  %361 = vmatprep.mubr.f32.mxu0 %v149
  %362 = vmatmul.mubr.f32.gmra.mrb[0].mxu0 %v16
  %v363 = vpop.f32.mrb[0].mxu0
  %v364 = vadd.f32 %v142, %v363
  %v365 = vpop.f32.mrb[0].mxu0
  %366 = vmatprep.mubr.f32.mxu0 %v152
  %367 = vmatmul.mubr.f32.gmra.mrb[0].mxu0 %v18
  %v368 = vpop.f32.mrb[0].mxu0
  %v369 = vadd.f32 %v142, %v368
  %v370 = vpop.f32.mrb[0].mxu0
  %371 = vmatprep.mubr.f32.mxu0 %v155
  %372 = vmatmul.mubr.f32.gmra.mrb[0].mxu0 %v20
  %v373 = vpop.f32.mrb[0].mxu0
  %v374 = vadd.f32 %v142, %v373
  %v375 = vpop.f32.mrb[0].mxu0
  %376 = vmatprep.mubr.f32.mxu0 %v158
  %377 = vmatmul.mubr.f32.gmra.mrb[0].mxu0 %v22
  %v378 = vpop.f32.mrb[0].mxu0
  %v379 = vadd.f32 %v142, %v378
  %v380 = vpop.f32.mrb[0].mxu0
  %381 = vmatprep.mubr.f32.mxu0 %v161
  %382 = vmatmul.mubr.f32.gmra.mrb[0].mxu0 %v24
  %v383 = vpop.f32.mrb[0].mxu0
  %v384 = vadd.f32 %v142, %v383
  %v385 = vpop.f32.mrb[0].mxu0
  %386 = vmatprep.mubr.f32.mxu0 %v164
  %387 = vmatmul.mubr.f32.gmra.mrb[0].mxu0 %v26
  %v388 = vpop.f32.mrb[0].mxu0
  %v389 = vadd.f32 %v142, %v388
  %v390 = vpop.f32.mrb[0].mxu0
  %391 = vmatprep.mubr.f32.mxu0 %v167
  %392 = vmatmul.mubr.f32.gmra.mrb[0].mxu0 %v28
  %v393 = vpop.f32.mrb[0].mxu0
  %v394 = vadd.f32 %v142, %v393
  %v395 = vpop.f32.mrb[0].mxu0
  %396 = vmatprep.mubr.f32.mxu0 %v170
  %397 = vmatmul.mubr.f32.gmra.mrb[0].mxu0 %v30
  %v398 = vpop.f32.mrb[0].mxu0
  %v399 = vadd.f32 %v142, %v398
  %v400 = vpop.f32.mrb[0].mxu0
  %401 = vmatprep.mubr.f32.mxu0 %v173
  %402 = vmatmul.mubr.f32.gmra.mrb[0].mxu0 %v32
  %v403 = vpop.f32.mrb[0].mxu0
  %v404 = vadd.f32 %v142, %v403
  %v405 = vpop.f32.mrb[0].mxu0
  %406 = vmatprep.mubr.f32.mxu0 %v176
  %407 = vmatmul.mubr.f32.gmra.mrb[0].mxu0 %v34
  %v408 = vpop.f32.mrb[0].mxu0
  %v409 = vadd.f32 %v142, %v408
  %v410 = vpop.f32.mrb[0].mxu0
  %411 = vmatprep.mubr.f32.mxu0 %v179
  %412 = vmatmul.mubr.f32.gmra.mrb[0].mxu0 %v36
  %v413 = vpop.f32.mrb[0].mxu0
  %v414 = vadd.f32 %v142, %v413
  %v415 = vpop.f32.mrb[0].mxu0
  %416 = vmatprep.mubr.f32.mxu0 %v182
  %417 = vmatmul.mubr.f32.gmra.mrb[0].mxu0 %v38
  %v418 = vpop.f32.mrb[0].mxu0
  %v419 = vadd.f32 %v142, %v418
  %v420 = vpop.f32.mrb[0].mxu0
  %421 = vmatprep.mubr.f32.mxu0 %v185
  %422 = vmatmul.mubr.f32.gmra.mrb[0].mxu0 %v40
  %v423 = vpop.f32.mrb[0].mxu0
  %v424 = vadd.f32 %v142, %v423
  %v425 = vpop.f32.mrb[0].mxu0
  %426 = vmatprep.mubr.f32.mxu0 %v188
  %427 = vmatmul.mubr.f32.gmra.mrb[0].mxu0 %v42
  %v428 = vpop.f32.mrb[0].mxu0
  %v429 = vadd.f32 %v142, %v428
  %v430 = vpop.f32.mrb[0].mxu0
  %431 = vmatprep.mubr.f32.mxu0 %v191
  %432 = vmatmul.mubr.f32.gmra.mrb[0].mxu0 %v44
  %v433 = vpop.f32.mrb[0].mxu0
  %v434 = vadd.f32 %v142, %v433
  %v435 = vpop.f32.mrb[0].mxu0
  %436 = vmatprep.mubr.f32.mxu0 %v194
  %437 = vmatmul.mubr.f32.gmra.mrb[0].mxu0 %v46
  %v438 = vpop.f32.mrb[0].mxu0
  %v439 = vadd.f32 %v142, %v438
  %v440 = vpop.f32.mrb[0].mxu0
  %441 = vmatprep.mubr.f32.mxu0 %v197
  %442 = vmatmul.mubr.f32.gmra.mrb[0].mxu0 %v48
  %v443 = vpop.f32.mrb[0].mxu0
  %v444 = vadd.f32 %v142, %v443
  %v445 = vpop.f32.mrb[0].mxu0
  %446 = vmatprep.mubr.f32.mxu0 %v200
  %447 = vmatmul.mubr.f32.gmra.mrb[0].mxu0 %v50
  %v448 = vpop.f32.mrb[0].mxu0
  %v449 = vadd.f32 %v142, %v448
  %v450 = vpop.f32.mrb[0].mxu0
  %451 = vmatprep.mubr.f32.mxu0 %v203
  %452 = vmatmul.mubr.f32.gmra.mrb[0].mxu0 %v52
  %v453 = vpop.f32.mrb[0].mxu0
  %v454 = vadd.f32 %v142, %v453
  %v455 = vpop.f32.mrb[0].mxu0
  %456 = vmatprep.mubr.f32.mxu0 %v206
  %457 = vmatmul.mubr.f32.gmra.mrb[0].mxu0 %v54
  %v458 = vpop.f32.mrb[0].mxu0
  %v459 = vadd.f32 %v142, %v458
  %v460 = vpop.f32.mrb[0].mxu0
  %461 = vmatprep.mubr.f32.mxu0 %v209
  %462 = vmatmul.mubr.f32.gmra.mrb[0].mxu0 %v56
  %v463 = vpop.f32.mrb[0].mxu0
  %v464 = vadd.f32 %v142, %v463
  %v465 = vpop.f32.mrb[0].mxu0
  %466 = vmatprep.mubr.f32.mxu0 %v212
  %467 = vmatmul.mubr.f32.gmra.mrb[0].mxu0 %v58
  %v468 = vpop.f32.mrb[0].mxu0
  %v469 = vadd.f32 %v142, %v468
  %v470 = vpop.f32.mrb[0].mxu0
  %471 = vmatprep.mubr.f32.mxu0 %v215
  %472 = vmatmul.mubr.f32.gmra.mrb[0].mxu0 %v60
  %v473 = vpop.f32.mrb[0].mxu0
  %v474 = vadd.f32 %v142, %v473
  %v475 = vpop.f32.mrb[0].mxu0
  %476 = vmatprep.mubr.f32.mxu0 %v218
  %477 = vmatmul.mubr.f32.gmra.mrb[0].mxu0 %v62
  %v478 = vpop.f32.mrb[0].mxu0
  %v479 = vadd.f32 %v142, %v478
  %v480 = vpop.f32.mrb[0].mxu0
  %481 = vmatprep.mubr.f32.mxu0 %v221
  %482 = vmatmul.mubr.f32.gmra.mrb[0].mxu0 %v64
  %v483 = vpop.f32.mrb[0].mxu0
  %v484 = vadd.f32 %v142, %v483
  %v485 = vpop.f32.mrb[0].mxu0
  %486 = vmatprep.mubr.f32.mxu0 %v224
  %487 = vmatmul.mubr.f32.gmra.mrb[0].mxu0 %v66
  %v488 = vpop.f32.mrb[0].mxu0
  %v489 = vadd.f32 %v142, %v488
  %v490 = vpop.f32.mrb[0].mxu0
  %491 = vmatprep.mubr.f32.mxu0 %v227
  %492 = vmatmul.mubr.f32.gmra.mrb[0].mxu0 %v68
  %v493 = vpop.f32.mrb[0].mxu0
  %v494 = vadd.f32 %v142, %v493
  %v495 = vpop.f32.mrb[0].mxu0
  %496 = vmatprep.mubr.f32.mxu0 %v230
  %497 = vmatmul.mubr.f32.gmra.mrb[0].mxu0 %v70
  %v498 = vpop.f32.mrb[0].mxu0
  %v499 = vadd.f32 %v142, %v498
  %v500 = vpop.f32.mrb[0].mxu0
  %501 = vmatprep.mubr.f32.mxu0 %v233
  %502 = vmatmul.mubr.f32.gmra.mrb[0].mxu0 %v72
  %v503 = vpop.f32.mrb[0].mxu0
  %v504 = vadd.f32 %v142, %v503
  %v505 = vpop.f32.mrb[0].mxu0
  %506 = vmatprep.mubr.f32.mxu0 %v236
  %507 = vmatmul.mubr.f32.gmra.mrb[0].mxu0 %v74
  %v508 = vpop.f32.mrb[0].mxu0
  %v509 = vadd.f32 %v142, %v508
  %v510 = vpop.f32.mrb[0].mxu0
  %511 = vmatprep.mubr.f32.mxu0 %v239
  %512 = vmatmul.mubr.f32.gmra.mrb[0].mxu0 %v76
  %v513 = vpop.f32.mrb[0].mxu0
  %v514 = vadd.f32 %v142, %v513
  %v515 = vpop.f32.mrb[0].mxu0
  %516 = vmatprep.mubr.f32.mxu0 %v242
  %517 = vmatmul.mubr.f32.gmra.mrb[0].mxu0 %v78
  %v518 = vpop.f32.mrb[0].mxu0
  %v519 = vadd.f32 %v142, %v518
  %v520 = vpop.f32.mrb[0].mxu0
  %521 = vmatprep.mubr.f32.mxu0 %v245
  %522 = vmatmul.mubr.f32.gmra.mrb[0].mxu0 %v80
  %v523 = vpop.f32.mrb[0].mxu0
  %v524 = vadd.f32 %v142, %v523
  %v525 = vpop.f32.mrb[0].mxu0
  %526 = vmatprep.mubr.f32.mxu0 %v248
  %527 = vmatmul.mubr.f32.gmra.mrb[0].mxu0 %v82
  %v528 = vpop.f32.mrb[0].mxu0
  %v529 = vadd.f32 %v142, %v528
  %v530 = vpop.f32.mrb[0].mxu0
  %531 = vmatprep.mubr.f32.mxu0 %v251
  %532 = vmatmul.mubr.f32.gmra.mrb[0].mxu0 %v84
  %v533 = vpop.f32.mrb[0].mxu0
  %v534 = vadd.f32 %v142, %v533
  %v535 = vpop.f32.mrb[0].mxu0
  %536 = vmatprep.mubr.f32.mxu0 %v254
  %537 = vmatmul.mubr.f32.gmra.mrb[0].mxu0 %v86
  %v538 = vpop.f32.mrb[0].mxu0
  %v539 = vadd.f32 %v142, %v538
  %v540 = vpop.f32.mrb[0].mxu0
  %541 = vmatprep.mubr.f32.mxu0 %v257
  %542 = vmatmul.mubr.f32.gmra.mrb[0].mxu0 %v88
  %v543 = vpop.f32.mrb[0].mxu0
  %v544 = vadd.f32 %v142, %v543
  %v545 = vpop.f32.mrb[0].mxu0
  %546 = vmatprep.mubr.f32.mxu0 %v260
  %547 = vmatmul.mubr.f32.gmra.mrb[0].mxu0 %v90
  %v548 = vpop.f32.mrb[0].mxu0
  %v549 = vadd.f32 %v142, %v548
  %v550 = vpop.f32.mrb[0].mxu0
  %551 = vmatprep.mubr.f32.mxu0 %v263
  %552 = vmatmul.mubr.f32.gmra.mrb[0].mxu0 %v92
  %v553 = vpop.f32.mrb[0].mxu0
  %v554 = vadd.f32 %v142, %v553
  %v555 = vpop.f32.mrb[0].mxu0
  %556 = vmatprep.mubr.f32.mxu0 %v266
  %557 = vmatmul.mubr.f32.gmra.mrb[0].mxu0 %v94
  %v558 = vpop.f32.mrb[0].mxu0
  %v559 = vadd.f32 %v142, %v558
  %v560 = vpop.f32.mrb[0].mxu0
  %561 = vmatprep.mubr.f32.mxu0 %v269
  %562 = vmatmul.mubr.f32.gmra.mrb[0].mxu0 %v96
  %v563 = vpop.f32.mrb[0].mxu0
  %v564 = vadd.f32 %v142, %v563
  %v565 = vpop.f32.mrb[0].mxu0
  %566 = vmatprep.mubr.f32.mxu0 %v272
  %567 = vmatmul.mubr.f32.gmra.mrb[0].mxu0 %v98
  %v568 = vpop.f32.mrb[0].mxu0
  %v569 = vadd.f32 %v142, %v568
  %v570 = vpop.f32.mrb[0].mxu0
  %571 = vmatprep.mubr.f32.mxu0 %v275
  %572 = vmatmul.mubr.f32.gmra.mrb[0].mxu0 %v100
  %v573 = vpop.f32.mrb[0].mxu0
  %v574 = vadd.f32 %v142, %v573
  %v575 = vpop.f32.mrb[0].mxu0
  %576 = vmatprep.mubr.f32.mxu0 %v278
  %577 = vmatmul.mubr.f32.gmra.mrb[0].mxu0 %v102
  %v578 = vpop.f32.mrb[0].mxu0
  %v579 = vadd.f32 %v142, %v578
  %v580 = vpop.f32.mrb[0].mxu0
  %581 = vmatprep.mubr.f32.mxu0 %v281
  %582 = vmatmul.mubr.f32.gmra.mrb[0].mxu0 %v104
  %v583 = vpop.f32.mrb[0].mxu0
  %v584 = vadd.f32 %v142, %v583
  %v585 = vpop.f32.mrb[0].mxu0
  %586 = vmatprep.mubr.f32.mxu0 %v284
  %587 = vmatmul.mubr.f32.gmra.mrb[0].mxu0 %v106
  %v588 = vpop.f32.mrb[0].mxu0
  %v589 = vadd.f32 %v142, %v588
  %v590 = vpop.f32.mrb[0].mxu0
  %591 = vmatprep.mubr.f32.mxu0 %v287
  %592 = vmatmul.mubr.f32.gmra.mrb[0].mxu0 %v108
  %v593 = vpop.f32.mrb[0].mxu0
  %v594 = vadd.f32 %v142, %v593
  %v595 = vpop.f32.mrb[0].mxu0
  %596 = vmatprep.mubr.f32.mxu0 %v290
  %597 = vmatmul.mubr.f32.gmra.mrb[0].mxu0 %v110
  %v598 = vpop.f32.mrb[0].mxu0
  %v599 = vadd.f32 %v142, %v598
  %v600 = vpop.f32.mrb[0].mxu0
  %601 = vdwg.mxu0
  %v602 = vmax.f32 %v359, 0.0
  %v603 = vmax.f32 %v364, 0.0
  %v604 = vmax.f32 %v369, 0.0
  %v605 = vmax.f32 %v374, 0.0
  %v606 = vmax.f32 %v379, 0.0
  %v607 = vmax.f32 %v384, 0.0
  %v608 = vmax.f32 %v389, 0.0
  %v609 = vmax.f32 %v394, 0.0
  %v610 = vmax.f32 %v399, 0.0
  %v611 = vmax.f32 %v404, 0.0
  %v612 = vmax.f32 %v409, 0.0
  %v613 = vmax.f32 %v414, 0.0
  %v614 = vmax.f32 %v419, 0.0
  %v615 = vmax.f32 %v424, 0.0
  %v616 = vmax.f32 %v429, 0.0
  %v617 = vmax.f32 %v434, 0.0
  %v618 = vmax.f32 %v439, 0.0
  %v619 = vmax.f32 %v444, 0.0
  %v620 = vmax.f32 %v449, 0.0
  %v621 = vmax.f32 %v454, 0.0
  %v622 = vmax.f32 %v459, 0.0
  %v623 = vmax.f32 %v464, 0.0
  %v624 = vmax.f32 %v469, 0.0
  %v625 = vmax.f32 %v474, 0.0
  %v626 = vmax.f32 %v479, 0.0
  %v627 = vmax.f32 %v484, 0.0
  %v628 = vmax.f32 %v489, 0.0
  %v629 = vmax.f32 %v494, 0.0
  %v630 = vmax.f32 %v499, 0.0
  %v631 = vmax.f32 %v504, 0.0
  %v632 = vmax.f32 %v509, 0.0
  %v633 = vmax.f32 %v514, 0.0
  %v634 = vmax.f32 %v519, 0.0
  %v635 = vmax.f32 %v524, 0.0
  %v636 = vmax.f32 %v529, 0.0
  %v637 = vmax.f32 %v534, 0.0
  %v638 = vmax.f32 %v539, 0.0
  %v639 = vmax.f32 %v544, 0.0
  %v640 = vmax.f32 %v549, 0.0
  %v641 = vmax.f32 %v554, 0.0
  %v642 = vmax.f32 %v559, 0.0
  %v643 = vmax.f32 %v564, 0.0
  %v644 = vmax.f32 %v569, 0.0
  %v645 = vmax.f32 %v574, 0.0
  %v646 = vmax.f32 %v579, 0.0
  %v647 = vmax.f32 %v584, 0.0
  %v648 = vmax.f32 %v589, 0.0
  %v649 = vmax.f32 %v594, 0.0
  %v650 = vmax.f32 %v599, 0.0
  %vm651 = vcmask 97280
  %652 = vst.msk [vmem:[%s3] sm:$0xff] %vm651, %v602
  %653 = vst.msk [vmem:[%s3 + $0x8] sm:$0xff] %vm651, %v603
  %654 = vst.msk [vmem:[%s3 + $0x10] sm:$0xff] %vm651, %v604
  %655 = vst.msk [vmem:[%s3 + $0x18] sm:$0xff] %vm651, %v605
  %656 = vst.msk [vmem:[%s3 + $0x20] sm:$0xff] %vm651, %v606
  %657 = vst.msk [vmem:[%s3 + $0x28] sm:$0xff] %vm651, %v607
  %658 = vst.msk [vmem:[%s3 + $0x30] sm:$0xff] %vm651, %v608
  %659 = vst.msk [vmem:[%s3 + $0x38] sm:$0xff] %vm651, %v609
  %660 = vst.msk [vmem:[%s3 + $0x40] sm:$0xff] %vm651, %v610
  %661 = vst.msk [vmem:[%s3 + $0x48] sm:$0xff] %vm651, %v611
  %662 = vst.msk [vmem:[%s3 + $0x50] sm:$0xff] %vm651, %v612
  %663 = vst.msk [vmem:[%s3 + $0x58] sm:$0xff] %vm651, %v613
  %664 = vst.msk [vmem:[%s3 + $0x60] sm:$0xff] %vm651, %v614
  %665 = vst.msk [vmem:[%s3 + $0x68] sm:$0xff] %vm651, %v615
  %666 = vst.msk [vmem:[%s3 + $0x70] sm:$0xff] %vm651, %v616
  %667 = vst.msk [vmem:[%s3 + $0x78] sm:$0xff] %vm651, %v617
  %668 = vst.msk [vmem:[%s3 + $0x80] sm:$0xff] %vm651, %v618
  %669 = vst.msk [vmem:[%s3 + $0x88] sm:$0xff] %vm651, %v619
  %670 = vst.msk [vmem:[%s3 + $0x90] sm:$0xff] %vm651, %v620
  %671 = vst.msk [vmem:[%s3 + $0x98] sm:$0xff] %vm651, %v621
  %672 = vst.msk [vmem:[%s3 + $0xa0] sm:$0xff] %vm651, %v622
  %673 = vst.msk [vmem:[%s3 + $0xa8] sm:$0xff] %vm651, %v623
  %674 = vst.msk [vmem:[%s3 + $0xb0] sm:$0xff] %vm651, %v624
  %675 = vst.msk [vmem:[%s3 + $0xb8] sm:$0xff] %vm651, %v625
  %676 = vst.msk [vmem:[%s3 + $0xc0] sm:$0xff] %vm651, %v626
  %677 = vst.msk [vmem:[%s3 + $0xc8] sm:$0xff] %vm651, %v627
  %678 = vst.msk [vmem:[%s3 + $0xd0] sm:$0xff] %vm651, %v628
  %679 = vst.msk [vmem:[%s3 + $0xd8] sm:$0xff] %vm651, %v629
  %680 = vst.msk [vmem:[%s3 + $0xe0] sm:$0xff] %vm651, %v630
  %681 = vst.msk [vmem:[%s3 + $0xe8] sm:$0xff] %vm651, %v631
  %682 = vst.msk [vmem:[%s3 + $0xf0] sm:$0xff] %vm651, %v632
  %683 = vst.msk [vmem:[%s3 + $0xf8] sm:$0xff] %vm651, %v633
  %684 = vst.msk [vmem:[%s3 + $0x100] sm:$0xff] %vm651, %v634
  %685 = vst.msk [vmem:[%s3 + $0x108] sm:$0xff] %vm651, %v635
  %686 = vst.msk [vmem:[%s3 + $0x110] sm:$0xff] %vm651, %v636
  %687 = vst.msk [vmem:[%s3 + $0x118] sm:$0xff] %vm651, %v637
  %688 = vst.msk [vmem:[%s3 + $0x120] sm:$0xff] %vm651, %v638
  %689 = vst.msk [vmem:[%s3 + $0x128] sm:$0xff] %vm651, %v639
  %690 = vst.msk [vmem:[%s3 + $0x130] sm:$0xff] %vm651, %v640
  %691 = vst.msk [vmem:[%s3 + $0x138] sm:$0xff] %vm651, %v641
  %692 = vst.msk [vmem:[%s3 + $0x140] sm:$0xff] %vm651, %v642
  %693 = vst.msk [vmem:[%s3 + $0x148] sm:$0xff] %vm651, %v643
  %694 = vst.msk [vmem:[%s3 + $0x150] sm:$0xff] %vm651, %v644
  %695 = vst.msk [vmem:[%s3 + $0x158] sm:$0xff] %vm651, %v645
  %696 = vst.msk [vmem:[%s3 + $0x160] sm:$0xff] %vm651, %v646
  %697 = vst.msk [vmem:[%s3 + $0x168] sm:$0xff] %vm651, %v647
  %698 = vst.msk [vmem:[%s3 + $0x170] sm:$0xff] %vm651, %v648
  %699 = vst.msk [vmem:[%s3 + $0x178] sm:$0xff] %vm651, %v649
  %700 = vst.msk [vmem:[%s3 + $0x180] sm:$0xff] %vm651, %v650
  // Predicated region
  $region14: #{patch_stn_apply.10} parent=0 // pred_check
    _
  $region15: #{patch_stn_apply.10} parent=0 // pred_check_branch
    %702 = sbr.rel (0) target = $region17
  $region16: #{patch_stn_apply.10} parent=0 // pred_region
    _
  $region17: #{patch_stn_apply.10} parent=0 // pred_fallthru
    _
  // Predicated region
  $region18: #{patch_stn_apply.10} parent=0 // pred_check
    _
  $region19: #{patch_stn_apply.10} parent=0 // pred_check_branch
    %704 = sbr.rel (0) target = $region21
  $region20: #{patch_stn_apply.10} parent=0 // pred_region
    _
  $region21: #{patch_stn_apply.10} parent=0 // pred_fallthru
    _

// kernel: patch_stn_apply.11
$region0: #{patch_stn_apply.11}
  #allocation0 [shape = 'u32[]', space=smem, size = 0x4, offset = 0x4, fixed_abs, tag = 'smem constant byte address 0x4 - core index']
  #allocation1 [shape = 'u32[144,128]{1,0:T(1,128)}', space=vmem, size = 0x12000, scoped, tag = 'internal scratch']
  %s0 = inlined_call_operand.vmem [shape: f32[4,104,12], index: 0, kind: input, shape index: {}]
  %s1 = inlined_call_operand.vmem [shape: f32[104,12], index: 1, kind: output, shape index: {}]
  %s2 = sld [smem:[#allocation0]]
  $region14: #{patch_stn_apply.11} parent=0
    _
  %s4 = ssub.s32 1, %s2
  %s5 = scalar_select 0, %s4, %s2
  // Predicated region
  $region2: #{patch_stn_apply.11} parent=0 // pred_check
    _
  $region3: #{patch_stn_apply.11} parent=0 // pred_check_branch
    %7 = sbr.rel (0) target = $region5
  $region4: #{patch_stn_apply.11} parent=0 // pred_region
    _
  $region5: #{patch_stn_apply.11} parent=0 // pred_fallthru
    _
  %v8 = vld [vmem:[%s0] sm:$0xff]
  %v9 = vld [vmem:[%s0 + $0x8] sm:$0xff]
  %v10 = vld [vmem:[%s0 + $0x10] sm:$0xff]
  %v11 = vld [vmem:[%s0 + $0x18] sm:$0xff]
  %v12 = vld [vmem:[%s0 + $0x20] sm:$0xff]
  %v13 = vld [vmem:[%s0 + $0x28] sm:$0xff]
  %v14 = vld [vmem:[%s0 + $0x30] sm:$0xff]
  %v15 = vld [vmem:[%s0 + $0x38] sm:$0xff]
  %v16 = vld [vmem:[%s0 + $0x40] sm:$0xff]
  %v17 = vld [vmem:[%s0 + $0x48] sm:$0xff]
  %v18 = vld [vmem:[%s0 + $0x50] sm:$0xff]
  %v19 = vld [vmem:[%s0 + $0x58] sm:$0xff]
  %v20 = vld [vmem:[%s0 + $0x60] sm:$0xff]
  %v21 = vld [vmem:[%s0 + $0x68] sm:$0xff]
  %v22 = vld [vmem:[%s0 + $0x70] sm:$0xff]
  %v23 = vld [vmem:[%s0 + $0x78] sm:$0xff]
  %v24 = vld [vmem:[%s0 + $0x80] sm:$0xff]
  %v25 = vld [vmem:[%s0 + $0x88] sm:$0xff]
  %v26 = vld [vmem:[%s0 + $0x90] sm:$0xff]
  %v27 = vld [vmem:[%s0 + $0x98] sm:$0xff]
  %v28 = vld [vmem:[%s0 + $0xa0] sm:$0xff]
  %v29 = vld [vmem:[%s0 + $0xa8] sm:$0xff]
  %v30 = vld [vmem:[%s0 + $0xb0] sm:$0xff]
  %v31 = vld [vmem:[%s0 + $0xb8] sm:$0xff]
  %v32 = vld [vmem:[%s0 + $0xc0] sm:$0xff]
  %v33 = vld [vmem:[%s0 + $0xc8] sm:$0xff]
  %v34 = vld [vmem:[%s0 + $0xd0] sm:$0xff]
  %v35 = vld [vmem:[%s0 + $0xd8] sm:$0xff]
  %v36 = vld [vmem:[%s0 + $0xe0] sm:$0xff]
  %v37 = vld [vmem:[%s0 + $0xe8] sm:$0xff]
  %v38 = vld [vmem:[%s0 + $0xf0] sm:$0xff]
  %v39 = vld [vmem:[%s0 + $0xf8] sm:$0xff]
  %v40 = vld [vmem:[%s0 + $0x100] sm:$0xff]
  %v41 = vld [vmem:[%s0 + $0x108] sm:$0xff]
  %v42 = vld [vmem:[%s0 + $0x110] sm:$0xff]
  %v43 = vld [vmem:[%s0 + $0x118] sm:$0xff]
  %v44 = vld [vmem:[%s0 + $0x120] sm:$0xff]
  %v45 = vld [vmem:[%s0 + $0x128] sm:$0xff]
  %v46 = vld [vmem:[%s0 + $0x130] sm:$0xff]
  %v47 = vld [vmem:[%s0 + $0x138] sm:$0xff]
  %v48 = vld [vmem:[%s0 + $0x140] sm:$0xff]
  %v49 = vld [vmem:[%s0 + $0x148] sm:$0xff]
  %v50 = vld [vmem:[%s0 + $0x150] sm:$0xff]
  %v51 = vld [vmem:[%s0 + $0x158] sm:$0xff]
  %v52 = vld [vmem:[%s0 + $0x160] sm:$0xff]
  %v53 = vld [vmem:[%s0 + $0x168] sm:$0xff]
  %v54 = vld [vmem:[%s0 + $0x170] sm:$0xff]
  %v55 = vld [vmem:[%s0 + $0x178] sm:$0xff]
  %v56 = vld [vmem:[%s0 + $0x180] sm:$0xff]
  %v57 = vld [vmem:[%s0 + $0x188] sm:$0xff]
  %v58 = vld [vmem:[%s0 + $0x190] sm:$0xff]
  %v59 = vld [vmem:[%s0 + $0x198] sm:$0xff]
  %vm60 = vcmask 97280
  %v61 = vsel %vm60, %v8, -inf
  %v62 = vsel %vm60, %v21, -inf
  %v63 = vmax.f32 %v61, %v62
  %v64 = vsel %vm60, %v34, -inf
  %v65 = vmax.f32 %v63, %v64
  %v66 = vsel %vm60, %v47, -inf
  %v67 = vmax.f32 %v65, %v66
  %v68 = vsel %vm60, %v9, -inf
  %v69 = vsel %vm60, %v22, -inf
  %v70 = vmax.f32 %v68, %v69
  %v71 = vsel %vm60, %v35, -inf
  %v72 = vmax.f32 %v70, %v71
  %v73 = vsel %vm60, %v48, -inf
  %v74 = vmax.f32 %v72, %v73
  %v75 = vsel %vm60, %v10, -inf
  %v76 = vsel %vm60, %v23, -inf
  %v77 = vmax.f32 %v75, %v76
  %v78 = vsel %vm60, %v36, -inf
  %v79 = vmax.f32 %v77, %v78
  %v80 = vsel %vm60, %v49, -inf
  %v81 = vmax.f32 %v79, %v80
  %v82 = vsel %vm60, %v11, -inf
  %v83 = vsel %vm60, %v24, -inf
  %v84 = vmax.f32 %v82, %v83
  %v85 = vsel %vm60, %v37, -inf
  %v86 = vmax.f32 %v84, %v85
  %v87 = vsel %vm60, %v50, -inf
  %v88 = vmax.f32 %v86, %v87
  %v89 = vsel %vm60, %v12, -inf
  %v90 = vsel %vm60, %v25, -inf
  %v91 = vmax.f32 %v89, %v90
  %v92 = vsel %vm60, %v38, -inf
  %v93 = vmax.f32 %v91, %v92
  %v94 = vsel %vm60, %v51, -inf
  %v95 = vmax.f32 %v93, %v94
  %v96 = vsel %vm60, %v13, -inf
  %v97 = vsel %vm60, %v26, -inf
  %v98 = vmax.f32 %v96, %v97
  %v99 = vsel %vm60, %v39, -inf
  %v100 = vmax.f32 %v98, %v99
  %v101 = vsel %vm60, %v52, -inf
  %v102 = vmax.f32 %v100, %v101
  %v103 = vsel %vm60, %v14, -inf
  %v104 = vsel %vm60, %v27, -inf
  %v105 = vmax.f32 %v103, %v104
  %v106 = vsel %vm60, %v40, -inf
  %v107 = vmax.f32 %v105, %v106
  %v108 = vsel %vm60, %v53, -inf
  %v109 = vmax.f32 %v107, %v108
  %v110 = vsel %vm60, %v15, -inf
  %v111 = vsel %vm60, %v28, -inf
  %v112 = vmax.f32 %v110, %v111
  %v113 = vsel %vm60, %v41, -inf
  %v114 = vmax.f32 %v112, %v113
  %v115 = vsel %vm60, %v54, -inf
  %v116 = vmax.f32 %v114, %v115
  %v117 = vsel %vm60, %v16, -inf
  %v118 = vsel %vm60, %v29, -inf
  %v119 = vmax.f32 %v117, %v118
  %v120 = vsel %vm60, %v42, -inf
  %v121 = vmax.f32 %v119, %v120
  %v122 = vsel %vm60, %v55, -inf
  %v123 = vmax.f32 %v121, %v122
  %v124 = vsel %vm60, %v17, -inf
  %v125 = vsel %vm60, %v30, -inf
  %v126 = vmax.f32 %v124, %v125
  %v127 = vsel %vm60, %v43, -inf
  %v128 = vmax.f32 %v126, %v127
  %v129 = vsel %vm60, %v56, -inf
  %v130 = vmax.f32 %v128, %v129
  %v131 = vsel %vm60, %v18, -inf
  %v132 = vsel %vm60, %v31, -inf
  %v133 = vmax.f32 %v131, %v132
  %v134 = vsel %vm60, %v44, -inf
  %v135 = vmax.f32 %v133, %v134
  %v136 = vsel %vm60, %v57, -inf
  %v137 = vmax.f32 %v135, %v136
  %v138 = vsel %vm60, %v19, -inf
  %v139 = vsel %vm60, %v32, -inf
  %v140 = vmax.f32 %v138, %v139
  %v141 = vsel %vm60, %v45, -inf
  %v142 = vmax.f32 %v140, %v141
  %v143 = vsel %vm60, %v58, -inf
  %v144 = vmax.f32 %v142, %v143
  %v145 = vsel %vm60, %v20, -inf
  %v146 = vsel %vm60, %v33, -inf
  %v147 = vmax.f32 %v145, %v146
  %v148 = vsel %vm60, %v46, -inf
  %v149 = vmax.f32 %v147, %v148
  %v150 = vsel %vm60, %v59, -inf
  %v151 = vmax.f32 %v149, %v150
  %152 = vst.msk [vmem:[%s1] sm:$0xff] %vm60, %v67
  %153 = vst.msk [vmem:[%s1 + $0x8] sm:$0xff] %vm60, %v74
  %154 = vst.msk [vmem:[%s1 + $0x10] sm:$0xff] %vm60, %v81
  %155 = vst.msk [vmem:[%s1 + $0x18] sm:$0xff] %vm60, %v88
  %156 = vst.msk [vmem:[%s1 + $0x20] sm:$0xff] %vm60, %v95
  %157 = vst.msk [vmem:[%s1 + $0x28] sm:$0xff] %vm60, %v102
  %158 = vst.msk [vmem:[%s1 + $0x30] sm:$0xff] %vm60, %v109
  %159 = vst.msk [vmem:[%s1 + $0x38] sm:$0xff] %vm60, %v116
  %160 = vst.msk [vmem:[%s1 + $0x40] sm:$0xff] %vm60, %v123
  %161 = vst.msk [vmem:[%s1 + $0x48] sm:$0xff] %vm60, %v130
  %162 = vst.msk [vmem:[%s1 + $0x50] sm:$0xff] %vm60, %v137
  %163 = vst.msk [vmem:[%s1 + $0x58] sm:$0xff] %vm60, %v144
  %164 = vst.msk [vmem:[%s1 + $0x60] sm:$0xff] %vm60, %v151
  // Predicated region
  $region6: #{patch_stn_apply.11} parent=0 // pred_check
    _
  $region7: #{patch_stn_apply.11} parent=0 // pred_check_branch
    %166 = sbr.rel (0) target = $region9
  $region8: #{patch_stn_apply.11} parent=0 // pred_region
    _
  $region9: #{patch_stn_apply.11} parent=0 // pred_fallthru
    _
  // Predicated region
  $region10: #{patch_stn_apply.11} parent=0 // pred_check
    _
  $region11: #{patch_stn_apply.11} parent=0 // pred_check_branch
    %168 = sbr.rel (0) target = $region13
  $region12: #{patch_stn_apply.11} parent=0 // pred_region
    _
  $region13: #{patch_stn_apply.11} parent=0 // pred_fallthru
    _

// kernel: patch_stn_apply.12
$region0: #{patch_stn_apply.12}
  #allocation0 [shape = 'u32[]', space=smem, size = 0x4, offset = 0x4, fixed_abs, tag = 'smem constant byte address 0x4 - core index']
  #allocation1 [shape = 'u32[144,128]{1,0:T(1,128)}', space=vmem, size = 0x12000, scoped, tag = 'internal scratch']
  %s0 = inlined_call_operand.vmem [shape: f32[56,108], index: 0, kind: input, shape index: {}]
  %s1 = inlined_call_operand.vmem [shape: f32[108,20], index: 1, kind: input, shape index: {}]
  %s2 = inlined_call_operand.vmem [shape: f32[1,20], index: 2, kind: input, shape index: {}]
  %s3 = inlined_call_operand.vmem [shape: f32[56,20], index: 3, kind: output, shape index: {}]
  %s4 = sld [smem:[#allocation0]]
  $region22: #{patch_stn_apply.12} parent=0
    _
  %s6 = ssub.s32 1, %s4
  %s7 = scalar_select 0, %s6, %s4
  // Predicated region
  $region2: #{patch_stn_apply.12} parent=0 // pred_check
    _
  $region3: #{patch_stn_apply.12} parent=0 // pred_check_branch
    %9 = sbr.rel (0) target = $region5
  $region4: #{patch_stn_apply.12} parent=0 // pred_region
    _
  $region5: #{patch_stn_apply.12} parent=0 // pred_fallthru
    _
  // Predicated region
  $region6: #{patch_stn_apply.12} parent=0 // pred_check
    _
  $region7: #{patch_stn_apply.12} parent=0 // pred_check_branch
    %11 = sbr.rel (0) target = $region9
  $region8: #{patch_stn_apply.12} parent=0 // pred_region
    _
  $region9: #{patch_stn_apply.12} parent=0 // pred_fallthru
    _
  // Predicated region
  $region10: #{patch_stn_apply.12} parent=0 // pred_check
    _
  $region11: #{patch_stn_apply.12} parent=0 // pred_check_branch
    %13 = sbr.rel (0) target = $region13
  $region12: #{patch_stn_apply.12} parent=0 // pred_region
    _
  $region13: #{patch_stn_apply.12} parent=0 // pred_fallthru
    _
  %v14 = vld [vmem:[%s0] sm:$0xff]
  %v15 = vld [vmem:[%s0 + $0x8] sm:$0xff]
  %v16 = vld [vmem:[%s0 + $0x10] sm:$0xff]
  %v17 = vld [vmem:[%s0 + $0x18] sm:$0xff]
  %v18 = vld [vmem:[%s0 + $0x20] sm:$0xff]
  %v19 = vld [vmem:[%s0 + $0x28] sm:$0xff]
  %v20 = vld [vmem:[%s0 + $0x30] sm:$0xff]
  %v21 = vld [vmem:[%s1] sm:$0xff]
  %v22 = vld [vmem:[%s1 + $0x8] sm:$0xff]
  %v23 = vld [vmem:[%s1 + $0x10] sm:$0xff]
  %v24 = vld [vmem:[%s1 + $0x18] sm:$0xff]
  %v25 = vld [vmem:[%s1 + $0x20] sm:$0xff]
  %v26 = vld [vmem:[%s1 + $0x28] sm:$0xff]
  %v27 = vld [vmem:[%s1 + $0x30] sm:$0xff]
  %v28 = vld [vmem:[%s1 + $0x38] sm:$0xff]
  %v29 = vld [vmem:[%s1 + $0x40] sm:$0xff]
  %v30 = vld [vmem:[%s1 + $0x48] sm:$0xff]
  %v31 = vld [vmem:[%s1 + $0x50] sm:$0xff]
  %v32 = vld [vmem:[%s1 + $0x58] sm:$0xff]
  %v33 = vld [vmem:[%s1 + $0x60] sm:$0xff]
  %v34 = vld [vmem:[%s1 + $0x68] sm:$0xf]
  %v35 = vld [vmem:[%s2] sm:$0x1]
  %v37 = vlaneseq
  %v38 = vshrl.u32 %v37, 7
  %v39 = vsub.s32 0, %v38
  %v40 = vrot.slane %v35, %v39
  %vm42 = vcmask 883712
  %v44 = vsel %vm42, %v14, 0
  %v47 = vsel %vm42, %v15, 0
  %v50 = vsel %vm42, %v16, 0
  %v53 = vsel %vm42, %v17, 0
  %v56 = vsel %vm42, %v18, 0
  %v59 = vsel %vm42, %v19, 0
  %v62 = vsel %vm42, %v20, 0
  %vm64 = vcmask 1043456
  %v66 = vsel %vm64, %v34, 0
  %68 = vmatprep.subr.mxu0 0.0
  %69 = vmatpush1.msra.mxu0 %v21
  %70 = vmatprep.subr.mxu0 0.0
  %71 = vmatpush1.msra.mxu0 %v22
  %72 = vmatprep.subr.mxu0 0.0
  %73 = vmatpush1.msra.mxu0 %v23
  %74 = vmatprep.subr.mxu0 0.0
  %75 = vmatpush1.msra.mxu0 %v24
  %76 = vmatprep.subr.mxu0 0.0
  %77 = vmatpush1.msra.mxu0 %v25
  %78 = vmatprep.subr.mxu0 0.0
  %79 = vmatpush1.msra.mxu0 %v26
  %80 = vmatprep.subr.mxu0 0.0
  %81 = vmatpush1.msra.mxu0 %v27
  %82 = vmatprep.subr.mxu0 0.0
  %83 = vmatpush1.msra.mxu0 %v28
  %84 = vmatprep.subr.mxu0 0.0
  %85 = vmatpush1.msra.mxu0 %v29
  %86 = vmatprep.subr.mxu0 0.0
  %87 = vmatpush1.msra.mxu0 %v30
  %88 = vmatprep.subr.mxu0 0.0
  %89 = vmatpush1.msra.mxu0 %v31
  %90 = vmatprep.subr.mxu0 0.0
  %91 = vmatpush1.msra.mxu0 %v32
  %92 = vmatprep.subr.mxu0 0.0
  %93 = vmatpush1.msra.mxu0 %v33
  %94 = vmatprep.subr.mxu0 0.0
  %95 = vmatpush1.msra.mxu0 %v66
  %96 = vmatprep.subr.mxu0 0.0
  %97 = vmatpush1.msra.mxu0 0.0
  %98 = vmatprep.subr.mxu0 0.0
  %99 = vmatpush1.msra.mxu0 0.0
  %100 = vmatprep.subr.mxu0 0.0
  %101 = vmatpush1.msra.mxu0 0.0
  %102 = vmatprep.subr.mxu0 0.0
  %103 = vmatpush1.msra.mxu0 0.0
  %104 = vmatprep.subr.mxu0 0.0
  %105 = vmatpush1.msra.mxu0 0.0
  %106 = vmatprep.subr.mxu0 0.0
  %107 = vmatpush1.msra.mxu0 0.0
  %108 = vmatprep.subr.mxu0 0.0
  %109 = vmatpush1.msra.mxu0 0.0
  %110 = vmatprep.subr.mxu0 0.0
  %111 = vmatpush1.msra.mxu0 0.0
  %112 = vmatprep.subr.mxu0 0.0
  %113 = vmatpush1.msra.mxu0 0.0
  %114 = vmatprep.subr.mxu0 0.0
  %115 = vmatpush1.msra.mxu0 0.0
  %116 = vmatprep.subr.mxu0 0.0
  %117 = vmatpush1.msra.mxu0 0.0
  %118 = vmatprep.subr.mxu0 0.0
  %119 = vmatpush1.msra.mxu0 0.0
  %120 = vmatprep.subr.mxu0 0.0
  %121 = vmatpush1.msra.mxu0 0.0
  %122 = vmatprep.subr.mxu0 0.0
  %123 = vmatpush1.msra.mxu0 0.0
  %124 = vmatprep.subr.mxu0 0.0
  %125 = vmatpush1.msra.mxu0 0.0
  %126 = vmatprep.subr.mxu0 0.0
  %127 = vmatpush1.msra.mxu0 0.0
  %128 = vmatprep.subr.mxu0 0.0
  %129 = vmatpush1.msra.mxu0 0.0
  %130 = vmatprep.subr.mxu0 0.0
  %131 = vmatpush1.msra.mxu0 0.0
  %132 = vmatprep.mubr.f32.mxu0 0.0
  %133 = vmatmul.mubr.f32.gmra.mrb[0].mxu0 %v44
  %v134 = vpop.f32.mrb[0].mxu0
  %v135 = vadd.f32 %v40, %v134
  %v136 = vpop.f32.mrb[0].mxu0
  %137 = vmatprep.mubr.f32.mxu0 0.0
  %138 = vmatmul.mubr.f32.gmra.mrb[0].mxu0 %v47
  %v139 = vpop.f32.mrb[0].mxu0
  %v140 = vadd.f32 %v40, %v139
  %v141 = vpop.f32.mrb[0].mxu0
  %142 = vmatprep.mubr.f32.mxu0 0.0
  %143 = vmatmul.mubr.f32.gmra.mrb[0].mxu0 %v50
  %v144 = vpop.f32.mrb[0].mxu0
  %v145 = vadd.f32 %v40, %v144
  %v146 = vpop.f32.mrb[0].mxu0
  %147 = vmatprep.mubr.f32.mxu0 0.0
  %148 = vmatmul.mubr.f32.gmra.mrb[0].mxu0 %v53
  %v149 = vpop.f32.mrb[0].mxu0
  %v150 = vadd.f32 %v40, %v149
  %v151 = vpop.f32.mrb[0].mxu0
  %152 = vmatprep.mubr.f32.mxu0 0.0
  %153 = vmatmul.mubr.f32.gmra.mrb[0].mxu0 %v56
  %v154 = vpop.f32.mrb[0].mxu0
  %v155 = vadd.f32 %v40, %v154
  %v156 = vpop.f32.mrb[0].mxu0
  %157 = vmatprep.mubr.f32.mxu0 0.0
  %158 = vmatmul.mubr.f32.gmra.mrb[0].mxu0 %v59
  %v159 = vpop.f32.mrb[0].mxu0
  %v160 = vadd.f32 %v40, %v159
  %v161 = vpop.f32.mrb[0].mxu0
  %162 = vmatprep.mubr.f32.mxu0 0.0
  %163 = vmatmul.mubr.f32.gmra.mrb[0].mxu0 %v62
  %v164 = vpop.f32.mrb[0].mxu0
  %v165 = vadd.f32 %v40, %v164
  %v166 = vpop.f32.mrb[0].mxu0
  %167 = vdwg.mxu0
  %v168 = vmax.f32 %v135, 0.0
  %v169 = vmax.f32 %v140, 0.0
  %v170 = vmax.f32 %v145, 0.0
  %v171 = vmax.f32 %v150, 0.0
  %v172 = vmax.f32 %v155, 0.0
  %v173 = vmax.f32 %v160, 0.0
  %v174 = vmax.f32 %v165, 0.0
  %vm175 = vcmask 162816
  %176 = vst.msk [vmem:[%s3] sm:$0xff] %vm175, %v168
  %177 = vst.msk [vmem:[%s3 + $0x8] sm:$0xff] %vm175, %v169
  %178 = vst.msk [vmem:[%s3 + $0x10] sm:$0xff] %vm175, %v170
  %179 = vst.msk [vmem:[%s3 + $0x18] sm:$0xff] %vm175, %v171
  %180 = vst.msk [vmem:[%s3 + $0x20] sm:$0xff] %vm175, %v172
  %181 = vst.msk [vmem:[%s3 + $0x28] sm:$0xff] %vm175, %v173
  %182 = vst.msk [vmem:[%s3 + $0x30] sm:$0xff] %vm175, %v174
  // Predicated region
  $region14: #{patch_stn_apply.12} parent=0 // pred_check
    _
  $region15: #{patch_stn_apply.12} parent=0 // pred_check_branch
    %184 = sbr.rel (0) target = $region17
  $region16: #{patch_stn_apply.12} parent=0 // pred_region
    _
  $region17: #{patch_stn_apply.12} parent=0 // pred_fallthru
    _
  // Predicated region
  $region18: #{patch_stn_apply.12} parent=0 // pred_check
    _
  $region19: #{patch_stn_apply.12} parent=0 // pred_check_branch
    %186 = sbr.rel (0) target = $region21
  $region20: #{patch_stn_apply.12} parent=0 // pred_region
    _
  $region21: #{patch_stn_apply.12} parent=0 // pred_fallthru
    _

// kernel: patch_stn_apply.13
$region0: #{patch_stn_apply.13}
  #allocation0 [shape = 'u32[]', space=smem, size = 0x4, offset = 0x4, fixed_abs, tag = 'smem constant byte address 0x4 - core index']
  #allocation1 [shape = 'u32[144,128]{1,0:T(1,128)}', space=vmem, size = 0x12000, scoped, tag = 'internal scratch']
  %s0 = inlined_call_operand.vmem [shape: f32[4,8,20], index: 0, kind: input, shape index: {}]
  %s1 = inlined_call_operand.vmem [shape: f32[8,20], index: 1, kind: output, shape index: {}]
  %s2 = sld [smem:[#allocation0]]
  $region14: #{patch_stn_apply.13} parent=0
    _
  %s4 = ssub.s32 1, %s2
  %s5 = scalar_select 0, %s4, %s2
  // Predicated region
  $region2: #{patch_stn_apply.13} parent=0 // pred_check
    _
  $region3: #{patch_stn_apply.13} parent=0 // pred_check_branch
    %7 = sbr.rel (0) target = $region5
  $region4: #{patch_stn_apply.13} parent=0 // pred_region
    _
  $region5: #{patch_stn_apply.13} parent=0 // pred_fallthru
    _
  %v8 = vld [vmem:[%s0] sm:$0xff]
  %v9 = vld [vmem:[%s0 + $0x8] sm:$0xff]
  %v10 = vld [vmem:[%s0 + $0x10] sm:$0xff]
  %v11 = vld [vmem:[%s0 + $0x18] sm:$0xff]
  %vm12 = vcmask 162816
  %v13 = vsel %vm12, %v8, -inf
  %v14 = vsel %vm12, %v9, -inf
  %v15 = vsel %vm12, %v10, -inf
  %v16 = vsel %vm12, %v11, -inf
  %v17 = vmax.f32 %v13, %v14
  %v18 = vmax.f32 %v15, %v16
  %v19 = vmax.f32 %v17, %v18
  %20 = vst.msk [vmem:[%s1] sm:$0xff] %vm12, %v19
  // Predicated region
  $region6: #{patch_stn_apply.13} parent=0 // pred_check
    _
  $region7: #{patch_stn_apply.13} parent=0 // pred_check_branch
    %22 = sbr.rel (0) target = $region9
  $region8: #{patch_stn_apply.13} parent=0 // pred_region
    _
  $region9: #{patch_stn_apply.13} parent=0 // pred_fallthru
    _
  // Predicated region
  $region10: #{patch_stn_apply.13} parent=0 // pred_check
    _
  $region11: #{patch_stn_apply.13} parent=0 // pred_check_branch
    %24 = sbr.rel (0) target = $region13
  $region12: #{patch_stn_apply.13} parent=0 // pred_region
    _
  $region13: #{patch_stn_apply.13} parent=0 // pred_fallthru
    _

// kernel: patch_stn_apply.14
$region0: #{patch_stn_apply.14}
  #allocation0 [shape = 'u32[]', space=smem, size = 0x4, offset = 0x4, fixed_abs, tag = 'smem constant byte address 0x4 - core index']
  #allocation1 [shape = 'u32[144,128]{1,0:T(1,128)}', space=vmem, size = 0x12000, scoped, tag = 'internal scratch']
  %s0 = inlined_call_operand.vmem [shape: f32[8,80], index: 0, kind: input, shape index: {}]
  %s1 = inlined_call_operand.vmem [shape: f32[80,32], index: 1, kind: input, shape index: {}]
  %s2 = inlined_call_operand.vmem [shape: f32[1,32], index: 2, kind: input, shape index: {}]
  %s3 = inlined_call_operand.vmem [shape: f32[8,32], index: 3, kind: output, shape index: {}]
  %s4 = sld [smem:[#allocation0]]
  $region22: #{patch_stn_apply.14} parent=0
    _
  %s6 = ssub.s32 1, %s4
  %s7 = scalar_select 0, %s6, %s4
  // Predicated region
  $region2: #{patch_stn_apply.14} parent=0 // pred_check
    _
  $region3: #{patch_stn_apply.14} parent=0 // pred_check_branch
    %9 = sbr.rel (0) target = $region5
  $region4: #{patch_stn_apply.14} parent=0 // pred_region
    _
  $region5: #{patch_stn_apply.14} parent=0 // pred_fallthru
    _
  // Predicated region
  $region6: #{patch_stn_apply.14} parent=0 // pred_check
    _
  $region7: #{patch_stn_apply.14} parent=0 // pred_check_branch
    %11 = sbr.rel (0) target = $region9
  $region8: #{patch_stn_apply.14} parent=0 // pred_region
    _
  $region9: #{patch_stn_apply.14} parent=0 // pred_fallthru
    _
  // Predicated region
  $region10: #{patch_stn_apply.14} parent=0 // pred_check
    _
  $region11: #{patch_stn_apply.14} parent=0 // pred_check_branch
    %13 = sbr.rel (0) target = $region13
  $region12: #{patch_stn_apply.14} parent=0 // pred_region
    _
  $region13: #{patch_stn_apply.14} parent=0 // pred_fallthru
    _
  %v14 = vld [vmem:[%s0] sm:$0xff]
  %v15 = vld [vmem:[%s1] sm:$0xff]
  %v16 = vld [vmem:[%s1 + $0x8] sm:$0xff]
  %v17 = vld [vmem:[%s1 + $0x10] sm:$0xff]
  %v18 = vld [vmem:[%s1 + $0x18] sm:$0xff]
  %v19 = vld [vmem:[%s1 + $0x20] sm:$0xff]
  %v20 = vld [vmem:[%s1 + $0x28] sm:$0xff]
  %v21 = vld [vmem:[%s1 + $0x30] sm:$0xff]
  %v22 = vld [vmem:[%s1 + $0x38] sm:$0xff]
  %v23 = vld [vmem:[%s1 + $0x40] sm:$0xff]
  %v24 = vld [vmem:[%s1 + $0x48] sm:$0xff]
  %v25 = vld [vmem:[%s2] sm:$0x1]
  %v27 = vlaneseq
  %v28 = vshrl.u32 %v27, 7
  %v29 = vsub.s32 0, %v28
  %v30 = vrot.slane %v25, %v29
  %vm32 = vcmask 654336
  %v34 = vsel %vm32, %v14, 0
  %36 = vmatprep.subr.mxu0 0.0
  %37 = vmatpush1.msra.mxu0 %v15
  %38 = vmatprep.subr.mxu0 0.0
  %39 = vmatpush1.msra.mxu0 %v16
  %40 = vmatprep.subr.mxu0 0.0
  %41 = vmatpush1.msra.mxu0 %v17
  %42 = vmatprep.subr.mxu0 0.0
  %43 = vmatpush1.msra.mxu0 %v18
  %44 = vmatprep.subr.mxu0 0.0
  %45 = vmatpush1.msra.mxu0 %v19
  %46 = vmatprep.subr.mxu0 0.0
  %47 = vmatpush1.msra.mxu0 %v20
  %48 = vmatprep.subr.mxu0 0.0
  %49 = vmatpush1.msra.mxu0 %v21
  %50 = vmatprep.subr.mxu0 0.0
  %51 = vmatpush1.msra.mxu0 %v22
  %52 = vmatprep.subr.mxu0 0.0
  %53 = vmatpush1.msra.mxu0 %v23
  %54 = vmatprep.subr.mxu0 0.0
  %55 = vmatpush1.msra.mxu0 %v24
  %56 = vmatprep.subr.mxu0 0.0
  %57 = vmatpush1.msra.mxu0 0.0
  %58 = vmatprep.subr.mxu0 0.0
  %59 = vmatpush1.msra.mxu0 0.0
  %60 = vmatprep.subr.mxu0 0.0
  %61 = vmatpush1.msra.mxu0 0.0
  %62 = vmatprep.subr.mxu0 0.0
  %63 = vmatpush1.msra.mxu0 0.0
  %64 = vmatprep.subr.mxu0 0.0
  %65 = vmatpush1.msra.mxu0 0.0
  %66 = vmatprep.subr.mxu0 0.0
  %67 = vmatpush1.msra.mxu0 0.0
  %68 = vmatprep.subr.mxu0 0.0
  %69 = vmatpush1.msra.mxu0 0.0
  %70 = vmatprep.subr.mxu0 0.0
  %71 = vmatpush1.msra.mxu0 0.0
  %72 = vmatprep.subr.mxu0 0.0
  %73 = vmatpush1.msra.mxu0 0.0
  %74 = vmatprep.subr.mxu0 0.0
  %75 = vmatpush1.msra.mxu0 0.0
  %76 = vmatprep.subr.mxu0 0.0
  %77 = vmatpush1.msra.mxu0 0.0
  %78 = vmatprep.subr.mxu0 0.0
  %79 = vmatpush1.msra.mxu0 0.0
  %80 = vmatprep.subr.mxu0 0.0
  %81 = vmatpush1.msra.mxu0 0.0
  %82 = vmatprep.subr.mxu0 0.0
  %83 = vmatpush1.msra.mxu0 0.0
  %84 = vmatprep.subr.mxu0 0.0
  %85 = vmatpush1.msra.mxu0 0.0
  %86 = vmatprep.subr.mxu0 0.0
  %87 = vmatpush1.msra.mxu0 0.0
  %88 = vmatprep.subr.mxu0 0.0
  %89 = vmatpush1.msra.mxu0 0.0
  %90 = vmatprep.subr.mxu0 0.0
  %91 = vmatpush1.msra.mxu0 0.0
  %92 = vmatprep.subr.mxu0 0.0
  %93 = vmatpush1.msra.mxu0 0.0
  %94 = vmatprep.subr.mxu0 0.0
  %95 = vmatpush1.msra.mxu0 0.0
  %96 = vmatprep.subr.mxu0 0.0
  %97 = vmatpush1.msra.mxu0 0.0
  %98 = vmatprep.subr.mxu0 0.0
  %99 = vmatpush1.msra.mxu0 0.0
  %100 = vmatprep.mubr.f32.mxu0 0.0
  %101 = vmatmul.mubr.f32.gmra.mrb[0].mxu0 %v34
  %v102 = vpop.f32.mrb[0].mxu0
  %v103 = vadd.f32 %v30, %v102
  %v104 = vpop.f32.mrb[0].mxu0
  %105 = vdwg.mxu0
  %v106 = vmax.f32 %v103, 0.0
  %vm107 = vcmask 261120
  %108 = vst.msk [vmem:[%s3] sm:$0xff] %vm107, %v106
  // Predicated region
  $region14: #{patch_stn_apply.14} parent=0 // pred_check
    _
  $region15: #{patch_stn_apply.14} parent=0 // pred_check_branch
    %110 = sbr.rel (0) target = $region17
  $region16: #{patch_stn_apply.14} parent=0 // pred_region
    _
  $region17: #{patch_stn_apply.14} parent=0 // pred_fallthru
    _
  // Predicated region
  $region18: #{patch_stn_apply.14} parent=0 // pred_check
    _
  $region19: #{patch_stn_apply.14} parent=0 // pred_check_branch
    %112 = sbr.rel (0) target = $region21
  $region20: #{patch_stn_apply.14} parent=0 // pred_region
    _
  $region21: #{patch_stn_apply.14} parent=0 // pred_fallthru
    _

// kernel: patch_stn_apply.15
$region0: #{patch_stn_apply.15}
  #allocation0 [shape = 'u32[]', space=smem, size = 0x4, offset = 0x4, fixed_abs, tag = 'smem constant byte address 0x4 - core index']
  #allocation1 [shape = 'u32[144,128]{1,0:T(1,128)}', space=vmem, size = 0x12000, scoped, tag = 'internal scratch']
  %s0 = inlined_call_operand.vmem [shape: f32[8,32], index: 0, kind: input, shape index: {}]
  %s1 = inlined_call_operand.vmem [shape: f32[32,6], index: 1, kind: input, shape index: {}]
  %s2 = inlined_call_operand.vmem [shape: f32[1,6], index: 2, kind: input, shape index: {}]
  %s3 = inlined_call_operand.vmem [shape: f32[8,6], index: 3, kind: output, shape index: {}]
  %s4 = sld [smem:[#allocation0]]
  $region22: #{patch_stn_apply.15} parent=0
    _
  %s6 = ssub.s32 1, %s4
  %s7 = scalar_select 0, %s6, %s4
  // Predicated region
  $region2: #{patch_stn_apply.15} parent=0 // pred_check
    _
  $region3: #{patch_stn_apply.15} parent=0 // pred_check_branch
    %9 = sbr.rel (0) target = $region5
  $region4: #{patch_stn_apply.15} parent=0 // pred_region
    _
  $region5: #{patch_stn_apply.15} parent=0 // pred_fallthru
    _
  // Predicated region
  $region6: #{patch_stn_apply.15} parent=0 // pred_check
    _
  $region7: #{patch_stn_apply.15} parent=0 // pred_check_branch
    %11 = sbr.rel (0) target = $region9
  $region8: #{patch_stn_apply.15} parent=0 // pred_region
    _
  $region9: #{patch_stn_apply.15} parent=0 // pred_fallthru
    _
  // Predicated region
  $region10: #{patch_stn_apply.15} parent=0 // pred_check
    _
  $region11: #{patch_stn_apply.15} parent=0 // pred_check_branch
    %13 = sbr.rel (0) target = $region13
  $region12: #{patch_stn_apply.15} parent=0 // pred_region
    _
  $region13: #{patch_stn_apply.15} parent=0 // pred_fallthru
    _
  %v14 = vld [vmem:[%s0] sm:$0xff]
  %v15 = vld [vmem:[%s1] sm:$0xff]
  %v16 = vld [vmem:[%s1 + $0x8] sm:$0xff]
  %v17 = vld [vmem:[%s1 + $0x10] sm:$0xff]
  %v18 = vld [vmem:[%s1 + $0x18] sm:$0xff]
  %v19 = vld [vmem:[%s2] sm:$0x1]
  %v21 = vlaneseq
  %v22 = vshrl.u32 %v21, 7
  %v23 = vsub.s32 0, %v22
  %v24 = vrot.slane %v19, %v23
  %vm26 = vcmask 261120
  %v28 = vsel %vm26, %v14, 0
  %30 = vmatprep.subr.mxu0 0.0
  %31 = vmatpush1.msra.mxu0 %v15
  %32 = vmatprep.subr.mxu0 0.0
  %33 = vmatpush1.msra.mxu0 %v16
  %34 = vmatprep.subr.mxu0 0.0
  %35 = vmatpush1.msra.mxu0 %v17
  %36 = vmatprep.subr.mxu0 0.0
  %37 = vmatpush1.msra.mxu0 %v18
  %38 = vmatprep.subr.mxu0 0.0
  %39 = vmatpush1.msra.mxu0 0.0
  %40 = vmatprep.subr.mxu0 0.0
  %41 = vmatpush1.msra.mxu0 0.0
  %42 = vmatprep.subr.mxu0 0.0
  %43 = vmatpush1.msra.mxu0 0.0
  %44 = vmatprep.subr.mxu0 0.0
  %45 = vmatpush1.msra.mxu0 0.0
  %46 = vmatprep.subr.mxu0 0.0
  %47 = vmatpush1.msra.mxu0 0.0
  %48 = vmatprep.subr.mxu0 0.0
  %49 = vmatpush1.msra.mxu0 0.0
  %50 = vmatprep.subr.mxu0 0.0
  %51 = vmatpush1.msra.mxu0 0.0
  %52 = vmatprep.subr.mxu0 0.0
  %53 = vmatpush1.msra.mxu0 0.0
  %54 = vmatprep.subr.mxu0 0.0
  %55 = vmatpush1.msra.mxu0 0.0
  %56 = vmatprep.subr.mxu0 0.0
  %57 = vmatpush1.msra.mxu0 0.0
  %58 = vmatprep.subr.mxu0 0.0
  %59 = vmatpush1.msra.mxu0 0.0
  %60 = vmatprep.subr.mxu0 0.0
  %61 = vmatpush1.msra.mxu0 0.0
  %62 = vmatprep.subr.mxu0 0.0
  %63 = vmatpush1.msra.mxu0 0.0
  %64 = vmatprep.subr.mxu0 0.0
  %65 = vmatpush1.msra.mxu0 0.0
  %66 = vmatprep.subr.mxu0 0.0
  %67 = vmatpush1.msra.mxu0 0.0
  %68 = vmatprep.subr.mxu0 0.0
  %69 = vmatpush1.msra.mxu0 0.0
  %70 = vmatprep.subr.mxu0 0.0
  %71 = vmatpush1.msra.mxu0 0.0
  %72 = vmatprep.subr.mxu0 0.0
  %73 = vmatpush1.msra.mxu0 0.0
  %74 = vmatprep.subr.mxu0 0.0
  %75 = vmatpush1.msra.mxu0 0.0
  %76 = vmatprep.subr.mxu0 0.0
  %77 = vmatpush1.msra.mxu0 0.0
  %78 = vmatprep.subr.mxu0 0.0
  %79 = vmatpush1.msra.mxu0 0.0
  %80 = vmatprep.subr.mxu0 0.0
  %81 = vmatpush1.msra.mxu0 0.0
  %82 = vmatprep.subr.mxu0 0.0
  %83 = vmatpush1.msra.mxu0 0.0
  %84 = vmatprep.subr.mxu0 0.0
  %85 = vmatpush1.msra.mxu0 0.0
  %86 = vmatprep.subr.mxu0 0.0
  %87 = vmatpush1.msra.mxu0 0.0
  %88 = vmatprep.subr.mxu0 0.0
  %89 = vmatpush1.msra.mxu0 0.0
  %90 = vmatprep.subr.mxu0 0.0
  %91 = vmatpush1.msra.mxu0 0.0
  %92 = vmatprep.subr.mxu0 0.0
  %93 = vmatpush1.msra.mxu0 0.0
  %94 = vmatprep.mubr.f32.mxu0 0.0
  %95 = vmatmul.mubr.f32.gmra.mrb[0].mxu0 %v28
  %v96 = vpop.f32.mrb[0].mxu0
  %v97 = vadd.f32 %v24, %v96
  %v98 = vpop.f32.mrb[0].mxu0
  %99 = vdwg.mxu0
  %vm100 = vcmask 48128
  %101 = vst.msk [vmem:[%s3] sm:$0xff] %vm100, %v97
  // Predicated region
  $region14: #{patch_stn_apply.15} parent=0 // pred_check
    _
  $region15: #{patch_stn_apply.15} parent=0 // pred_check_branch
    %103 = sbr.rel (0) target = $region17
  $region16: #{patch_stn_apply.15} parent=0 // pred_region
    _
  $region17: #{patch_stn_apply.15} parent=0 // pred_fallthru
    _
  // Predicated region
  $region18: #{patch_stn_apply.15} parent=0 // pred_check
    _
  $region19: #{patch_stn_apply.15} parent=0 // pred_check_branch
    %105 = sbr.rel (0) target = $region21
  $region20: #{patch_stn_apply.15} parent=0 // pred_region
    _
  $region21: #{patch_stn_apply.15} parent=0 // pred_fallthru
    _

</llo_original>
